<compile_context>
chip_gen: v7x
topology: tpu7x:2x2x1
jax: 0.10.0
libtpu: 0.0.40
codegen_flags: <defaults>
</compile_context>

<pallas_src>
import functools

import jax
import jax.numpy as jnp
from jax.experimental import pallas as pl
from jax.experimental.pallas import tpu as pltpu

# ---- small config consistent with a Transformer-XL forward ----
VOCAB = 100
D_MODEL = 32
N_HEAD = 4
D_HEAD = 8
D_INNER = 64
N_LAYER = 2
SEQ = 8
BATCH = 2
LENGTH = 1024 * 20          # matches `self.length = 1024 * 20` in the module
LN_EPS = 1e-5


# ----------------------------------------------------------------------------
# Fused Pallas kernel: full Transformer-XL forward for one batch element.
# ----------------------------------------------------------------------------
def _layer_norm(y, g, b):
    mu = jnp.mean(y, axis=-1, keepdims=True)
    var = jnp.mean((y - mu) ** 2, axis=-1, keepdims=True)
    return (y - mu) * jax.lax.rsqrt(var + LN_EPS) * g + b


def _transxl_kernel(emb_ref, pos_ref,
                    wq_ref, wk_ref, wv_ref, wr_ref, wo_ref,
                    rwb_ref, rrb_ref, ln1g_ref, ln1b_ref,
                    w1_ref, b1_ref, w2_ref, b2_ref, ln2g_ref, ln2b_ref,
                    o_ref):
    S = emb_ref.shape[1]
    D = emb_ref.shape[2]

    h = emb_ref[0]          # (S, D) hidden state, resident for the whole forward
    pos = pos_ref[...]      # (S, D) sinusoidal relative position embedding

    # ---- constants built once (iota-based, 2-D only) ----
    row = jax.lax.broadcasted_iota(jnp.int32, (S, S), 0)
    col = jax.lax.broadcasted_iota(jnp.int32, (S, S), 1)
    causal = col > row                                        # mask j > i
    shift_amt = (S - 1) - jax.lax.broadcasted_iota(jnp.int32, (S, 1), 0)
    n_bits = max(1, (S - 1).bit_length())

    # Constant left-circular-shift-by-2^b permutation matrices (no % op).
    perms = []
    bit_masks = []
    for b in range(n_bits):
        s = 1 << b
        cps = col + s
        cps = jnp.where(cps >= S, cps - S, cps)
        perms.append((row == cps).astype(jnp.float32))        # perm[k, j]
        bit_masks.append(((shift_amt >> b) & 1) == 1)         # (S, 1) bool

    scale = 1.0 / (D_HEAD ** 0.5)
    trans_b = (((1,), (1,)), ((), ()))                        # contract last dims

    for l in range(N_LAYER):
        # ---------- relative multi-head attention (heads unrolled) ----------
        attn_out = jnp.zeros((S, D), jnp.float32)
        for hd in range(N_HEAD):
            q = jnp.dot(h, wq_ref[l, hd], preferred_element_type=jnp.float32)
            k = jnp.dot(h, wk_ref[l, hd], preferred_element_type=jnp.float32)
            v = jnp.dot(h, wv_ref[l, hd], preferred_element_type=jnp.float32)
            r = jnp.dot(pos, wr_ref[l, hd], preferred_element_type=jnp.float32)
            u = rwb_ref[l, hd]                                # (1, Dh) content bias
            vb = rrb_ref[l, hd]                               # (1, Dh) position bias

            ac = jax.lax.dot_general(q + u, k, trans_b,
                                     preferred_element_type=jnp.float32)   # (S, S)
            bd = jax.lax.dot_general(q + vb, r, trans_b,
                                     preferred_element_type=jnp.float32)   # (S, S)

            # Relative shift (HF _rel_shift): for j <= i,
            # bd_shift[i, j] = bd[i, S-1-i+j].  Implemented as a per-row
            # left-circular shift by (S-1-i), binary-decomposed into
            # log2(S) constant-permutation matmuls + masked selects. O(S^2) mem.
            x = bd
            for b in range(n_bits):
                rolled = jnp.dot(x, perms[b], preferred_element_type=jnp.float32)
                x = jnp.where(bit_masks[b], rolled, x)

            score = (ac + x) * scale
            score = jnp.where(causal, -1e30, score)           # causal decoder mask
            score = score - jnp.max(score, axis=-1, keepdims=True)
            p = jnp.exp(score)
            p = p / jnp.sum(p, axis=-1, keepdims=True)

            oh = jnp.dot(p, v, preferred_element_type=jnp.float32)          # (S, Dh)
            attn_out = attn_out + jnp.dot(oh, wo_ref[l, hd],
                                          preferred_element_type=jnp.float32)

        # ---------- residual + LayerNorm ----------
        h = _layer_norm(h + attn_out, ln1g_ref[l], ln1b_ref[l])

        # ---------- position-wise FFN + residual + LayerNorm ----------
        f = jnp.dot(h, w1_ref[l], preferred_element_type=jnp.float32) + b1_ref[l]
        f = jnp.maximum(f, 0.0)
        f = jnp.dot(f, w2_ref[l], preferred_element_type=jnp.float32) + b2_ref[l]
        h = _layer_norm(h + f, ln2g_ref[l], ln2b_ref[l])

    o_ref[0] = h


def _full_spec(arr):
    nd = arr.ndim
    return pl.BlockSpec(arr.shape, lambda b, _nd=nd: (0,) * _nd)


# ----------------------------------------------------------------------------
# Parameters (stacked per-layer, per-head form so the kernel only needs
# leading-dim static indexing -> clean 2-D loads).
# ----------------------------------------------------------------------------
def init_params(key):
    ks = jax.random.split(key, 10)

    def nrm(k, shape):
        return jax.random.normal(k, shape, jnp.float32) * 0.02

    return dict(
        emb=nrm(ks[0], (VOCAB, D_MODEL)),
        w_q=nrm(ks[1], (N_LAYER, N_HEAD, D_MODEL, D_HEAD)),
        w_k=nrm(ks[2], (N_LAYER, N_HEAD, D_MODEL, D_HEAD)),
        w_v=nrm(ks[3], (N_LAYER, N_HEAD, D_MODEL, D_HEAD)),
        w_r=nrm(ks[4], (N_LAYER, N_HEAD, D_MODEL, D_HEAD)),
        w_o=nrm(ks[5], (N_LAYER, N_HEAD, D_HEAD, D_MODEL)),
        r_w_bias=nrm(ks[6], (N_LAYER, N_HEAD, 1, D_HEAD)),
        r_r_bias=nrm(ks[7], (N_LAYER, N_HEAD, 1, D_HEAD)),
        ln1_g=jnp.ones((N_LAYER, 1, D_MODEL), jnp.float32),
        ln1_b=jnp.zeros((N_LAYER, 1, D_MODEL), jnp.float32),
        w1=nrm(ks[8], (N_LAYER, D_MODEL, D_INNER)),
        b1=jnp.zeros((N_LAYER, 1, D_INNER), jnp.float32),
        w2=nrm(ks[9], (N_LAYER, D_INNER, D_MODEL)),
        b2=jnp.zeros((N_LAYER, 1, D_MODEL), jnp.float32),
        ln2_g=jnp.ones((N_LAYER, 1, D_MODEL), jnp.float32),
        ln2_b=jnp.zeros((N_LAYER, 1, D_MODEL), jnp.float32),
    )


_WEIGHT_NAMES = ['w_q', 'w_k', 'w_v', 'w_r', 'w_o', 'r_w_bias', 'r_r_bias',
                 'ln1_g', 'ln1_b', 'w1', 'b1', 'w2', 'b2', 'ln2_g', 'ln2_b']


# ----------------------------------------------------------------------------
# Forward: mirrors TransXL.forward (per-example model run, flatten, pad to
# LENGTH, stack), but batched through one fused kernel launch.
# ----------------------------------------------------------------------------
def transxl_forward(tokens, params):
    B, S = tokens.shape

    # embedding lookup (+ adaptive-embedding scale) in plain JAX
    emb = params['emb'][tokens] * (D_MODEL ** 0.5)                 # (B, S, D)

    # sinusoidal relative positional embedding, pos_seq = klen-1 .. 0
    pos_seq = jnp.arange(S - 1, -1, -1, dtype=jnp.float32)
    inv_freq = 1.0 / (10000.0 ** (jnp.arange(0, D_MODEL, 2,
                                             dtype=jnp.float32) / D_MODEL))
    sinusoid = pos_seq[:, None] * inv_freq[None, :]
    pos_emb = jnp.concatenate([jnp.sin(sinusoid), jnp.cos(sinusoid)], axis=-1)

    weights = [params[n] for n in _WEIGHT_NAMES]

    hidden = pl.pallas_call(
        _transxl_kernel,
        out_shape=jax.ShapeDtypeStruct((B, S, D_MODEL), jnp.float32),
        grid=(B,),
        in_specs=[pl.BlockSpec((1, S, D_MODEL), lambda b: (b, 0, 0)),
                  pl.BlockSpec((S, D_MODEL), lambda b: (0, 0))]
                 + [_full_spec(w) for w in weights],
        out_specs=pl.BlockSpec((1, S, D_MODEL), lambda b: (b, 0, 0)),
        compiler_params=pltpu.CompilerParams(
            dimension_semantics=("parallel",)),
    )(emb, pos_emb, *weights)                                       # (B, S, D)

    # flatten per example and pad / truncate to LENGTH (single batched op)
    flat = hidden.reshape(B, -1)
    n = flat.shape[1]
    if n < LENGTH:
        out = jnp.pad(flat, ((0, 0), (0, LENGTH - n)))
    else:
        out = flat[:, :LENGTH]
    return out


if __name__ == "__main__":
    key = jax.random.PRNGKey(0)
    pkey, tkey = jax.random.split(key)
    params = init_params(pkey)

    # TODO(synk): TransfoXLTokenizer (string -> token ids) and the pretrained
    # 'transfo-xl-wt103' checkpoint cannot be reproduced in a kernel; inputs
    # are pre-tokenized integer ids and weights are deterministic synthetic.
    tokens = jax.random.randint(tkey, (BATCH, SEQ), 0, VOCAB, dtype=jnp.int32)

    fwd = jax.jit(functools.partial(transxl_forward, params=params))
    y = fwd(tokens)
    jax.block_until_ready(y)
    assert y.shape == (BATCH, LENGTH) and y.dtype == jnp.float32
    assert bool(jnp.all(jnp.isfinite(y)))
    print("KERNEL_OK")
</pallas_src>

<mosaic_0001>
module attributes {stable_mosaic.version = 11 : i64} {
  func.func @_transxl_kernel(%arg0: i32, %arg1: memref<1x8x32xf32, #tpu.memory_space<vmem>>, %arg2: memref<8x32xf32, #tpu.memory_space<vmem>>, %arg3: memref<2x4x32x8xf32, #tpu.memory_space<vmem>>, %arg4: memref<2x4x32x8xf32, #tpu.memory_space<vmem>>, %arg5: memref<2x4x32x8xf32, #tpu.memory_space<vmem>>, %arg6: memref<2x4x32x8xf32, #tpu.memory_space<vmem>>, %arg7: memref<2x4x8x32xf32, #tpu.memory_space<vmem>>, %arg8: memref<2x4x1x8xf32, #tpu.memory_space<vmem>>, %arg9: memref<2x4x1x8xf32, #tpu.memory_space<vmem>>, %arg10: memref<2x1x32xf32, #tpu.memory_space<vmem>>, %arg11: memref<2x1x32xf32, #tpu.memory_space<vmem>>, %arg12: memref<2x32x64xf32, #tpu.memory_space<vmem>>, %arg13: memref<2x1x64xf32, #tpu.memory_space<vmem>>, %arg14: memref<2x64x32xf32, #tpu.memory_space<vmem>>, %arg15: memref<2x1x32xf32, #tpu.memory_space<vmem>>, %arg16: memref<2x1x32xf32, #tpu.memory_space<vmem>>, %arg17: memref<2x1x32xf32, #tpu.memory_space<vmem>>, %arg18: memref<1x8x32xf32, #tpu.memory_space<vmem>>) attributes {dimension_semantics = [#tpu.dimension_semantics<parallel>], iteration_bounds = array<i64: 2>, scalar_prefetch = 0 : i64, scratch_operands = 0 : i64, tpu.core_type = #tpu.core_type<tc>, window_params = [{transform_indices = @transform_0, window_bounds = array<i64: 1, 8, 32>}, {pipeline_mode = #tpu.pipeline_mode<synchronous>, transform_indices = @transform_1, window_bounds = array<i64: 8, 32>}, {pipeline_mode = #tpu.pipeline_mode<synchronous>, transform_indices = @transform_2, window_bounds = array<i64: 2, 4, 32, 8>}, {pipeline_mode = #tpu.pipeline_mode<synchronous>, transform_indices = @transform_3, window_bounds = array<i64: 2, 4, 32, 8>}, {pipeline_mode = #tpu.pipeline_mode<synchronous>, transform_indices = @transform_4, window_bounds = array<i64: 2, 4, 32, 8>}, {pipeline_mode = #tpu.pipeline_mode<synchronous>, transform_indices = @transform_5, window_bounds = array<i64: 2, 4, 32, 8>}, {pipeline_mode = #tpu.pipeline_mode<synchronous>, transform_indices = @transform_6, window_bounds = array<i64: 2, 4, 8, 32>}, {pipeline_mode = #tpu.pipeline_mode<synchronous>, transform_indices = @transform_7, window_bounds = array<i64: 2, 4, 1, 8>}, {pipeline_mode = #tpu.pipeline_mode<synchronous>, transform_indices = @transform_8, window_bounds = array<i64: 2, 4, 1, 8>}, {pipeline_mode = #tpu.pipeline_mode<synchronous>, transform_indices = @transform_9, window_bounds = array<i64: 2, 1, 32>}, {pipeline_mode = #tpu.pipeline_mode<synchronous>, transform_indices = @transform_10, window_bounds = array<i64: 2, 1, 32>}, {pipeline_mode = #tpu.pipeline_mode<synchronous>, transform_indices = @transform_11, window_bounds = array<i64: 2, 32, 64>}, {pipeline_mode = #tpu.pipeline_mode<synchronous>, transform_indices = @transform_12, window_bounds = array<i64: 2, 1, 64>}, {pipeline_mode = #tpu.pipeline_mode<synchronous>, transform_indices = @transform_13, window_bounds = array<i64: 2, 64, 32>}, {pipeline_mode = #tpu.pipeline_mode<synchronous>, transform_indices = @transform_14, window_bounds = array<i64: 2, 1, 32>}, {pipeline_mode = #tpu.pipeline_mode<synchronous>, transform_indices = @transform_15, window_bounds = array<i64: 2, 1, 32>}, {pipeline_mode = #tpu.pipeline_mode<synchronous>, transform_indices = @transform_16, window_bounds = array<i64: 2, 1, 32>}, {transform_indices = @transform_17, window_bounds = array<i64: 1, 8, 32>}]} {
    %c0 = arith.constant 0 : index
    %c0_0 = arith.constant 0 : index
    %c0_1 = arith.constant 0 : index
    %0 = vector.load %arg1[%c0, %c0_0, %c0_1] : memref<1x8x32xf32, #tpu.memory_space<vmem>>, vector<1x8x32xf32>
    %1 = vector.shape_cast %0 : vector<1x8x32xf32> to vector<8x32xf32>
    %c0_2 = arith.constant 0 : index
    %c0_3 = arith.constant 0 : index
    %2 = vector.load %arg2[%c0_2, %c0_3] : memref<8x32xf32, #tpu.memory_space<vmem>>, vector<8x32xf32>
    %3 = tpu.iota {dimensions = array<i32: 0>} : vector<8x8xi32>
    %4 = tpu.iota {dimensions = array<i32: 1>} : vector<8x8xi32>
    %5 = arith.cmpi sgt, %4, %3 : vector<8x8xi32>
    %6 = tpu.iota {dimensions = array<i32: 0>} : vector<8x1xi32>
    %c7_i32 = arith.constant 7 : i32
    %7 = vector.broadcast %c7_i32 : i32 to vector<8x1xi32>
    %8 = arith.subi %7, %6 : vector<8x1xi32>
    %c1_i32 = arith.constant 1 : i32
    %9 = vector.broadcast %c1_i32 : i32 to vector<8x8xi32>
    %10 = arith.addi %4, %9 : vector<8x8xi32>
    %c8_i32 = arith.constant 8 : i32
    %11 = vector.broadcast %c8_i32 : i32 to vector<8x8xi32>
    %12 = arith.cmpi sge, %10, %11 : vector<8x8xi32>
    %c8_i32_4 = arith.constant 8 : i32
    %13 = vector.broadcast %c8_i32_4 : i32 to vector<8x8xi32>
    %14 = arith.subi %10, %13 : vector<8x8xi32>
    %15 = arith.select %12, %14, %10 : vector<8x8xi1>, vector<8x8xi32>
    %16 = arith.cmpi eq, %3, %15 : vector<8x8xi32>
    %17 = arith.extui %16 : vector<8x8xi1> to vector<8x8xi32>
    %18 = arith.sitofp %17 : vector<8x8xi32> to vector<8x8xf32>
    %c0_i32 = arith.constant 0 : i32
    %19 = vector.broadcast %c0_i32 : i32 to vector<8x1xi32>
    %20 = arith.shrsi %8, %19 : vector<8x1xi32>
    %c1_i32_5 = arith.constant 1 : i32
    %21 = vector.broadcast %c1_i32_5 : i32 to vector<8x1xi32>
    %22 = arith.andi %20, %21 : vector<8x1xi32>
    %c1_i32_6 = arith.constant 1 : i32
    %23 = vector.broadcast %c1_i32_6 : i32 to vector<8x1xi32>
    %24 = arith.cmpi eq, %22, %23 : vector<8x1xi32>
    %c2_i32 = arith.constant 2 : i32
    %25 = vector.broadcast %c2_i32 : i32 to vector<8x8xi32>
    %26 = arith.addi %4, %25 : vector<8x8xi32>
    %c8_i32_7 = arith.constant 8 : i32
    %27 = vector.broadcast %c8_i32_7 : i32 to vector<8x8xi32>
    %28 = arith.cmpi sge, %26, %27 : vector<8x8xi32>
    %c8_i32_8 = arith.constant 8 : i32
    %29 = vector.broadcast %c8_i32_8 : i32 to vector<8x8xi32>
    %30 = arith.subi %26, %29 : vector<8x8xi32>
    %31 = arith.select %28, %30, %26 : vector<8x8xi1>, vector<8x8xi32>
    %32 = arith.cmpi eq, %3, %31 : vector<8x8xi32>
    %33 = arith.extui %32 : vector<8x8xi1> to vector<8x8xi32>
    %34 = arith.sitofp %33 : vector<8x8xi32> to vector<8x8xf32>
    %c1_i32_9 = arith.constant 1 : i32
    %35 = vector.broadcast %c1_i32_9 : i32 to vector<8x1xi32>
    %36 = arith.shrsi %8, %35 : vector<8x1xi32>
    %c1_i32_10 = arith.constant 1 : i32
    %37 = vector.broadcast %c1_i32_10 : i32 to vector<8x1xi32>
    %38 = arith.andi %36, %37 : vector<8x1xi32>
    %c1_i32_11 = arith.constant 1 : i32
    %39 = vector.broadcast %c1_i32_11 : i32 to vector<8x1xi32>
    %40 = arith.cmpi eq, %38, %39 : vector<8x1xi32>
    %c4_i32 = arith.constant 4 : i32
    %41 = vector.broadcast %c4_i32 : i32 to vector<8x8xi32>
    %42 = arith.addi %4, %41 : vector<8x8xi32>
    %c8_i32_12 = arith.constant 8 : i32
    %43 = vector.broadcast %c8_i32_12 : i32 to vector<8x8xi32>
    %44 = arith.cmpi sge, %42, %43 : vector<8x8xi32>
    %c8_i32_13 = arith.constant 8 : i32
    %45 = vector.broadcast %c8_i32_13 : i32 to vector<8x8xi32>
    %46 = arith.subi %42, %45 : vector<8x8xi32>
    %47 = arith.select %44, %46, %42 : vector<8x8xi1>, vector<8x8xi32>
    %48 = arith.cmpi eq, %3, %47 : vector<8x8xi32>
    %49 = arith.extui %48 : vector<8x8xi1> to vector<8x8xi32>
    %50 = arith.sitofp %49 : vector<8x8xi32> to vector<8x8xf32>
    %c2_i32_14 = arith.constant 2 : i32
    %51 = vector.broadcast %c2_i32_14 : i32 to vector<8x1xi32>
    %52 = arith.shrsi %8, %51 : vector<8x1xi32>
    %c1_i32_15 = arith.constant 1 : i32
    %53 = vector.broadcast %c1_i32_15 : i32 to vector<8x1xi32>
    %54 = arith.andi %52, %53 : vector<8x1xi32>
    %c1_i32_16 = arith.constant 1 : i32
    %55 = vector.broadcast %c1_i32_16 : i32 to vector<8x1xi32>
    %56 = arith.cmpi eq, %54, %55 : vector<8x1xi32>
    %cst = arith.constant 0.000000e+00 : f32
    %57 = vector.broadcast %cst : f32 to vector<8x32xf32>
    %c0_17 = arith.constant 0 : index
    %c0_18 = arith.constant 0 : index
    %c0_19 = arith.constant 0 : index
    %c0_20 = arith.constant 0 : index
    %58 = vector.load %arg3[%c0_17, %c0_18, %c0_19, %c0_20] : memref<2x4x32x8xf32, #tpu.memory_space<vmem>>, vector<1x1x32x8xf32>
    %59 = vector.shape_cast %58 : vector<1x1x32x8xf32> to vector<32x8xf32>
    %cst_21 = arith.constant dense<0.000000e+00> : vector<8x8xf32>
    %60 = tpu.matmul %1, %59, %cst_21 {dimension_numbers = #tpu.dot_dimension_numbers<[1], [0], [0], [1], [0, 0, 1, 1], [], []>} : vector<8x32xf32>, vector<32x8xf32>, vector<8x8xf32> -> vector<8x8xf32>
    %c0_22 = arith.constant 0 : index
    %c0_23 = arith.constant 0 : index
    %c0_24 = arith.constant 0 : index
    %c0_25 = arith.constant 0 : index
    %61 = vector.load %arg4[%c0_22, %c0_23, %c0_24, %c0_25] : memref<2x4x32x8xf32, #tpu.memory_space<vmem>>, vector<1x1x32x8xf32>
    %62 = vector.shape_cast %61 : vector<1x1x32x8xf32> to vector<32x8xf32>
    %cst_26 = arith.constant dense<0.000000e+00> : vector<8x8xf32>
    %63 = tpu.matmul %1, %62, %cst_26 {dimension_numbers = #tpu.dot_dimension_numbers<[1], [0], [0], [1], [0, 0, 1, 1], [], []>} : vector<8x32xf32>, vector<32x8xf32>, vector<8x8xf32> -> vector<8x8xf32>
    %c0_27 = arith.constant 0 : index
    %c0_28 = arith.constant 0 : index
    %c0_29 = arith.constant 0 : index
    %c0_30 = arith.constant 0 : index
    %64 = vector.load %arg5[%c0_27, %c0_28, %c0_29, %c0_30] : memref<2x4x32x8xf32, #tpu.memory_space<vmem>>, vector<1x1x32x8xf32>
    %65 = vector.shape_cast %64 : vector<1x1x32x8xf32> to vector<32x8xf32>
    %cst_31 = arith.constant dense<0.000000e+00> : vector<8x8xf32>
    %66 = tpu.matmul %1, %65, %cst_31 {dimension_numbers = #tpu.dot_dimension_numbers<[1], [0], [0], [1], [0, 0, 1, 1], [], []>} : vector<8x32xf32>, vector<32x8xf32>, vector<8x8xf32> -> vector<8x8xf32>
    %c0_32 = arith.constant 0 : index
    %c0_33 = arith.constant 0 : index
    %c0_34 = arith.constant 0 : index
    %c0_35 = arith.constant 0 : index
    %67 = vector.load %arg6[%c0_32, %c0_33, %c0_34, %c0_35] : memref<2x4x32x8xf32, #tpu.memory_space<vmem>>, vector<1x1x32x8xf32>
    %68 = vector.shape_cast %67 : vector<1x1x32x8xf32> to vector<32x8xf32>
    %cst_36 = arith.constant dense<0.000000e+00> : vector<8x8xf32>
    %69 = tpu.matmul %2, %68, %cst_36 {dimension_numbers = #tpu.dot_dimension_numbers<[1], [0], [0], [1], [0, 0, 1, 1], [], []>} : vector<8x32xf32>, vector<32x8xf32>, vector<8x8xf32> -> vector<8x8xf32>
    %c0_37 = arith.constant 0 : index
    %c0_38 = arith.constant 0 : index
    %c0_39 = arith.constant 0 : index
    %c0_40 = arith.constant 0 : index
    %70 = vector.load %arg8[%c0_37, %c0_38, %c0_39, %c0_40] : memref<2x4x1x8xf32, #tpu.memory_space<vmem>>, vector<1x1x1x8xf32>
    %71 = vector.shape_cast %70 : vector<1x1x1x8xf32> to vector<1x8xf32>
    %c0_41 = arith.constant 0 : index
    %c0_42 = arith.constant 0 : index
    %c0_43 = arith.constant 0 : index
    %c0_44 = arith.constant 0 : index
    %72 = vector.load %arg9[%c0_41, %c0_42, %c0_43, %c0_44] : memref<2x4x1x8xf32, #tpu.memory_space<vmem>>, vector<1x1x1x8xf32>
    %73 = vector.shape_cast %72 : vector<1x1x1x8xf32> to vector<1x8xf32>
    %74 = vector.broadcast %71 : vector<1x8xf32> to vector<8x8xf32>
    %75 = arith.addf %60, %74 : vector<8x8xf32>
    %cst_45 = arith.constant dense<0.000000e+00> : vector<8x8xf32>
    %76 = tpu.matmul %75, %63, %cst_45 {dimension_numbers = #tpu.dot_dimension_numbers<[1], [1], [0], [0], [0, 0, 1, 0], [], []>} : vector<8x8xf32>, vector<8x8xf32>, vector<8x8xf32> -> vector<8x8xf32>
    %77 = vector.broadcast %73 : vector<1x8xf32> to vector<8x8xf32>
    %78 = arith.addf %60, %77 : vector<8x8xf32>
    %cst_46 = arith.constant dense<0.000000e+00> : vector<8x8xf32>
    %79 = tpu.matmul %78, %69, %cst_46 {dimension_numbers = #tpu.dot_dimension_numbers<[1], [1], [0], [0], [0, 0, 1, 0], [], []>} : vector<8x8xf32>, vector<8x8xf32>, vector<8x8xf32> -> vector<8x8xf32>
    %cst_47 = arith.constant dense<0.000000e+00> : vector<8x8xf32>
    %80 = tpu.matmul %79, %18, %cst_47 {dimension_numbers = #tpu.dot_dimension_numbers<[1], [0], [0], [1], [0, 0, 1, 1], [], []>} : vector<8x8xf32>, vector<8x8xf32>, vector<8x8xf32> -> vector<8x8xf32>
    %81 = vector.shape_cast %24 : vector<8x1xi1> to vector<8x1xi1>
    %82 = vector.broadcast %81 : vector<8x1xi1> to vector<8x8xi1>
    %83 = arith.select %82, %80, %79 : vector<8x8xi1>, vector<8x8xf32>
    %cst_48 = arith.constant dense<0.000000e+00> : vector<8x8xf32>
    %84 = tpu.matmul %83, %34, %cst_48 {dimension_numbers = #tpu.dot_dimension_numbers<[1], [0], [0], [1], [0, 0, 1, 1], [], []>} : vector<8x8xf32>, vector<8x8xf32>, vector<8x8xf32> -> vector<8x8xf32>
    %85 = vector.shape_cast %40 : vector<8x1xi1> to vector<8x1xi1>
    %86 = vector.broadcast %85 : vector<8x1xi1> to vector<8x8xi1>
    %87 = arith.select %86, %84, %83 : vector<8x8xi1>, vector<8x8xf32>
    %cst_49 = arith.constant dense<0.000000e+00> : vector<8x8xf32>
    %88 = tpu.matmul %87, %50, %cst_49 {dimension_numbers = #tpu.dot_dimension_numbers<[1], [0], [0], [1], [0, 0, 1, 1], [], []>} : vector<8x8xf32>, vector<8x8xf32>, vector<8x8xf32> -> vector<8x8xf32>
    %89 = vector.shape_cast %56 : vector<8x1xi1> to vector<8x1xi1>
    %90 = vector.broadcast %89 : vector<8x1xi1> to vector<8x8xi1>
    %91 = arith.select %90, %88, %87 : vector<8x8xi1>, vector<8x8xf32>
    %92 = arith.addf %76, %91 : vector<8x8xf32>
    %cst_50 = arith.constant 0.353553385 : f32
    %93 = vector.broadcast %cst_50 : f32 to vector<8x8xf32>
    %94 = arith.mulf %92, %93 : vector<8x8xf32>
    %cst_51 = arith.constant -1.000000e+30 : f32
    %95 = vector.broadcast %cst_51 : f32 to vector<8x8xf32>
    %96 = arith.select %5, %95, %94 : vector<8x8xi1>, vector<8x8xf32>
    %cst_52 = arith.constant dense<0xFF800000> : vector<8xf32>
    %97 = vector.multi_reduction <maximumf>, %96, %cst_52 [1] : vector<8x8xf32> to vector<8xf32>
    %98 = vector.shape_cast %97 : vector<8xf32> to vector<8x1xf32>
    %99 = vector.broadcast %98 : vector<8x1xf32> to vector<8x8xf32>
    %100 = arith.subf %96, %99 : vector<8x8xf32>
    %101 = math.exp %100 : vector<8x8xf32>
    %cst_53 = arith.constant dense<0.000000e+00> : vector<8xf32>
    %102 = vector.multi_reduction <add>, %101, %cst_53 [1] : vector<8x8xf32> to vector<8xf32>
    %103 = vector.shape_cast %102 : vector<8xf32> to vector<8x1xf32>
    %104 = vector.broadcast %103 : vector<8x1xf32> to vector<8x8xf32>
    %105 = arith.divf %101, %104 : vector<8x8xf32>
    %cst_54 = arith.constant dense<0.000000e+00> : vector<8x8xf32>
    %106 = tpu.matmul %105, %66, %cst_54 {dimension_numbers = #tpu.dot_dimension_numbers<[1], [0], [0], [1], [0, 0, 1, 1], [], []>} : vector<8x8xf32>, vector<8x8xf32>, vector<8x8xf32> -> vector<8x8xf32>
    %c0_55 = arith.constant 0 : index
    %c0_56 = arith.constant 0 : index
    %c0_57 = arith.constant 0 : index
    %c0_58 = arith.constant 0 : index
    %107 = vector.load %arg7[%c0_55, %c0_56, %c0_57, %c0_58] : memref<2x4x8x32xf32, #tpu.memory_space<vmem>>, vector<1x1x8x32xf32>
    %108 = vector.shape_cast %107 : vector<1x1x8x32xf32> to vector<8x32xf32>
    %cst_59 = arith.constant dense<0.000000e+00> : vector<8x32xf32>
    %109 = tpu.matmul %106, %108, %cst_59 {dimension_numbers = #tpu.dot_dimension_numbers<[1], [0], [0], [1], [0, 0, 1, 1], [], []>} : vector<8x8xf32>, vector<8x32xf32>, vector<8x32xf32> -> vector<8x32xf32>
    %110 = arith.addf %57, %109 : vector<8x32xf32>
    %c0_60 = arith.constant 0 : index
    %c1 = arith.constant 1 : index
    %c0_61 = arith.constant 0 : index
    %c0_62 = arith.constant 0 : index
    %111 = vector.load %arg3[%c0_60, %c1, %c0_61, %c0_62] : memref<2x4x32x8xf32, #tpu.memory_space<vmem>>, vector<1x1x32x8xf32>
    %112 = vector.shape_cast %111 : vector<1x1x32x8xf32> to vector<32x8xf32>
    %cst_63 = arith.constant dense<0.000000e+00> : vector<8x8xf32>
    %113 = tpu.matmul %1, %112, %cst_63 {dimension_numbers = #tpu.dot_dimension_numbers<[1], [0], [0], [1], [0, 0, 1, 1], [], []>} : vector<8x32xf32>, vector<32x8xf32>, vector<8x8xf32> -> vector<8x8xf32>
    %c0_64 = arith.constant 0 : index
    %c1_65 = arith.constant 1 : index
    %c0_66 = arith.constant 0 : index
    %c0_67 = arith.constant 0 : index
    %114 = vector.load %arg4[%c0_64, %c1_65, %c0_66, %c0_67] : memref<2x4x32x8xf32, #tpu.memory_space<vmem>>, vector<1x1x32x8xf32>
    %115 = vector.shape_cast %114 : vector<1x1x32x8xf32> to vector<32x8xf32>
    %cst_68 = arith.constant dense<0.000000e+00> : vector<8x8xf32>
    %116 = tpu.matmul %1, %115, %cst_68 {dimension_numbers = #tpu.dot_dimension_numbers<[1], [0], [0], [1], [0, 0, 1, 1], [], []>} : vector<8x32xf32>, vector<32x8xf32>, vector<8x8xf32> -> vector<8x8xf32>
    %c0_69 = arith.constant 0 : index
    %c1_70 = arith.constant 1 : index
    %c0_71 = arith.constant 0 : index
    %c0_72 = arith.constant 0 : index
    %117 = vector.load %arg5[%c0_69, %c1_70, %c0_71, %c0_72] : memref<2x4x32x8xf32, #tpu.memory_space<vmem>>, vector<1x1x32x8xf32>
    %118 = vector.shape_cast %117 : vector<1x1x32x8xf32> to vector<32x8xf32>
    %cst_73 = arith.constant dense<0.000000e+00> : vector<8x8xf32>
    %119 = tpu.matmul %1, %118, %cst_73 {dimension_numbers = #tpu.dot_dimension_numbers<[1], [0], [0], [1], [0, 0, 1, 1], [], []>} : vector<8x32xf32>, vector<32x8xf32>, vector<8x8xf32> -> vector<8x8xf32>
    %c0_74 = arith.constant 0 : index
    %c1_75 = arith.constant 1 : index
    %c0_76 = arith.constant 0 : index
    %c0_77 = arith.constant 0 : index
    %120 = vector.load %arg6[%c0_74, %c1_75, %c0_76, %c0_77] : memref<2x4x32x8xf32, #tpu.memory_space<vmem>>, vector<1x1x32x8xf32>
    %121 = vector.shape_cast %120 : vector<1x1x32x8xf32> to vector<32x8xf32>
    %cst_78 = arith.constant dense<0.000000e+00> : vector<8x8xf32>
    %122 = tpu.matmul %2, %121, %cst_78 {dimension_numbers = #tpu.dot_dimension_numbers<[1], [0], [0], [1], [0, 0, 1, 1], [], []>} : vector<8x32xf32>, vector<32x8xf32>, vector<8x8xf32> -> vector<8x8xf32>
    %c0_79 = arith.constant 0 : index
    %c1_80 = arith.constant 1 : index
    %c0_81 = arith.constant 0 : index
    %c0_82 = arith.constant 0 : index
    %123 = vector.load %arg8[%c0_79, %c1_80, %c0_81, %c0_82] : memref<2x4x1x8xf32, #tpu.memory_space<vmem>>, vector<1x1x1x8xf32>
    %124 = vector.shape_cast %123 : vector<1x1x1x8xf32> to vector<1x8xf32>
    %c0_83 = arith.constant 0 : index
    %c1_84 = arith.constant 1 : index
    %c0_85 = arith.constant 0 : index
    %c0_86 = arith.constant 0 : index
    %125 = vector.load %arg9[%c0_83, %c1_84, %c0_85, %c0_86] : memref<2x4x1x8xf32, #tpu.memory_space<vmem>>, vector<1x1x1x8xf32>
    %126 = vector.shape_cast %125 : vector<1x1x1x8xf32> to vector<1x8xf32>
    %127 = vector.broadcast %124 : vector<1x8xf32> to vector<8x8xf32>
    %128 = arith.addf %113, %127 : vector<8x8xf32>
    %cst_87 = arith.constant dense<0.000000e+00> : vector<8x8xf32>
    %129 = tpu.matmul %128, %116, %cst_87 {dimension_numbers = #tpu.dot_dimension_numbers<[1], [1], [0], [0], [0, 0, 1, 0], [], []>} : vector<8x8xf32>, vector<8x8xf32>, vector<8x8xf32> -> vector<8x8xf32>
    %130 = vector.broadcast %126 : vector<1x8xf32> to vector<8x8xf32>
    %131 = arith.addf %113, %130 : vector<8x8xf32>
    %cst_88 = arith.constant dense<0.000000e+00> : vector<8x8xf32>
    %132 = tpu.matmul %131, %122, %cst_88 {dimension_numbers = #tpu.dot_dimension_numbers<[1], [1], [0], [0], [0, 0, 1, 0], [], []>} : vector<8x8xf32>, vector<8x8xf32>, vector<8x8xf32> -> vector<8x8xf32>
    %cst_89 = arith.constant dense<0.000000e+00> : vector<8x8xf32>
    %133 = tpu.matmul %132, %18, %cst_89 {dimension_numbers = #tpu.dot_dimension_numbers<[1], [0], [0], [1], [0, 0, 1, 1], [], []>} : vector<8x8xf32>, vector<8x8xf32>, vector<8x8xf32> -> vector<8x8xf32>
    %134 = vector.shape_cast %24 : vector<8x1xi1> to vector<8x1xi1>
    %135 = vector.broadcast %134 : vector<8x1xi1> to vector<8x8xi1>
    %136 = arith.select %135, %133, %132 : vector<8x8xi1>, vector<8x8xf32>
    %cst_90 = arith.constant dense<0.000000e+00> : vector<8x8xf32>
    %137 = tpu.matmul %136, %34, %cst_90 {dimension_numbers = #tpu.dot_dimension_numbers<[1], [0], [0], [1], [0, 0, 1, 1], [], []>} : vector<8x8xf32>, vector<8x8xf32>, vector<8x8xf32> -> vector<8x8xf32>
    %138 = vector.shape_cast %40 : vector<8x1xi1> to vector<8x1xi1>
    %139 = vector.broadcast %138 : vector<8x1xi1> to vector<8x8xi1>
    %140 = arith.select %139, %137, %136 : vector<8x8xi1>, vector<8x8xf32>
    %cst_91 = arith.constant dense<0.000000e+00> : vector<8x8xf32>
    %141 = tpu.matmul %140, %50, %cst_91 {dimension_numbers = #tpu.dot_dimension_numbers<[1], [0], [0], [1], [0, 0, 1, 1], [], []>} : vector<8x8xf32>, vector<8x8xf32>, vector<8x8xf32> -> vector<8x8xf32>
    %142 = vector.shape_cast %56 : vector<8x1xi1> to vector<8x1xi1>
    %143 = vector.broadcast %142 : vector<8x1xi1> to vector<8x8xi1>
    %144 = arith.select %143, %141, %140 : vector<8x8xi1>, vector<8x8xf32>
    %145 = arith.addf %129, %144 : vector<8x8xf32>
    %cst_92 = arith.constant 0.353553385 : f32
    %146 = vector.broadcast %cst_92 : f32 to vector<8x8xf32>
    %147 = arith.mulf %145, %146 : vector<8x8xf32>
    %cst_93 = arith.constant -1.000000e+30 : f32
    %148 = vector.broadcast %cst_93 : f32 to vector<8x8xf32>
    %149 = arith.select %5, %148, %147 : vector<8x8xi1>, vector<8x8xf32>
    %cst_94 = arith.constant dense<0xFF800000> : vector<8xf32>
    %150 = vector.multi_reduction <maximumf>, %149, %cst_94 [1] : vector<8x8xf32> to vector<8xf32>
    %151 = vector.shape_cast %150 : vector<8xf32> to vector<8x1xf32>
    %152 = vector.broadcast %151 : vector<8x1xf32> to vector<8x8xf32>
    %153 = arith.subf %149, %152 : vector<8x8xf32>
    %154 = math.exp %153 : vector<8x8xf32>
    %cst_95 = arith.constant dense<0.000000e+00> : vector<8xf32>
    %155 = vector.multi_reduction <add>, %154, %cst_95 [1] : vector<8x8xf32> to vector<8xf32>
    %156 = vector.shape_cast %155 : vector<8xf32> to vector<8x1xf32>
    %157 = vector.broadcast %156 : vector<8x1xf32> to vector<8x8xf32>
    %158 = arith.divf %154, %157 : vector<8x8xf32>
    %cst_96 = arith.constant dense<0.000000e+00> : vector<8x8xf32>
    %159 = tpu.matmul %158, %119, %cst_96 {dimension_numbers = #tpu.dot_dimension_numbers<[1], [0], [0], [1], [0, 0, 1, 1], [], []>} : vector<8x8xf32>, vector<8x8xf32>, vector<8x8xf32> -> vector<8x8xf32>
    %c0_97 = arith.constant 0 : index
    %c1_98 = arith.constant 1 : index
    %c0_99 = arith.constant 0 : index
    %c0_100 = arith.constant 0 : index
    %160 = vector.load %arg7[%c0_97, %c1_98, %c0_99, %c0_100] : memref<2x4x8x32xf32, #tpu.memory_space<vmem>>, vector<1x1x8x32xf32>
    %161 = vector.shape_cast %160 : vector<1x1x8x32xf32> to vector<8x32xf32>
    %cst_101 = arith.constant dense<0.000000e+00> : vector<8x32xf32>
    %162 = tpu.matmul %159, %161, %cst_101 {dimension_numbers = #tpu.dot_dimension_numbers<[1], [0], [0], [1], [0, 0, 1, 1], [], []>} : vector<8x8xf32>, vector<8x32xf32>, vector<8x32xf32> -> vector<8x32xf32>
    %163 = arith.addf %110, %162 : vector<8x32xf32>
    %c0_102 = arith.constant 0 : index
    %c2 = arith.constant 2 : index
    %c0_103 = arith.constant 0 : index
    %c0_104 = arith.constant 0 : index
    %164 = vector.load %arg3[%c0_102, %c2, %c0_103, %c0_104] : memref<2x4x32x8xf32, #tpu.memory_space<vmem>>, vector<1x1x32x8xf32>
    %165 = vector.shape_cast %164 : vector<1x1x32x8xf32> to vector<32x8xf32>
    %cst_105 = arith.constant dense<0.000000e+00> : vector<8x8xf32>
    %166 = tpu.matmul %1, %165, %cst_105 {dimension_numbers = #tpu.dot_dimension_numbers<[1], [0], [0], [1], [0, 0, 1, 1], [], []>} : vector<8x32xf32>, vector<32x8xf32>, vector<8x8xf32> -> vector<8x8xf32>
    %c0_106 = arith.constant 0 : index
    %c2_107 = arith.constant 2 : index
    %c0_108 = arith.constant 0 : index
    %c0_109 = arith.constant 0 : index
    %167 = vector.load %arg4[%c0_106, %c2_107, %c0_108, %c0_109] : memref<2x4x32x8xf32, #tpu.memory_space<vmem>>, vector<1x1x32x8xf32>
    %168 = vector.shape_cast %167 : vector<1x1x32x8xf32> to vector<32x8xf32>
    %cst_110 = arith.constant dense<0.000000e+00> : vector<8x8xf32>
    %169 = tpu.matmul %1, %168, %cst_110 {dimension_numbers = #tpu.dot_dimension_numbers<[1], [0], [0], [1], [0, 0, 1, 1], [], []>} : vector<8x32xf32>, vector<32x8xf32>, vector<8x8xf32> -> vector<8x8xf32>
    %c0_111 = arith.constant 0 : index
    %c2_112 = arith.constant 2 : index
    %c0_113 = arith.constant 0 : index
    %c0_114 = arith.constant 0 : index
    %170 = vector.load %arg5[%c0_111, %c2_112, %c0_113, %c0_114] : memref<2x4x32x8xf32, #tpu.memory_space<vmem>>, vector<1x1x32x8xf32>
    %171 = vector.shape_cast %170 : vector<1x1x32x8xf32> to vector<32x8xf32>
    %cst_115 = arith.constant dense<0.000000e+00> : vector<8x8xf32>
    %172 = tpu.matmul %1, %171, %cst_115 {dimension_numbers = #tpu.dot_dimension_numbers<[1], [0], [0], [1], [0, 0, 1, 1], [], []>} : vector<8x32xf32>, vector<32x8xf32>, vector<8x8xf32> -> vector<8x8xf32>
    %c0_116 = arith.constant 0 : index
    %c2_117 = arith.constant 2 : index
    %c0_118 = arith.constant 0 : index
    %c0_119 = arith.constant 0 : index
    %173 = vector.load %arg6[%c0_116, %c2_117, %c0_118, %c0_119] : memref<2x4x32x8xf32, #tpu.memory_space<vmem>>, vector<1x1x32x8xf32>
    %174 = vector.shape_cast %173 : vector<1x1x32x8xf32> to vector<32x8xf32>
    %cst_120 = arith.constant dense<0.000000e+00> : vector<8x8xf32>
    %175 = tpu.matmul %2, %174, %cst_120 {dimension_numbers = #tpu.dot_dimension_numbers<[1], [0], [0], [1], [0, 0, 1, 1], [], []>} : vector<8x32xf32>, vector<32x8xf32>, vector<8x8xf32> -> vector<8x8xf32>
    %c0_121 = arith.constant 0 : index
    %c2_122 = arith.constant 2 : index
    %c0_123 = arith.constant 0 : index
    %c0_124 = arith.constant 0 : index
    %176 = vector.load %arg8[%c0_121, %c2_122, %c0_123, %c0_124] : memref<2x4x1x8xf32, #tpu.memory_space<vmem>>, vector<1x1x1x8xf32>
    %177 = vector.shape_cast %176 : vector<1x1x1x8xf32> to vector<1x8xf32>
    %c0_125 = arith.constant 0 : index
    %c2_126 = arith.constant 2 : index
    %c0_127 = arith.constant 0 : index
    %c0_128 = arith.constant 0 : index
    %178 = vector.load %arg9[%c0_125, %c2_126, %c0_127, %c0_128] : memref<2x4x1x8xf32, #tpu.memory_space<vmem>>, vector<1x1x1x8xf32>
    %179 = vector.shape_cast %178 : vector<1x1x1x8xf32> to vector<1x8xf32>
    %180 = vector.broadcast %177 : vector<1x8xf32> to vector<8x8xf32>
    %181 = arith.addf %166, %180 : vector<8x8xf32>
    %cst_129 = arith.constant dense<0.000000e+00> : vector<8x8xf32>
    %182 = tpu.matmul %181, %169, %cst_129 {dimension_numbers = #tpu.dot_dimension_numbers<[1], [1], [0], [0], [0, 0, 1, 0], [], []>} : vector<8x8xf32>, vector<8x8xf32>, vector<8x8xf32> -> vector<8x8xf32>
    %183 = vector.broadcast %179 : vector<1x8xf32> to vector<8x8xf32>
    %184 = arith.addf %166, %183 : vector<8x8xf32>
    %cst_130 = arith.constant dense<0.000000e+00> : vector<8x8xf32>
    %185 = tpu.matmul %184, %175, %cst_130 {dimension_numbers = #tpu.dot_dimension_numbers<[1], [1], [0], [0], [0, 0, 1, 0], [], []>} : vector<8x8xf32>, vector<8x8xf32>, vector<8x8xf32> -> vector<8x8xf32>
    %cst_131 = arith.constant dense<0.000000e+00> : vector<8x8xf32>
    %186 = tpu.matmul %185, %18, %cst_131 {dimension_numbers = #tpu.dot_dimension_numbers<[1], [0], [0], [1], [0, 0, 1, 1], [], []>} : vector<8x8xf32>, vector<8x8xf32>, vector<8x8xf32> -> vector<8x8xf32>
    %187 = vector.shape_cast %24 : vector<8x1xi1> to vector<8x1xi1>
    %188 = vector.broadcast %187 : vector<8x1xi1> to vector<8x8xi1>
    %189 = arith.select %188, %186, %185 : vector<8x8xi1>, vector<8x8xf32>
    %cst_132 = arith.constant dense<0.000000e+00> : vector<8x8xf32>
    %190 = tpu.matmul %189, %34, %cst_132 {dimension_numbers = #tpu.dot_dimension_numbers<[1], [0], [0], [1], [0, 0, 1, 1], [], []>} : vector<8x8xf32>, vector<8x8xf32>, vector<8x8xf32> -> vector<8x8xf32>
    %191 = vector.shape_cast %40 : vector<8x1xi1> to vector<8x1xi1>
    %192 = vector.broadcast %191 : vector<8x1xi1> to vector<8x8xi1>
    %193 = arith.select %192, %190, %189 : vector<8x8xi1>, vector<8x8xf32>
    %cst_133 = arith.constant dense<0.000000e+00> : vector<8x8xf32>
    %194 = tpu.matmul %193, %50, %cst_133 {dimension_numbers = #tpu.dot_dimension_numbers<[1], [0], [0], [1], [0, 0, 1, 1], [], []>} : vector<8x8xf32>, vector<8x8xf32>, vector<8x8xf32> -> vector<8x8xf32>
    %195 = vector.shape_cast %56 : vector<8x1xi1> to vector<8x1xi1>
    %196 = vector.broadcast %195 : vector<8x1xi1> to vector<8x8xi1>
    %197 = arith.select %196, %194, %193 : vector<8x8xi1>, vector<8x8xf32>
    %198 = arith.addf %182, %197 : vector<8x8xf32>
    %cst_134 = arith.constant 0.353553385 : f32
    %199 = vector.broadcast %cst_134 : f32 to vector<8x8xf32>
    %200 = arith.mulf %198, %199 : vector<8x8xf32>
    %cst_135 = arith.constant -1.000000e+30 : f32
    %201 = vector.broadcast %cst_135 : f32 to vector<8x8xf32>
    %202 = arith.select %5, %201, %200 : vector<8x8xi1>, vector<8x8xf32>
    %cst_136 = arith.constant dense<0xFF800000> : vector<8xf32>
    %203 = vector.multi_reduction <maximumf>, %202, %cst_136 [1] : vector<8x8xf32> to vector<8xf32>
    %204 = vector.shape_cast %203 : vector<8xf32> to vector<8x1xf32>
    %205 = vector.broadcast %204 : vector<8x1xf32> to vector<8x8xf32>
    %206 = arith.subf %202, %205 : vector<8x8xf32>
    %207 = math.exp %206 : vector<8x8xf32>
    %cst_137 = arith.constant dense<0.000000e+00> : vector<8xf32>
    %208 = vector.multi_reduction <add>, %207, %cst_137 [1] : vector<8x8xf32> to vector<8xf32>
    %209 = vector.shape_cast %208 : vector<8xf32> to vector<8x1xf32>
    %210 = vector.broadcast %209 : vector<8x1xf32> to vector<8x8xf32>
    %211 = arith.divf %207, %210 : vector<8x8xf32>
    %cst_138 = arith.constant dense<0.000000e+00> : vector<8x8xf32>
    %212 = tpu.matmul %211, %172, %cst_138 {dimension_numbers = #tpu.dot_dimension_numbers<[1], [0], [0], [1], [0, 0, 1, 1], [], []>} : vector<8x8xf32>, vector<8x8xf32>, vector<8x8xf32> -> vector<8x8xf32>
    %c0_139 = arith.constant 0 : index
    %c2_140 = arith.constant 2 : index
    %c0_141 = arith.constant 0 : index
    %c0_142 = arith.constant 0 : index
    %213 = vector.load %arg7[%c0_139, %c2_140, %c0_141, %c0_142] : memref<2x4x8x32xf32, #tpu.memory_space<vmem>>, vector<1x1x8x32xf32>
    %214 = vector.shape_cast %213 : vector<1x1x8x32xf32> to vector<8x32xf32>
    %cst_143 = arith.constant dense<0.000000e+00> : vector<8x32xf32>
    %215 = tpu.matmul %212, %214, %cst_143 {dimension_numbers = #tpu.dot_dimension_numbers<[1], [0], [0], [1], [0, 0, 1, 1], [], []>} : vector<8x8xf32>, vector<8x32xf32>, vector<8x32xf32> -> vector<8x32xf32>
    %216 = arith.addf %163, %215 : vector<8x32xf32>
    %c0_144 = arith.constant 0 : index
    %c3 = arith.constant 3 : index
    %c0_145 = arith.constant 0 : index
    %c0_146 = arith.constant 0 : index
    %217 = vector.load %arg3[%c0_144, %c3, %c0_145, %c0_146] : memref<2x4x32x8xf32, #tpu.memory_space<vmem>>, vector<1x1x32x8xf32>
    %218 = vector.shape_cast %217 : vector<1x1x32x8xf32> to vector<32x8xf32>
    %cst_147 = arith.constant dense<0.000000e+00> : vector<8x8xf32>
    %219 = tpu.matmul %1, %218, %cst_147 {dimension_numbers = #tpu.dot_dimension_numbers<[1], [0], [0], [1], [0, 0, 1, 1], [], []>} : vector<8x32xf32>, vector<32x8xf32>, vector<8x8xf32> -> vector<8x8xf32>
    %c0_148 = arith.constant 0 : index
    %c3_149 = arith.constant 3 : index
    %c0_150 = arith.constant 0 : index
    %c0_151 = arith.constant 0 : index
    %220 = vector.load %arg4[%c0_148, %c3_149, %c0_150, %c0_151] : memref<2x4x32x8xf32, #tpu.memory_space<vmem>>, vector<1x1x32x8xf32>
    %221 = vector.shape_cast %220 : vector<1x1x32x8xf32> to vector<32x8xf32>
    %cst_152 = arith.constant dense<0.000000e+00> : vector<8x8xf32>
    %222 = tpu.matmul %1, %221, %cst_152 {dimension_numbers = #tpu.dot_dimension_numbers<[1], [0], [0], [1], [0, 0, 1, 1], [], []>} : vector<8x32xf32>, vector<32x8xf32>, vector<8x8xf32> -> vector<8x8xf32>
    %c0_153 = arith.constant 0 : index
    %c3_154 = arith.constant 3 : index
    %c0_155 = arith.constant 0 : index
    %c0_156 = arith.constant 0 : index
    %223 = vector.load %arg5[%c0_153, %c3_154, %c0_155, %c0_156] : memref<2x4x32x8xf32, #tpu.memory_space<vmem>>, vector<1x1x32x8xf32>
    %224 = vector.shape_cast %223 : vector<1x1x32x8xf32> to vector<32x8xf32>
    %cst_157 = arith.constant dense<0.000000e+00> : vector<8x8xf32>
    %225 = tpu.matmul %1, %224, %cst_157 {dimension_numbers = #tpu.dot_dimension_numbers<[1], [0], [0], [1], [0, 0, 1, 1], [], []>} : vector<8x32xf32>, vector<32x8xf32>, vector<8x8xf32> -> vector<8x8xf32>
    %c0_158 = arith.constant 0 : index
    %c3_159 = arith.constant 3 : index
    %c0_160 = arith.constant 0 : index
    %c0_161 = arith.constant 0 : index
    %226 = vector.load %arg6[%c0_158, %c3_159, %c0_160, %c0_161] : memref<2x4x32x8xf32, #tpu.memory_space<vmem>>, vector<1x1x32x8xf32>
    %227 = vector.shape_cast %226 : vector<1x1x32x8xf32> to vector<32x8xf32>
    %cst_162 = arith.constant dense<0.000000e+00> : vector<8x8xf32>
    %228 = tpu.matmul %2, %227, %cst_162 {dimension_numbers = #tpu.dot_dimension_numbers<[1], [0], [0], [1], [0, 0, 1, 1], [], []>} : vector<8x32xf32>, vector<32x8xf32>, vector<8x8xf32> -> vector<8x8xf32>
    %c0_163 = arith.constant 0 : index
    %c3_164 = arith.constant 3 : index
    %c0_165 = arith.constant 0 : index
    %c0_166 = arith.constant 0 : index
    %229 = vector.load %arg8[%c0_163, %c3_164, %c0_165, %c0_166] : memref<2x4x1x8xf32, #tpu.memory_space<vmem>>, vector<1x1x1x8xf32>
    %230 = vector.shape_cast %229 : vector<1x1x1x8xf32> to vector<1x8xf32>
    %c0_167 = arith.constant 0 : index
    %c3_168 = arith.constant 3 : index
    %c0_169 = arith.constant 0 : index
    %c0_170 = arith.constant 0 : index
    %231 = vector.load %arg9[%c0_167, %c3_168, %c0_169, %c0_170] : memref<2x4x1x8xf32, #tpu.memory_space<vmem>>, vector<1x1x1x8xf32>
    %232 = vector.shape_cast %231 : vector<1x1x1x8xf32> to vector<1x8xf32>
    %233 = vector.broadcast %230 : vector<1x8xf32> to vector<8x8xf32>
    %234 = arith.addf %219, %233 : vector<8x8xf32>
    %cst_171 = arith.constant dense<0.000000e+00> : vector<8x8xf32>
    %235 = tpu.matmul %234, %222, %cst_171 {dimension_numbers = #tpu.dot_dimension_numbers<[1], [1], [0], [0], [0, 0, 1, 0], [], []>} : vector<8x8xf32>, vector<8x8xf32>, vector<8x8xf32> -> vector<8x8xf32>
    %236 = vector.broadcast %232 : vector<1x8xf32> to vector<8x8xf32>
    %237 = arith.addf %219, %236 : vector<8x8xf32>
    %cst_172 = arith.constant dense<0.000000e+00> : vector<8x8xf32>
    %238 = tpu.matmul %237, %228, %cst_172 {dimension_numbers = #tpu.dot_dimension_numbers<[1], [1], [0], [0], [0, 0, 1, 0], [], []>} : vector<8x8xf32>, vector<8x8xf32>, vector<8x8xf32> -> vector<8x8xf32>
    %cst_173 = arith.constant dense<0.000000e+00> : vector<8x8xf32>
    %239 = tpu.matmul %238, %18, %cst_173 {dimension_numbers = #tpu.dot_dimension_numbers<[1], [0], [0], [1], [0, 0, 1, 1], [], []>} : vector<8x8xf32>, vector<8x8xf32>, vector<8x8xf32> -> vector<8x8xf32>
    %240 = vector.shape_cast %24 : vector<8x1xi1> to vector<8x1xi1>
    %241 = vector.broadcast %240 : vector<8x1xi1> to vector<8x8xi1>
    %242 = arith.select %241, %239, %238 : vector<8x8xi1>, vector<8x8xf32>
    %cst_174 = arith.constant dense<0.000000e+00> : vector<8x8xf32>
    %243 = tpu.matmul %242, %34, %cst_174 {dimension_numbers = #tpu.dot_dimension_numbers<[1], [0], [0], [1], [0, 0, 1, 1], [], []>} : vector<8x8xf32>, vector<8x8xf32>, vector<8x8xf32> -> vector<8x8xf32>
    %244 = vector.shape_cast %40 : vector<8x1xi1> to vector<8x1xi1>
    %245 = vector.broadcast %244 : vector<8x1xi1> to vector<8x8xi1>
    %246 = arith.select %245, %243, %242 : vector<8x8xi1>, vector<8x8xf32>
    %cst_175 = arith.constant dense<0.000000e+00> : vector<8x8xf32>
    %247 = tpu.matmul %246, %50, %cst_175 {dimension_numbers = #tpu.dot_dimension_numbers<[1], [0], [0], [1], [0, 0, 1, 1], [], []>} : vector<8x8xf32>, vector<8x8xf32>, vector<8x8xf32> -> vector<8x8xf32>
    %248 = vector.shape_cast %56 : vector<8x1xi1> to vector<8x1xi1>
    %249 = vector.broadcast %248 : vector<8x1xi1> to vector<8x8xi1>
    %250 = arith.select %249, %247, %246 : vector<8x8xi1>, vector<8x8xf32>
    %251 = arith.addf %235, %250 : vector<8x8xf32>
    %cst_176 = arith.constant 0.353553385 : f32
    %252 = vector.broadcast %cst_176 : f32 to vector<8x8xf32>
    %253 = arith.mulf %251, %252 : vector<8x8xf32>
    %cst_177 = arith.constant -1.000000e+30 : f32
    %254 = vector.broadcast %cst_177 : f32 to vector<8x8xf32>
    %255 = arith.select %5, %254, %253 : vector<8x8xi1>, vector<8x8xf32>
    %cst_178 = arith.constant dense<0xFF800000> : vector<8xf32>
    %256 = vector.multi_reduction <maximumf>, %255, %cst_178 [1] : vector<8x8xf32> to vector<8xf32>
    %257 = vector.shape_cast %256 : vector<8xf32> to vector<8x1xf32>
    %258 = vector.broadcast %257 : vector<8x1xf32> to vector<8x8xf32>
    %259 = arith.subf %255, %258 : vector<8x8xf32>
    %260 = math.exp %259 : vector<8x8xf32>
    %cst_179 = arith.constant dense<0.000000e+00> : vector<8xf32>
    %261 = vector.multi_reduction <add>, %260, %cst_179 [1] : vector<8x8xf32> to vector<8xf32>
    %262 = vector.shape_cast %261 : vector<8xf32> to vector<8x1xf32>
    %263 = vector.broadcast %262 : vector<8x1xf32> to vector<8x8xf32>
    %264 = arith.divf %260, %263 : vector<8x8xf32>
    %cst_180 = arith.constant dense<0.000000e+00> : vector<8x8xf32>
    %265 = tpu.matmul %264, %225, %cst_180 {dimension_numbers = #tpu.dot_dimension_numbers<[1], [0], [0], [1], [0, 0, 1, 1], [], []>} : vector<8x8xf32>, vector<8x8xf32>, vector<8x8xf32> -> vector<8x8xf32>
    %c0_181 = arith.constant 0 : index
    %c3_182 = arith.constant 3 : index
    %c0_183 = arith.constant 0 : index
    %c0_184 = arith.constant 0 : index
    %266 = vector.load %arg7[%c0_181, %c3_182, %c0_183, %c0_184] : memref<2x4x8x32xf32, #tpu.memory_space<vmem>>, vector<1x1x8x32xf32>
    %267 = vector.shape_cast %266 : vector<1x1x8x32xf32> to vector<8x32xf32>
    %cst_185 = arith.constant dense<0.000000e+00> : vector<8x32xf32>
    %268 = tpu.matmul %265, %267, %cst_185 {dimension_numbers = #tpu.dot_dimension_numbers<[1], [0], [0], [1], [0, 0, 1, 1], [], []>} : vector<8x8xf32>, vector<8x32xf32>, vector<8x32xf32> -> vector<8x32xf32>
    %269 = arith.addf %216, %268 : vector<8x32xf32>
    %270 = arith.addf %1, %269 : vector<8x32xf32>
    %c0_186 = arith.constant 0 : index
    %c0_187 = arith.constant 0 : index
    %c0_188 = arith.constant 0 : index
    %271 = vector.load %arg10[%c0_186, %c0_187, %c0_188] : memref<2x1x32xf32, #tpu.memory_space<vmem>>, vector<1x1x32xf32>
    %272 = vector.shape_cast %271 : vector<1x1x32xf32> to vector<1x32xf32>
    %c0_189 = arith.constant 0 : index
    %c0_190 = arith.constant 0 : index
    %c0_191 = arith.constant 0 : index
    %273 = vector.load %arg11[%c0_189, %c0_190, %c0_191] : memref<2x1x32xf32, #tpu.memory_space<vmem>>, vector<1x1x32xf32>
    %274 = vector.shape_cast %273 : vector<1x1x32xf32> to vector<1x32xf32>
    %cst_192 = arith.constant dense<0.000000e+00> : vector<8xf32>
    %275 = vector.multi_reduction <add>, %270, %cst_192 [1] : vector<8x32xf32> to vector<8xf32>
    %276 = vector.shape_cast %275 : vector<8xf32> to vector<8x1xf32>
    %cst_193 = arith.constant 3.200000e+01 : f32
    %277 = vector.broadcast %cst_193 : f32 to vector<8x1xf32>
    %278 = arith.divf %276, %277 : vector<8x1xf32>
    %279 = vector.broadcast %278 : vector<8x1xf32> to vector<8x32xf32>
    %280 = arith.subf %270, %279 : vector<8x32xf32>
    %281 = arith.mulf %280, %280 : vector<8x32xf32>
    %cst_194 = arith.constant dense<0.000000e+00> : vector<8xf32>
    %282 = vector.multi_reduction <add>, %281, %cst_194 [1] : vector<8x32xf32> to vector<8xf32>
    %283 = vector.shape_cast %282 : vector<8xf32> to vector<8x1xf32>
    %cst_195 = arith.constant 3.200000e+01 : f32
    %284 = vector.broadcast %cst_195 : f32 to vector<8x1xf32>
    %285 = arith.divf %283, %284 : vector<8x1xf32>
    %286 = vector.broadcast %278 : vector<8x1xf32> to vector<8x32xf32>
    %287 = arith.subf %270, %286 : vector<8x32xf32>
    %cst_196 = arith.constant 9.99999974E-6 : f32
    %288 = vector.broadcast %cst_196 : f32 to vector<8x1xf32>
    %289 = arith.addf %285, %288 : vector<8x1xf32>
    %290 = math.rsqrt %289 : vector<8x1xf32>
    %291 = vector.broadcast %290 : vector<8x1xf32> to vector<8x32xf32>
    %292 = arith.mulf %287, %291 : vector<8x32xf32>
    %293 = vector.broadcast %272 : vector<1x32xf32> to vector<8x32xf32>
    %294 = arith.mulf %292, %293 : vector<8x32xf32>
    %295 = vector.broadcast %274 : vector<1x32xf32> to vector<8x32xf32>
    %296 = arith.addf %294, %295 : vector<8x32xf32>
    %c0_197 = arith.constant 0 : index
    %c0_198 = arith.constant 0 : index
    %c0_199 = arith.constant 0 : index
    %297 = vector.load %arg12[%c0_197, %c0_198, %c0_199] : memref<2x32x64xf32, #tpu.memory_space<vmem>>, vector<1x32x64xf32>
    %298 = vector.shape_cast %297 : vector<1x32x64xf32> to vector<32x64xf32>
    %cst_200 = arith.constant dense<0.000000e+00> : vector<8x64xf32>
    %299 = tpu.matmul %296, %298, %cst_200 {dimension_numbers = #tpu.dot_dimension_numbers<[1], [0], [0], [1], [0, 0, 1, 1], [], []>} : vector<8x32xf32>, vector<32x64xf32>, vector<8x64xf32> -> vector<8x64xf32>
    %c0_201 = arith.constant 0 : index
    %c0_202 = arith.constant 0 : index
    %c0_203 = arith.constant 0 : index
    %300 = vector.load %arg13[%c0_201, %c0_202, %c0_203] : memref<2x1x64xf32, #tpu.memory_space<vmem>>, vector<1x1x64xf32>
    %301 = vector.shape_cast %300 : vector<1x1x64xf32> to vector<1x64xf32>
    %302 = vector.broadcast %301 : vector<1x64xf32> to vector<8x64xf32>
    %303 = arith.addf %299, %302 : vector<8x64xf32>
    %cst_204 = arith.constant 0.000000e+00 : f32
    %304 = vector.broadcast %cst_204 : f32 to vector<8x64xf32>
    %305 = arith.maximumf %303, %304 : vector<8x64xf32>
    %c0_205 = arith.constant 0 : index
    %c0_206 = arith.constant 0 : index
    %c0_207 = arith.constant 0 : index
    %306 = vector.load %arg14[%c0_205, %c0_206, %c0_207] : memref<2x64x32xf32, #tpu.memory_space<vmem>>, vector<1x64x32xf32>
    %307 = vector.shape_cast %306 : vector<1x64x32xf32> to vector<64x32xf32>
    %cst_208 = arith.constant dense<0.000000e+00> : vector<8x32xf32>
    %308 = tpu.matmul %305, %307, %cst_208 {dimension_numbers = #tpu.dot_dimension_numbers<[1], [0], [0], [1], [0, 0, 1, 1], [], []>} : vector<8x64xf32>, vector<64x32xf32>, vector<8x32xf32> -> vector<8x32xf32>
    %c0_209 = arith.constant 0 : index
    %c0_210 = arith.constant 0 : index
    %c0_211 = arith.constant 0 : index
    %309 = vector.load %arg15[%c0_209, %c0_210, %c0_211] : memref<2x1x32xf32, #tpu.memory_space<vmem>>, vector<1x1x32xf32>
    %310 = vector.shape_cast %309 : vector<1x1x32xf32> to vector<1x32xf32>
    %311 = vector.broadcast %310 : vector<1x32xf32> to vector<8x32xf32>
    %312 = arith.addf %308, %311 : vector<8x32xf32>
    %313 = arith.addf %296, %312 : vector<8x32xf32>
    %c0_212 = arith.constant 0 : index
    %c0_213 = arith.constant 0 : index
    %c0_214 = arith.constant 0 : index
    %314 = vector.load %arg16[%c0_212, %c0_213, %c0_214] : memref<2x1x32xf32, #tpu.memory_space<vmem>>, vector<1x1x32xf32>
    %315 = vector.shape_cast %314 : vector<1x1x32xf32> to vector<1x32xf32>
    %c0_215 = arith.constant 0 : index
    %c0_216 = arith.constant 0 : index
    %c0_217 = arith.constant 0 : index
    %316 = vector.load %arg17[%c0_215, %c0_216, %c0_217] : memref<2x1x32xf32, #tpu.memory_space<vmem>>, vector<1x1x32xf32>
    %317 = vector.shape_cast %316 : vector<1x1x32xf32> to vector<1x32xf32>
    %cst_218 = arith.constant dense<0.000000e+00> : vector<8xf32>
    %318 = vector.multi_reduction <add>, %313, %cst_218 [1] : vector<8x32xf32> to vector<8xf32>
    %319 = vector.shape_cast %318 : vector<8xf32> to vector<8x1xf32>
    %cst_219 = arith.constant 3.200000e+01 : f32
    %320 = vector.broadcast %cst_219 : f32 to vector<8x1xf32>
    %321 = arith.divf %319, %320 : vector<8x1xf32>
    %322 = vector.broadcast %321 : vector<8x1xf32> to vector<8x32xf32>
    %323 = arith.subf %313, %322 : vector<8x32xf32>
    %324 = arith.mulf %323, %323 : vector<8x32xf32>
    %cst_220 = arith.constant dense<0.000000e+00> : vector<8xf32>
    %325 = vector.multi_reduction <add>, %324, %cst_220 [1] : vector<8x32xf32> to vector<8xf32>
    %326 = vector.shape_cast %325 : vector<8xf32> to vector<8x1xf32>
    %cst_221 = arith.constant 3.200000e+01 : f32
    %327 = vector.broadcast %cst_221 : f32 to vector<8x1xf32>
    %328 = arith.divf %326, %327 : vector<8x1xf32>
    %329 = vector.broadcast %321 : vector<8x1xf32> to vector<8x32xf32>
    %330 = arith.subf %313, %329 : vector<8x32xf32>
    %cst_222 = arith.constant 9.99999974E-6 : f32
    %331 = vector.broadcast %cst_222 : f32 to vector<8x1xf32>
    %332 = arith.addf %328, %331 : vector<8x1xf32>
    %333 = math.rsqrt %332 : vector<8x1xf32>
    %334 = vector.broadcast %333 : vector<8x1xf32> to vector<8x32xf32>
    %335 = arith.mulf %330, %334 : vector<8x32xf32>
    %336 = vector.broadcast %315 : vector<1x32xf32> to vector<8x32xf32>
    %337 = arith.mulf %335, %336 : vector<8x32xf32>
    %338 = vector.broadcast %317 : vector<1x32xf32> to vector<8x32xf32>
    %339 = arith.addf %337, %338 : vector<8x32xf32>
    %cst_223 = arith.constant 0.000000e+00 : f32
    %340 = vector.broadcast %cst_223 : f32 to vector<8x32xf32>
    %c1_224 = arith.constant 1 : index
    %c0_225 = arith.constant 0 : index
    %c0_226 = arith.constant 0 : index
    %c0_227 = arith.constant 0 : index
    %341 = vector.load %arg3[%c1_224, %c0_225, %c0_226, %c0_227] : memref<2x4x32x8xf32, #tpu.memory_space<vmem>>, vector<1x1x32x8xf32>
    %342 = vector.shape_cast %341 : vector<1x1x32x8xf32> to vector<32x8xf32>
    %cst_228 = arith.constant dense<0.000000e+00> : vector<8x8xf32>
    %343 = tpu.matmul %339, %342, %cst_228 {dimension_numbers = #tpu.dot_dimension_numbers<[1], [0], [0], [1], [0, 0, 1, 1], [], []>} : vector<8x32xf32>, vector<32x8xf32>, vector<8x8xf32> -> vector<8x8xf32>
    %c1_229 = arith.constant 1 : index
    %c0_230 = arith.constant 0 : index
    %c0_231 = arith.constant 0 : index
    %c0_232 = arith.constant 0 : index
    %344 = vector.load %arg4[%c1_229, %c0_230, %c0_231, %c0_232] : memref<2x4x32x8xf32, #tpu.memory_space<vmem>>, vector<1x1x32x8xf32>
    %345 = vector.shape_cast %344 : vector<1x1x32x8xf32> to vector<32x8xf32>
    %cst_233 = arith.constant dense<0.000000e+00> : vector<8x8xf32>
    %346 = tpu.matmul %339, %345, %cst_233 {dimension_numbers = #tpu.dot_dimension_numbers<[1], [0], [0], [1], [0, 0, 1, 1], [], []>} : vector<8x32xf32>, vector<32x8xf32>, vector<8x8xf32> -> vector<8x8xf32>
    %c1_234 = arith.constant 1 : index
    %c0_235 = arith.constant 0 : index
    %c0_236 = arith.constant 0 : index
    %c0_237 = arith.constant 0 : index
    %347 = vector.load %arg5[%c1_234, %c0_235, %c0_236, %c0_237] : memref<2x4x32x8xf32, #tpu.memory_space<vmem>>, vector<1x1x32x8xf32>
    %348 = vector.shape_cast %347 : vector<1x1x32x8xf32> to vector<32x8xf32>
    %cst_238 = arith.constant dense<0.000000e+00> : vector<8x8xf32>
    %349 = tpu.matmul %339, %348, %cst_238 {dimension_numbers = #tpu.dot_dimension_numbers<[1], [0], [0], [1], [0, 0, 1, 1], [], []>} : vector<8x32xf32>, vector<32x8xf32>, vector<8x8xf32> -> vector<8x8xf32>
    %c1_239 = arith.constant 1 : index
    %c0_240 = arith.constant 0 : index
    %c0_241 = arith.constant 0 : index
    %c0_242 = arith.constant 0 : index
    %350 = vector.load %arg6[%c1_239, %c0_240, %c0_241, %c0_242] : memref<2x4x32x8xf32, #tpu.memory_space<vmem>>, vector<1x1x32x8xf32>
    %351 = vector.shape_cast %350 : vector<1x1x32x8xf32> to vector<32x8xf32>
    %cst_243 = arith.constant dense<0.000000e+00> : vector<8x8xf32>
    %352 = tpu.matmul %2, %351, %cst_243 {dimension_numbers = #tpu.dot_dimension_numbers<[1], [0], [0], [1], [0, 0, 1, 1], [], []>} : vector<8x32xf32>, vector<32x8xf32>, vector<8x8xf32> -> vector<8x8xf32>
    %c1_244 = arith.constant 1 : index
    %c0_245 = arith.constant 0 : index
    %c0_246 = arith.constant 0 : index
    %c0_247 = arith.constant 0 : index
    %353 = vector.load %arg8[%c1_244, %c0_245, %c0_246, %c0_247] : memref<2x4x1x8xf32, #tpu.memory_space<vmem>>, vector<1x1x1x8xf32>
    %354 = vector.shape_cast %353 : vector<1x1x1x8xf32> to vector<1x8xf32>
    %c1_248 = arith.constant 1 : index
    %c0_249 = arith.constant 0 : index
    %c0_250 = arith.constant 0 : index
    %c0_251 = arith.constant 0 : index
    %355 = vector.load %arg9[%c1_248, %c0_249, %c0_250, %c0_251] : memref<2x4x1x8xf32, #tpu.memory_space<vmem>>, vector<1x1x1x8xf32>
    %356 = vector.shape_cast %355 : vector<1x1x1x8xf32> to vector<1x8xf32>
    %357 = vector.broadcast %354 : vector<1x8xf32> to vector<8x8xf32>
    %358 = arith.addf %343, %357 : vector<8x8xf32>
    %cst_252 = arith.constant dense<0.000000e+00> : vector<8x8xf32>
    %359 = tpu.matmul %358, %346, %cst_252 {dimension_numbers = #tpu.dot_dimension_numbers<[1], [1], [0], [0], [0, 0, 1, 0], [], []>} : vector<8x8xf32>, vector<8x8xf32>, vector<8x8xf32> -> vector<8x8xf32>
    %360 = vector.broadcast %356 : vector<1x8xf32> to vector<8x8xf32>
    %361 = arith.addf %343, %360 : vector<8x8xf32>
    %cst_253 = arith.constant dense<0.000000e+00> : vector<8x8xf32>
    %362 = tpu.matmul %361, %352, %cst_253 {dimension_numbers = #tpu.dot_dimension_numbers<[1], [1], [0], [0], [0, 0, 1, 0], [], []>} : vector<8x8xf32>, vector<8x8xf32>, vector<8x8xf32> -> vector<8x8xf32>
    %cst_254 = arith.constant dense<0.000000e+00> : vector<8x8xf32>
    %363 = tpu.matmul %362, %18, %cst_254 {dimension_numbers = #tpu.dot_dimension_numbers<[1], [0], [0], [1], [0, 0, 1, 1], [], []>} : vector<8x8xf32>, vector<8x8xf32>, vector<8x8xf32> -> vector<8x8xf32>
    %364 = vector.shape_cast %24 : vector<8x1xi1> to vector<8x1xi1>
    %365 = vector.broadcast %364 : vector<8x1xi1> to vector<8x8xi1>
    %366 = arith.select %365, %363, %362 : vector<8x8xi1>, vector<8x8xf32>
    %cst_255 = arith.constant dense<0.000000e+00> : vector<8x8xf32>
    %367 = tpu.matmul %366, %34, %cst_255 {dimension_numbers = #tpu.dot_dimension_numbers<[1], [0], [0], [1], [0, 0, 1, 1], [], []>} : vector<8x8xf32>, vector<8x8xf32>, vector<8x8xf32> -> vector<8x8xf32>
    %368 = vector.shape_cast %40 : vector<8x1xi1> to vector<8x1xi1>
    %369 = vector.broadcast %368 : vector<8x1xi1> to vector<8x8xi1>
    %370 = arith.select %369, %367, %366 : vector<8x8xi1>, vector<8x8xf32>
    %cst_256 = arith.constant dense<0.000000e+00> : vector<8x8xf32>
    %371 = tpu.matmul %370, %50, %cst_256 {dimension_numbers = #tpu.dot_dimension_numbers<[1], [0], [0], [1], [0, 0, 1, 1], [], []>} : vector<8x8xf32>, vector<8x8xf32>, vector<8x8xf32> -> vector<8x8xf32>
    %372 = vector.shape_cast %56 : vector<8x1xi1> to vector<8x1xi1>
    %373 = vector.broadcast %372 : vector<8x1xi1> to vector<8x8xi1>
    %374 = arith.select %373, %371, %370 : vector<8x8xi1>, vector<8x8xf32>
    %375 = arith.addf %359, %374 : vector<8x8xf32>
    %cst_257 = arith.constant 0.353553385 : f32
    %376 = vector.broadcast %cst_257 : f32 to vector<8x8xf32>
    %377 = arith.mulf %375, %376 : vector<8x8xf32>
    %cst_258 = arith.constant -1.000000e+30 : f32
    %378 = vector.broadcast %cst_258 : f32 to vector<8x8xf32>
    %379 = arith.select %5, %378, %377 : vector<8x8xi1>, vector<8x8xf32>
    %cst_259 = arith.constant dense<0xFF800000> : vector<8xf32>
    %380 = vector.multi_reduction <maximumf>, %379, %cst_259 [1] : vector<8x8xf32> to vector<8xf32>
    %381 = vector.shape_cast %380 : vector<8xf32> to vector<8x1xf32>
    %382 = vector.broadcast %381 : vector<8x1xf32> to vector<8x8xf32>
    %383 = arith.subf %379, %382 : vector<8x8xf32>
    %384 = math.exp %383 : vector<8x8xf32>
    %cst_260 = arith.constant dense<0.000000e+00> : vector<8xf32>
    %385 = vector.multi_reduction <add>, %384, %cst_260 [1] : vector<8x8xf32> to vector<8xf32>
    %386 = vector.shape_cast %385 : vector<8xf32> to vector<8x1xf32>
    %387 = vector.broadcast %386 : vector<8x1xf32> to vector<8x8xf32>
    %388 = arith.divf %384, %387 : vector<8x8xf32>
    %cst_261 = arith.constant dense<0.000000e+00> : vector<8x8xf32>
    %389 = tpu.matmul %388, %349, %cst_261 {dimension_numbers = #tpu.dot_dimension_numbers<[1], [0], [0], [1], [0, 0, 1, 1], [], []>} : vector<8x8xf32>, vector<8x8xf32>, vector<8x8xf32> -> vector<8x8xf32>
    %c1_262 = arith.constant 1 : index
    %c0_263 = arith.constant 0 : index
    %c0_264 = arith.constant 0 : index
    %c0_265 = arith.constant 0 : index
    %390 = vector.load %arg7[%c1_262, %c0_263, %c0_264, %c0_265] : memref<2x4x8x32xf32, #tpu.memory_space<vmem>>, vector<1x1x8x32xf32>
    %391 = vector.shape_cast %390 : vector<1x1x8x32xf32> to vector<8x32xf32>
    %cst_266 = arith.constant dense<0.000000e+00> : vector<8x32xf32>
    %392 = tpu.matmul %389, %391, %cst_266 {dimension_numbers = #tpu.dot_dimension_numbers<[1], [0], [0], [1], [0, 0, 1, 1], [], []>} : vector<8x8xf32>, vector<8x32xf32>, vector<8x32xf32> -> vector<8x32xf32>
    %393 = arith.addf %340, %392 : vector<8x32xf32>
    %c1_267 = arith.constant 1 : index
    %c1_268 = arith.constant 1 : index
    %c0_269 = arith.constant 0 : index
    %c0_270 = arith.constant 0 : index
    %394 = vector.load %arg3[%c1_267, %c1_268, %c0_269, %c0_270] : memref<2x4x32x8xf32, #tpu.memory_space<vmem>>, vector<1x1x32x8xf32>
    %395 = vector.shape_cast %394 : vector<1x1x32x8xf32> to vector<32x8xf32>
    %cst_271 = arith.constant dense<0.000000e+00> : vector<8x8xf32>
    %396 = tpu.matmul %339, %395, %cst_271 {dimension_numbers = #tpu.dot_dimension_numbers<[1], [0], [0], [1], [0, 0, 1, 1], [], []>} : vector<8x32xf32>, vector<32x8xf32>, vector<8x8xf32> -> vector<8x8xf32>
    %c1_272 = arith.constant 1 : index
    %c1_273 = arith.constant 1 : index
    %c0_274 = arith.constant 0 : index
    %c0_275 = arith.constant 0 : index
    %397 = vector.load %arg4[%c1_272, %c1_273, %c0_274, %c0_275] : memref<2x4x32x8xf32, #tpu.memory_space<vmem>>, vector<1x1x32x8xf32>
    %398 = vector.shape_cast %397 : vector<1x1x32x8xf32> to vector<32x8xf32>
    %cst_276 = arith.constant dense<0.000000e+00> : vector<8x8xf32>
    %399 = tpu.matmul %339, %398, %cst_276 {dimension_numbers = #tpu.dot_dimension_numbers<[1], [0], [0], [1], [0, 0, 1, 1], [], []>} : vector<8x32xf32>, vector<32x8xf32>, vector<8x8xf32> -> vector<8x8xf32>
    %c1_277 = arith.constant 1 : index
    %c1_278 = arith.constant 1 : index
    %c0_279 = arith.constant 0 : index
    %c0_280 = arith.constant 0 : index
    %400 = vector.load %arg5[%c1_277, %c1_278, %c0_279, %c0_280] : memref<2x4x32x8xf32, #tpu.memory_space<vmem>>, vector<1x1x32x8xf32>
    %401 = vector.shape_cast %400 : vector<1x1x32x8xf32> to vector<32x8xf32>
    %cst_281 = arith.constant dense<0.000000e+00> : vector<8x8xf32>
    %402 = tpu.matmul %339, %401, %cst_281 {dimension_numbers = #tpu.dot_dimension_numbers<[1], [0], [0], [1], [0, 0, 1, 1], [], []>} : vector<8x32xf32>, vector<32x8xf32>, vector<8x8xf32> -> vector<8x8xf32>
    %c1_282 = arith.constant 1 : index
    %c1_283 = arith.constant 1 : index
    %c0_284 = arith.constant 0 : index
    %c0_285 = arith.constant 0 : index
    %403 = vector.load %arg6[%c1_282, %c1_283, %c0_284, %c0_285] : memref<2x4x32x8xf32, #tpu.memory_space<vmem>>, vector<1x1x32x8xf32>
    %404 = vector.shape_cast %403 : vector<1x1x32x8xf32> to vector<32x8xf32>
    %cst_286 = arith.constant dense<0.000000e+00> : vector<8x8xf32>
    %405 = tpu.matmul %2, %404, %cst_286 {dimension_numbers = #tpu.dot_dimension_numbers<[1], [0], [0], [1], [0, 0, 1, 1], [], []>} : vector<8x32xf32>, vector<32x8xf32>, vector<8x8xf32> -> vector<8x8xf32>
    %c1_287 = arith.constant 1 : index
    %c1_288 = arith.constant 1 : index
    %c0_289 = arith.constant 0 : index
    %c0_290 = arith.constant 0 : index
    %406 = vector.load %arg8[%c1_287, %c1_288, %c0_289, %c0_290] : memref<2x4x1x8xf32, #tpu.memory_space<vmem>>, vector<1x1x1x8xf32>
    %407 = vector.shape_cast %406 : vector<1x1x1x8xf32> to vector<1x8xf32>
    %c1_291 = arith.constant 1 : index
    %c1_292 = arith.constant 1 : index
    %c0_293 = arith.constant 0 : index
    %c0_294 = arith.constant 0 : index
    %408 = vector.load %arg9[%c1_291, %c1_292, %c0_293, %c0_294] : memref<2x4x1x8xf32, #tpu.memory_space<vmem>>, vector<1x1x1x8xf32>
    %409 = vector.shape_cast %408 : vector<1x1x1x8xf32> to vector<1x8xf32>
    %410 = vector.broadcast %407 : vector<1x8xf32> to vector<8x8xf32>
    %411 = arith.addf %396, %410 : vector<8x8xf32>
    %cst_295 = arith.constant dense<0.000000e+00> : vector<8x8xf32>
    %412 = tpu.matmul %411, %399, %cst_295 {dimension_numbers = #tpu.dot_dimension_numbers<[1], [1], [0], [0], [0, 0, 1, 0], [], []>} : vector<8x8xf32>, vector<8x8xf32>, vector<8x8xf32> -> vector<8x8xf32>
    %413 = vector.broadcast %409 : vector<1x8xf32> to vector<8x8xf32>
    %414 = arith.addf %396, %413 : vector<8x8xf32>
    %cst_296 = arith.constant dense<0.000000e+00> : vector<8x8xf32>
    %415 = tpu.matmul %414, %405, %cst_296 {dimension_numbers = #tpu.dot_dimension_numbers<[1], [1], [0], [0], [0, 0, 1, 0], [], []>} : vector<8x8xf32>, vector<8x8xf32>, vector<8x8xf32> -> vector<8x8xf32>
    %cst_297 = arith.constant dense<0.000000e+00> : vector<8x8xf32>
    %416 = tpu.matmul %415, %18, %cst_297 {dimension_numbers = #tpu.dot_dimension_numbers<[1], [0], [0], [1], [0, 0, 1, 1], [], []>} : vector<8x8xf32>, vector<8x8xf32>, vector<8x8xf32> -> vector<8x8xf32>
    %417 = vector.shape_cast %24 : vector<8x1xi1> to vector<8x1xi1>
    %418 = vector.broadcast %417 : vector<8x1xi1> to vector<8x8xi1>
    %419 = arith.select %418, %416, %415 : vector<8x8xi1>, vector<8x8xf32>
    %cst_298 = arith.constant dense<0.000000e+00> : vector<8x8xf32>
    %420 = tpu.matmul %419, %34, %cst_298 {dimension_numbers = #tpu.dot_dimension_numbers<[1], [0], [0], [1], [0, 0, 1, 1], [], []>} : vector<8x8xf32>, vector<8x8xf32>, vector<8x8xf32> -> vector<8x8xf32>
    %421 = vector.shape_cast %40 : vector<8x1xi1> to vector<8x1xi1>
    %422 = vector.broadcast %421 : vector<8x1xi1> to vector<8x8xi1>
    %423 = arith.select %422, %420, %419 : vector<8x8xi1>, vector<8x8xf32>
    %cst_299 = arith.constant dense<0.000000e+00> : vector<8x8xf32>
    %424 = tpu.matmul %423, %50, %cst_299 {dimension_numbers = #tpu.dot_dimension_numbers<[1], [0], [0], [1], [0, 0, 1, 1], [], []>} : vector<8x8xf32>, vector<8x8xf32>, vector<8x8xf32> -> vector<8x8xf32>
    %425 = vector.shape_cast %56 : vector<8x1xi1> to vector<8x1xi1>
    %426 = vector.broadcast %425 : vector<8x1xi1> to vector<8x8xi1>
    %427 = arith.select %426, %424, %423 : vector<8x8xi1>, vector<8x8xf32>
    %428 = arith.addf %412, %427 : vector<8x8xf32>
    %cst_300 = arith.constant 0.353553385 : f32
    %429 = vector.broadcast %cst_300 : f32 to vector<8x8xf32>
    %430 = arith.mulf %428, %429 : vector<8x8xf32>
    %cst_301 = arith.constant -1.000000e+30 : f32
    %431 = vector.broadcast %cst_301 : f32 to vector<8x8xf32>
    %432 = arith.select %5, %431, %430 : vector<8x8xi1>, vector<8x8xf32>
    %cst_302 = arith.constant dense<0xFF800000> : vector<8xf32>
    %433 = vector.multi_reduction <maximumf>, %432, %cst_302 [1] : vector<8x8xf32> to vector<8xf32>
    %434 = vector.shape_cast %433 : vector<8xf32> to vector<8x1xf32>
    %435 = vector.broadcast %434 : vector<8x1xf32> to vector<8x8xf32>
    %436 = arith.subf %432, %435 : vector<8x8xf32>
    %437 = math.exp %436 : vector<8x8xf32>
    %cst_303 = arith.constant dense<0.000000e+00> : vector<8xf32>
    %438 = vector.multi_reduction <add>, %437, %cst_303 [1] : vector<8x8xf32> to vector<8xf32>
    %439 = vector.shape_cast %438 : vector<8xf32> to vector<8x1xf32>
    %440 = vector.broadcast %439 : vector<8x1xf32> to vector<8x8xf32>
    %441 = arith.divf %437, %440 : vector<8x8xf32>
    %cst_304 = arith.constant dense<0.000000e+00> : vector<8x8xf32>
    %442 = tpu.matmul %441, %402, %cst_304 {dimension_numbers = #tpu.dot_dimension_numbers<[1], [0], [0], [1], [0, 0, 1, 1], [], []>} : vector<8x8xf32>, vector<8x8xf32>, vector<8x8xf32> -> vector<8x8xf32>
    %c1_305 = arith.constant 1 : index
    %c1_306 = arith.constant 1 : index
    %c0_307 = arith.constant 0 : index
    %c0_308 = arith.constant 0 : index
    %443 = vector.load %arg7[%c1_305, %c1_306, %c0_307, %c0_308] : memref<2x4x8x32xf32, #tpu.memory_space<vmem>>, vector<1x1x8x32xf32>
    %444 = vector.shape_cast %443 : vector<1x1x8x32xf32> to vector<8x32xf32>
    %cst_309 = arith.constant dense<0.000000e+00> : vector<8x32xf32>
    %445 = tpu.matmul %442, %444, %cst_309 {dimension_numbers = #tpu.dot_dimension_numbers<[1], [0], [0], [1], [0, 0, 1, 1], [], []>} : vector<8x8xf32>, vector<8x32xf32>, vector<8x32xf32> -> vector<8x32xf32>
    %446 = arith.addf %393, %445 : vector<8x32xf32>
    %c1_310 = arith.constant 1 : index
    %c2_311 = arith.constant 2 : index
    %c0_312 = arith.constant 0 : index
    %c0_313 = arith.constant 0 : index
    %447 = vector.load %arg3[%c1_310, %c2_311, %c0_312, %c0_313] : memref<2x4x32x8xf32, #tpu.memory_space<vmem>>, vector<1x1x32x8xf32>
    %448 = vector.shape_cast %447 : vector<1x1x32x8xf32> to vector<32x8xf32>
    %cst_314 = arith.constant dense<0.000000e+00> : vector<8x8xf32>
    %449 = tpu.matmul %339, %448, %cst_314 {dimension_numbers = #tpu.dot_dimension_numbers<[1], [0], [0], [1], [0, 0, 1, 1], [], []>} : vector<8x32xf32>, vector<32x8xf32>, vector<8x8xf32> -> vector<8x8xf32>
    %c1_315 = arith.constant 1 : index
    %c2_316 = arith.constant 2 : index
    %c0_317 = arith.constant 0 : index
    %c0_318 = arith.constant 0 : index
    %450 = vector.load %arg4[%c1_315, %c2_316, %c0_317, %c0_318] : memref<2x4x32x8xf32, #tpu.memory_space<vmem>>, vector<1x1x32x8xf32>
    %451 = vector.shape_cast %450 : vector<1x1x32x8xf32> to vector<32x8xf32>
    %cst_319 = arith.constant dense<0.000000e+00> : vector<8x8xf32>
    %452 = tpu.matmul %339, %451, %cst_319 {dimension_numbers = #tpu.dot_dimension_numbers<[1], [0], [0], [1], [0, 0, 1, 1], [], []>} : vector<8x32xf32>, vector<32x8xf32>, vector<8x8xf32> -> vector<8x8xf32>
    %c1_320 = arith.constant 1 : index
    %c2_321 = arith.constant 2 : index
    %c0_322 = arith.constant 0 : index
    %c0_323 = arith.constant 0 : index
    %453 = vector.load %arg5[%c1_320, %c2_321, %c0_322, %c0_323] : memref<2x4x32x8xf32, #tpu.memory_space<vmem>>, vector<1x1x32x8xf32>
    %454 = vector.shape_cast %453 : vector<1x1x32x8xf32> to vector<32x8xf32>
    %cst_324 = arith.constant dense<0.000000e+00> : vector<8x8xf32>
    %455 = tpu.matmul %339, %454, %cst_324 {dimension_numbers = #tpu.dot_dimension_numbers<[1], [0], [0], [1], [0, 0, 1, 1], [], []>} : vector<8x32xf32>, vector<32x8xf32>, vector<8x8xf32> -> vector<8x8xf32>
    %c1_325 = arith.constant 1 : index
    %c2_326 = arith.constant 2 : index
    %c0_327 = arith.constant 0 : index
    %c0_328 = arith.constant 0 : index
    %456 = vector.load %arg6[%c1_325, %c2_326, %c0_327, %c0_328] : memref<2x4x32x8xf32, #tpu.memory_space<vmem>>, vector<1x1x32x8xf32>
    %457 = vector.shape_cast %456 : vector<1x1x32x8xf32> to vector<32x8xf32>
    %cst_329 = arith.constant dense<0.000000e+00> : vector<8x8xf32>
    %458 = tpu.matmul %2, %457, %cst_329 {dimension_numbers = #tpu.dot_dimension_numbers<[1], [0], [0], [1], [0, 0, 1, 1], [], []>} : vector<8x32xf32>, vector<32x8xf32>, vector<8x8xf32> -> vector<8x8xf32>
    %c1_330 = arith.constant 1 : index
    %c2_331 = arith.constant 2 : index
    %c0_332 = arith.constant 0 : index
    %c0_333 = arith.constant 0 : index
    %459 = vector.load %arg8[%c1_330, %c2_331, %c0_332, %c0_333] : memref<2x4x1x8xf32, #tpu.memory_space<vmem>>, vector<1x1x1x8xf32>
    %460 = vector.shape_cast %459 : vector<1x1x1x8xf32> to vector<1x8xf32>
    %c1_334 = arith.constant 1 : index
    %c2_335 = arith.constant 2 : index
    %c0_336 = arith.constant 0 : index
    %c0_337 = arith.constant 0 : index
    %461 = vector.load %arg9[%c1_334, %c2_335, %c0_336, %c0_337] : memref<2x4x1x8xf32, #tpu.memory_space<vmem>>, vector<1x1x1x8xf32>
    %462 = vector.shape_cast %461 : vector<1x1x1x8xf32> to vector<1x8xf32>
    %463 = vector.broadcast %460 : vector<1x8xf32> to vector<8x8xf32>
    %464 = arith.addf %449, %463 : vector<8x8xf32>
    %cst_338 = arith.constant dense<0.000000e+00> : vector<8x8xf32>
    %465 = tpu.matmul %464, %452, %cst_338 {dimension_numbers = #tpu.dot_dimension_numbers<[1], [1], [0], [0], [0, 0, 1, 0], [], []>} : vector<8x8xf32>, vector<8x8xf32>, vector<8x8xf32> -> vector<8x8xf32>
    %466 = vector.broadcast %462 : vector<1x8xf32> to vector<8x8xf32>
    %467 = arith.addf %449, %466 : vector<8x8xf32>
    %cst_339 = arith.constant dense<0.000000e+00> : vector<8x8xf32>
    %468 = tpu.matmul %467, %458, %cst_339 {dimension_numbers = #tpu.dot_dimension_numbers<[1], [1], [0], [0], [0, 0, 1, 0], [], []>} : vector<8x8xf32>, vector<8x8xf32>, vector<8x8xf32> -> vector<8x8xf32>
    %cst_340 = arith.constant dense<0.000000e+00> : vector<8x8xf32>
    %469 = tpu.matmul %468, %18, %cst_340 {dimension_numbers = #tpu.dot_dimension_numbers<[1], [0], [0], [1], [0, 0, 1, 1], [], []>} : vector<8x8xf32>, vector<8x8xf32>, vector<8x8xf32> -> vector<8x8xf32>
    %470 = vector.shape_cast %24 : vector<8x1xi1> to vector<8x1xi1>
    %471 = vector.broadcast %470 : vector<8x1xi1> to vector<8x8xi1>
    %472 = arith.select %471, %469, %468 : vector<8x8xi1>, vector<8x8xf32>
    %cst_341 = arith.constant dense<0.000000e+00> : vector<8x8xf32>
    %473 = tpu.matmul %472, %34, %cst_341 {dimension_numbers = #tpu.dot_dimension_numbers<[1], [0], [0], [1], [0, 0, 1, 1], [], []>} : vector<8x8xf32>, vector<8x8xf32>, vector<8x8xf32> -> vector<8x8xf32>
    %474 = vector.shape_cast %40 : vector<8x1xi1> to vector<8x1xi1>
    %475 = vector.broadcast %474 : vector<8x1xi1> to vector<8x8xi1>
    %476 = arith.select %475, %473, %472 : vector<8x8xi1>, vector<8x8xf32>
    %cst_342 = arith.constant dense<0.000000e+00> : vector<8x8xf32>
    %477 = tpu.matmul %476, %50, %cst_342 {dimension_numbers = #tpu.dot_dimension_numbers<[1], [0], [0], [1], [0, 0, 1, 1], [], []>} : vector<8x8xf32>, vector<8x8xf32>, vector<8x8xf32> -> vector<8x8xf32>
    %478 = vector.shape_cast %56 : vector<8x1xi1> to vector<8x1xi1>
    %479 = vector.broadcast %478 : vector<8x1xi1> to vector<8x8xi1>
    %480 = arith.select %479, %477, %476 : vector<8x8xi1>, vector<8x8xf32>
    %481 = arith.addf %465, %480 : vector<8x8xf32>
    %cst_343 = arith.constant 0.353553385 : f32
    %482 = vector.broadcast %cst_343 : f32 to vector<8x8xf32>
    %483 = arith.mulf %481, %482 : vector<8x8xf32>
    %cst_344 = arith.constant -1.000000e+30 : f32
    %484 = vector.broadcast %cst_344 : f32 to vector<8x8xf32>
    %485 = arith.select %5, %484, %483 : vector<8x8xi1>, vector<8x8xf32>
    %cst_345 = arith.constant dense<0xFF800000> : vector<8xf32>
    %486 = vector.multi_reduction <maximumf>, %485, %cst_345 [1] : vector<8x8xf32> to vector<8xf32>
    %487 = vector.shape_cast %486 : vector<8xf32> to vector<8x1xf32>
    %488 = vector.broadcast %487 : vector<8x1xf32> to vector<8x8xf32>
    %489 = arith.subf %485, %488 : vector<8x8xf32>
    %490 = math.exp %489 : vector<8x8xf32>
    %cst_346 = arith.constant dense<0.000000e+00> : vector<8xf32>
    %491 = vector.multi_reduction <add>, %490, %cst_346 [1] : vector<8x8xf32> to vector<8xf32>
    %492 = vector.shape_cast %491 : vector<8xf32> to vector<8x1xf32>
    %493 = vector.broadcast %492 : vector<8x1xf32> to vector<8x8xf32>
    %494 = arith.divf %490, %493 : vector<8x8xf32>
    %cst_347 = arith.constant dense<0.000000e+00> : vector<8x8xf32>
    %495 = tpu.matmul %494, %455, %cst_347 {dimension_numbers = #tpu.dot_dimension_numbers<[1], [0], [0], [1], [0, 0, 1, 1], [], []>} : vector<8x8xf32>, vector<8x8xf32>, vector<8x8xf32> -> vector<8x8xf32>
    %c1_348 = arith.constant 1 : index
    %c2_349 = arith.constant 2 : index
    %c0_350 = arith.constant 0 : index
    %c0_351 = arith.constant 0 : index
    %496 = vector.load %arg7[%c1_348, %c2_349, %c0_350, %c0_351] : memref<2x4x8x32xf32, #tpu.memory_space<vmem>>, vector<1x1x8x32xf32>
    %497 = vector.shape_cast %496 : vector<1x1x8x32xf32> to vector<8x32xf32>
    %cst_352 = arith.constant dense<0.000000e+00> : vector<8x32xf32>
    %498 = tpu.matmul %495, %497, %cst_352 {dimension_numbers = #tpu.dot_dimension_numbers<[1], [0], [0], [1], [0, 0, 1, 1], [], []>} : vector<8x8xf32>, vector<8x32xf32>, vector<8x32xf32> -> vector<8x32xf32>
    %499 = arith.addf %446, %498 : vector<8x32xf32>
    %c1_353 = arith.constant 1 : index
    %c3_354 = arith.constant 3 : index
    %c0_355 = arith.constant 0 : index
    %c0_356 = arith.constant 0 : index
    %500 = vector.load %arg3[%c1_353, %c3_354, %c0_355, %c0_356] : memref<2x4x32x8xf32, #tpu.memory_space<vmem>>, vector<1x1x32x8xf32>
    %501 = vector.shape_cast %500 : vector<1x1x32x8xf32> to vector<32x8xf32>
    %cst_357 = arith.constant dense<0.000000e+00> : vector<8x8xf32>
    %502 = tpu.matmul %339, %501, %cst_357 {dimension_numbers = #tpu.dot_dimension_numbers<[1], [0], [0], [1], [0, 0, 1, 1], [], []>} : vector<8x32xf32>, vector<32x8xf32>, vector<8x8xf32> -> vector<8x8xf32>
    %c1_358 = arith.constant 1 : index
    %c3_359 = arith.constant 3 : index
    %c0_360 = arith.constant 0 : index
    %c0_361 = arith.constant 0 : index
    %503 = vector.load %arg4[%c1_358, %c3_359, %c0_360, %c0_361] : memref<2x4x32x8xf32, #tpu.memory_space<vmem>>, vector<1x1x32x8xf32>
    %504 = vector.shape_cast %503 : vector<1x1x32x8xf32> to vector<32x8xf32>
    %cst_362 = arith.constant dense<0.000000e+00> : vector<8x8xf32>
    %505 = tpu.matmul %339, %504, %cst_362 {dimension_numbers = #tpu.dot_dimension_numbers<[1], [0], [0], [1], [0, 0, 1, 1], [], []>} : vector<8x32xf32>, vector<32x8xf32>, vector<8x8xf32> -> vector<8x8xf32>
    %c1_363 = arith.constant 1 : index
    %c3_364 = arith.constant 3 : index
    %c0_365 = arith.constant 0 : index
    %c0_366 = arith.constant 0 : index
    %506 = vector.load %arg5[%c1_363, %c3_364, %c0_365, %c0_366] : memref<2x4x32x8xf32, #tpu.memory_space<vmem>>, vector<1x1x32x8xf32>
    %507 = vector.shape_cast %506 : vector<1x1x32x8xf32> to vector<32x8xf32>
    %cst_367 = arith.constant dense<0.000000e+00> : vector<8x8xf32>
    %508 = tpu.matmul %339, %507, %cst_367 {dimension_numbers = #tpu.dot_dimension_numbers<[1], [0], [0], [1], [0, 0, 1, 1], [], []>} : vector<8x32xf32>, vector<32x8xf32>, vector<8x8xf32> -> vector<8x8xf32>
    %c1_368 = arith.constant 1 : index
    %c3_369 = arith.constant 3 : index
    %c0_370 = arith.constant 0 : index
    %c0_371 = arith.constant 0 : index
    %509 = vector.load %arg6[%c1_368, %c3_369, %c0_370, %c0_371] : memref<2x4x32x8xf32, #tpu.memory_space<vmem>>, vector<1x1x32x8xf32>
    %510 = vector.shape_cast %509 : vector<1x1x32x8xf32> to vector<32x8xf32>
    %cst_372 = arith.constant dense<0.000000e+00> : vector<8x8xf32>
    %511 = tpu.matmul %2, %510, %cst_372 {dimension_numbers = #tpu.dot_dimension_numbers<[1], [0], [0], [1], [0, 0, 1, 1], [], []>} : vector<8x32xf32>, vector<32x8xf32>, vector<8x8xf32> -> vector<8x8xf32>
    %c1_373 = arith.constant 1 : index
    %c3_374 = arith.constant 3 : index
    %c0_375 = arith.constant 0 : index
    %c0_376 = arith.constant 0 : index
    %512 = vector.load %arg8[%c1_373, %c3_374, %c0_375, %c0_376] : memref<2x4x1x8xf32, #tpu.memory_space<vmem>>, vector<1x1x1x8xf32>
    %513 = vector.shape_cast %512 : vector<1x1x1x8xf32> to vector<1x8xf32>
    %c1_377 = arith.constant 1 : index
    %c3_378 = arith.constant 3 : index
    %c0_379 = arith.constant 0 : index
    %c0_380 = arith.constant 0 : index
    %514 = vector.load %arg9[%c1_377, %c3_378, %c0_379, %c0_380] : memref<2x4x1x8xf32, #tpu.memory_space<vmem>>, vector<1x1x1x8xf32>
    %515 = vector.shape_cast %514 : vector<1x1x1x8xf32> to vector<1x8xf32>
    %516 = vector.broadcast %513 : vector<1x8xf32> to vector<8x8xf32>
    %517 = arith.addf %502, %516 : vector<8x8xf32>
    %cst_381 = arith.constant dense<0.000000e+00> : vector<8x8xf32>
    %518 = tpu.matmul %517, %505, %cst_381 {dimension_numbers = #tpu.dot_dimension_numbers<[1], [1], [0], [0], [0, 0, 1, 0], [], []>} : vector<8x8xf32>, vector<8x8xf32>, vector<8x8xf32> -> vector<8x8xf32>
    %519 = vector.broadcast %515 : vector<1x8xf32> to vector<8x8xf32>
    %520 = arith.addf %502, %519 : vector<8x8xf32>
    %cst_382 = arith.constant dense<0.000000e+00> : vector<8x8xf32>
    %521 = tpu.matmul %520, %511, %cst_382 {dimension_numbers = #tpu.dot_dimension_numbers<[1], [1], [0], [0], [0, 0, 1, 0], [], []>} : vector<8x8xf32>, vector<8x8xf32>, vector<8x8xf32> -> vector<8x8xf32>
    %cst_383 = arith.constant dense<0.000000e+00> : vector<8x8xf32>
    %522 = tpu.matmul %521, %18, %cst_383 {dimension_numbers = #tpu.dot_dimension_numbers<[1], [0], [0], [1], [0, 0, 1, 1], [], []>} : vector<8x8xf32>, vector<8x8xf32>, vector<8x8xf32> -> vector<8x8xf32>
    %523 = vector.shape_cast %24 : vector<8x1xi1> to vector<8x1xi1>
    %524 = vector.broadcast %523 : vector<8x1xi1> to vector<8x8xi1>
    %525 = arith.select %524, %522, %521 : vector<8x8xi1>, vector<8x8xf32>
    %cst_384 = arith.constant dense<0.000000e+00> : vector<8x8xf32>
    %526 = tpu.matmul %525, %34, %cst_384 {dimension_numbers = #tpu.dot_dimension_numbers<[1], [0], [0], [1], [0, 0, 1, 1], [], []>} : vector<8x8xf32>, vector<8x8xf32>, vector<8x8xf32> -> vector<8x8xf32>
    %527 = vector.shape_cast %40 : vector<8x1xi1> to vector<8x1xi1>
    %528 = vector.broadcast %527 : vector<8x1xi1> to vector<8x8xi1>
    %529 = arith.select %528, %526, %525 : vector<8x8xi1>, vector<8x8xf32>
    %cst_385 = arith.constant dense<0.000000e+00> : vector<8x8xf32>
    %530 = tpu.matmul %529, %50, %cst_385 {dimension_numbers = #tpu.dot_dimension_numbers<[1], [0], [0], [1], [0, 0, 1, 1], [], []>} : vector<8x8xf32>, vector<8x8xf32>, vector<8x8xf32> -> vector<8x8xf32>
    %531 = vector.shape_cast %56 : vector<8x1xi1> to vector<8x1xi1>
    %532 = vector.broadcast %531 : vector<8x1xi1> to vector<8x8xi1>
    %533 = arith.select %532, %530, %529 : vector<8x8xi1>, vector<8x8xf32>
    %534 = arith.addf %518, %533 : vector<8x8xf32>
    %cst_386 = arith.constant 0.353553385 : f32
    %535 = vector.broadcast %cst_386 : f32 to vector<8x8xf32>
    %536 = arith.mulf %534, %535 : vector<8x8xf32>
    %cst_387 = arith.constant -1.000000e+30 : f32
    %537 = vector.broadcast %cst_387 : f32 to vector<8x8xf32>
    %538 = arith.select %5, %537, %536 : vector<8x8xi1>, vector<8x8xf32>
    %cst_388 = arith.constant dense<0xFF800000> : vector<8xf32>
    %539 = vector.multi_reduction <maximumf>, %538, %cst_388 [1] : vector<8x8xf32> to vector<8xf32>
    %540 = vector.shape_cast %539 : vector<8xf32> to vector<8x1xf32>
    %541 = vector.broadcast %540 : vector<8x1xf32> to vector<8x8xf32>
    %542 = arith.subf %538, %541 : vector<8x8xf32>
    %543 = math.exp %542 : vector<8x8xf32>
    %cst_389 = arith.constant dense<0.000000e+00> : vector<8xf32>
    %544 = vector.multi_reduction <add>, %543, %cst_389 [1] : vector<8x8xf32> to vector<8xf32>
    %545 = vector.shape_cast %544 : vector<8xf32> to vector<8x1xf32>
    %546 = vector.broadcast %545 : vector<8x1xf32> to vector<8x8xf32>
    %547 = arith.divf %543, %546 : vector<8x8xf32>
    %cst_390 = arith.constant dense<0.000000e+00> : vector<8x8xf32>
    %548 = tpu.matmul %547, %508, %cst_390 {dimension_numbers = #tpu.dot_dimension_numbers<[1], [0], [0], [1], [0, 0, 1, 1], [], []>} : vector<8x8xf32>, vector<8x8xf32>, vector<8x8xf32> -> vector<8x8xf32>
    %c1_391 = arith.constant 1 : index
    %c3_392 = arith.constant 3 : index
    %c0_393 = arith.constant 0 : index
    %c0_394 = arith.constant 0 : index
    %549 = vector.load %arg7[%c1_391, %c3_392, %c0_393, %c0_394] : memref<2x4x8x32xf32, #tpu.memory_space<vmem>>, vector<1x1x8x32xf32>
    %550 = vector.shape_cast %549 : vector<1x1x8x32xf32> to vector<8x32xf32>
    %cst_395 = arith.constant dense<0.000000e+00> : vector<8x32xf32>
    %551 = tpu.matmul %548, %550, %cst_395 {dimension_numbers = #tpu.dot_dimension_numbers<[1], [0], [0], [1], [0, 0, 1, 1], [], []>} : vector<8x8xf32>, vector<8x32xf32>, vector<8x32xf32> -> vector<8x32xf32>
    %552 = arith.addf %499, %551 : vector<8x32xf32>
    %553 = arith.addf %339, %552 : vector<8x32xf32>
    %c1_396 = arith.constant 1 : index
    %c0_397 = arith.constant 0 : index
    %c0_398 = arith.constant 0 : index
    %554 = vector.load %arg10[%c1_396, %c0_397, %c0_398] : memref<2x1x32xf32, #tpu.memory_space<vmem>>, vector<1x1x32xf32>
    %555 = vector.shape_cast %554 : vector<1x1x32xf32> to vector<1x32xf32>
    %c1_399 = arith.constant 1 : index
    %c0_400 = arith.constant 0 : index
    %c0_401 = arith.constant 0 : index
    %556 = vector.load %arg11[%c1_399, %c0_400, %c0_401] : memref<2x1x32xf32, #tpu.memory_space<vmem>>, vector<1x1x32xf32>
    %557 = vector.shape_cast %556 : vector<1x1x32xf32> to vector<1x32xf32>
    %cst_402 = arith.constant dense<0.000000e+00> : vector<8xf32>
    %558 = vector.multi_reduction <add>, %553, %cst_402 [1] : vector<8x32xf32> to vector<8xf32>
    %559 = vector.shape_cast %558 : vector<8xf32> to vector<8x1xf32>
    %cst_403 = arith.constant 3.200000e+01 : f32
    %560 = vector.broadcast %cst_403 : f32 to vector<8x1xf32>
    %561 = arith.divf %559, %560 : vector<8x1xf32>
    %562 = vector.broadcast %561 : vector<8x1xf32> to vector<8x32xf32>
    %563 = arith.subf %553, %562 : vector<8x32xf32>
    %564 = arith.mulf %563, %563 : vector<8x32xf32>
    %cst_404 = arith.constant dense<0.000000e+00> : vector<8xf32>
    %565 = vector.multi_reduction <add>, %564, %cst_404 [1] : vector<8x32xf32> to vector<8xf32>
    %566 = vector.shape_cast %565 : vector<8xf32> to vector<8x1xf32>
    %cst_405 = arith.constant 3.200000e+01 : f32
    %567 = vector.broadcast %cst_405 : f32 to vector<8x1xf32>
    %568 = arith.divf %566, %567 : vector<8x1xf32>
    %569 = vector.broadcast %561 : vector<8x1xf32> to vector<8x32xf32>
    %570 = arith.subf %553, %569 : vector<8x32xf32>
    %cst_406 = arith.constant 9.99999974E-6 : f32
    %571 = vector.broadcast %cst_406 : f32 to vector<8x1xf32>
    %572 = arith.addf %568, %571 : vector<8x1xf32>
    %573 = math.rsqrt %572 : vector<8x1xf32>
    %574 = vector.broadcast %573 : vector<8x1xf32> to vector<8x32xf32>
    %575 = arith.mulf %570, %574 : vector<8x32xf32>
    %576 = vector.broadcast %555 : vector<1x32xf32> to vector<8x32xf32>
    %577 = arith.mulf %575, %576 : vector<8x32xf32>
    %578 = vector.broadcast %557 : vector<1x32xf32> to vector<8x32xf32>
    %579 = arith.addf %577, %578 : vector<8x32xf32>
    %c1_407 = arith.constant 1 : index
    %c0_408 = arith.constant 0 : index
    %c0_409 = arith.constant 0 : index
    %580 = vector.load %arg12[%c1_407, %c0_408, %c0_409] : memref<2x32x64xf32, #tpu.memory_space<vmem>>, vector<1x32x64xf32>
    %581 = vector.shape_cast %580 : vector<1x32x64xf32> to vector<32x64xf32>
    %cst_410 = arith.constant dense<0.000000e+00> : vector<8x64xf32>
    %582 = tpu.matmul %579, %581, %cst_410 {dimension_numbers = #tpu.dot_dimension_numbers<[1], [0], [0], [1], [0, 0, 1, 1], [], []>} : vector<8x32xf32>, vector<32x64xf32>, vector<8x64xf32> -> vector<8x64xf32>
    %c1_411 = arith.constant 1 : index
    %c0_412 = arith.constant 0 : index
    %c0_413 = arith.constant 0 : index
    %583 = vector.load %arg13[%c1_411, %c0_412, %c0_413] : memref<2x1x64xf32, #tpu.memory_space<vmem>>, vector<1x1x64xf32>
    %584 = vector.shape_cast %583 : vector<1x1x64xf32> to vector<1x64xf32>
    %585 = vector.broadcast %584 : vector<1x64xf32> to vector<8x64xf32>
    %586 = arith.addf %582, %585 : vector<8x64xf32>
    %cst_414 = arith.constant 0.000000e+00 : f32
    %587 = vector.broadcast %cst_414 : f32 to vector<8x64xf32>
    %588 = arith.maximumf %586, %587 : vector<8x64xf32>
    %c1_415 = arith.constant 1 : index
    %c0_416 = arith.constant 0 : index
    %c0_417 = arith.constant 0 : index
    %589 = vector.load %arg14[%c1_415, %c0_416, %c0_417] : memref<2x64x32xf32, #tpu.memory_space<vmem>>, vector<1x64x32xf32>
    %590 = vector.shape_cast %589 : vector<1x64x32xf32> to vector<64x32xf32>
    %cst_418 = arith.constant dense<0.000000e+00> : vector<8x32xf32>
    %591 = tpu.matmul %588, %590, %cst_418 {dimension_numbers = #tpu.dot_dimension_numbers<[1], [0], [0], [1], [0, 0, 1, 1], [], []>} : vector<8x64xf32>, vector<64x32xf32>, vector<8x32xf32> -> vector<8x32xf32>
    %c1_419 = arith.constant 1 : index
    %c0_420 = arith.constant 0 : index
    %c0_421 = arith.constant 0 : index
    %592 = vector.load %arg15[%c1_419, %c0_420, %c0_421] : memref<2x1x32xf32, #tpu.memory_space<vmem>>, vector<1x1x32xf32>
    %593 = vector.shape_cast %592 : vector<1x1x32xf32> to vector<1x32xf32>
    %594 = vector.broadcast %593 : vector<1x32xf32> to vector<8x32xf32>
    %595 = arith.addf %591, %594 : vector<8x32xf32>
    %596 = arith.addf %579, %595 : vector<8x32xf32>
    %c1_422 = arith.constant 1 : index
    %c0_423 = arith.constant 0 : index
    %c0_424 = arith.constant 0 : index
    %597 = vector.load %arg16[%c1_422, %c0_423, %c0_424] : memref<2x1x32xf32, #tpu.memory_space<vmem>>, vector<1x1x32xf32>
    %598 = vector.shape_cast %597 : vector<1x1x32xf32> to vector<1x32xf32>
    %c1_425 = arith.constant 1 : index
    %c0_426 = arith.constant 0 : index
    %c0_427 = arith.constant 0 : index
    %599 = vector.load %arg17[%c1_425, %c0_426, %c0_427] : memref<2x1x32xf32, #tpu.memory_space<vmem>>, vector<1x1x32xf32>
    %600 = vector.shape_cast %599 : vector<1x1x32xf32> to vector<1x32xf32>
    %cst_428 = arith.constant dense<0.000000e+00> : vector<8xf32>
    %601 = vector.multi_reduction <add>, %596, %cst_428 [1] : vector<8x32xf32> to vector<8xf32>
    %602 = vector.shape_cast %601 : vector<8xf32> to vector<8x1xf32>
    %cst_429 = arith.constant 3.200000e+01 : f32
    %603 = vector.broadcast %cst_429 : f32 to vector<8x1xf32>
    %604 = arith.divf %602, %603 : vector<8x1xf32>
    %605 = vector.broadcast %604 : vector<8x1xf32> to vector<8x32xf32>
    %606 = arith.subf %596, %605 : vector<8x32xf32>
    %607 = arith.mulf %606, %606 : vector<8x32xf32>
    %cst_430 = arith.constant dense<0.000000e+00> : vector<8xf32>
    %608 = vector.multi_reduction <add>, %607, %cst_430 [1] : vector<8x32xf32> to vector<8xf32>
    %609 = vector.shape_cast %608 : vector<8xf32> to vector<8x1xf32>
    %cst_431 = arith.constant 3.200000e+01 : f32
    %610 = vector.broadcast %cst_431 : f32 to vector<8x1xf32>
    %611 = arith.divf %609, %610 : vector<8x1xf32>
    %612 = vector.broadcast %604 : vector<8x1xf32> to vector<8x32xf32>
    %613 = arith.subf %596, %612 : vector<8x32xf32>
    %cst_432 = arith.constant 9.99999974E-6 : f32
    %614 = vector.broadcast %cst_432 : f32 to vector<8x1xf32>
    %615 = arith.addf %611, %614 : vector<8x1xf32>
    %616 = math.rsqrt %615 : vector<8x1xf32>
    %617 = vector.broadcast %616 : vector<8x1xf32> to vector<8x32xf32>
    %618 = arith.mulf %613, %617 : vector<8x32xf32>
    %619 = vector.broadcast %598 : vector<1x32xf32> to vector<8x32xf32>
    %620 = arith.mulf %618, %619 : vector<8x32xf32>
    %621 = vector.broadcast %600 : vector<1x32xf32> to vector<8x32xf32>
    %622 = arith.addf %620, %621 : vector<8x32xf32>
    %c0_433 = arith.constant 0 : index
    %c0_434 = arith.constant 0 : index
    %c0_435 = arith.constant 0 : index
    %623 = vector.load %arg18[%c0_433, %c0_434, %c0_435] : memref<1x8x32xf32, #tpu.memory_space<vmem>>, vector<1x8x32xf32>
    %624 = vector.shape_cast %623 : vector<1x8x32xf32> to vector<8x32xf32>
    %625 = vector.shape_cast %622 : vector<8x32xf32> to vector<1x8x32xf32>
    tpu.vector_store %arg18[%c0_433, %c0_434, %c0_435], %625 {strides = array<i32>} : memref<1x8x32xf32, #tpu.memory_space<vmem>>, vector<1x8x32xf32>,
    return
  }
  func.func @transform_0(%arg0: i32) -> (i32, i32, i32) {
    %c0_i32 = arith.constant 0 : i32
    %c0_i32_0 = arith.constant 0 : i32
    %c0_i32_1 = arith.constant 0 : i32
    return %arg0, %c0_i32, %c0_i32_0 : i32, i32, i32
  }
  func.func @transform_1(%arg0: i32) -> (i32, i32) {
    %c0_i32 = arith.constant 0 : i32
    %c0_i32_0 = arith.constant 0 : i32
    %c0_i32_1 = arith.constant 0 : i32
    return %c0_i32, %c0_i32_0 : i32, i32
  }
  func.func @transform_2(%arg0: i32) -> (i32, i32, i32, i32) {
    %c0_i32 = arith.constant 0 : i32
    %c0_i32_0 = arith.constant 0 : i32
    %c0_i32_1 = arith.constant 0 : i32
    %c0_i32_2 = arith.constant 0 : i32
    %c0_i32_3 = arith.constant 0 : i32
    return %c0_i32, %c0_i32_0, %c0_i32_1, %c0_i32_2 : i32, i32, i32, i32
  }
  func.func @transform_3(%arg0: i32) -> (i32, i32, i32, i32) {
    %c0_i32 = arith.constant 0 : i32
    %c0_i32_0 = arith.constant 0 : i32
    %c0_i32_1 = arith.constant 0 : i32
    %c0_i32_2 = arith.constant 0 : i32
    %c0_i32_3 = arith.constant 0 : i32
    return %c0_i32, %c0_i32_0, %c0_i32_1, %c0_i32_2 : i32, i32, i32, i32
  }
  func.func @transform_4(%arg0: i32) -> (i32, i32, i32, i32) {
    %c0_i32 = arith.constant 0 : i32
    %c0_i32_0 = arith.constant 0 : i32
    %c0_i32_1 = arith.constant 0 : i32
    %c0_i32_2 = arith.constant 0 : i32
    %c0_i32_3 = arith.constant 0 : i32
    return %c0_i32, %c0_i32_0, %c0_i32_1, %c0_i32_2 : i32, i32, i32, i32
  }
  func.func @transform_5(%arg0: i32) -> (i32, i32, i32, i32) {
    %c0_i32 = arith.constant 0 : i32
    %c0_i32_0 = arith.constant 0 : i32
    %c0_i32_1 = arith.constant 0 : i32
    %c0_i32_2 = arith.constant 0 : i32
    %c0_i32_3 = arith.constant 0 : i32
    return %c0_i32, %c0_i32_0, %c0_i32_1, %c0_i32_2 : i32, i32, i32, i32
  }
  func.func @transform_6(%arg0: i32) -> (i32, i32, i32, i32) {
    %c0_i32 = arith.constant 0 : i32
    %c0_i32_0 = arith.constant 0 : i32
    %c0_i32_1 = arith.constant 0 : i32
    %c0_i32_2 = arith.constant 0 : i32
    %c0_i32_3 = arith.constant 0 : i32
    return %c0_i32, %c0_i32_0, %c0_i32_1, %c0_i32_2 : i32, i32, i32, i32
  }
  func.func @transform_7(%arg0: i32) -> (i32, i32, i32, i32) {
    %c0_i32 = arith.constant 0 : i32
    %c0_i32_0 = arith.constant 0 : i32
    %c0_i32_1 = arith.constant 0 : i32
    %c0_i32_2 = arith.constant 0 : i32
    %c0_i32_3 = arith.constant 0 : i32
    return %c0_i32, %c0_i32_0, %c0_i32_1, %c0_i32_2 : i32, i32, i32, i32
  }
  func.func @transform_8(%arg0: i32) -> (i32, i32, i32, i32) {
    %c0_i32 = arith.constant 0 : i32
    %c0_i32_0 = arith.constant 0 : i32
    %c0_i32_1 = arith.constant 0 : i32
    %c0_i32_2 = arith.constant 0 : i32
    %c0_i32_3 = arith.constant 0 : i32
    return %c0_i32, %c0_i32_0, %c0_i32_1, %c0_i32_2 : i32, i32, i32, i32
  }
  func.func @transform_9(%arg0: i32) -> (i32, i32, i32) {
    %c0_i32 = arith.constant 0 : i32
    %c0_i32_0 = arith.constant 0 : i32
    %c0_i32_1 = arith.constant 0 : i32
    %c0_i32_2 = arith.constant 0 : i32
    return %c0_i32, %c0_i32_0, %c0_i32_1 : i32, i32, i32
  }
  func.func @transform_10(%arg0: i32) -> (i32, i32, i32) {
    %c0_i32 = arith.constant 0 : i32
    %c0_i32_0 = arith.constant 0 : i32
    %c0_i32_1 = arith.constant 0 : i32
    %c0_i32_2 = arith.constant 0 : i32
    return %c0_i32, %c0_i32_0, %c0_i32_1 : i32, i32, i32
  }
  func.func @transform_11(%arg0: i32) -> (i32, i32, i32) {
    %c0_i32 = arith.constant 0 : i32
    %c0_i32_0 = arith.constant 0 : i32
    %c0_i32_1 = arith.constant 0 : i32
    %c0_i32_2 = arith.constant 0 : i32
    return %c0_i32, %c0_i32_0, %c0_i32_1 : i32, i32, i32
  }
  func.func @transform_12(%arg0: i32) -> (i32, i32, i32) {
    %c0_i32 = arith.constant 0 : i32
    %c0_i32_0 = arith.constant 0 : i32
    %c0_i32_1 = arith.constant 0 : i32
    %c0_i32_2 = arith.constant 0 : i32
    return %c0_i32, %c0_i32_0, %c0_i32_1 : i32, i32, i32
  }
  func.func @transform_13(%arg0: i32) -> (i32, i32, i32) {
    %c0_i32 = arith.constant 0 : i32
    %c0_i32_0 = arith.constant 0 : i32
    %c0_i32_1 = arith.constant 0 : i32
    %c0_i32_2 = arith.constant 0 : i32
    return %c0_i32, %c0_i32_0, %c0_i32_1 : i32, i32, i32
  }
  func.func @transform_14(%arg0: i32) -> (i32, i32, i32) {
    %c0_i32 = arith.constant 0 : i32
    %c0_i32_0 = arith.constant 0 : i32
    %c0_i32_1 = arith.constant 0 : i32
    %c0_i32_2 = arith.constant 0 : i32
    return %c0_i32, %c0_i32_0, %c0_i32_1 : i32, i32, i32
  }
  func.func @transform_15(%arg0: i32) -> (i32, i32, i32) {
    %c0_i32 = arith.constant 0 : i32
    %c0_i32_0 = arith.constant 0 : i32
    %c0_i32_1 = arith.constant 0 : i32
    %c0_i32_2 = arith.constant 0 : i32
    return %c0_i32, %c0_i32_0, %c0_i32_1 : i32, i32, i32
  }
  func.func @transform_16(%arg0: i32) -> (i32, i32, i32) {
    %c0_i32 = arith.constant 0 : i32
    %c0_i32_0 = arith.constant 0 : i32
    %c0_i32_1 = arith.constant 0 : i32
    %c0_i32_2 = arith.constant 0 : i32
    return %c0_i32, %c0_i32_0, %c0_i32_1 : i32, i32, i32
  }
  func.func @transform_17(%arg0: i32) -> (i32, i32, i32) {
    %c0_i32 = arith.constant 0 : i32
    %c0_i32_0 = arith.constant 0 : i32
    %c0_i32_1 = arith.constant 0 : i32
    return %arg0, %c0_i32, %c0_i32_0 : i32, i32, i32
  }
}

</mosaic_0001>

<llo_original>
// kernel: transxl_forward.1
$region0: #{transxl_forward.1}
  #allocation0 [shape = 'u32[]', space=smem, size = 0x4, offset = 0x4, fixed_abs, tag = 'smem constant byte address 0x4 - core index']
  #allocation1 [shape = 'u32[144,128]{1,0:T(1,128)}', space=vmem, size = 0x12000, scoped, tag = 'internal scratch']
  %s0 = inlined_call_operand.vmem [shape: f32[2,8,32], index: 0, kind: input, shape index: {}]
  %s1 = inlined_call_operand.vmem [shape: f32[8,32], index: 1, kind: input, shape index: {}]
  %s2 = inlined_call_operand.hbm [shape: f32[2,4,32,8], index: 2, kind: input, shape index: {}]
  %s3 = inlined_call_operand.hbm [shape: f32[2,4,32,8], index: 3, kind: input, shape index: {}]
  %s4 = inlined_call_operand.hbm [shape: f32[2,4,32,8], index: 4, kind: input, shape index: {}]
  %s5 = inlined_call_operand.vmem [shape: f32[2,4,32,8], index: 5, kind: input, shape index: {}]
  %s6 = inlined_call_operand.hbm [shape: f32[2,4,8,32], index: 6, kind: input, shape index: {}]
  %s7 = inlined_call_operand.vmem [shape: f32[2,4,1,8], index: 7, kind: input, shape index: {}]
  %s8 = inlined_call_operand.vmem [shape: f32[2,4,1,8], index: 8, kind: input, shape index: {}]
  %s9 = inlined_call_operand.vmem [shape: f32[2,1,32], index: 9, kind: input, shape index: {}, may-alias: {9,15}]
  %s10 = inlined_call_operand.vmem [shape: f32[2,1,32], index: 10, kind: input, shape index: {}, may-alias: {10,14,16}]
  %s11 = inlined_call_operand.hbm [shape: f32[2,32,64], index: 11, kind: input, shape index: {}]
  %s12 = inlined_call_operand.vmem [shape: f32[2,1,64], index: 12, kind: input, shape index: {}]
  %s13 = inlined_call_operand.hbm [shape: f32[2,64,32], index: 13, kind: input, shape index: {}]
  %s14 = inlined_call_operand.vmem [shape: f32[2,1,32], index: 14, kind: input, shape index: {}, may-alias: {10,14,16}]
  %s15 = inlined_call_operand.vmem [shape: f32[2,1,32], index: 15, kind: input, shape index: {}, may-alias: {9,15}]
  %s16 = inlined_call_operand.vmem [shape: f32[2,1,32], index: 16, kind: input, shape index: {}, may-alias: {10,14,16}]
  %s17 = inlined_call_operand.vmem [shape: f32[2,8,32], index: 17, kind: output, shape index: {}]
  %s18 = sld [smem:[#allocation0]]
  $region125: #{transxl_forward.1} parent=0
    _
  %s20 = ssub.s32 1, %s18
  %s21 = scalar_select 0, %s20, %s18
  $region1: #{transxl_forward.1} parent=0
    #allocation2 [shape = 'u8[131072]{0}', space=vmem, size = 0x20000, scoped, tag = 'input window, operand 2, single buffered']
    #allocation3 [shape = 's32[2]{0}', space=sflag, size = 0x8, scoped, tag = 'scoped memory for transxl_forward.1']
    #allocation4 [shape = 'u8[131072]{0}', space=vmem, size = 0x20000, scoped, tag = 'input window, operand 3, single buffered']
    #allocation5 [shape = 's32[1]{0}', space=sflag, size = 0x4, scoped, tag = 'scoped memory for transxl_forward.1']
    #allocation6 [shape = 'u8[131072]{0}', space=vmem, size = 0x20000, scoped, tag = 'input window, operand 4, single buffered']
    #allocation7 [shape = 'u8[32768]{0}', space=vmem, size = 0x8000, scoped, tag = 'input window, operand 6, single buffered']
    #allocation8 [shape = 's32[1]{0}', space=sflag, size = 0x4, scoped, tag = 'scoped memory for transxl_forward.1']
    #allocation9 [shape = 'u8[32768]{0}', space=vmem, size = 0x8000, scoped, tag = 'input window, operand 11, single buffered']
    #allocation10 [shape = 'u8[65536]{0}', space=vmem, size = 0x10000, scoped, tag = 'input window, operand 13, single buffered']
    #allocation11 [shape = 's32[1]{0}', space=sflag, size = 0x4, scoped, tag = 'scoped memory for transxl_forward.1']
    %22 = vsyncpa [#allocation3], 0
    %23 = vsyncpa [#allocation5], 0
    %24 = vsyncpa [#allocation8], 0
    %25 = vsyncpa [#allocation11], 0
    loop: start=0, step=1, limit=4
    $region2: #{transxl_forward.1} parent=1 // loop_pre_header
      _
    $region3: #{transxl_forward.1} parent=1 // loop_header
      %s27 = sphi 0, %s31
      %p28 = scmp.ge.s32.totalorder %s27, 4
      %s37 = sphi 0, %s39
      %s40 = sphi 0, %s37
      %s41 = sphi 0, %s40
      %s57 = sphi 0, %s41
      %s61 = sphi 0, %s61
      %s63 = sphi 0, %s61
      %s64 = sphi 0, %s63
      %s78 = sphi 0, %s64
      %s82 = sphi 0, %s82
      %s84 = sphi 0, %s82
      %s85 = sphi 0, %s84
      %s99 = sphi 0, %s85
      %s103 = sphi 0, %s103
      %s105 = sphi 0, %s103
      %s106 = sphi 0, %s105
      %s120 = sphi 0, %s106
      %s124 = sphi 0, %s124
      %s126 = sphi 0, %s124
      %s127 = sphi 0, %s126
      %s141 = sphi 0, %s127
      %s145 = sphi 0, %s145
      %s147 = sphi 0, %s145
      %s148 = sphi 0, %s147
      %s162 = sphi 0, %s148
      %s166 = sphi 0, %s166
      %s168 = sphi 0, %s166
      %s169 = sphi 0, %s168
      %s183 = sphi 0, %s169
      %s187 = sphi 0, %s187
      %s189 = sphi 0, %s187
      %s190 = sphi 0, %s189
      %s204 = sphi 0, %s190
      %s208 = sphi 0, %s208
      %s210 = sphi 0, %s208
      %s211 = sphi 0, %s210
      %s225 = sphi 0, %s211
      %s229 = sphi 0, %s229
      %s231 = sphi 0, %s229
      %s232 = sphi 0, %s231
      %s246 = sphi 0, %s232
      %s250 = sphi 0, %s250
      %s252 = sphi 0, %s250
      %s253 = sphi 0, %s252
      %s267 = sphi 0, %s253
      %s271 = sphi 0, %s271
      %s273 = sphi 0, %s271
      %s274 = sphi 0, %s273
      %s288 = sphi 0, %s274
      %s292 = sphi 0, %s292
      %s294 = sphi 0, %s292
      %s295 = sphi 0, %s294
      %s309 = sphi 0, %s295
      %s313 = sphi 0, %s313
      %s315 = sphi 0, %s313
      %s316 = sphi 0, %s315
      %s330 = sphi 0, %s316
      %s334 = sphi 0, %s334
      %s336 = sphi 0, %s334
      %s337 = sphi 0, %s336
      %s351 = sphi 0, %s337
      %s355 = sphi 0, %s355
      %s357 = sphi 0, %s355
      %s358 = sphi 0, %s357
      %s372 = sphi 0, %s358
      %s376 = sphi 0, %s376
      %s378 = sphi 0, %s376
      %s379 = sphi 0, %s378
      %s393 = sphi 0, %s379
      %s399 = sphi 0, %s401
      %s402 = sphi 0, %s399
      %s403 = sphi 0, %s402
      %s419 = sphi 0, %s403
    $region4: #{transxl_forward.1} parent=1 // loop_header_branch
      %30 = sbr.rel (%p28) target = $region8
    $region5: #{transxl_forward.1} parent=1 // loop_body
      %s32 = ssub.s32 %s27, 1
      %s33 = ssub.s32 %s27, 2
      %s34 = sadd.s32 %s27, 1
      %s35 = ssub.s32 %s27, %s34
      %p36 = scmp.eq.s32.totalorder %s35, 0
      %s38 = sadd.s32 %s37, 1
      %s39 = scalar_select %p36, %s37, %s38
      %p42 = pneg %p36
      %p43 = scmp.eq.s32.totalorder %s27, 1
      %p44 = por %p42, %p43
      %p45 = scmp.ne.s32.totalorder %s37, %s40
      %p46 = scmp.eq.s32.totalorder %s27, 0
      %p47 = por %p45, %p46
      %p48 = scmp.ne.s32.totalorder %s37, %s40
      %p49 = scmp.eq.s32.totalorder %s32, 1
      %p50 = por %p48, %p49
      %p51 = scmp.ne.s32.totalorder %s40, %s41
      %p52 = scmp.eq.s32.totalorder %s32, 0
      %p53 = por %p51, %p52
      %p54 = scmp.ne.s32.totalorder %s40, %s41
      %p55 = scmp.eq.s32.totalorder %s33, 1
      %p56 = por %p54, %p55
      %p58 = scmp.ne.s32.totalorder %s41, %s57
      %p59 = scmp.eq.s32.totalorder %s33, 0
      %p60 = por %p58, %p59
      %s62 = sadd.s32 %s61, 1
      %p65 = scmp.eq.s32.totalorder %s27, 1
      %p66 = scmp.ne.s32.totalorder %s61, %s63
      %p67 = scmp.eq.s32.totalorder %s27, 0
      %p68 = por %p66, %p67
      %p69 = scmp.ne.s32.totalorder %s61, %s63
      %p70 = scmp.eq.s32.totalorder %s32, 1
      %p71 = por %p69, %p70
      %p72 = scmp.ne.s32.totalorder %s63, %s64
      %p73 = scmp.eq.s32.totalorder %s32, 0
      %p74 = por %p72, %p73
      %p75 = scmp.ne.s32.totalorder %s63, %s64
      %p76 = scmp.eq.s32.totalorder %s33, 1
      %p77 = por %p75, %p76
      %p79 = scmp.ne.s32.totalorder %s64, %s78
      %p80 = scmp.eq.s32.totalorder %s33, 0
      %p81 = por %p79, %p80
      %s83 = sadd.s32 %s82, 1
      %p86 = scmp.eq.s32.totalorder %s27, 1
      %p87 = scmp.ne.s32.totalorder %s82, %s84
      %p88 = scmp.eq.s32.totalorder %s27, 0
      %p89 = por %p87, %p88
      %p90 = scmp.ne.s32.totalorder %s82, %s84
      %p91 = scmp.eq.s32.totalorder %s32, 1
      %p92 = por %p90, %p91
      %p93 = scmp.ne.s32.totalorder %s84, %s85
      %p94 = scmp.eq.s32.totalorder %s32, 0
      %p95 = por %p93, %p94
      %p96 = scmp.ne.s32.totalorder %s84, %s85
      %p97 = scmp.eq.s32.totalorder %s33, 1
      %p98 = por %p96, %p97
      %p100 = scmp.ne.s32.totalorder %s85, %s99
      %p101 = scmp.eq.s32.totalorder %s33, 0
      %p102 = por %p100, %p101
      %s104 = sadd.s32 %s103, 1
      %p107 = scmp.eq.s32.totalorder %s27, 1
      %p108 = scmp.ne.s32.totalorder %s103, %s105
      %p109 = scmp.eq.s32.totalorder %s27, 0
      %p110 = por %p108, %p109
      %p111 = scmp.ne.s32.totalorder %s103, %s105
      %p112 = scmp.eq.s32.totalorder %s32, 1
      %p113 = por %p111, %p112
      %p114 = scmp.ne.s32.totalorder %s105, %s106
      %p115 = scmp.eq.s32.totalorder %s32, 0
      %p116 = por %p114, %p115
      %p117 = scmp.ne.s32.totalorder %s105, %s106
      %p118 = scmp.eq.s32.totalorder %s33, 1
      %p119 = por %p117, %p118
      %p121 = scmp.ne.s32.totalorder %s106, %s120
      %p122 = scmp.eq.s32.totalorder %s33, 0
      %p123 = por %p121, %p122
      %s125 = sadd.s32 %s124, 1
      %p128 = scmp.eq.s32.totalorder %s27, 1
      %p129 = scmp.ne.s32.totalorder %s124, %s126
      %p130 = scmp.eq.s32.totalorder %s27, 0
      %p131 = por %p129, %p130
      %p132 = scmp.ne.s32.totalorder %s124, %s126
      %p133 = scmp.eq.s32.totalorder %s32, 1
      %p134 = por %p132, %p133
      %p135 = scmp.ne.s32.totalorder %s126, %s127
      %p136 = scmp.eq.s32.totalorder %s32, 0
      %p137 = por %p135, %p136
      %p138 = scmp.ne.s32.totalorder %s126, %s127
      %p139 = scmp.eq.s32.totalorder %s33, 1
      %p140 = por %p138, %p139
      %p142 = scmp.ne.s32.totalorder %s127, %s141
      %p143 = scmp.eq.s32.totalorder %s33, 0
      %p144 = por %p142, %p143
      %s146 = sadd.s32 %s145, 1
      %p149 = scmp.eq.s32.totalorder %s27, 1
      %p150 = scmp.ne.s32.totalorder %s145, %s147
      %p151 = scmp.eq.s32.totalorder %s27, 0
      %p152 = por %p150, %p151
      %p153 = scmp.ne.s32.totalorder %s145, %s147
      %p154 = scmp.eq.s32.totalorder %s32, 1
      %p155 = por %p153, %p154
      %p156 = scmp.ne.s32.totalorder %s147, %s148
      %p157 = scmp.eq.s32.totalorder %s32, 0
      %p158 = por %p156, %p157
      %p159 = scmp.ne.s32.totalorder %s147, %s148
      %p160 = scmp.eq.s32.totalorder %s33, 1
      %p161 = por %p159, %p160
      %p163 = scmp.ne.s32.totalorder %s148, %s162
      %p164 = scmp.eq.s32.totalorder %s33, 0
      %p165 = por %p163, %p164
      %s167 = sadd.s32 %s166, 1
      %p170 = scmp.eq.s32.totalorder %s27, 1
      %p171 = scmp.ne.s32.totalorder %s166, %s168
      %p172 = scmp.eq.s32.totalorder %s27, 0
      %p173 = por %p171, %p172
      %p174 = scmp.ne.s32.totalorder %s166, %s168
      %p175 = scmp.eq.s32.totalorder %s32, 1
      %p176 = por %p174, %p175
      %p177 = scmp.ne.s32.totalorder %s168, %s169
      %p178 = scmp.eq.s32.totalorder %s32, 0
      %p179 = por %p177, %p178
      %p180 = scmp.ne.s32.totalorder %s168, %s169
      %p181 = scmp.eq.s32.totalorder %s33, 1
      %p182 = por %p180, %p181
      %p184 = scmp.ne.s32.totalorder %s169, %s183
      %p185 = scmp.eq.s32.totalorder %s33, 0
      %p186 = por %p184, %p185
      %s188 = sadd.s32 %s187, 1
      %p191 = scmp.eq.s32.totalorder %s27, 1
      %p192 = scmp.ne.s32.totalorder %s187, %s189
      %p193 = scmp.eq.s32.totalorder %s27, 0
      %p194 = por %p192, %p193
      %p195 = scmp.ne.s32.totalorder %s187, %s189
      %p196 = scmp.eq.s32.totalorder %s32, 1
      %p197 = por %p195, %p196
      %p198 = scmp.ne.s32.totalorder %s189, %s190
      %p199 = scmp.eq.s32.totalorder %s32, 0
      %p200 = por %p198, %p199
      %p201 = scmp.ne.s32.totalorder %s189, %s190
      %p202 = scmp.eq.s32.totalorder %s33, 1
      %p203 = por %p201, %p202
      %p205 = scmp.ne.s32.totalorder %s190, %s204
      %p206 = scmp.eq.s32.totalorder %s33, 0
      %p207 = por %p205, %p206
      %s209 = sadd.s32 %s208, 1
      %p212 = scmp.eq.s32.totalorder %s27, 1
      %p213 = scmp.ne.s32.totalorder %s208, %s210
      %p214 = scmp.eq.s32.totalorder %s27, 0
      %p215 = por %p213, %p214
      %p216 = scmp.ne.s32.totalorder %s208, %s210
      %p217 = scmp.eq.s32.totalorder %s32, 1
      %p218 = por %p216, %p217
      %p219 = scmp.ne.s32.totalorder %s210, %s211
      %p220 = scmp.eq.s32.totalorder %s32, 0
      %p221 = por %p219, %p220
      %p222 = scmp.ne.s32.totalorder %s210, %s211
      %p223 = scmp.eq.s32.totalorder %s33, 1
      %p224 = por %p222, %p223
      %p226 = scmp.ne.s32.totalorder %s211, %s225
      %p227 = scmp.eq.s32.totalorder %s33, 0
      %p228 = por %p226, %p227
      %s230 = sadd.s32 %s229, 1
      %p233 = scmp.eq.s32.totalorder %s27, 1
      %p234 = scmp.ne.s32.totalorder %s229, %s231
      %p235 = scmp.eq.s32.totalorder %s27, 0
      %p236 = por %p234, %p235
      %p237 = scmp.ne.s32.totalorder %s229, %s231
      %p238 = scmp.eq.s32.totalorder %s32, 1
      %p239 = por %p237, %p238
      %p240 = scmp.ne.s32.totalorder %s231, %s232
      %p241 = scmp.eq.s32.totalorder %s32, 0
      %p242 = por %p240, %p241
      %p243 = scmp.ne.s32.totalorder %s231, %s232
      %p244 = scmp.eq.s32.totalorder %s33, 1
      %p245 = por %p243, %p244
      %p247 = scmp.ne.s32.totalorder %s232, %s246
      %p248 = scmp.eq.s32.totalorder %s33, 0
      %p249 = por %p247, %p248
      %s251 = sadd.s32 %s250, 1
      %p254 = scmp.eq.s32.totalorder %s27, 1
      %p255 = scmp.ne.s32.totalorder %s250, %s252
      %p256 = scmp.eq.s32.totalorder %s27, 0
      %p257 = por %p255, %p256
      %p258 = scmp.ne.s32.totalorder %s250, %s252
      %p259 = scmp.eq.s32.totalorder %s32, 1
      %p260 = por %p258, %p259
      %p261 = scmp.ne.s32.totalorder %s252, %s253
      %p262 = scmp.eq.s32.totalorder %s32, 0
      %p263 = por %p261, %p262
      %p264 = scmp.ne.s32.totalorder %s252, %s253
      %p265 = scmp.eq.s32.totalorder %s33, 1
      %p266 = por %p264, %p265
      %p268 = scmp.ne.s32.totalorder %s253, %s267
      %p269 = scmp.eq.s32.totalorder %s33, 0
      %p270 = por %p268, %p269
      %s272 = sadd.s32 %s271, 1
      %p275 = scmp.eq.s32.totalorder %s27, 1
      %p276 = scmp.ne.s32.totalorder %s271, %s273
      %p277 = scmp.eq.s32.totalorder %s27, 0
      %p278 = por %p276, %p277
      %p279 = scmp.ne.s32.totalorder %s271, %s273
      %p280 = scmp.eq.s32.totalorder %s32, 1
      %p281 = por %p279, %p280
      %p282 = scmp.ne.s32.totalorder %s273, %s274
      %p283 = scmp.eq.s32.totalorder %s32, 0
      %p284 = por %p282, %p283
      %p285 = scmp.ne.s32.totalorder %s273, %s274
      %p286 = scmp.eq.s32.totalorder %s33, 1
      %p287 = por %p285, %p286
      %p289 = scmp.ne.s32.totalorder %s274, %s288
      %p290 = scmp.eq.s32.totalorder %s33, 0
      %p291 = por %p289, %p290
      %s293 = sadd.s32 %s292, 1
      %p296 = scmp.eq.s32.totalorder %s27, 1
      %p297 = scmp.ne.s32.totalorder %s292, %s294
      %p298 = scmp.eq.s32.totalorder %s27, 0
      %p299 = por %p297, %p298
      %p300 = scmp.ne.s32.totalorder %s292, %s294
      %p301 = scmp.eq.s32.totalorder %s32, 1
      %p302 = por %p300, %p301
      %p303 = scmp.ne.s32.totalorder %s294, %s295
      %p304 = scmp.eq.s32.totalorder %s32, 0
      %p305 = por %p303, %p304
      %p306 = scmp.ne.s32.totalorder %s294, %s295
      %p307 = scmp.eq.s32.totalorder %s33, 1
      %p308 = por %p306, %p307
      %p310 = scmp.ne.s32.totalorder %s295, %s309
      %p311 = scmp.eq.s32.totalorder %s33, 0
      %p312 = por %p310, %p311
      %s314 = sadd.s32 %s313, 1
      %p317 = scmp.eq.s32.totalorder %s27, 1
      %p318 = scmp.ne.s32.totalorder %s313, %s315
      %p319 = scmp.eq.s32.totalorder %s27, 0
      %p320 = por %p318, %p319
      %p321 = scmp.ne.s32.totalorder %s313, %s315
      %p322 = scmp.eq.s32.totalorder %s32, 1
      %p323 = por %p321, %p322
      %p324 = scmp.ne.s32.totalorder %s315, %s316
      %p325 = scmp.eq.s32.totalorder %s32, 0
      %p326 = por %p324, %p325
      %p327 = scmp.ne.s32.totalorder %s315, %s316
      %p328 = scmp.eq.s32.totalorder %s33, 1
      %p329 = por %p327, %p328
      %p331 = scmp.ne.s32.totalorder %s316, %s330
      %p332 = scmp.eq.s32.totalorder %s33, 0
      %p333 = por %p331, %p332
      %s335 = sadd.s32 %s334, 1
      %p338 = scmp.eq.s32.totalorder %s27, 1
      %p339 = scmp.ne.s32.totalorder %s334, %s336
      %p340 = scmp.eq.s32.totalorder %s27, 0
      %p341 = por %p339, %p340
      %p342 = scmp.ne.s32.totalorder %s334, %s336
      %p343 = scmp.eq.s32.totalorder %s32, 1
      %p344 = por %p342, %p343
      %p345 = scmp.ne.s32.totalorder %s336, %s337
      %p346 = scmp.eq.s32.totalorder %s32, 0
      %p347 = por %p345, %p346
      %p348 = scmp.ne.s32.totalorder %s336, %s337
      %p349 = scmp.eq.s32.totalorder %s33, 1
      %p350 = por %p348, %p349
      %p352 = scmp.ne.s32.totalorder %s337, %s351
      %p353 = scmp.eq.s32.totalorder %s33, 0
      %p354 = por %p352, %p353
      %s356 = sadd.s32 %s355, 1
      %p359 = scmp.eq.s32.totalorder %s27, 1
      %p360 = scmp.ne.s32.totalorder %s355, %s357
      %p361 = scmp.eq.s32.totalorder %s27, 0
      %p362 = por %p360, %p361
      %p363 = scmp.ne.s32.totalorder %s355, %s357
      %p364 = scmp.eq.s32.totalorder %s32, 1
      %p365 = por %p363, %p364
      %p366 = scmp.ne.s32.totalorder %s357, %s358
      %p367 = scmp.eq.s32.totalorder %s32, 0
      %p368 = por %p366, %p367
      %p369 = scmp.ne.s32.totalorder %s357, %s358
      %p370 = scmp.eq.s32.totalorder %s33, 1
      %p371 = por %p369, %p370
      %p373 = scmp.ne.s32.totalorder %s358, %s372
      %p374 = scmp.eq.s32.totalorder %s33, 0
      %p375 = por %p373, %p374
      %s377 = sadd.s32 %s376, 1
      %p380 = scmp.eq.s32.totalorder %s27, 1
      %p381 = scmp.ne.s32.totalorder %s376, %s378
      %p382 = scmp.eq.s32.totalorder %s27, 0
      %p383 = por %p381, %p382
      %p384 = scmp.ne.s32.totalorder %s376, %s378
      %p385 = scmp.eq.s32.totalorder %s32, 1
      %p386 = por %p384, %p385
      %p387 = scmp.ne.s32.totalorder %s378, %s379
      %p388 = scmp.eq.s32.totalorder %s32, 0
      %p389 = por %p387, %p388
      %p390 = scmp.ne.s32.totalorder %s378, %s379
      %p391 = scmp.eq.s32.totalorder %s33, 1
      %p392 = por %p390, %p391
      %p394 = scmp.ne.s32.totalorder %s379, %s393
      %p395 = scmp.eq.s32.totalorder %s33, 0
      %p396 = por %p394, %p395
      %s397 = ssub.s32 %s27, %s34
      %p398 = scmp.eq.s32.totalorder %s397, 0
      %s400 = sadd.s32 %s399, 1
      %s401 = scalar_select %p398, %s399, %s400
      %p404 = pneg %p398
      %p405 = scmp.eq.s32.totalorder %s27, 1
      %p406 = por %p404, %p405
      %p407 = scmp.ne.s32.totalorder %s399, %s402
      %p408 = scmp.eq.s32.totalorder %s27, 0
      %p409 = por %p407, %p408
      %p410 = scmp.ne.s32.totalorder %s399, %s402
      %p411 = scmp.eq.s32.totalorder %s32, 1
      %p412 = por %p410, %p411
      %p413 = scmp.ne.s32.totalorder %s402, %s403
      %p414 = scmp.eq.s32.totalorder %s32, 0
      %p415 = por %p413, %p414
      %p416 = scmp.ne.s32.totalorder %s402, %s403
      %p417 = scmp.eq.s32.totalorder %s33, 1
      %p418 = por %p416, %p417
      %p420 = scmp.ne.s32.totalorder %s403, %s419
      %p421 = scmp.eq.s32.totalorder %s33, 0
      %p422 = por %p420, %p421
      %p423 = scmp.le.s32.totalorder 1, %s27
      %p424 = scmp.lt.s32.totalorder %s27, 3
      %p425 = pnand %p423, %p424
      %p426 = pneg %p425
      // Predicated region
      $region9: #{transxl_forward.1} parent=5 // pred_check
        _
      $region10: #{transxl_forward.1} parent=5 // pred_check_branch
        %428 = sbr.rel (%p425) target = $region12
      $region11: #{transxl_forward.1} parent=5 // pred_region
        %s429 = ssub.s32 %s27, 1
        // Predicated region
        $region13: #{transxl_forward.1} parent=11 // pred_check
          %p430 = pneg %p74
        $region14: #{transxl_forward.1} parent=11 // pred_check_branch
          %432 = sbr.rel (%p430) target = $region16
        $region15: #{transxl_forward.1} parent=11 // pred_region
          _
        $region16: #{transxl_forward.1} parent=11 // pred_fallthru
          _
        // Predicated region
        $region17: #{transxl_forward.1} parent=11 // pred_check
          %p433 = pneg %p95
        $region18: #{transxl_forward.1} parent=11 // pred_check_branch
          %435 = sbr.rel (%p433) target = $region20
        $region19: #{transxl_forward.1} parent=11 // pred_region
          %s437 = ssub.s32 4096, 4096
          %438 = vsyncadd [#allocation3], %s437
          %s439 = sshll.u32 [#allocation2], 4
          %s440 = int_to_ptr.vmem [resolvable:$true] %s439
          %445 = dma.hbm_to_vmem [thread:$0]  %s2, 4096, %s440, [#allocation3], 128, 128, 8
        $region20: #{transxl_forward.1} parent=11 // pred_fallthru
          _
        // Predicated region
        $region21: #{transxl_forward.1} parent=11 // pred_check
          %p446 = pneg %p116
        $region22: #{transxl_forward.1} parent=11 // pred_check_branch
          %448 = sbr.rel (%p446) target = $region24
        $region23: #{transxl_forward.1} parent=11 // pred_region
          %s450 = ssub.s32 4096, 4096
          %451 = vsyncadd [#allocation5], %s450
          %s452 = sshll.u32 [#allocation4], 4
          %s453 = int_to_ptr.vmem [resolvable:$true] %s452
          %458 = dma.hbm_to_vmem [thread:$0]  %s3, 4096, %s453, [#allocation5], 128, 128, 8
        $region24: #{transxl_forward.1} parent=11 // pred_fallthru
          _
        // Predicated region
        $region25: #{transxl_forward.1} parent=11 // pred_check
          %p459 = pneg %p137
        $region26: #{transxl_forward.1} parent=11 // pred_check_branch
          %461 = sbr.rel (%p459) target = $region28
        $region27: #{transxl_forward.1} parent=11 // pred_region
          %s463 = ssub.s32 4096, 4096
          %464 = vsyncadd [#allocation5], %s463
          %s465 = sshll.u32 [#allocation6], 4
          %s466 = int_to_ptr.vmem [resolvable:$true] %s465
          %471 = dma.hbm_to_vmem [thread:$0]  %s4, 4096, %s466, [#allocation5], 128, 128, 8
        $region28: #{transxl_forward.1} parent=11 // pred_fallthru
          _
        // Predicated region
        $region29: #{transxl_forward.1} parent=11 // pred_check
          %p472 = pneg %p158
        $region30: #{transxl_forward.1} parent=11 // pred_check_branch
          %474 = sbr.rel (%p472) target = $region32
        $region31: #{transxl_forward.1} parent=11 // pred_region
          _
        $region32: #{transxl_forward.1} parent=11 // pred_fallthru
          _
        // Predicated region
        $region33: #{transxl_forward.1} parent=11 // pred_check
          %p475 = pneg %p179
        $region34: #{transxl_forward.1} parent=11 // pred_check_branch
          %477 = sbr.rel (%p475) target = $region36
        $region35: #{transxl_forward.1} parent=11 // pred_region
          %s479 = ssub.s32 1024, 1024
          %480 = vsyncadd [#allocation8], %s479
          %s481 = sshll.u32 [#allocation7], 4
          %s482 = int_to_ptr.vmem [resolvable:$true] %s481
          %487 = dma.hbm_to_vmem [thread:$0]  %s6, 1024, %s482, [#allocation8], 128, 128, 8
        $region36: #{transxl_forward.1} parent=11 // pred_fallthru
          _
        // Predicated region
        $region37: #{transxl_forward.1} parent=11 // pred_check
          %p488 = pneg %p200
        $region38: #{transxl_forward.1} parent=11 // pred_check_branch
          %490 = sbr.rel (%p488) target = $region40
        $region39: #{transxl_forward.1} parent=11 // pred_region
          _
        $region40: #{transxl_forward.1} parent=11 // pred_fallthru
          _
        // Predicated region
        $region41: #{transxl_forward.1} parent=11 // pred_check
          %p491 = pneg %p221
        $region42: #{transxl_forward.1} parent=11 // pred_check_branch
          %493 = sbr.rel (%p491) target = $region44
        $region43: #{transxl_forward.1} parent=11 // pred_region
          _
        $region44: #{transxl_forward.1} parent=11 // pred_fallthru
          _
        // Predicated region
        $region45: #{transxl_forward.1} parent=11 // pred_check
          %p494 = pneg %p242
        $region46: #{transxl_forward.1} parent=11 // pred_check_branch
          %496 = sbr.rel (%p494) target = $region48
        $region47: #{transxl_forward.1} parent=11 // pred_region
          _
        $region48: #{transxl_forward.1} parent=11 // pred_fallthru
          _
        // Predicated region
        $region49: #{transxl_forward.1} parent=11 // pred_check
          %p497 = pneg %p263
        $region50: #{transxl_forward.1} parent=11 // pred_check_branch
          %499 = sbr.rel (%p497) target = $region52
        $region51: #{transxl_forward.1} parent=11 // pred_region
          _
        $region52: #{transxl_forward.1} parent=11 // pred_fallthru
          _
        // Predicated region
        $region53: #{transxl_forward.1} parent=11 // pred_check
          %p500 = pneg %p284
        $region54: #{transxl_forward.1} parent=11 // pred_check_branch
          %502 = sbr.rel (%p500) target = $region56
        $region55: #{transxl_forward.1} parent=11 // pred_region
          %s504 = ssub.s32 1024, 1024
          %505 = vsyncadd [#allocation8], %s504
          %s506 = sshll.u32 [#allocation9], 4
          %s507 = int_to_ptr.vmem [resolvable:$true] %s506
          %512 = dma.hbm_to_vmem [thread:$0]  %s11, 1024, %s507, [#allocation8], 128, 128, 8
        $region56: #{transxl_forward.1} parent=11 // pred_fallthru
          _
        // Predicated region
        $region57: #{transxl_forward.1} parent=11 // pred_check
          %p513 = pneg %p305
        $region58: #{transxl_forward.1} parent=11 // pred_check_branch
          %515 = sbr.rel (%p513) target = $region60
        $region59: #{transxl_forward.1} parent=11 // pred_region
          _
        $region60: #{transxl_forward.1} parent=11 // pred_fallthru
          _
        // Predicated region
        $region61: #{transxl_forward.1} parent=11 // pred_check
          %p516 = pneg %p326
        $region62: #{transxl_forward.1} parent=11 // pred_check_branch
          %518 = sbr.rel (%p516) target = $region64
        $region63: #{transxl_forward.1} parent=11 // pred_region
          %s520 = ssub.s32 2048, 2048
          %521 = vsyncadd [#allocation11], %s520
          %s522 = sshll.u32 [#allocation10], 4
          %s523 = int_to_ptr.vmem [resolvable:$true] %s522
          %528 = dma.hbm_to_vmem [thread:$0]  %s13, 2048, %s523, [#allocation11], 128, 128, 8
        $region64: #{transxl_forward.1} parent=11 // pred_fallthru
          _
        // Predicated region
        $region65: #{transxl_forward.1} parent=11 // pred_check
          %p529 = pneg %p347
        $region66: #{transxl_forward.1} parent=11 // pred_check_branch
          %531 = sbr.rel (%p529) target = $region68
        $region67: #{transxl_forward.1} parent=11 // pred_region
          _
        $region68: #{transxl_forward.1} parent=11 // pred_fallthru
          _
        // Predicated region
        $region69: #{transxl_forward.1} parent=11 // pred_check
          %p532 = pneg %p368
        $region70: #{transxl_forward.1} parent=11 // pred_check_branch
          %534 = sbr.rel (%p532) target = $region72
        $region71: #{transxl_forward.1} parent=11 // pred_region
          _
        $region72: #{transxl_forward.1} parent=11 // pred_fallthru
          _
        // Predicated region
        $region73: #{transxl_forward.1} parent=11 // pred_check
          %p535 = pneg %p389
        $region74: #{transxl_forward.1} parent=11 // pred_check_branch
          %537 = sbr.rel (%p535) target = $region76
        $region75: #{transxl_forward.1} parent=11 // pred_region
          _
        $region76: #{transxl_forward.1} parent=11 // pred_fallthru
          _
      $region12: #{transxl_forward.1} parent=5 // pred_fallthru
        _
      %p538 = scmp.lt.s32.totalorder %s27, 2
      // Predicated region
      $region77: #{transxl_forward.1} parent=5 // pred_check
        %p539 = pneg %p538
      $region78: #{transxl_forward.1} parent=5 // pred_check_branch
        %541 = sbr.rel (%p539) target = $region80
      $region79: #{transxl_forward.1} parent=5 // pred_region
        // Predicated region
        $region81: #{transxl_forward.1} parent=79 // pred_check
          %p542 = pneg %p47
        $region82: #{transxl_forward.1} parent=79 // pred_check_branch
          %544 = sbr.rel (%p542) target = $region84
        $region83: #{transxl_forward.1} parent=79 // pred_region
          %p545 = scmp.lt.s32.totalorder %s27, 1
          %s546 = scalar_select %p545, %s27, 1
          %s547 = smul.addr %s546, 8
          %s548 = scalar_lea.vmem %s0, %s547
        $region84: #{transxl_forward.1} parent=79 // pred_fallthru
          _
      $region80: #{transxl_forward.1} parent=5 // pred_fallthru
        _
      %p549 = scmp.le.s32.totalorder 1, %s27
      %p550 = scmp.lt.s32.totalorder %s27, 3
      %p551 = pnand %p549, %p550
      %p552 = pneg %p551
      // Predicated region
      $region85: #{transxl_forward.1} parent=5 // pred_check
        _
      $region86: #{transxl_forward.1} parent=5 // pred_check_branch
        %554 = sbr.rel (%p551) target = $region88
      $region87: #{transxl_forward.1} parent=5 // pred_region
        %s555 = ssub.s32 %s27, 1
        // Predicated region
        $region89: #{transxl_forward.1} parent=87 // pred_check
          %p556 = pneg %p95
        $region90: #{transxl_forward.1} parent=87 // pred_check_branch
          %558 = sbr.rel (%p556) target = $region92
        $region91: #{transxl_forward.1} parent=87 // pred_region
          %559 = dma.done [#allocation3], 4096
        $region92: #{transxl_forward.1} parent=87 // pred_fallthru
          _
        // Predicated region
        $region93: #{transxl_forward.1} parent=87 // pred_check
          %p560 = pneg %p116
        $region94: #{transxl_forward.1} parent=87 // pred_check_branch
          %562 = sbr.rel (%p560) target = $region96
        $region95: #{transxl_forward.1} parent=87 // pred_region
          %563 = dma.done [#allocation5], 4096
        $region96: #{transxl_forward.1} parent=87 // pred_fallthru
          _
        // Predicated region
        $region97: #{transxl_forward.1} parent=87 // pred_check
          %p564 = pneg %p137
        $region98: #{transxl_forward.1} parent=87 // pred_check_branch
          %566 = sbr.rel (%p564) target = $region100
        $region99: #{transxl_forward.1} parent=87 // pred_region
          %567 = dma.done [#allocation5], 4096
        $region100: #{transxl_forward.1} parent=87 // pred_fallthru
          _
        // Predicated region
        $region101: #{transxl_forward.1} parent=87 // pred_check
          %p568 = pneg %p179
        $region102: #{transxl_forward.1} parent=87 // pred_check_branch
          %570 = sbr.rel (%p568) target = $region104
        $region103: #{transxl_forward.1} parent=87 // pred_region
          %571 = dma.done [#allocation8], 1024
        $region104: #{transxl_forward.1} parent=87 // pred_fallthru
          _
        // Predicated region
        $region105: #{transxl_forward.1} parent=87 // pred_check
          %p572 = pneg %p284
        $region106: #{transxl_forward.1} parent=87 // pred_check_branch
          %574 = sbr.rel (%p572) target = $region108
        $region107: #{transxl_forward.1} parent=87 // pred_region
          %575 = dma.done [#allocation8], 1024
        $region108: #{transxl_forward.1} parent=87 // pred_fallthru
          _
        // Predicated region
        $region109: #{transxl_forward.1} parent=87 // pred_check
          %p576 = pneg %p326
        $region110: #{transxl_forward.1} parent=87 // pred_check_branch
          %578 = sbr.rel (%p576) target = $region112
        $region111: #{transxl_forward.1} parent=87 // pred_region
          %579 = dma.done [#allocation11], 2048
        $region112: #{transxl_forward.1} parent=87 // pred_fallthru
          _
        %p580 = scmp.lt.s32.totalorder %s32, 1
        %s581 = scalar_select %p580, %s32, 1
        %s582 = smul.addr %s581, 8
        %s583 = scalar_lea.vmem %s0, %s582
        %p584 = pneg %p53
        %p585 = pneg %p50
        %p586 = pneg %p74
        %p587 = pneg %p71
        %p588 = pneg %p95
        %p589 = pneg %p92
        %p590 = pneg %p116
        %p591 = pneg %p113
        %p592 = pneg %p137
        %p593 = pneg %p134
        %p594 = pneg %p158
        %p595 = pneg %p155
        %p596 = pneg %p179
        %p597 = pneg %p176
        %p598 = pneg %p200
        %p599 = pneg %p197
        %p600 = pneg %p221
        %p601 = pneg %p218
        %p602 = pneg %p242
        %p603 = pneg %p239
        %p604 = pneg %p263
        %p605 = pneg %p260
        %p606 = pneg %p284
        %p607 = pneg %p281
        %p608 = pneg %p305
        %p609 = pneg %p302
        %p610 = pneg %p326
        %p611 = pneg %p323
        %p612 = pneg %p347
        %p613 = pneg %p344
        %p614 = pneg %p368
        %p615 = pneg %p365
        %p616 = pneg %p389
        %p617 = pneg %p386
        %p618 = pneg %p415
        %p619 = pneg %p412
        %p620 = scmp.lt.s32.totalorder %s32, 1
        %s621 = scalar_select %p620, %s32, 1
        %s622 = smul.addr %s621, 8
        %s623 = scalar_lea.vmem %s17, %s622
        %p624 = scmp.lt.s32.totalorder %s32, 1
        %s625 = scalar_select %p624, %s32, 1
        %s626 = smul.addr %s625, 8
        %s627 = scalar_lea.vmem %s0, %s626
        %p628 = scmp.lt.s32.totalorder %s32, 1
        %s629 = scalar_select %p628, %s32, 1
        %s630 = smul.addr %s629, 8
        %s631 = scalar_lea.vmem %s17, %s630
        %v632 = vld [vmem:[%s627] sm:$0xff]
        %v633 = vld [vmem:[%s1] sm:$0xff]
        %v634 = vlaneseq
        %v635 = vshrl.u32 %v634, 7
        %v636 = vlaneseq
        %v637 = vand.u32 %v636, 127
        %vm638 = vcmp.gt.s32.totalorder %v637, %v635
        %v639 = vsub.s32 7, %v635
        %v640 = vadd.s32 %v637, 1
        %vm641 = vcmp.ge.s32.totalorder %v640, 8
        %v642 = vsub.s32 %v640, 8
        %v643 = vsel %vm641, %v642, %v640
        %vm644 = vcmp.eq.s32.totalorder %v635, %v643
        %v645 = vsel %vm644, 1, 0
        %v646 = vcvt.s32.f32 %v645
        %v647 = vand.u32 %v639, 1
        %vm648 = vcmp.eq.s32.totalorder %v647, 1
        %v649 = vadd.s32 %v637, 2
        %vm650 = vcmp.ge.s32.totalorder %v649, 8
        %v651 = vsub.s32 %v649, 8
        %v652 = vsel %vm650, %v651, %v649
        %vm653 = vcmp.eq.s32.totalorder %v635, %v652
        %v654 = vsel %vm653, 1, 0
        %v655 = vcvt.s32.f32 %v654
        %v656 = vshra.s32 %v639, 1
        %v657 = vand.u32 %v656, 1
        %vm658 = vcmp.eq.s32.totalorder %v657, 1
        %v659 = vadd.s32 %v637, 4
        %vm660 = vcmp.ge.s32.totalorder %v659, 8
        %v661 = vsub.s32 %v659, 8
        %v662 = vsel %vm660, %v661, %v659
        %vm663 = vcmp.eq.s32.totalorder %v635, %v662
        %v664 = vsel %vm663, 1, 0
        %v665 = vcvt.s32.f32 %v664
        %v666 = vshra.s32 %v639, 2
        %v667 = vand.u32 %v666, 1
        %vm668 = vcmp.eq.s32.totalorder %v667, 1
        %v669 = vld [vmem:[#allocation2] sm:$0xff]
        %v670 = vld [vmem:[#allocation2 + $0x8] sm:$0xff]
        %v671 = vld [vmem:[#allocation2 + $0x10] sm:$0xff]
        %v672 = vld [vmem:[#allocation2 + $0x18] sm:$0xff]
        %vm673 = vcmask 261120
        %v675 = vsel %vm673, %v632, 0
        %677 = vmatprep.subr.mxu0 0.0
        %678 = vmatpush1.msra.mxu0 %v669
        %679 = vmatprep.subr.mxu0 0.0
        %680 = vmatpush1.msra.mxu0 %v670
        %681 = vmatprep.subr.mxu0 0.0
        %682 = vmatpush1.msra.mxu0 %v671
        %683 = vmatprep.subr.mxu0 0.0
        %684 = vmatpush1.msra.mxu0 %v672
        %685 = vmatprep.subr.mxu0 0.0
        %686 = vmatpush1.msra.mxu0 0.0
        %687 = vmatprep.subr.mxu0 0.0
        %688 = vmatpush1.msra.mxu0 0.0
        %689 = vmatprep.subr.mxu0 0.0
        %690 = vmatpush1.msra.mxu0 0.0
        %691 = vmatprep.subr.mxu0 0.0
        %692 = vmatpush1.msra.mxu0 0.0
        %693 = vmatprep.subr.mxu0 0.0
        %694 = vmatpush1.msra.mxu0 0.0
        %695 = vmatprep.subr.mxu0 0.0
        %696 = vmatpush1.msra.mxu0 0.0
        %697 = vmatprep.subr.mxu0 0.0
        %698 = vmatpush1.msra.mxu0 0.0
        %699 = vmatprep.subr.mxu0 0.0
        %700 = vmatpush1.msra.mxu0 0.0
        %701 = vmatprep.subr.mxu0 0.0
        %702 = vmatpush1.msra.mxu0 0.0
        %703 = vmatprep.subr.mxu0 0.0
        %704 = vmatpush1.msra.mxu0 0.0
        %705 = vmatprep.subr.mxu0 0.0
        %706 = vmatpush1.msra.mxu0 0.0
        %707 = vmatprep.subr.mxu0 0.0
        %708 = vmatpush1.msra.mxu0 0.0
        %709 = vmatprep.subr.mxu0 0.0
        %710 = vmatpush1.msra.mxu0 0.0
        %711 = vmatprep.subr.mxu0 0.0
        %712 = vmatpush1.msra.mxu0 0.0
        %713 = vmatprep.subr.mxu0 0.0
        %714 = vmatpush1.msra.mxu0 0.0
        %715 = vmatprep.subr.mxu0 0.0
        %716 = vmatpush1.msra.mxu0 0.0
        %717 = vmatprep.subr.mxu0 0.0
        %718 = vmatpush1.msra.mxu0 0.0
        %719 = vmatprep.subr.mxu0 0.0
        %720 = vmatpush1.msra.mxu0 0.0
        %721 = vmatprep.subr.mxu0 0.0
        %722 = vmatpush1.msra.mxu0 0.0
        %723 = vmatprep.subr.mxu0 0.0
        %724 = vmatpush1.msra.mxu0 0.0
        %725 = vmatprep.subr.mxu0 0.0
        %726 = vmatpush1.msra.mxu0 0.0
        %727 = vmatprep.subr.mxu0 0.0
        %728 = vmatpush1.msra.mxu0 0.0
        %729 = vmatprep.subr.mxu0 0.0
        %730 = vmatpush1.msra.mxu0 0.0
        %731 = vmatprep.subr.mxu0 0.0
        %732 = vmatpush1.msra.mxu0 0.0
        %733 = vmatprep.subr.mxu0 0.0
        %734 = vmatpush1.msra.mxu0 0.0
        %735 = vmatprep.subr.mxu0 0.0
        %736 = vmatpush1.msra.mxu0 0.0
        %737 = vmatprep.subr.mxu0 0.0
        %738 = vmatpush1.msra.mxu0 0.0
        %739 = vmatprep.subr.mxu0 0.0
        %740 = vmatpush1.msra.mxu0 0.0
        %741 = vmatprep.mubr.f32.mxu0 0.0
        %742 = vmatmul.mubr.f32.gmra.mrb[0].mxu0 %v675
        %v743 = vpop.f32.mrb[0].mxu0
        %v744 = vadd.f32 0.0, %v743
        %v745 = vpop.f32.mrb[0].mxu0
        %746 = vdwg.mxu0
        %v747 = vld [vmem:[#allocation4] sm:$0xff]
        %v748 = vld [vmem:[#allocation4 + $0x8] sm:$0xff]
        %v749 = vld [vmem:[#allocation4 + $0x10] sm:$0xff]
        %v750 = vld [vmem:[#allocation4 + $0x18] sm:$0xff]
        %751 = vmatprep.subr.mxu0 0.0
        %752 = vmatpush1.msra.mxu0 %v747
        %753 = vmatprep.subr.mxu0 0.0
        %754 = vmatpush1.msra.mxu0 %v748
        %755 = vmatprep.subr.mxu0 0.0
        %756 = vmatpush1.msra.mxu0 %v749
        %757 = vmatprep.subr.mxu0 0.0
        %758 = vmatpush1.msra.mxu0 %v750
        %759 = vmatprep.subr.mxu0 0.0
        %760 = vmatpush1.msra.mxu0 0.0
        %761 = vmatprep.subr.mxu0 0.0
        %762 = vmatpush1.msra.mxu0 0.0
        %763 = vmatprep.subr.mxu0 0.0
        %764 = vmatpush1.msra.mxu0 0.0
        %765 = vmatprep.subr.mxu0 0.0
        %766 = vmatpush1.msra.mxu0 0.0
        %767 = vmatprep.subr.mxu0 0.0
        %768 = vmatpush1.msra.mxu0 0.0
        %769 = vmatprep.subr.mxu0 0.0
        %770 = vmatpush1.msra.mxu0 0.0
        %771 = vmatprep.subr.mxu0 0.0
        %772 = vmatpush1.msra.mxu0 0.0
        %773 = vmatprep.subr.mxu0 0.0
        %774 = vmatpush1.msra.mxu0 0.0
        %775 = vmatprep.subr.mxu0 0.0
        %776 = vmatpush1.msra.mxu0 0.0
        %777 = vmatprep.subr.mxu0 0.0
        %778 = vmatpush1.msra.mxu0 0.0
        %779 = vmatprep.subr.mxu0 0.0
        %780 = vmatpush1.msra.mxu0 0.0
        %781 = vmatprep.subr.mxu0 0.0
        %782 = vmatpush1.msra.mxu0 0.0
        %783 = vmatprep.subr.mxu0 0.0
        %784 = vmatpush1.msra.mxu0 0.0
        %785 = vmatprep.subr.mxu0 0.0
        %786 = vmatpush1.msra.mxu0 0.0
        %787 = vmatprep.subr.mxu0 0.0
        %788 = vmatpush1.msra.mxu0 0.0
        %789 = vmatprep.subr.mxu0 0.0
        %790 = vmatpush1.msra.mxu0 0.0
        %791 = vmatprep.subr.mxu0 0.0
        %792 = vmatpush1.msra.mxu0 0.0
        %793 = vmatprep.subr.mxu0 0.0
        %794 = vmatpush1.msra.mxu0 0.0
        %795 = vmatprep.subr.mxu0 0.0
        %796 = vmatpush1.msra.mxu0 0.0
        %797 = vmatprep.subr.mxu0 0.0
        %798 = vmatpush1.msra.mxu0 0.0
        %799 = vmatprep.subr.mxu0 0.0
        %800 = vmatpush1.msra.mxu0 0.0
        %801 = vmatprep.subr.mxu0 0.0
        %802 = vmatpush1.msra.mxu0 0.0
        %803 = vmatprep.subr.mxu0 0.0
        %804 = vmatpush1.msra.mxu0 0.0
        %805 = vmatprep.subr.mxu0 0.0
        %806 = vmatpush1.msra.mxu0 0.0
        %807 = vmatprep.subr.mxu0 0.0
        %808 = vmatpush1.msra.mxu0 0.0
        %809 = vmatprep.subr.mxu0 0.0
        %810 = vmatpush1.msra.mxu0 0.0
        %811 = vmatprep.subr.mxu0 0.0
        %812 = vmatpush1.msra.mxu0 0.0
        %813 = vmatprep.subr.mxu0 0.0
        %814 = vmatpush1.msra.mxu0 0.0
        %815 = vmatprep.mubr.f32.mxu0 0.0
        %816 = vmatmul.mubr.f32.gmra.mrb[0].mxu0 %v675
        %v817 = vpop.f32.mrb[0].mxu0
        %v818 = vadd.f32 0.0, %v817
        %v819 = vpop.f32.mrb[0].mxu0
        %820 = vdwg.mxu0
        %v821 = vld [vmem:[#allocation6] sm:$0xff]
        %v822 = vld [vmem:[#allocation6 + $0x8] sm:$0xff]
        %v823 = vld [vmem:[#allocation6 + $0x10] sm:$0xff]
        %v824 = vld [vmem:[#allocation6 + $0x18] sm:$0xff]
        %825 = vmatprep.subr.mxu0 0.0
        %826 = vmatpush1.msra.mxu0 %v821
        %827 = vmatprep.subr.mxu0 0.0
        %828 = vmatpush1.msra.mxu0 %v822
        %829 = vmatprep.subr.mxu0 0.0
        %830 = vmatpush1.msra.mxu0 %v823
        %831 = vmatprep.subr.mxu0 0.0
        %832 = vmatpush1.msra.mxu0 %v824
        %833 = vmatprep.subr.mxu0 0.0
        %834 = vmatpush1.msra.mxu0 0.0
        %835 = vmatprep.subr.mxu0 0.0
        %836 = vmatpush1.msra.mxu0 0.0
        %837 = vmatprep.subr.mxu0 0.0
        %838 = vmatpush1.msra.mxu0 0.0
        %839 = vmatprep.subr.mxu0 0.0
        %840 = vmatpush1.msra.mxu0 0.0
        %841 = vmatprep.subr.mxu0 0.0
        %842 = vmatpush1.msra.mxu0 0.0
        %843 = vmatprep.subr.mxu0 0.0
        %844 = vmatpush1.msra.mxu0 0.0
        %845 = vmatprep.subr.mxu0 0.0
        %846 = vmatpush1.msra.mxu0 0.0
        %847 = vmatprep.subr.mxu0 0.0
        %848 = vmatpush1.msra.mxu0 0.0
        %849 = vmatprep.subr.mxu0 0.0
        %850 = vmatpush1.msra.mxu0 0.0
        %851 = vmatprep.subr.mxu0 0.0
        %852 = vmatpush1.msra.mxu0 0.0
        %853 = vmatprep.subr.mxu0 0.0
        %854 = vmatpush1.msra.mxu0 0.0
        %855 = vmatprep.subr.mxu0 0.0
        %856 = vmatpush1.msra.mxu0 0.0
        %857 = vmatprep.subr.mxu0 0.0
        %858 = vmatpush1.msra.mxu0 0.0
        %859 = vmatprep.subr.mxu0 0.0
        %860 = vmatpush1.msra.mxu0 0.0
        %861 = vmatprep.subr.mxu0 0.0
        %862 = vmatpush1.msra.mxu0 0.0
        %863 = vmatprep.subr.mxu0 0.0
        %864 = vmatpush1.msra.mxu0 0.0
        %865 = vmatprep.subr.mxu0 0.0
        %866 = vmatpush1.msra.mxu0 0.0
        %867 = vmatprep.subr.mxu0 0.0
        %868 = vmatpush1.msra.mxu0 0.0
        %869 = vmatprep.subr.mxu0 0.0
        %870 = vmatpush1.msra.mxu0 0.0
        %871 = vmatprep.subr.mxu0 0.0
        %872 = vmatpush1.msra.mxu0 0.0
        %873 = vmatprep.subr.mxu0 0.0
        %874 = vmatpush1.msra.mxu0 0.0
        %875 = vmatprep.subr.mxu0 0.0
        %876 = vmatpush1.msra.mxu0 0.0
        %877 = vmatprep.subr.mxu0 0.0
        %878 = vmatpush1.msra.mxu0 0.0
        %879 = vmatprep.subr.mxu0 0.0
        %880 = vmatpush1.msra.mxu0 0.0
        %881 = vmatprep.subr.mxu0 0.0
        %882 = vmatpush1.msra.mxu0 0.0
        %883 = vmatprep.subr.mxu0 0.0
        %884 = vmatpush1.msra.mxu0 0.0
        %885 = vmatprep.subr.mxu0 0.0
        %886 = vmatpush1.msra.mxu0 0.0
        %887 = vmatprep.subr.mxu0 0.0
        %888 = vmatpush1.msra.mxu0 0.0
        %889 = vmatprep.mubr.f32.mxu0 0.0
        %890 = vmatmul.mubr.f32.gmra.mrb[0].mxu0 %v675
        %v891 = vpop.f32.mrb[0].mxu0
        %v892 = vadd.f32 0.0, %v891
        %v893 = vpop.f32.mrb[0].mxu0
        %894 = vdwg.mxu0
        %v895 = vld [vmem:[%s5] sm:$0xff]
        %v896 = vld [vmem:[%s5 + $0x8] sm:$0xff]
        %v897 = vld [vmem:[%s5 + $0x10] sm:$0xff]
        %v898 = vld [vmem:[%s5 + $0x18] sm:$0xff]
        %v900 = vsel %vm673, %v633, 0
        %902 = vmatprep.subr.mxu0 0.0
        %903 = vmatpush1.msra.mxu0 %v895
        %904 = vmatprep.subr.mxu0 0.0
        %905 = vmatpush1.msra.mxu0 %v896
        %906 = vmatprep.subr.mxu0 0.0
        %907 = vmatpush1.msra.mxu0 %v897
        %908 = vmatprep.subr.mxu0 0.0
        %909 = vmatpush1.msra.mxu0 %v898
        %910 = vmatprep.subr.mxu0 0.0
        %911 = vmatpush1.msra.mxu0 0.0
        %912 = vmatprep.subr.mxu0 0.0
        %913 = vmatpush1.msra.mxu0 0.0
        %914 = vmatprep.subr.mxu0 0.0
        %915 = vmatpush1.msra.mxu0 0.0
        %916 = vmatprep.subr.mxu0 0.0
        %917 = vmatpush1.msra.mxu0 0.0
        %918 = vmatprep.subr.mxu0 0.0
        %919 = vmatpush1.msra.mxu0 0.0
        %920 = vmatprep.subr.mxu0 0.0
        %921 = vmatpush1.msra.mxu0 0.0
        %922 = vmatprep.subr.mxu0 0.0
        %923 = vmatpush1.msra.mxu0 0.0
        %924 = vmatprep.subr.mxu0 0.0
        %925 = vmatpush1.msra.mxu0 0.0
        %926 = vmatprep.subr.mxu0 0.0
        %927 = vmatpush1.msra.mxu0 0.0
        %928 = vmatprep.subr.mxu0 0.0
        %929 = vmatpush1.msra.mxu0 0.0
        %930 = vmatprep.subr.mxu0 0.0
        %931 = vmatpush1.msra.mxu0 0.0
        %932 = vmatprep.subr.mxu0 0.0
        %933 = vmatpush1.msra.mxu0 0.0
        %934 = vmatprep.subr.mxu0 0.0
        %935 = vmatpush1.msra.mxu0 0.0
        %936 = vmatprep.subr.mxu0 0.0
        %937 = vmatpush1.msra.mxu0 0.0
        %938 = vmatprep.subr.mxu0 0.0
        %939 = vmatpush1.msra.mxu0 0.0
        %940 = vmatprep.subr.mxu0 0.0
        %941 = vmatpush1.msra.mxu0 0.0
        %942 = vmatprep.subr.mxu0 0.0
        %943 = vmatpush1.msra.mxu0 0.0
        %944 = vmatprep.subr.mxu0 0.0
        %945 = vmatpush1.msra.mxu0 0.0
        %946 = vmatprep.subr.mxu0 0.0
        %947 = vmatpush1.msra.mxu0 0.0
        %948 = vmatprep.subr.mxu0 0.0
        %949 = vmatpush1.msra.mxu0 0.0
        %950 = vmatprep.subr.mxu0 0.0
        %951 = vmatpush1.msra.mxu0 0.0
        %952 = vmatprep.subr.mxu0 0.0
        %953 = vmatpush1.msra.mxu0 0.0
        %954 = vmatprep.subr.mxu0 0.0
        %955 = vmatpush1.msra.mxu0 0.0
        %956 = vmatprep.subr.mxu0 0.0
        %957 = vmatpush1.msra.mxu0 0.0
        %958 = vmatprep.subr.mxu0 0.0
        %959 = vmatpush1.msra.mxu0 0.0
        %960 = vmatprep.subr.mxu0 0.0
        %961 = vmatpush1.msra.mxu0 0.0
        %962 = vmatprep.subr.mxu0 0.0
        %963 = vmatpush1.msra.mxu0 0.0
        %964 = vmatprep.subr.mxu0 0.0
        %965 = vmatpush1.msra.mxu0 0.0
        %966 = vmatprep.mubr.f32.mxu0 0.0
        %967 = vmatmul.mubr.f32.gmra.mrb[0].mxu0 %v900
        %v968 = vpop.f32.mrb[0].mxu0
        %v969 = vadd.f32 0.0, %v968
        %v970 = vpop.f32.mrb[0].mxu0
        %971 = vdwg.mxu0
        %v972 = vld [vmem:[%s7] sm:$0x1]
        %v973 = vld [vmem:[%s8] sm:$0x1]
        %v975 = vlaneseq
        %v976 = vshrl.u32 %v975, 7
        %v977 = vsub.s32 0, %v976
        %v978 = vrot.slane %v972, %v977
        %v980 = vadd.f32 %v744, %v978
        %v982 = vlaneseq
        %v983 = vshrl.u32 %v982, 7
        %v984 = vsub.s32 0, %v983
        %v985 = vrot.slane %v973, %v984
        %v987 = vadd.f32 %v744, %v985
        %vm988 = vcmask 64512
        %v990 = vsel %vm988, %v987, 0
        %v993 = vsel %vm988, %v969, 0
        %995 = vmatprep.subr.mxu0 0.0
        %996 = vmatpush1.xpose.msra.mxu0 %v993
        %997 = vmatprep.subr.mxu0 0.0
        %998 = vmatpush1.xpose.msra.mxu0 0.0
        %999 = vmatprep.subr.mxu0 0.0
        %1000 = vmatpush1.xpose.msra.mxu0 0.0
        %1001 = vmatprep.subr.mxu0 0.0
        %1002 = vmatpush1.xpose.msra.mxu0 0.0
        %1003 = vmatprep.subr.mxu0 0.0
        %1004 = vmatpush1.xpose.msra.mxu0 0.0
        %1005 = vmatprep.subr.mxu0 0.0
        %1006 = vmatpush1.xpose.msra.mxu0 0.0
        %1007 = vmatprep.subr.mxu0 0.0
        %1008 = vmatpush1.xpose.msra.mxu0 0.0
        %1009 = vmatprep.subr.mxu0 0.0
        %1010 = vmatpush1.xpose.msra.mxu0 0.0
        %1011 = vmatprep.subr.mxu0 0.0
        %1012 = vmatpush1.xpose.msra.mxu0 0.0
        %1013 = vmatprep.subr.mxu0 0.0
        %1014 = vmatpush1.xpose.msra.mxu0 0.0
        %1015 = vmatprep.subr.mxu0 0.0
        %1016 = vmatpush1.xpose.msra.mxu0 0.0
        %1017 = vmatprep.subr.mxu0 0.0
        %1018 = vmatpush1.xpose.msra.mxu0 0.0
        %1019 = vmatprep.subr.mxu0 0.0
        %1020 = vmatpush1.xpose.msra.mxu0 0.0
        %1021 = vmatprep.subr.mxu0 0.0
        %1022 = vmatpush1.xpose.msra.mxu0 0.0
        %1023 = vmatprep.subr.mxu0 0.0
        %1024 = vmatpush1.xpose.msra.mxu0 0.0
        %1025 = vmatprep.subr.mxu0 0.0
        %1026 = vmatpush1.xpose.msra.mxu0 0.0
        %1027 = vmatprep.subr.mxu0 0.0
        %1028 = vmatpush1.xpose.msra.mxu0 0.0
        %1029 = vmatprep.subr.mxu0 0.0
        %1030 = vmatpush1.xpose.msra.mxu0 0.0
        %1031 = vmatprep.subr.mxu0 0.0
        %1032 = vmatpush1.xpose.msra.mxu0 0.0
        %1033 = vmatprep.subr.mxu0 0.0
        %1034 = vmatpush1.xpose.msra.mxu0 0.0
        %1035 = vmatprep.subr.mxu0 0.0
        %1036 = vmatpush1.xpose.msra.mxu0 0.0
        %1037 = vmatprep.subr.mxu0 0.0
        %1038 = vmatpush1.xpose.msra.mxu0 0.0
        %1039 = vmatprep.subr.mxu0 0.0
        %1040 = vmatpush1.xpose.msra.mxu0 0.0
        %1041 = vmatprep.subr.mxu0 0.0
        %1042 = vmatpush1.xpose.msra.mxu0 0.0
        %1043 = vmatprep.subr.mxu0 0.0
        %1044 = vmatpush1.xpose.msra.mxu0 0.0
        %1045 = vmatprep.subr.mxu0 0.0
        %1046 = vmatpush1.xpose.msra.mxu0 0.0
        %1047 = vmatprep.subr.mxu0 0.0
        %1048 = vmatpush1.xpose.msra.mxu0 0.0
        %1049 = vmatprep.subr.mxu0 0.0
        %1050 = vmatpush1.xpose.msra.mxu0 0.0
        %1051 = vmatprep.subr.mxu0 0.0
        %1052 = vmatpush1.xpose.msra.mxu0 0.0
        %1053 = vmatprep.subr.mxu0 0.0
        %1054 = vmatpush1.xpose.msra.mxu0 0.0
        %1055 = vmatprep.subr.mxu0 0.0
        %1056 = vmatpush1.xpose.msra.mxu0 0.0
        %1057 = vmatprep.subr.mxu0 0.0
        %1058 = vmatpush1.xpose.msra.mxu0 0.0
        %1059 = vmatprep.mubr.f32.mxu0 0.0
        %1060 = vmatmul.mubr.f32.gmra.mrb[0].mxu0 %v990
        %v1061 = vpop.f32.mrb[0].mxu0
        %v1062 = vadd.f32 0.0, %v1061
        %v1063 = vpop.f32.mrb[0].mxu0
        %1064 = vdwg.mxu0
        %v1066 = vsel %vm988, %v1062, 0
        %1068 = vmatprep.subr.mxu0 0.0
        %1069 = vmatpush1.msra.mxu0 %v646
        %1070 = vmatprep.subr.mxu0 0.0
        %1071 = vmatpush1.msra.mxu0 0.0
        %1072 = vmatprep.subr.mxu0 0.0
        %1073 = vmatpush1.msra.mxu0 0.0
        %1074 = vmatprep.subr.mxu0 0.0
        %1075 = vmatpush1.msra.mxu0 0.0
        %1076 = vmatprep.subr.mxu0 0.0
        %1077 = vmatpush1.msra.mxu0 0.0
        %1078 = vmatprep.subr.mxu0 0.0
        %1079 = vmatpush1.msra.mxu0 0.0
        %1080 = vmatprep.subr.mxu0 0.0
        %1081 = vmatpush1.msra.mxu0 0.0
        %1082 = vmatprep.subr.mxu0 0.0
        %1083 = vmatpush1.msra.mxu0 0.0
        %1084 = vmatprep.subr.mxu0 0.0
        %1085 = vmatpush1.msra.mxu0 0.0
        %1086 = vmatprep.subr.mxu0 0.0
        %1087 = vmatpush1.msra.mxu0 0.0
        %1088 = vmatprep.subr.mxu0 0.0
        %1089 = vmatpush1.msra.mxu0 0.0
        %1090 = vmatprep.subr.mxu0 0.0
        %1091 = vmatpush1.msra.mxu0 0.0
        %1092 = vmatprep.subr.mxu0 0.0
        %1093 = vmatpush1.msra.mxu0 0.0
        %1094 = vmatprep.subr.mxu0 0.0
        %1095 = vmatpush1.msra.mxu0 0.0
        %1096 = vmatprep.subr.mxu0 0.0
        %1097 = vmatpush1.msra.mxu0 0.0
        %1098 = vmatprep.subr.mxu0 0.0
        %1099 = vmatpush1.msra.mxu0 0.0
        %1100 = vmatprep.subr.mxu0 0.0
        %1101 = vmatpush1.msra.mxu0 0.0
        %1102 = vmatprep.subr.mxu0 0.0
        %1103 = vmatpush1.msra.mxu0 0.0
        %1104 = vmatprep.subr.mxu0 0.0
        %1105 = vmatpush1.msra.mxu0 0.0
        %1106 = vmatprep.subr.mxu0 0.0
        %1107 = vmatpush1.msra.mxu0 0.0
        %1108 = vmatprep.subr.mxu0 0.0
        %1109 = vmatpush1.msra.mxu0 0.0
        %1110 = vmatprep.subr.mxu0 0.0
        %1111 = vmatpush1.msra.mxu0 0.0
        %1112 = vmatprep.subr.mxu0 0.0
        %1113 = vmatpush1.msra.mxu0 0.0
        %1114 = vmatprep.subr.mxu0 0.0
        %1115 = vmatpush1.msra.mxu0 0.0
        %1116 = vmatprep.subr.mxu0 0.0
        %1117 = vmatpush1.msra.mxu0 0.0
        %1118 = vmatprep.subr.mxu0 0.0
        %1119 = vmatpush1.msra.mxu0 0.0
        %1120 = vmatprep.subr.mxu0 0.0
        %1121 = vmatpush1.msra.mxu0 0.0
        %1122 = vmatprep.subr.mxu0 0.0
        %1123 = vmatpush1.msra.mxu0 0.0
        %1124 = vmatprep.subr.mxu0 0.0
        %1125 = vmatpush1.msra.mxu0 0.0
        %1126 = vmatprep.subr.mxu0 0.0
        %1127 = vmatpush1.msra.mxu0 0.0
        %1128 = vmatprep.subr.mxu0 0.0
        %1129 = vmatpush1.msra.mxu0 0.0
        %1130 = vmatprep.subr.mxu0 0.0
        %1131 = vmatpush1.msra.mxu0 0.0
        %1132 = vmatprep.mubr.f32.mxu0 0.0
        %1133 = vmatmul.mubr.f32.gmra.mrb[0].mxu0 %v1066
        %v1134 = vpop.f32.mrb[0].mxu0
        %v1135 = vadd.f32 0.0, %v1134
        %v1136 = vpop.f32.mrb[0].mxu0
        %1137 = vdwg.mxu0
        %v1138 = vsel %vm648, 1, 0
        %vm1139 = vcmp.eq.s32.totalorder %v1138, 1
        %v1140 = vsel %vm1139, %v1135, %v1062
        %v1142 = vsel %vm988, %v1140, 0
        %1144 = vmatprep.subr.mxu0 0.0
        %1145 = vmatpush1.msra.mxu0 %v655
        %1146 = vmatprep.subr.mxu0 0.0
        %1147 = vmatpush1.msra.mxu0 0.0
        %1148 = vmatprep.subr.mxu0 0.0
        %1149 = vmatpush1.msra.mxu0 0.0
        %1150 = vmatprep.subr.mxu0 0.0
        %1151 = vmatpush1.msra.mxu0 0.0
        %1152 = vmatprep.subr.mxu0 0.0
        %1153 = vmatpush1.msra.mxu0 0.0
        %1154 = vmatprep.subr.mxu0 0.0
        %1155 = vmatpush1.msra.mxu0 0.0
        %1156 = vmatprep.subr.mxu0 0.0
        %1157 = vmatpush1.msra.mxu0 0.0
        %1158 = vmatprep.subr.mxu0 0.0
        %1159 = vmatpush1.msra.mxu0 0.0
        %1160 = vmatprep.subr.mxu0 0.0
        %1161 = vmatpush1.msra.mxu0 0.0
        %1162 = vmatprep.subr.mxu0 0.0
        %1163 = vmatpush1.msra.mxu0 0.0
        %1164 = vmatprep.subr.mxu0 0.0
        %1165 = vmatpush1.msra.mxu0 0.0
        %1166 = vmatprep.subr.mxu0 0.0
        %1167 = vmatpush1.msra.mxu0 0.0
        %1168 = vmatprep.subr.mxu0 0.0
        %1169 = vmatpush1.msra.mxu0 0.0
        %1170 = vmatprep.subr.mxu0 0.0
        %1171 = vmatpush1.msra.mxu0 0.0
        %1172 = vmatprep.subr.mxu0 0.0
        %1173 = vmatpush1.msra.mxu0 0.0
        %1174 = vmatprep.subr.mxu0 0.0
        %1175 = vmatpush1.msra.mxu0 0.0
        %1176 = vmatprep.subr.mxu0 0.0
        %1177 = vmatpush1.msra.mxu0 0.0
        %1178 = vmatprep.subr.mxu0 0.0
        %1179 = vmatpush1.msra.mxu0 0.0
        %1180 = vmatprep.subr.mxu0 0.0
        %1181 = vmatpush1.msra.mxu0 0.0
        %1182 = vmatprep.subr.mxu0 0.0
        %1183 = vmatpush1.msra.mxu0 0.0
        %1184 = vmatprep.subr.mxu0 0.0
        %1185 = vmatpush1.msra.mxu0 0.0
        %1186 = vmatprep.subr.mxu0 0.0
        %1187 = vmatpush1.msra.mxu0 0.0
        %1188 = vmatprep.subr.mxu0 0.0
        %1189 = vmatpush1.msra.mxu0 0.0
        %1190 = vmatprep.subr.mxu0 0.0
        %1191 = vmatpush1.msra.mxu0 0.0
        %1192 = vmatprep.subr.mxu0 0.0
        %1193 = vmatpush1.msra.mxu0 0.0
        %1194 = vmatprep.subr.mxu0 0.0
        %1195 = vmatpush1.msra.mxu0 0.0
        %1196 = vmatprep.subr.mxu0 0.0
        %1197 = vmatpush1.msra.mxu0 0.0
        %1198 = vmatprep.subr.mxu0 0.0
        %1199 = vmatpush1.msra.mxu0 0.0
        %1200 = vmatprep.subr.mxu0 0.0
        %1201 = vmatpush1.msra.mxu0 0.0
        %1202 = vmatprep.subr.mxu0 0.0
        %1203 = vmatpush1.msra.mxu0 0.0
        %1204 = vmatprep.subr.mxu0 0.0
        %1205 = vmatpush1.msra.mxu0 0.0
        %1206 = vmatprep.subr.mxu0 0.0
        %1207 = vmatpush1.msra.mxu0 0.0
        %1208 = vmatprep.mubr.f32.mxu0 0.0
        %1209 = vmatmul.mubr.f32.gmra.mrb[0].mxu0 %v1142
        %v1210 = vpop.f32.mrb[0].mxu0
        %v1211 = vadd.f32 0.0, %v1210
        %v1212 = vpop.f32.mrb[0].mxu0
        %1213 = vdwg.mxu0
        %v1214 = vsel %vm658, 1, 0
        %vm1215 = vcmp.eq.s32.totalorder %v1214, 1
        %v1216 = vsel %vm1215, %v1211, %v1140
        %v1218 = vsel %vm988, %v1216, 0
        %1220 = vmatprep.subr.mxu0 0.0
        %1221 = vmatpush1.msra.mxu0 %v665
        %1222 = vmatprep.subr.mxu0 0.0
        %1223 = vmatpush1.msra.mxu0 0.0
        %1224 = vmatprep.subr.mxu0 0.0
        %1225 = vmatpush1.msra.mxu0 0.0
        %1226 = vmatprep.subr.mxu0 0.0
        %1227 = vmatpush1.msra.mxu0 0.0
        %1228 = vmatprep.subr.mxu0 0.0
        %1229 = vmatpush1.msra.mxu0 0.0
        %1230 = vmatprep.subr.mxu0 0.0
        %1231 = vmatpush1.msra.mxu0 0.0
        %1232 = vmatprep.subr.mxu0 0.0
        %1233 = vmatpush1.msra.mxu0 0.0
        %1234 = vmatprep.subr.mxu0 0.0
        %1235 = vmatpush1.msra.mxu0 0.0
        %1236 = vmatprep.subr.mxu0 0.0
        %1237 = vmatpush1.msra.mxu0 0.0
        %1238 = vmatprep.subr.mxu0 0.0
        %1239 = vmatpush1.msra.mxu0 0.0
        %1240 = vmatprep.subr.mxu0 0.0
        %1241 = vmatpush1.msra.mxu0 0.0
        %1242 = vmatprep.subr.mxu0 0.0
        %1243 = vmatpush1.msra.mxu0 0.0
        %1244 = vmatprep.subr.mxu0 0.0
        %1245 = vmatpush1.msra.mxu0 0.0
        %1246 = vmatprep.subr.mxu0 0.0
        %1247 = vmatpush1.msra.mxu0 0.0
        %1248 = vmatprep.subr.mxu0 0.0
        %1249 = vmatpush1.msra.mxu0 0.0
        %1250 = vmatprep.subr.mxu0 0.0
        %1251 = vmatpush1.msra.mxu0 0.0
        %1252 = vmatprep.subr.mxu0 0.0
        %1253 = vmatpush1.msra.mxu0 0.0
        %1254 = vmatprep.subr.mxu0 0.0
        %1255 = vmatpush1.msra.mxu0 0.0
        %1256 = vmatprep.subr.mxu0 0.0
        %1257 = vmatpush1.msra.mxu0 0.0
        %1258 = vmatprep.subr.mxu0 0.0
        %1259 = vmatpush1.msra.mxu0 0.0
        %1260 = vmatprep.subr.mxu0 0.0
        %1261 = vmatpush1.msra.mxu0 0.0
        %1262 = vmatprep.subr.mxu0 0.0
        %1263 = vmatpush1.msra.mxu0 0.0
        %1264 = vmatprep.subr.mxu0 0.0
        %1265 = vmatpush1.msra.mxu0 0.0
        %1266 = vmatprep.subr.mxu0 0.0
        %1267 = vmatpush1.msra.mxu0 0.0
        %1268 = vmatprep.subr.mxu0 0.0
        %1269 = vmatpush1.msra.mxu0 0.0
        %1270 = vmatprep.subr.mxu0 0.0
        %1271 = vmatpush1.msra.mxu0 0.0
        %1272 = vmatprep.subr.mxu0 0.0
        %1273 = vmatpush1.msra.mxu0 0.0
        %1274 = vmatprep.subr.mxu0 0.0
        %1275 = vmatpush1.msra.mxu0 0.0
        %1276 = vmatprep.subr.mxu0 0.0
        %1277 = vmatpush1.msra.mxu0 0.0
        %1278 = vmatprep.subr.mxu0 0.0
        %1279 = vmatpush1.msra.mxu0 0.0
        %1280 = vmatprep.subr.mxu0 0.0
        %1281 = vmatpush1.msra.mxu0 0.0
        %1282 = vmatprep.subr.mxu0 0.0
        %1283 = vmatpush1.msra.mxu0 0.0
        %1284 = vmatprep.mubr.f32.mxu0 0.0
        %1285 = vmatmul.mubr.f32.gmra.mrb[0].mxu0 %v1218
        %v1286 = vpop.f32.mrb[0].mxu0
        %v1287 = vadd.f32 0.0, %v1286
        %v1288 = vpop.f32.mrb[0].mxu0
        %1289 = vdwg.mxu0
        %v1290 = vsel %vm668, 1, 0
        %vm1291 = vcmp.eq.s32.totalorder %v1290, 1
        %v1292 = vsel %vm1291, %v1287, %v1216
        %v1294 = vsel %vm988, %v980, 0
        %v1297 = vsel %vm988, %v818, 0
        %1299 = vmatprep.subr.mxu0 0.0
        %1300 = vmatpush1.xpose.msra.mxu0 %v1297
        %1301 = vmatprep.subr.mxu0 0.0
        %1302 = vmatpush1.xpose.msra.mxu0 0.0
        %1303 = vmatprep.subr.mxu0 0.0
        %1304 = vmatpush1.xpose.msra.mxu0 0.0
        %1305 = vmatprep.subr.mxu0 0.0
        %1306 = vmatpush1.xpose.msra.mxu0 0.0
        %1307 = vmatprep.subr.mxu0 0.0
        %1308 = vmatpush1.xpose.msra.mxu0 0.0
        %1309 = vmatprep.subr.mxu0 0.0
        %1310 = vmatpush1.xpose.msra.mxu0 0.0
        %1311 = vmatprep.subr.mxu0 0.0
        %1312 = vmatpush1.xpose.msra.mxu0 0.0
        %1313 = vmatprep.subr.mxu0 0.0
        %1314 = vmatpush1.xpose.msra.mxu0 0.0
        %1315 = vmatprep.subr.mxu0 0.0
        %1316 = vmatpush1.xpose.msra.mxu0 0.0
        %1317 = vmatprep.subr.mxu0 0.0
        %1318 = vmatpush1.xpose.msra.mxu0 0.0
        %1319 = vmatprep.subr.mxu0 0.0
        %1320 = vmatpush1.xpose.msra.mxu0 0.0
        %1321 = vmatprep.subr.mxu0 0.0
        %1322 = vmatpush1.xpose.msra.mxu0 0.0
        %1323 = vmatprep.subr.mxu0 0.0
        %1324 = vmatpush1.xpose.msra.mxu0 0.0
        %1325 = vmatprep.subr.mxu0 0.0
        %1326 = vmatpush1.xpose.msra.mxu0 0.0
        %1327 = vmatprep.subr.mxu0 0.0
        %1328 = vmatpush1.xpose.msra.mxu0 0.0
        %1329 = vmatprep.subr.mxu0 0.0
        %1330 = vmatpush1.xpose.msra.mxu0 0.0
        %1331 = vmatprep.subr.mxu0 0.0
        %1332 = vmatpush1.xpose.msra.mxu0 0.0
        %1333 = vmatprep.subr.mxu0 0.0
        %1334 = vmatpush1.xpose.msra.mxu0 0.0
        %1335 = vmatprep.subr.mxu0 0.0
        %1336 = vmatpush1.xpose.msra.mxu0 0.0
        %1337 = vmatprep.subr.mxu0 0.0
        %1338 = vmatpush1.xpose.msra.mxu0 0.0
        %1339 = vmatprep.subr.mxu0 0.0
        %1340 = vmatpush1.xpose.msra.mxu0 0.0
        %1341 = vmatprep.subr.mxu0 0.0
        %1342 = vmatpush1.xpose.msra.mxu0 0.0
        %1343 = vmatprep.subr.mxu0 0.0
        %1344 = vmatpush1.xpose.msra.mxu0 0.0
        %1345 = vmatprep.subr.mxu0 0.0
        %1346 = vmatpush1.xpose.msra.mxu0 0.0
        %1347 = vmatprep.subr.mxu0 0.0
        %1348 = vmatpush1.xpose.msra.mxu0 0.0
        %1349 = vmatprep.subr.mxu0 0.0
        %1350 = vmatpush1.xpose.msra.mxu0 0.0
        %1351 = vmatprep.subr.mxu0 0.0
        %1352 = vmatpush1.xpose.msra.mxu0 0.0
        %1353 = vmatprep.subr.mxu0 0.0
        %1354 = vmatpush1.xpose.msra.mxu0 0.0
        %1355 = vmatprep.subr.mxu0 0.0
        %1356 = vmatpush1.xpose.msra.mxu0 0.0
        %1357 = vmatprep.subr.mxu0 0.0
        %1358 = vmatpush1.xpose.msra.mxu0 0.0
        %1359 = vmatprep.subr.mxu0 0.0
        %1360 = vmatpush1.xpose.msra.mxu0 0.0
        %1361 = vmatprep.subr.mxu0 0.0
        %1362 = vmatpush1.xpose.msra.mxu0 0.0
        %1363 = vmatprep.mubr.f32.mxu0 0.0
        %1364 = vmatmul.mubr.f32.gmra.mrb[0].mxu0 %v1294
        %v1365 = vpop.f32.mrb[0].mxu0
        %v1366 = vadd.f32 %v1292, %v1365
        %v1367 = vpop.f32.mrb[0].mxu0
        %1368 = vdwg.mxu0
        %v1369 = vmul.f32 %v1366, 0.35355338
        %v1370 = vsel %vm638, -1e+30, %v1369
        %v1371 = vsel %vm988, %v1370, -inf
        %1372 = vmax.xlane.f32.xlu0 %v1371
        %v1373 = vpop.xlane.xlu0 %1372
        %v1374 = vsub.f32 %v1370, %v1373
        %v1375 = vmul.f32 %v1374, 1.442695
        %v1376 = vpow.pop %v1375
        %v1377 = vsel %vm988, %v1376, 0.0
        %1378 = vadd.xlane.f32.xlu0 %v1377
        %v1379 = vpop.xlane.xlu0 %1378
        %v1380 = vrcp.pop %v1379
        %v1381 = vmul.f32 %v1376, %v1380
        %v1383 = vsel %vm988, %v1381, 0
        %1385 = vmatprep.subr.mxu0 0.0
        %1386 = vmatpush1.msra.mxu0 %v892
        %1387 = vmatprep.subr.mxu0 0.0
        %1388 = vmatpush1.msra.mxu0 0.0
        %1389 = vmatprep.subr.mxu0 0.0
        %1390 = vmatpush1.msra.mxu0 0.0
        %1391 = vmatprep.subr.mxu0 0.0
        %1392 = vmatpush1.msra.mxu0 0.0
        %1393 = vmatprep.subr.mxu0 0.0
        %1394 = vmatpush1.msra.mxu0 0.0
        %1395 = vmatprep.subr.mxu0 0.0
        %1396 = vmatpush1.msra.mxu0 0.0
        %1397 = vmatprep.subr.mxu0 0.0
        %1398 = vmatpush1.msra.mxu0 0.0
        %1399 = vmatprep.subr.mxu0 0.0
        %1400 = vmatpush1.msra.mxu0 0.0
        %1401 = vmatprep.subr.mxu0 0.0
        %1402 = vmatpush1.msra.mxu0 0.0
        %1403 = vmatprep.subr.mxu0 0.0
        %1404 = vmatpush1.msra.mxu0 0.0
        %1405 = vmatprep.subr.mxu0 0.0
        %1406 = vmatpush1.msra.mxu0 0.0
        %1407 = vmatprep.subr.mxu0 0.0
        %1408 = vmatpush1.msra.mxu0 0.0
        %1409 = vmatprep.subr.mxu0 0.0
        %1410 = vmatpush1.msra.mxu0 0.0
        %1411 = vmatprep.subr.mxu0 0.0
        %1412 = vmatpush1.msra.mxu0 0.0
        %1413 = vmatprep.subr.mxu0 0.0
        %1414 = vmatpush1.msra.mxu0 0.0
        %1415 = vmatprep.subr.mxu0 0.0
        %1416 = vmatpush1.msra.mxu0 0.0
        %1417 = vmatprep.subr.mxu0 0.0
        %1418 = vmatpush1.msra.mxu0 0.0
        %1419 = vmatprep.subr.mxu0 0.0
        %1420 = vmatpush1.msra.mxu0 0.0
        %1421 = vmatprep.subr.mxu0 0.0
        %1422 = vmatpush1.msra.mxu0 0.0
        %1423 = vmatprep.subr.mxu0 0.0
        %1424 = vmatpush1.msra.mxu0 0.0
        %1425 = vmatprep.subr.mxu0 0.0
        %1426 = vmatpush1.msra.mxu0 0.0
        %1427 = vmatprep.subr.mxu0 0.0
        %1428 = vmatpush1.msra.mxu0 0.0
        %1429 = vmatprep.subr.mxu0 0.0
        %1430 = vmatpush1.msra.mxu0 0.0
        %1431 = vmatprep.subr.mxu0 0.0
        %1432 = vmatpush1.msra.mxu0 0.0
        %1433 = vmatprep.subr.mxu0 0.0
        %1434 = vmatpush1.msra.mxu0 0.0
        %1435 = vmatprep.subr.mxu0 0.0
        %1436 = vmatpush1.msra.mxu0 0.0
        %1437 = vmatprep.subr.mxu0 0.0
        %1438 = vmatpush1.msra.mxu0 0.0
        %1439 = vmatprep.subr.mxu0 0.0
        %1440 = vmatpush1.msra.mxu0 0.0
        %1441 = vmatprep.subr.mxu0 0.0
        %1442 = vmatpush1.msra.mxu0 0.0
        %1443 = vmatprep.subr.mxu0 0.0
        %1444 = vmatpush1.msra.mxu0 0.0
        %1445 = vmatprep.subr.mxu0 0.0
        %1446 = vmatpush1.msra.mxu0 0.0
        %1447 = vmatprep.subr.mxu0 0.0
        %1448 = vmatpush1.msra.mxu0 0.0
        %1449 = vmatprep.mubr.f32.mxu0 0.0
        %1450 = vmatmul.mubr.f32.gmra.mrb[0].mxu0 %v1383
        %v1451 = vpop.f32.mrb[0].mxu0
        %v1452 = vadd.f32 0.0, %v1451
        %v1453 = vpop.f32.mrb[0].mxu0
        %1454 = vdwg.mxu0
        %v1455 = vld [vmem:[#allocation7] sm:$0xff]
        %s1456 = scalar_lea.vmem [#allocation2], 32
        %v1457 = vld [vmem:[%s1456] sm:$0xff]
        %v1458 = vld [vmem:[%s1456 + $0x8] sm:$0xff]
        %v1459 = vld [vmem:[%s1456 + $0x10] sm:$0xff]
        %v1460 = vld [vmem:[%s1456 + $0x18] sm:$0xff]
        %1461 = vmatprep.subr.mxu0 0.0
        %1462 = vmatpush1.msra.mxu0 %v1457
        %1463 = vmatprep.subr.mxu0 0.0
        %1464 = vmatpush1.msra.mxu0 %v1458
        %1465 = vmatprep.subr.mxu0 0.0
        %1466 = vmatpush1.msra.mxu0 %v1459
        %1467 = vmatprep.subr.mxu0 0.0
        %1468 = vmatpush1.msra.mxu0 %v1460
        %1469 = vmatprep.subr.mxu0 0.0
        %1470 = vmatpush1.msra.mxu0 0.0
        %1471 = vmatprep.subr.mxu0 0.0
        %1472 = vmatpush1.msra.mxu0 0.0
        %1473 = vmatprep.subr.mxu0 0.0
        %1474 = vmatpush1.msra.mxu0 0.0
        %1475 = vmatprep.subr.mxu0 0.0
        %1476 = vmatpush1.msra.mxu0 0.0
        %1477 = vmatprep.subr.mxu0 0.0
        %1478 = vmatpush1.msra.mxu0 0.0
        %1479 = vmatprep.subr.mxu0 0.0
        %1480 = vmatpush1.msra.mxu0 0.0
        %1481 = vmatprep.subr.mxu0 0.0
        %1482 = vmatpush1.msra.mxu0 0.0
        %1483 = vmatprep.subr.mxu0 0.0
        %1484 = vmatpush1.msra.mxu0 0.0
        %1485 = vmatprep.subr.mxu0 0.0
        %1486 = vmatpush1.msra.mxu0 0.0
        %1487 = vmatprep.subr.mxu0 0.0
        %1488 = vmatpush1.msra.mxu0 0.0
        %1489 = vmatprep.subr.mxu0 0.0
        %1490 = vmatpush1.msra.mxu0 0.0
        %1491 = vmatprep.subr.mxu0 0.0
        %1492 = vmatpush1.msra.mxu0 0.0
        %1493 = vmatprep.subr.mxu0 0.0
        %1494 = vmatpush1.msra.mxu0 0.0
        %1495 = vmatprep.subr.mxu0 0.0
        %1496 = vmatpush1.msra.mxu0 0.0
        %1497 = vmatprep.subr.mxu0 0.0
        %1498 = vmatpush1.msra.mxu0 0.0
        %1499 = vmatprep.subr.mxu0 0.0
        %1500 = vmatpush1.msra.mxu0 0.0
        %1501 = vmatprep.subr.mxu0 0.0
        %1502 = vmatpush1.msra.mxu0 0.0
        %1503 = vmatprep.subr.mxu0 0.0
        %1504 = vmatpush1.msra.mxu0 0.0
        %1505 = vmatprep.subr.mxu0 0.0
        %1506 = vmatpush1.msra.mxu0 0.0
        %1507 = vmatprep.subr.mxu0 0.0
        %1508 = vmatpush1.msra.mxu0 0.0
        %1509 = vmatprep.subr.mxu0 0.0
        %1510 = vmatpush1.msra.mxu0 0.0
        %1511 = vmatprep.subr.mxu0 0.0
        %1512 = vmatpush1.msra.mxu0 0.0
        %1513 = vmatprep.subr.mxu0 0.0
        %1514 = vmatpush1.msra.mxu0 0.0
        %1515 = vmatprep.subr.mxu0 0.0
        %1516 = vmatpush1.msra.mxu0 0.0
        %1517 = vmatprep.subr.mxu0 0.0
        %1518 = vmatpush1.msra.mxu0 0.0
        %1519 = vmatprep.subr.mxu0 0.0
        %1520 = vmatpush1.msra.mxu0 0.0
        %1521 = vmatprep.subr.mxu0 0.0
        %1522 = vmatpush1.msra.mxu0 0.0
        %1523 = vmatprep.subr.mxu0 0.0
        %1524 = vmatpush1.msra.mxu0 0.0
        %1525 = vmatprep.mubr.f32.mxu0 0.0
        %1526 = vmatmul.mubr.f32.gmra.mrb[0].mxu0 %v675
        %v1527 = vpop.f32.mrb[0].mxu0
        %v1528 = vadd.f32 0.0, %v1527
        %v1529 = vpop.f32.mrb[0].mxu0
        %1530 = vdwg.mxu0
        %s1531 = scalar_lea.vmem [#allocation4], 32
        %v1532 = vld [vmem:[%s1531] sm:$0xff]
        %v1533 = vld [vmem:[%s1531 + $0x8] sm:$0xff]
        %v1534 = vld [vmem:[%s1531 + $0x10] sm:$0xff]
        %v1535 = vld [vmem:[%s1531 + $0x18] sm:$0xff]
        %1536 = vmatprep.subr.mxu0 0.0
        %1537 = vmatpush1.msra.mxu0 %v1532
        %1538 = vmatprep.subr.mxu0 0.0
        %1539 = vmatpush1.msra.mxu0 %v1533
        %1540 = vmatprep.subr.mxu0 0.0
        %1541 = vmatpush1.msra.mxu0 %v1534
        %1542 = vmatprep.subr.mxu0 0.0
        %1543 = vmatpush1.msra.mxu0 %v1535
        %1544 = vmatprep.subr.mxu0 0.0
        %1545 = vmatpush1.msra.mxu0 0.0
        %1546 = vmatprep.subr.mxu0 0.0
        %1547 = vmatpush1.msra.mxu0 0.0
        %1548 = vmatprep.subr.mxu0 0.0
        %1549 = vmatpush1.msra.mxu0 0.0
        %1550 = vmatprep.subr.mxu0 0.0
        %1551 = vmatpush1.msra.mxu0 0.0
        %1552 = vmatprep.subr.mxu0 0.0
        %1553 = vmatpush1.msra.mxu0 0.0
        %1554 = vmatprep.subr.mxu0 0.0
        %1555 = vmatpush1.msra.mxu0 0.0
        %1556 = vmatprep.subr.mxu0 0.0
        %1557 = vmatpush1.msra.mxu0 0.0
        %1558 = vmatprep.subr.mxu0 0.0
        %1559 = vmatpush1.msra.mxu0 0.0
        %1560 = vmatprep.subr.mxu0 0.0
        %1561 = vmatpush1.msra.mxu0 0.0
        %1562 = vmatprep.subr.mxu0 0.0
        %1563 = vmatpush1.msra.mxu0 0.0
        %1564 = vmatprep.subr.mxu0 0.0
        %1565 = vmatpush1.msra.mxu0 0.0
        %1566 = vmatprep.subr.mxu0 0.0
        %1567 = vmatpush1.msra.mxu0 0.0
        %1568 = vmatprep.subr.mxu0 0.0
        %1569 = vmatpush1.msra.mxu0 0.0
        %1570 = vmatprep.subr.mxu0 0.0
        %1571 = vmatpush1.msra.mxu0 0.0
        %1572 = vmatprep.subr.mxu0 0.0
        %1573 = vmatpush1.msra.mxu0 0.0
        %1574 = vmatprep.subr.mxu0 0.0
        %1575 = vmatpush1.msra.mxu0 0.0
        %1576 = vmatprep.subr.mxu0 0.0
        %1577 = vmatpush1.msra.mxu0 0.0
        %1578 = vmatprep.subr.mxu0 0.0
        %1579 = vmatpush1.msra.mxu0 0.0
        %1580 = vmatprep.subr.mxu0 0.0
        %1581 = vmatpush1.msra.mxu0 0.0
        %1582 = vmatprep.subr.mxu0 0.0
        %1583 = vmatpush1.msra.mxu0 0.0
        %1584 = vmatprep.subr.mxu0 0.0
        %1585 = vmatpush1.msra.mxu0 0.0
        %1586 = vmatprep.subr.mxu0 0.0
        %1587 = vmatpush1.msra.mxu0 0.0
        %1588 = vmatprep.subr.mxu0 0.0
        %1589 = vmatpush1.msra.mxu0 0.0
        %1590 = vmatprep.subr.mxu0 0.0
        %1591 = vmatpush1.msra.mxu0 0.0
        %1592 = vmatprep.subr.mxu0 0.0
        %1593 = vmatpush1.msra.mxu0 0.0
        %1594 = vmatprep.subr.mxu0 0.0
        %1595 = vmatpush1.msra.mxu0 0.0
        %1596 = vmatprep.subr.mxu0 0.0
        %1597 = vmatpush1.msra.mxu0 0.0
        %1598 = vmatprep.subr.mxu0 0.0
        %1599 = vmatpush1.msra.mxu0 0.0
        %1600 = vmatprep.mubr.f32.mxu0 0.0
        %1601 = vmatmul.mubr.f32.gmra.mrb[0].mxu0 %v675
        %v1602 = vpop.f32.mrb[0].mxu0
        %v1603 = vadd.f32 0.0, %v1602
        %v1604 = vpop.f32.mrb[0].mxu0
        %1605 = vdwg.mxu0
        %s1606 = scalar_lea.vmem [#allocation6], 32
        %v1607 = vld [vmem:[%s1606] sm:$0xff]
        %v1608 = vld [vmem:[%s1606 + $0x8] sm:$0xff]
        %v1609 = vld [vmem:[%s1606 + $0x10] sm:$0xff]
        %v1610 = vld [vmem:[%s1606 + $0x18] sm:$0xff]
        %1611 = vmatprep.subr.mxu0 0.0
        %1612 = vmatpush1.msra.mxu0 %v1607
        %1613 = vmatprep.subr.mxu0 0.0
        %1614 = vmatpush1.msra.mxu0 %v1608
        %1615 = vmatprep.subr.mxu0 0.0
        %1616 = vmatpush1.msra.mxu0 %v1609
        %1617 = vmatprep.subr.mxu0 0.0
        %1618 = vmatpush1.msra.mxu0 %v1610
        %1619 = vmatprep.subr.mxu0 0.0
        %1620 = vmatpush1.msra.mxu0 0.0
        %1621 = vmatprep.subr.mxu0 0.0
        %1622 = vmatpush1.msra.mxu0 0.0
        %1623 = vmatprep.subr.mxu0 0.0
        %1624 = vmatpush1.msra.mxu0 0.0
        %1625 = vmatprep.subr.mxu0 0.0
        %1626 = vmatpush1.msra.mxu0 0.0
        %1627 = vmatprep.subr.mxu0 0.0
        %1628 = vmatpush1.msra.mxu0 0.0
        %1629 = vmatprep.subr.mxu0 0.0
        %1630 = vmatpush1.msra.mxu0 0.0
        %1631 = vmatprep.subr.mxu0 0.0
        %1632 = vmatpush1.msra.mxu0 0.0
        %1633 = vmatprep.subr.mxu0 0.0
        %1634 = vmatpush1.msra.mxu0 0.0
        %1635 = vmatprep.subr.mxu0 0.0
        %1636 = vmatpush1.msra.mxu0 0.0
        %1637 = vmatprep.subr.mxu0 0.0
        %1638 = vmatpush1.msra.mxu0 0.0
        %1639 = vmatprep.subr.mxu0 0.0
        %1640 = vmatpush1.msra.mxu0 0.0
        %1641 = vmatprep.subr.mxu0 0.0
        %1642 = vmatpush1.msra.mxu0 0.0
        %1643 = vmatprep.subr.mxu0 0.0
        %1644 = vmatpush1.msra.mxu0 0.0
        %1645 = vmatprep.subr.mxu0 0.0
        %1646 = vmatpush1.msra.mxu0 0.0
        %1647 = vmatprep.subr.mxu0 0.0
        %1648 = vmatpush1.msra.mxu0 0.0
        %1649 = vmatprep.subr.mxu0 0.0
        %1650 = vmatpush1.msra.mxu0 0.0
        %1651 = vmatprep.subr.mxu0 0.0
        %1652 = vmatpush1.msra.mxu0 0.0
        %1653 = vmatprep.subr.mxu0 0.0
        %1654 = vmatpush1.msra.mxu0 0.0
        %1655 = vmatprep.subr.mxu0 0.0
        %1656 = vmatpush1.msra.mxu0 0.0
        %1657 = vmatprep.subr.mxu0 0.0
        %1658 = vmatpush1.msra.mxu0 0.0
        %1659 = vmatprep.subr.mxu0 0.0
        %1660 = vmatpush1.msra.mxu0 0.0
        %1661 = vmatprep.subr.mxu0 0.0
        %1662 = vmatpush1.msra.mxu0 0.0
        %1663 = vmatprep.subr.mxu0 0.0
        %1664 = vmatpush1.msra.mxu0 0.0
        %1665 = vmatprep.subr.mxu0 0.0
        %1666 = vmatpush1.msra.mxu0 0.0
        %1667 = vmatprep.subr.mxu0 0.0
        %1668 = vmatpush1.msra.mxu0 0.0
        %1669 = vmatprep.subr.mxu0 0.0
        %1670 = vmatpush1.msra.mxu0 0.0
        %1671 = vmatprep.subr.mxu0 0.0
        %1672 = vmatpush1.msra.mxu0 0.0
        %1673 = vmatprep.subr.mxu0 0.0
        %1674 = vmatpush1.msra.mxu0 0.0
        %1675 = vmatprep.mubr.f32.mxu0 0.0
        %1676 = vmatmul.mubr.f32.gmra.mrb[0].mxu0 %v675
        %v1677 = vpop.f32.mrb[0].mxu0
        %v1678 = vadd.f32 0.0, %v1677
        %v1679 = vpop.f32.mrb[0].mxu0
        %1680 = vdwg.mxu0
        %s1681 = scalar_lea.vmem %s5, 32
        %v1682 = vld [vmem:[%s1681] sm:$0xff]
        %v1683 = vld [vmem:[%s1681 + $0x8] sm:$0xff]
        %v1684 = vld [vmem:[%s1681 + $0x10] sm:$0xff]
        %v1685 = vld [vmem:[%s1681 + $0x18] sm:$0xff]
        %1686 = vmatprep.subr.mxu0 0.0
        %1687 = vmatpush1.msra.mxu0 %v1682
        %1688 = vmatprep.subr.mxu0 0.0
        %1689 = vmatpush1.msra.mxu0 %v1683
        %1690 = vmatprep.subr.mxu0 0.0
        %1691 = vmatpush1.msra.mxu0 %v1684
        %1692 = vmatprep.subr.mxu0 0.0
        %1693 = vmatpush1.msra.mxu0 %v1685
        %1694 = vmatprep.subr.mxu0 0.0
        %1695 = vmatpush1.msra.mxu0 0.0
        %1696 = vmatprep.subr.mxu0 0.0
        %1697 = vmatpush1.msra.mxu0 0.0
        %1698 = vmatprep.subr.mxu0 0.0
        %1699 = vmatpush1.msra.mxu0 0.0
        %1700 = vmatprep.subr.mxu0 0.0
        %1701 = vmatpush1.msra.mxu0 0.0
        %1702 = vmatprep.subr.mxu0 0.0
        %1703 = vmatpush1.msra.mxu0 0.0
        %1704 = vmatprep.subr.mxu0 0.0
        %1705 = vmatpush1.msra.mxu0 0.0
        %1706 = vmatprep.subr.mxu0 0.0
        %1707 = vmatpush1.msra.mxu0 0.0
        %1708 = vmatprep.subr.mxu0 0.0
        %1709 = vmatpush1.msra.mxu0 0.0
        %1710 = vmatprep.subr.mxu0 0.0
        %1711 = vmatpush1.msra.mxu0 0.0
        %1712 = vmatprep.subr.mxu0 0.0
        %1713 = vmatpush1.msra.mxu0 0.0
        %1714 = vmatprep.subr.mxu0 0.0
        %1715 = vmatpush1.msra.mxu0 0.0
        %1716 = vmatprep.subr.mxu0 0.0
        %1717 = vmatpush1.msra.mxu0 0.0
        %1718 = vmatprep.subr.mxu0 0.0
        %1719 = vmatpush1.msra.mxu0 0.0
        %1720 = vmatprep.subr.mxu0 0.0
        %1721 = vmatpush1.msra.mxu0 0.0
        %1722 = vmatprep.subr.mxu0 0.0
        %1723 = vmatpush1.msra.mxu0 0.0
        %1724 = vmatprep.subr.mxu0 0.0
        %1725 = vmatpush1.msra.mxu0 0.0
        %1726 = vmatprep.subr.mxu0 0.0
        %1727 = vmatpush1.msra.mxu0 0.0
        %1728 = vmatprep.subr.mxu0 0.0
        %1729 = vmatpush1.msra.mxu0 0.0
        %1730 = vmatprep.subr.mxu0 0.0
        %1731 = vmatpush1.msra.mxu0 0.0
        %1732 = vmatprep.subr.mxu0 0.0
        %1733 = vmatpush1.msra.mxu0 0.0
        %1734 = vmatprep.subr.mxu0 0.0
        %1735 = vmatpush1.msra.mxu0 0.0
        %1736 = vmatprep.subr.mxu0 0.0
        %1737 = vmatpush1.msra.mxu0 0.0
        %1738 = vmatprep.subr.mxu0 0.0
        %1739 = vmatpush1.msra.mxu0 0.0
        %1740 = vmatprep.subr.mxu0 0.0
        %1741 = vmatpush1.msra.mxu0 0.0
        %1742 = vmatprep.subr.mxu0 0.0
        %1743 = vmatpush1.msra.mxu0 0.0
        %1744 = vmatprep.subr.mxu0 0.0
        %1745 = vmatpush1.msra.mxu0 0.0
        %1746 = vmatprep.subr.mxu0 0.0
        %1747 = vmatpush1.msra.mxu0 0.0
        %1748 = vmatprep.subr.mxu0 0.0
        %1749 = vmatpush1.msra.mxu0 0.0
        %1750 = vmatprep.mubr.f32.mxu0 0.0
        %1751 = vmatmul.mubr.f32.gmra.mrb[0].mxu0 %v900
        %v1752 = vpop.f32.mrb[0].mxu0
        %v1753 = vadd.f32 0.0, %v1752
        %v1754 = vpop.f32.mrb[0].mxu0
        %1755 = vdwg.mxu0
        %s1756 = scalar_lea.vmem %s7, 1
        %v1757 = vld [vmem:[%s1756] sm:$0x1]
        %s1758 = scalar_lea.vmem %s8, 1
        %v1759 = vld [vmem:[%s1758] sm:$0x1]
        %v1761 = vlaneseq
        %v1762 = vshrl.u32 %v1761, 7
        %v1763 = vsub.s32 0, %v1762
        %v1764 = vrot.slane %v1757, %v1763
        %v1766 = vadd.f32 %v1528, %v1764
        %v1768 = vlaneseq
        %v1769 = vshrl.u32 %v1768, 7
        %v1770 = vsub.s32 0, %v1769
        %v1771 = vrot.slane %v1759, %v1770
        %v1773 = vadd.f32 %v1528, %v1771
        %v1775 = vsel %vm988, %v1773, 0
        %v1778 = vsel %vm988, %v1753, 0
        %1780 = vmatprep.subr.mxu0 0.0
        %1781 = vmatpush1.xpose.msra.mxu0 %v1778
        %1782 = vmatprep.subr.mxu0 0.0
        %1783 = vmatpush1.xpose.msra.mxu0 0.0
        %1784 = vmatprep.subr.mxu0 0.0
        %1785 = vmatpush1.xpose.msra.mxu0 0.0
        %1786 = vmatprep.subr.mxu0 0.0
        %1787 = vmatpush1.xpose.msra.mxu0 0.0
        %1788 = vmatprep.subr.mxu0 0.0
        %1789 = vmatpush1.xpose.msra.mxu0 0.0
        %1790 = vmatprep.subr.mxu0 0.0
        %1791 = vmatpush1.xpose.msra.mxu0 0.0
        %1792 = vmatprep.subr.mxu0 0.0
        %1793 = vmatpush1.xpose.msra.mxu0 0.0
        %1794 = vmatprep.subr.mxu0 0.0
        %1795 = vmatpush1.xpose.msra.mxu0 0.0
        %1796 = vmatprep.subr.mxu0 0.0
        %1797 = vmatpush1.xpose.msra.mxu0 0.0
        %1798 = vmatprep.subr.mxu0 0.0
        %1799 = vmatpush1.xpose.msra.mxu0 0.0
        %1800 = vmatprep.subr.mxu0 0.0
        %1801 = vmatpush1.xpose.msra.mxu0 0.0
        %1802 = vmatprep.subr.mxu0 0.0
        %1803 = vmatpush1.xpose.msra.mxu0 0.0
        %1804 = vmatprep.subr.mxu0 0.0
        %1805 = vmatpush1.xpose.msra.mxu0 0.0
        %1806 = vmatprep.subr.mxu0 0.0
        %1807 = vmatpush1.xpose.msra.mxu0 0.0
        %1808 = vmatprep.subr.mxu0 0.0
        %1809 = vmatpush1.xpose.msra.mxu0 0.0
        %1810 = vmatprep.subr.mxu0 0.0
        %1811 = vmatpush1.xpose.msra.mxu0 0.0
        %1812 = vmatprep.subr.mxu0 0.0
        %1813 = vmatpush1.xpose.msra.mxu0 0.0
        %1814 = vmatprep.subr.mxu0 0.0
        %1815 = vmatpush1.xpose.msra.mxu0 0.0
        %1816 = vmatprep.subr.mxu0 0.0
        %1817 = vmatpush1.xpose.msra.mxu0 0.0
        %1818 = vmatprep.subr.mxu0 0.0
        %1819 = vmatpush1.xpose.msra.mxu0 0.0
        %1820 = vmatprep.subr.mxu0 0.0
        %1821 = vmatpush1.xpose.msra.mxu0 0.0
        %1822 = vmatprep.subr.mxu0 0.0
        %1823 = vmatpush1.xpose.msra.mxu0 0.0
        %1824 = vmatprep.subr.mxu0 0.0
        %1825 = vmatpush1.xpose.msra.mxu0 0.0
        %1826 = vmatprep.subr.mxu0 0.0
        %1827 = vmatpush1.xpose.msra.mxu0 0.0
        %1828 = vmatprep.subr.mxu0 0.0
        %1829 = vmatpush1.xpose.msra.mxu0 0.0
        %1830 = vmatprep.subr.mxu0 0.0
        %1831 = vmatpush1.xpose.msra.mxu0 0.0
        %1832 = vmatprep.subr.mxu0 0.0
        %1833 = vmatpush1.xpose.msra.mxu0 0.0
        %1834 = vmatprep.subr.mxu0 0.0
        %1835 = vmatpush1.xpose.msra.mxu0 0.0
        %1836 = vmatprep.subr.mxu0 0.0
        %1837 = vmatpush1.xpose.msra.mxu0 0.0
        %1838 = vmatprep.subr.mxu0 0.0
        %1839 = vmatpush1.xpose.msra.mxu0 0.0
        %1840 = vmatprep.subr.mxu0 0.0
        %1841 = vmatpush1.xpose.msra.mxu0 0.0
        %1842 = vmatprep.subr.mxu0 0.0
        %1843 = vmatpush1.xpose.msra.mxu0 0.0
        %1844 = vmatprep.mubr.f32.mxu0 0.0
        %1845 = vmatmul.mubr.f32.gmra.mrb[0].mxu0 %v1775
        %v1846 = vpop.f32.mrb[0].mxu0
        %v1847 = vadd.f32 0.0, %v1846
        %v1848 = vpop.f32.mrb[0].mxu0
        %1849 = vdwg.mxu0
        %v1851 = vsel %vm988, %v1847, 0
        %1853 = vmatprep.subr.mxu0 0.0
        %1854 = vmatpush1.msra.mxu0 %v646
        %1855 = vmatprep.subr.mxu0 0.0
        %1856 = vmatpush1.msra.mxu0 0.0
        %1857 = vmatprep.subr.mxu0 0.0
        %1858 = vmatpush1.msra.mxu0 0.0
        %1859 = vmatprep.subr.mxu0 0.0
        %1860 = vmatpush1.msra.mxu0 0.0
        %1861 = vmatprep.subr.mxu0 0.0
        %1862 = vmatpush1.msra.mxu0 0.0
        %1863 = vmatprep.subr.mxu0 0.0
        %1864 = vmatpush1.msra.mxu0 0.0
        %1865 = vmatprep.subr.mxu0 0.0
        %1866 = vmatpush1.msra.mxu0 0.0
        %1867 = vmatprep.subr.mxu0 0.0
        %1868 = vmatpush1.msra.mxu0 0.0
        %1869 = vmatprep.subr.mxu0 0.0
        %1870 = vmatpush1.msra.mxu0 0.0
        %1871 = vmatprep.subr.mxu0 0.0
        %1872 = vmatpush1.msra.mxu0 0.0
        %1873 = vmatprep.subr.mxu0 0.0
        %1874 = vmatpush1.msra.mxu0 0.0
        %1875 = vmatprep.subr.mxu0 0.0
        %1876 = vmatpush1.msra.mxu0 0.0
        %1877 = vmatprep.subr.mxu0 0.0
        %1878 = vmatpush1.msra.mxu0 0.0
        %1879 = vmatprep.subr.mxu0 0.0
        %1880 = vmatpush1.msra.mxu0 0.0
        %1881 = vmatprep.subr.mxu0 0.0
        %1882 = vmatpush1.msra.mxu0 0.0
        %1883 = vmatprep.subr.mxu0 0.0
        %1884 = vmatpush1.msra.mxu0 0.0
        %1885 = vmatprep.subr.mxu0 0.0
        %1886 = vmatpush1.msra.mxu0 0.0
        %1887 = vmatprep.subr.mxu0 0.0
        %1888 = vmatpush1.msra.mxu0 0.0
        %1889 = vmatprep.subr.mxu0 0.0
        %1890 = vmatpush1.msra.mxu0 0.0
        %1891 = vmatprep.subr.mxu0 0.0
        %1892 = vmatpush1.msra.mxu0 0.0
        %1893 = vmatprep.subr.mxu0 0.0
        %1894 = vmatpush1.msra.mxu0 0.0
        %1895 = vmatprep.subr.mxu0 0.0
        %1896 = vmatpush1.msra.mxu0 0.0
        %1897 = vmatprep.subr.mxu0 0.0
        %1898 = vmatpush1.msra.mxu0 0.0
        %1899 = vmatprep.subr.mxu0 0.0
        %1900 = vmatpush1.msra.mxu0 0.0
        %1901 = vmatprep.subr.mxu0 0.0
        %1902 = vmatpush1.msra.mxu0 0.0
        %1903 = vmatprep.subr.mxu0 0.0
        %1904 = vmatpush1.msra.mxu0 0.0
        %1905 = vmatprep.subr.mxu0 0.0
        %1906 = vmatpush1.msra.mxu0 0.0
        %1907 = vmatprep.subr.mxu0 0.0
        %1908 = vmatpush1.msra.mxu0 0.0
        %1909 = vmatprep.subr.mxu0 0.0
        %1910 = vmatpush1.msra.mxu0 0.0
        %1911 = vmatprep.subr.mxu0 0.0
        %1912 = vmatpush1.msra.mxu0 0.0
        %1913 = vmatprep.subr.mxu0 0.0
        %1914 = vmatpush1.msra.mxu0 0.0
        %1915 = vmatprep.subr.mxu0 0.0
        %1916 = vmatpush1.msra.mxu0 0.0
        %1917 = vmatprep.mubr.f32.mxu0 0.0
        %1918 = vmatmul.mubr.f32.gmra.mrb[0].mxu0 %v1851
        %v1919 = vpop.f32.mrb[0].mxu0
        %v1920 = vadd.f32 0.0, %v1919
        %v1921 = vpop.f32.mrb[0].mxu0
        %1922 = vdwg.mxu0
        %v1923 = vsel %vm1139, %v1920, %v1847
        %v1925 = vsel %vm988, %v1923, 0
        %1927 = vmatprep.subr.mxu0 0.0
        %1928 = vmatpush1.msra.mxu0 %v655
        %1929 = vmatprep.subr.mxu0 0.0
        %1930 = vmatpush1.msra.mxu0 0.0
        %1931 = vmatprep.subr.mxu0 0.0
        %1932 = vmatpush1.msra.mxu0 0.0
        %1933 = vmatprep.subr.mxu0 0.0
        %1934 = vmatpush1.msra.mxu0 0.0
        %1935 = vmatprep.subr.mxu0 0.0
        %1936 = vmatpush1.msra.mxu0 0.0
        %1937 = vmatprep.subr.mxu0 0.0
        %1938 = vmatpush1.msra.mxu0 0.0
        %1939 = vmatprep.subr.mxu0 0.0
        %1940 = vmatpush1.msra.mxu0 0.0
        %1941 = vmatprep.subr.mxu0 0.0
        %1942 = vmatpush1.msra.mxu0 0.0
        %1943 = vmatprep.subr.mxu0 0.0
        %1944 = vmatpush1.msra.mxu0 0.0
        %1945 = vmatprep.subr.mxu0 0.0
        %1946 = vmatpush1.msra.mxu0 0.0
        %1947 = vmatprep.subr.mxu0 0.0
        %1948 = vmatpush1.msra.mxu0 0.0
        %1949 = vmatprep.subr.mxu0 0.0
        %1950 = vmatpush1.msra.mxu0 0.0
        %1951 = vmatprep.subr.mxu0 0.0
        %1952 = vmatpush1.msra.mxu0 0.0
        %1953 = vmatprep.subr.mxu0 0.0
        %1954 = vmatpush1.msra.mxu0 0.0
        %1955 = vmatprep.subr.mxu0 0.0
        %1956 = vmatpush1.msra.mxu0 0.0
        %1957 = vmatprep.subr.mxu0 0.0
        %1958 = vmatpush1.msra.mxu0 0.0
        %1959 = vmatprep.subr.mxu0 0.0
        %1960 = vmatpush1.msra.mxu0 0.0
        %1961 = vmatprep.subr.mxu0 0.0
        %1962 = vmatpush1.msra.mxu0 0.0
        %1963 = vmatprep.subr.mxu0 0.0
        %1964 = vmatpush1.msra.mxu0 0.0
        %1965 = vmatprep.subr.mxu0 0.0
        %1966 = vmatpush1.msra.mxu0 0.0
        %1967 = vmatprep.subr.mxu0 0.0
        %1968 = vmatpush1.msra.mxu0 0.0
        %1969 = vmatprep.subr.mxu0 0.0
        %1970 = vmatpush1.msra.mxu0 0.0
        %1971 = vmatprep.subr.mxu0 0.0
        %1972 = vmatpush1.msra.mxu0 0.0
        %1973 = vmatprep.subr.mxu0 0.0
        %1974 = vmatpush1.msra.mxu0 0.0
        %1975 = vmatprep.subr.mxu0 0.0
        %1976 = vmatpush1.msra.mxu0 0.0
        %1977 = vmatprep.subr.mxu0 0.0
        %1978 = vmatpush1.msra.mxu0 0.0
        %1979 = vmatprep.subr.mxu0 0.0
        %1980 = vmatpush1.msra.mxu0 0.0
        %1981 = vmatprep.subr.mxu0 0.0
        %1982 = vmatpush1.msra.mxu0 0.0
        %1983 = vmatprep.subr.mxu0 0.0
        %1984 = vmatpush1.msra.mxu0 0.0
        %1985 = vmatprep.subr.mxu0 0.0
        %1986 = vmatpush1.msra.mxu0 0.0
        %1987 = vmatprep.subr.mxu0 0.0
        %1988 = vmatpush1.msra.mxu0 0.0
        %1989 = vmatprep.subr.mxu0 0.0
        %1990 = vmatpush1.msra.mxu0 0.0
        %1991 = vmatprep.mubr.f32.mxu0 0.0
        %1992 = vmatmul.mubr.f32.gmra.mrb[0].mxu0 %v1925
        %v1993 = vpop.f32.mrb[0].mxu0
        %v1994 = vadd.f32 0.0, %v1993
        %v1995 = vpop.f32.mrb[0].mxu0
        %1996 = vdwg.mxu0
        %v1997 = vsel %vm1215, %v1994, %v1923
        %v1999 = vsel %vm988, %v1997, 0
        %2001 = vmatprep.subr.mxu0 0.0
        %2002 = vmatpush1.msra.mxu0 %v665
        %2003 = vmatprep.subr.mxu0 0.0
        %2004 = vmatpush1.msra.mxu0 0.0
        %2005 = vmatprep.subr.mxu0 0.0
        %2006 = vmatpush1.msra.mxu0 0.0
        %2007 = vmatprep.subr.mxu0 0.0
        %2008 = vmatpush1.msra.mxu0 0.0
        %2009 = vmatprep.subr.mxu0 0.0
        %2010 = vmatpush1.msra.mxu0 0.0
        %2011 = vmatprep.subr.mxu0 0.0
        %2012 = vmatpush1.msra.mxu0 0.0
        %2013 = vmatprep.subr.mxu0 0.0
        %2014 = vmatpush1.msra.mxu0 0.0
        %2015 = vmatprep.subr.mxu0 0.0
        %2016 = vmatpush1.msra.mxu0 0.0
        %2017 = vmatprep.subr.mxu0 0.0
        %2018 = vmatpush1.msra.mxu0 0.0
        %2019 = vmatprep.subr.mxu0 0.0
        %2020 = vmatpush1.msra.mxu0 0.0
        %2021 = vmatprep.subr.mxu0 0.0
        %2022 = vmatpush1.msra.mxu0 0.0
        %2023 = vmatprep.subr.mxu0 0.0
        %2024 = vmatpush1.msra.mxu0 0.0
        %2025 = vmatprep.subr.mxu0 0.0
        %2026 = vmatpush1.msra.mxu0 0.0
        %2027 = vmatprep.subr.mxu0 0.0
        %2028 = vmatpush1.msra.mxu0 0.0
        %2029 = vmatprep.subr.mxu0 0.0
        %2030 = vmatpush1.msra.mxu0 0.0
        %2031 = vmatprep.subr.mxu0 0.0
        %2032 = vmatpush1.msra.mxu0 0.0
        %2033 = vmatprep.subr.mxu0 0.0
        %2034 = vmatpush1.msra.mxu0 0.0
        %2035 = vmatprep.subr.mxu0 0.0
        %2036 = vmatpush1.msra.mxu0 0.0
        %2037 = vmatprep.subr.mxu0 0.0
        %2038 = vmatpush1.msra.mxu0 0.0
        %2039 = vmatprep.subr.mxu0 0.0
        %2040 = vmatpush1.msra.mxu0 0.0
        %2041 = vmatprep.subr.mxu0 0.0
        %2042 = vmatpush1.msra.mxu0 0.0
        %2043 = vmatprep.subr.mxu0 0.0
        %2044 = vmatpush1.msra.mxu0 0.0
        %2045 = vmatprep.subr.mxu0 0.0
        %2046 = vmatpush1.msra.mxu0 0.0
        %2047 = vmatprep.subr.mxu0 0.0
        %2048 = vmatpush1.msra.mxu0 0.0
        %2049 = vmatprep.subr.mxu0 0.0
        %2050 = vmatpush1.msra.mxu0 0.0
        %2051 = vmatprep.subr.mxu0 0.0
        %2052 = vmatpush1.msra.mxu0 0.0
        %2053 = vmatprep.subr.mxu0 0.0
        %2054 = vmatpush1.msra.mxu0 0.0
        %2055 = vmatprep.subr.mxu0 0.0
        %2056 = vmatpush1.msra.mxu0 0.0
        %2057 = vmatprep.subr.mxu0 0.0
        %2058 = vmatpush1.msra.mxu0 0.0
        %2059 = vmatprep.subr.mxu0 0.0
        %2060 = vmatpush1.msra.mxu0 0.0
        %2061 = vmatprep.subr.mxu0 0.0
        %2062 = vmatpush1.msra.mxu0 0.0
        %2063 = vmatprep.subr.mxu0 0.0
        %2064 = vmatpush1.msra.mxu0 0.0
        %2065 = vmatprep.mubr.f32.mxu0 0.0
        %2066 = vmatmul.mubr.f32.gmra.mrb[0].mxu0 %v1999
        %v2067 = vpop.f32.mrb[0].mxu0
        %v2068 = vadd.f32 0.0, %v2067
        %v2069 = vpop.f32.mrb[0].mxu0
        %2070 = vdwg.mxu0
        %v2071 = vsel %vm1291, %v2068, %v1997
        %v2073 = vsel %vm988, %v1766, 0
        %v2076 = vsel %vm988, %v1603, 0
        %2078 = vmatprep.subr.mxu0 0.0
        %2079 = vmatpush1.xpose.msra.mxu0 %v2076
        %2080 = vmatprep.subr.mxu0 0.0
        %2081 = vmatpush1.xpose.msra.mxu0 0.0
        %2082 = vmatprep.subr.mxu0 0.0
        %2083 = vmatpush1.xpose.msra.mxu0 0.0
        %2084 = vmatprep.subr.mxu0 0.0
        %2085 = vmatpush1.xpose.msra.mxu0 0.0
        %2086 = vmatprep.subr.mxu0 0.0
        %2087 = vmatpush1.xpose.msra.mxu0 0.0
        %2088 = vmatprep.subr.mxu0 0.0
        %2089 = vmatpush1.xpose.msra.mxu0 0.0
        %2090 = vmatprep.subr.mxu0 0.0
        %2091 = vmatpush1.xpose.msra.mxu0 0.0
        %2092 = vmatprep.subr.mxu0 0.0
        %2093 = vmatpush1.xpose.msra.mxu0 0.0
        %2094 = vmatprep.subr.mxu0 0.0
        %2095 = vmatpush1.xpose.msra.mxu0 0.0
        %2096 = vmatprep.subr.mxu0 0.0
        %2097 = vmatpush1.xpose.msra.mxu0 0.0
        %2098 = vmatprep.subr.mxu0 0.0
        %2099 = vmatpush1.xpose.msra.mxu0 0.0
        %2100 = vmatprep.subr.mxu0 0.0
        %2101 = vmatpush1.xpose.msra.mxu0 0.0
        %2102 = vmatprep.subr.mxu0 0.0
        %2103 = vmatpush1.xpose.msra.mxu0 0.0
        %2104 = vmatprep.subr.mxu0 0.0
        %2105 = vmatpush1.xpose.msra.mxu0 0.0
        %2106 = vmatprep.subr.mxu0 0.0
        %2107 = vmatpush1.xpose.msra.mxu0 0.0
        %2108 = vmatprep.subr.mxu0 0.0
        %2109 = vmatpush1.xpose.msra.mxu0 0.0
        %2110 = vmatprep.subr.mxu0 0.0
        %2111 = vmatpush1.xpose.msra.mxu0 0.0
        %2112 = vmatprep.subr.mxu0 0.0
        %2113 = vmatpush1.xpose.msra.mxu0 0.0
        %2114 = vmatprep.subr.mxu0 0.0
        %2115 = vmatpush1.xpose.msra.mxu0 0.0
        %2116 = vmatprep.subr.mxu0 0.0
        %2117 = vmatpush1.xpose.msra.mxu0 0.0
        %2118 = vmatprep.subr.mxu0 0.0
        %2119 = vmatpush1.xpose.msra.mxu0 0.0
        %2120 = vmatprep.subr.mxu0 0.0
        %2121 = vmatpush1.xpose.msra.mxu0 0.0
        %2122 = vmatprep.subr.mxu0 0.0
        %2123 = vmatpush1.xpose.msra.mxu0 0.0
        %2124 = vmatprep.subr.mxu0 0.0
        %2125 = vmatpush1.xpose.msra.mxu0 0.0
        %2126 = vmatprep.subr.mxu0 0.0
        %2127 = vmatpush1.xpose.msra.mxu0 0.0
        %2128 = vmatprep.subr.mxu0 0.0
        %2129 = vmatpush1.xpose.msra.mxu0 0.0
        %2130 = vmatprep.subr.mxu0 0.0
        %2131 = vmatpush1.xpose.msra.mxu0 0.0
        %2132 = vmatprep.subr.mxu0 0.0
        %2133 = vmatpush1.xpose.msra.mxu0 0.0
        %2134 = vmatprep.subr.mxu0 0.0
        %2135 = vmatpush1.xpose.msra.mxu0 0.0
        %2136 = vmatprep.subr.mxu0 0.0
        %2137 = vmatpush1.xpose.msra.mxu0 0.0
        %2138 = vmatprep.subr.mxu0 0.0
        %2139 = vmatpush1.xpose.msra.mxu0 0.0
        %2140 = vmatprep.subr.mxu0 0.0
        %2141 = vmatpush1.xpose.msra.mxu0 0.0
        %2142 = vmatprep.mubr.f32.mxu0 0.0
        %2143 = vmatmul.mubr.f32.gmra.mrb[0].mxu0 %v2073
        %v2144 = vpop.f32.mrb[0].mxu0
        %v2145 = vadd.f32 %v2071, %v2144
        %v2146 = vpop.f32.mrb[0].mxu0
        %2147 = vdwg.mxu0
        %v2148 = vmul.f32 %v2145, 0.35355338
        %v2149 = vsel %vm638, -1e+30, %v2148
        %v2150 = vsel %vm988, %v2149, -inf
        %2151 = vmax.xlane.f32.xlu0 %v2150
        %v2152 = vpop.xlane.xlu0 %2151
        %v2153 = vsub.f32 %v2149, %v2152
        %v2154 = vmul.f32 %v2153, 1.442695
        %v2155 = vpow.pop %v2154
        %v2156 = vsel %vm988, %v2155, 0.0
        %2157 = vadd.xlane.f32.xlu0 %v2156
        %v2158 = vpop.xlane.xlu0 %2157
        %v2159 = vrcp.pop %v2158
        %v2160 = vmul.f32 %v2155, %v2159
        %v2162 = vsel %vm988, %v2160, 0
        %2164 = vmatprep.subr.mxu0 0.0
        %2165 = vmatpush1.msra.mxu0 %v1678
        %2166 = vmatprep.subr.mxu0 0.0
        %2167 = vmatpush1.msra.mxu0 0.0
        %2168 = vmatprep.subr.mxu0 0.0
        %2169 = vmatpush1.msra.mxu0 0.0
        %2170 = vmatprep.subr.mxu0 0.0
        %2171 = vmatpush1.msra.mxu0 0.0
        %2172 = vmatprep.subr.mxu0 0.0
        %2173 = vmatpush1.msra.mxu0 0.0
        %2174 = vmatprep.subr.mxu0 0.0
        %2175 = vmatpush1.msra.mxu0 0.0
        %2176 = vmatprep.subr.mxu0 0.0
        %2177 = vmatpush1.msra.mxu0 0.0
        %2178 = vmatprep.subr.mxu0 0.0
        %2179 = vmatpush1.msra.mxu0 0.0
        %2180 = vmatprep.subr.mxu0 0.0
        %2181 = vmatpush1.msra.mxu0 0.0
        %2182 = vmatprep.subr.mxu0 0.0
        %2183 = vmatpush1.msra.mxu0 0.0
        %2184 = vmatprep.subr.mxu0 0.0
        %2185 = vmatpush1.msra.mxu0 0.0
        %2186 = vmatprep.subr.mxu0 0.0
        %2187 = vmatpush1.msra.mxu0 0.0
        %2188 = vmatprep.subr.mxu0 0.0
        %2189 = vmatpush1.msra.mxu0 0.0
        %2190 = vmatprep.subr.mxu0 0.0
        %2191 = vmatpush1.msra.mxu0 0.0
        %2192 = vmatprep.subr.mxu0 0.0
        %2193 = vmatpush1.msra.mxu0 0.0
        %2194 = vmatprep.subr.mxu0 0.0
        %2195 = vmatpush1.msra.mxu0 0.0
        %2196 = vmatprep.subr.mxu0 0.0
        %2197 = vmatpush1.msra.mxu0 0.0
        %2198 = vmatprep.subr.mxu0 0.0
        %2199 = vmatpush1.msra.mxu0 0.0
        %2200 = vmatprep.subr.mxu0 0.0
        %2201 = vmatpush1.msra.mxu0 0.0
        %2202 = vmatprep.subr.mxu0 0.0
        %2203 = vmatpush1.msra.mxu0 0.0
        %2204 = vmatprep.subr.mxu0 0.0
        %2205 = vmatpush1.msra.mxu0 0.0
        %2206 = vmatprep.subr.mxu0 0.0
        %2207 = vmatpush1.msra.mxu0 0.0
        %2208 = vmatprep.subr.mxu0 0.0
        %2209 = vmatpush1.msra.mxu0 0.0
        %2210 = vmatprep.subr.mxu0 0.0
        %2211 = vmatpush1.msra.mxu0 0.0
        %2212 = vmatprep.subr.mxu0 0.0
        %2213 = vmatpush1.msra.mxu0 0.0
        %2214 = vmatprep.subr.mxu0 0.0
        %2215 = vmatpush1.msra.mxu0 0.0
        %2216 = vmatprep.subr.mxu0 0.0
        %2217 = vmatpush1.msra.mxu0 0.0
        %2218 = vmatprep.subr.mxu0 0.0
        %2219 = vmatpush1.msra.mxu0 0.0
        %2220 = vmatprep.subr.mxu0 0.0
        %2221 = vmatpush1.msra.mxu0 0.0
        %2222 = vmatprep.subr.mxu0 0.0
        %2223 = vmatpush1.msra.mxu0 0.0
        %2224 = vmatprep.subr.mxu0 0.0
        %2225 = vmatpush1.msra.mxu0 0.0
        %2226 = vmatprep.subr.mxu0 0.0
        %2227 = vmatpush1.msra.mxu0 0.0
        %2228 = vmatprep.mubr.f32.mxu0 0.0
        %2229 = vmatmul.mubr.f32.gmra.mrb[0].mxu0 %v2162
        %v2230 = vpop.f32.mrb[0].mxu0
        %v2231 = vadd.f32 0.0, %v2230
        %v2232 = vpop.f32.mrb[0].mxu0
        %2233 = vdwg.mxu0
        %s2234 = scalar_lea.vmem [#allocation7], 8
        %v2235 = vld [vmem:[%s2234] sm:$0xff]
        %v2237 = vsel %vm988, %v2231, 0
        %2239 = vmatprep.subr.mxu0 0.0
        %2240 = vmatpush1.msra.mxu0 %v2235
        %2241 = vmatprep.subr.mxu0 0.0
        %2242 = vmatpush1.msra.mxu0 0.0
        %2243 = vmatprep.subr.mxu0 0.0
        %2244 = vmatpush1.msra.mxu0 0.0
        %2245 = vmatprep.subr.mxu0 0.0
        %2246 = vmatpush1.msra.mxu0 0.0
        %2247 = vmatprep.subr.mxu0 0.0
        %2248 = vmatpush1.msra.mxu0 0.0
        %2249 = vmatprep.subr.mxu0 0.0
        %2250 = vmatpush1.msra.mxu0 0.0
        %2251 = vmatprep.subr.mxu0 0.0
        %2252 = vmatpush1.msra.mxu0 0.0
        %2253 = vmatprep.subr.mxu0 0.0
        %2254 = vmatpush1.msra.mxu0 0.0
        %2255 = vmatprep.subr.mxu0 0.0
        %2256 = vmatpush1.msra.mxu0 0.0
        %2257 = vmatprep.subr.mxu0 0.0
        %2258 = vmatpush1.msra.mxu0 0.0
        %2259 = vmatprep.subr.mxu0 0.0
        %2260 = vmatpush1.msra.mxu0 0.0
        %2261 = vmatprep.subr.mxu0 0.0
        %2262 = vmatpush1.msra.mxu0 0.0
        %2263 = vmatprep.subr.mxu0 0.0
        %2264 = vmatpush1.msra.mxu0 0.0
        %2265 = vmatprep.subr.mxu0 0.0
        %2266 = vmatpush1.msra.mxu0 0.0
        %2267 = vmatprep.subr.mxu0 0.0
        %2268 = vmatpush1.msra.mxu0 0.0
        %2269 = vmatprep.subr.mxu0 0.0
        %2270 = vmatpush1.msra.mxu0 0.0
        %2271 = vmatprep.subr.mxu0 0.0
        %2272 = vmatpush1.msra.mxu0 0.0
        %2273 = vmatprep.subr.mxu0 0.0
        %2274 = vmatpush1.msra.mxu0 0.0
        %2275 = vmatprep.subr.mxu0 0.0
        %2276 = vmatpush1.msra.mxu0 0.0
        %2277 = vmatprep.subr.mxu0 0.0
        %2278 = vmatpush1.msra.mxu0 0.0
        %2279 = vmatprep.subr.mxu0 0.0
        %2280 = vmatpush1.msra.mxu0 0.0
        %2281 = vmatprep.subr.mxu0 0.0
        %2282 = vmatpush1.msra.mxu0 0.0
        %2283 = vmatprep.subr.mxu0 0.0
        %2284 = vmatpush1.msra.mxu0 0.0
        %2285 = vmatprep.subr.mxu0 0.0
        %2286 = vmatpush1.msra.mxu0 0.0
        %2287 = vmatprep.subr.mxu0 0.0
        %2288 = vmatpush1.msra.mxu0 0.0
        %2289 = vmatprep.subr.mxu0 0.0
        %2290 = vmatpush1.msra.mxu0 0.0
        %2291 = vmatprep.subr.mxu0 0.0
        %2292 = vmatpush1.msra.mxu0 0.0
        %2293 = vmatprep.subr.mxu0 0.0
        %2294 = vmatpush1.msra.mxu0 0.0
        %2295 = vmatprep.subr.mxu0 0.0
        %2296 = vmatpush1.msra.mxu0 0.0
        %2297 = vmatprep.subr.mxu0 0.0
        %2298 = vmatpush1.msra.mxu0 0.0
        %2299 = vmatprep.subr.mxu0 0.0
        %2300 = vmatpush1.msra.mxu0 0.0
        %2301 = vmatprep.subr.mxu0 0.0
        %2302 = vmatpush1.msra.mxu0 0.0
        %2303 = vmatprep.mubr.f32.mxu0 0.0
        %2304 = vmatmul.mubr.f32.gmra.mrb[0].mxu0 %v2237
        %v2305 = vpop.f32.mrb[0].mxu0
        %v2306 = vadd.f32 0.0, %v2305
        %v2307 = vpop.f32.mrb[0].mxu0
        %2308 = vdwg.mxu0
        %v2310 = vsel %vm988, %v1452, 0
        %2312 = vmatprep.subr.mxu0 0.0
        %2313 = vmatpush1.msra.mxu0 %v1455
        %2314 = vmatprep.subr.mxu0 0.0
        %2315 = vmatpush1.msra.mxu0 0.0
        %2316 = vmatprep.subr.mxu0 0.0
        %2317 = vmatpush1.msra.mxu0 0.0
        %2318 = vmatprep.subr.mxu0 0.0
        %2319 = vmatpush1.msra.mxu0 0.0
        %2320 = vmatprep.subr.mxu0 0.0
        %2321 = vmatpush1.msra.mxu0 0.0
        %2322 = vmatprep.subr.mxu0 0.0
        %2323 = vmatpush1.msra.mxu0 0.0
        %2324 = vmatprep.subr.mxu0 0.0
        %2325 = vmatpush1.msra.mxu0 0.0
        %2326 = vmatprep.subr.mxu0 0.0
        %2327 = vmatpush1.msra.mxu0 0.0
        %2328 = vmatprep.subr.mxu0 0.0
        %2329 = vmatpush1.msra.mxu0 0.0
        %2330 = vmatprep.subr.mxu0 0.0
        %2331 = vmatpush1.msra.mxu0 0.0
        %2332 = vmatprep.subr.mxu0 0.0
        %2333 = vmatpush1.msra.mxu0 0.0
        %2334 = vmatprep.subr.mxu0 0.0
        %2335 = vmatpush1.msra.mxu0 0.0
        %2336 = vmatprep.subr.mxu0 0.0
        %2337 = vmatpush1.msra.mxu0 0.0
        %2338 = vmatprep.subr.mxu0 0.0
        %2339 = vmatpush1.msra.mxu0 0.0
        %2340 = vmatprep.subr.mxu0 0.0
        %2341 = vmatpush1.msra.mxu0 0.0
        %2342 = vmatprep.subr.mxu0 0.0
        %2343 = vmatpush1.msra.mxu0 0.0
        %2344 = vmatprep.subr.mxu0 0.0
        %2345 = vmatpush1.msra.mxu0 0.0
        %2346 = vmatprep.subr.mxu0 0.0
        %2347 = vmatpush1.msra.mxu0 0.0
        %2348 = vmatprep.subr.mxu0 0.0
        %2349 = vmatpush1.msra.mxu0 0.0
        %2350 = vmatprep.subr.mxu0 0.0
        %2351 = vmatpush1.msra.mxu0 0.0
        %2352 = vmatprep.subr.mxu0 0.0
        %2353 = vmatpush1.msra.mxu0 0.0
        %2354 = vmatprep.subr.mxu0 0.0
        %2355 = vmatpush1.msra.mxu0 0.0
        %2356 = vmatprep.subr.mxu0 0.0
        %2357 = vmatpush1.msra.mxu0 0.0
        %2358 = vmatprep.subr.mxu0 0.0
        %2359 = vmatpush1.msra.mxu0 0.0
        %2360 = vmatprep.subr.mxu0 0.0
        %2361 = vmatpush1.msra.mxu0 0.0
        %2362 = vmatprep.subr.mxu0 0.0
        %2363 = vmatpush1.msra.mxu0 0.0
        %2364 = vmatprep.subr.mxu0 0.0
        %2365 = vmatpush1.msra.mxu0 0.0
        %2366 = vmatprep.subr.mxu0 0.0
        %2367 = vmatpush1.msra.mxu0 0.0
        %2368 = vmatprep.subr.mxu0 0.0
        %2369 = vmatpush1.msra.mxu0 0.0
        %2370 = vmatprep.subr.mxu0 0.0
        %2371 = vmatpush1.msra.mxu0 0.0
        %2372 = vmatprep.subr.mxu0 0.0
        %2373 = vmatpush1.msra.mxu0 0.0
        %2374 = vmatprep.subr.mxu0 0.0
        %2375 = vmatpush1.msra.mxu0 0.0
        %2376 = vmatprep.mubr.f32.mxu0 0.0
        %2377 = vmatmul.mubr.f32.gmra.mrb[0].mxu0 %v2310
        %v2378 = vpop.f32.mrb[0].mxu0
        %v2379 = vadd.f32 %v2306, %v2378
        %v2380 = vpop.f32.mrb[0].mxu0
        %2381 = vdwg.mxu0
        %s2382 = scalar_lea.vmem [#allocation2], 64
        %v2383 = vld [vmem:[%s2382] sm:$0xff]
        %v2384 = vld [vmem:[%s2382 + $0x8] sm:$0xff]
        %v2385 = vld [vmem:[%s2382 + $0x10] sm:$0xff]
        %v2386 = vld [vmem:[%s2382 + $0x18] sm:$0xff]
        %2387 = vmatprep.subr.mxu0 0.0
        %2388 = vmatpush1.msra.mxu0 %v2383
        %2389 = vmatprep.subr.mxu0 0.0
        %2390 = vmatpush1.msra.mxu0 %v2384
        %2391 = vmatprep.subr.mxu0 0.0
        %2392 = vmatpush1.msra.mxu0 %v2385
        %2393 = vmatprep.subr.mxu0 0.0
        %2394 = vmatpush1.msra.mxu0 %v2386
        %2395 = vmatprep.subr.mxu0 0.0
        %2396 = vmatpush1.msra.mxu0 0.0
        %2397 = vmatprep.subr.mxu0 0.0
        %2398 = vmatpush1.msra.mxu0 0.0
        %2399 = vmatprep.subr.mxu0 0.0
        %2400 = vmatpush1.msra.mxu0 0.0
        %2401 = vmatprep.subr.mxu0 0.0
        %2402 = vmatpush1.msra.mxu0 0.0
        %2403 = vmatprep.subr.mxu0 0.0
        %2404 = vmatpush1.msra.mxu0 0.0
        %2405 = vmatprep.subr.mxu0 0.0
        %2406 = vmatpush1.msra.mxu0 0.0
        %2407 = vmatprep.subr.mxu0 0.0
        %2408 = vmatpush1.msra.mxu0 0.0
        %2409 = vmatprep.subr.mxu0 0.0
        %2410 = vmatpush1.msra.mxu0 0.0
        %2411 = vmatprep.subr.mxu0 0.0
        %2412 = vmatpush1.msra.mxu0 0.0
        %2413 = vmatprep.subr.mxu0 0.0
        %2414 = vmatpush1.msra.mxu0 0.0
        %2415 = vmatprep.subr.mxu0 0.0
        %2416 = vmatpush1.msra.mxu0 0.0
        %2417 = vmatprep.subr.mxu0 0.0
        %2418 = vmatpush1.msra.mxu0 0.0
        %2419 = vmatprep.subr.mxu0 0.0
        %2420 = vmatpush1.msra.mxu0 0.0
        %2421 = vmatprep.subr.mxu0 0.0
        %2422 = vmatpush1.msra.mxu0 0.0
        %2423 = vmatprep.subr.mxu0 0.0
        %2424 = vmatpush1.msra.mxu0 0.0
        %2425 = vmatprep.subr.mxu0 0.0
        %2426 = vmatpush1.msra.mxu0 0.0
        %2427 = vmatprep.subr.mxu0 0.0
        %2428 = vmatpush1.msra.mxu0 0.0
        %2429 = vmatprep.subr.mxu0 0.0
        %2430 = vmatpush1.msra.mxu0 0.0
        %2431 = vmatprep.subr.mxu0 0.0
        %2432 = vmatpush1.msra.mxu0 0.0
        %2433 = vmatprep.subr.mxu0 0.0
        %2434 = vmatpush1.msra.mxu0 0.0
        %2435 = vmatprep.subr.mxu0 0.0
        %2436 = vmatpush1.msra.mxu0 0.0
        %2437 = vmatprep.subr.mxu0 0.0
        %2438 = vmatpush1.msra.mxu0 0.0
        %2439 = vmatprep.subr.mxu0 0.0
        %2440 = vmatpush1.msra.mxu0 0.0
        %2441 = vmatprep.subr.mxu0 0.0
        %2442 = vmatpush1.msra.mxu0 0.0
        %2443 = vmatprep.subr.mxu0 0.0
        %2444 = vmatpush1.msra.mxu0 0.0
        %2445 = vmatprep.subr.mxu0 0.0
        %2446 = vmatpush1.msra.mxu0 0.0
        %2447 = vmatprep.subr.mxu0 0.0
        %2448 = vmatpush1.msra.mxu0 0.0
        %2449 = vmatprep.subr.mxu0 0.0
        %2450 = vmatpush1.msra.mxu0 0.0
        %2451 = vmatprep.mubr.f32.mxu0 0.0
        %2452 = vmatmul.mubr.f32.gmra.mrb[0].mxu0 %v675
        %v2453 = vpop.f32.mrb[0].mxu0
        %v2454 = vadd.f32 0.0, %v2453
        %v2455 = vpop.f32.mrb[0].mxu0
        %2456 = vdwg.mxu0
        %s2457 = scalar_lea.vmem [#allocation4], 64
        %v2458 = vld [vmem:[%s2457] sm:$0xff]
        %v2459 = vld [vmem:[%s2457 + $0x8] sm:$0xff]
        %v2460 = vld [vmem:[%s2457 + $0x10] sm:$0xff]
        %v2461 = vld [vmem:[%s2457 + $0x18] sm:$0xff]
        %2462 = vmatprep.subr.mxu0 0.0
        %2463 = vmatpush1.msra.mxu0 %v2458
        %2464 = vmatprep.subr.mxu0 0.0
        %2465 = vmatpush1.msra.mxu0 %v2459
        %2466 = vmatprep.subr.mxu0 0.0
        %2467 = vmatpush1.msra.mxu0 %v2460
        %2468 = vmatprep.subr.mxu0 0.0
        %2469 = vmatpush1.msra.mxu0 %v2461
        %2470 = vmatprep.subr.mxu0 0.0
        %2471 = vmatpush1.msra.mxu0 0.0
        %2472 = vmatprep.subr.mxu0 0.0
        %2473 = vmatpush1.msra.mxu0 0.0
        %2474 = vmatprep.subr.mxu0 0.0
        %2475 = vmatpush1.msra.mxu0 0.0
        %2476 = vmatprep.subr.mxu0 0.0
        %2477 = vmatpush1.msra.mxu0 0.0
        %2478 = vmatprep.subr.mxu0 0.0
        %2479 = vmatpush1.msra.mxu0 0.0
        %2480 = vmatprep.subr.mxu0 0.0
        %2481 = vmatpush1.msra.mxu0 0.0
        %2482 = vmatprep.subr.mxu0 0.0
        %2483 = vmatpush1.msra.mxu0 0.0
        %2484 = vmatprep.subr.mxu0 0.0
        %2485 = vmatpush1.msra.mxu0 0.0
        %2486 = vmatprep.subr.mxu0 0.0
        %2487 = vmatpush1.msra.mxu0 0.0
        %2488 = vmatprep.subr.mxu0 0.0
        %2489 = vmatpush1.msra.mxu0 0.0
        %2490 = vmatprep.subr.mxu0 0.0
        %2491 = vmatpush1.msra.mxu0 0.0
        %2492 = vmatprep.subr.mxu0 0.0
        %2493 = vmatpush1.msra.mxu0 0.0
        %2494 = vmatprep.subr.mxu0 0.0
        %2495 = vmatpush1.msra.mxu0 0.0
        %2496 = vmatprep.subr.mxu0 0.0
        %2497 = vmatpush1.msra.mxu0 0.0
        %2498 = vmatprep.subr.mxu0 0.0
        %2499 = vmatpush1.msra.mxu0 0.0
        %2500 = vmatprep.subr.mxu0 0.0
        %2501 = vmatpush1.msra.mxu0 0.0
        %2502 = vmatprep.subr.mxu0 0.0
        %2503 = vmatpush1.msra.mxu0 0.0
        %2504 = vmatprep.subr.mxu0 0.0
        %2505 = vmatpush1.msra.mxu0 0.0
        %2506 = vmatprep.subr.mxu0 0.0
        %2507 = vmatpush1.msra.mxu0 0.0
        %2508 = vmatprep.subr.mxu0 0.0
        %2509 = vmatpush1.msra.mxu0 0.0
        %2510 = vmatprep.subr.mxu0 0.0
        %2511 = vmatpush1.msra.mxu0 0.0
        %2512 = vmatprep.subr.mxu0 0.0
        %2513 = vmatpush1.msra.mxu0 0.0
        %2514 = vmatprep.subr.mxu0 0.0
        %2515 = vmatpush1.msra.mxu0 0.0
        %2516 = vmatprep.subr.mxu0 0.0
        %2517 = vmatpush1.msra.mxu0 0.0
        %2518 = vmatprep.subr.mxu0 0.0
        %2519 = vmatpush1.msra.mxu0 0.0
        %2520 = vmatprep.subr.mxu0 0.0
        %2521 = vmatpush1.msra.mxu0 0.0
        %2522 = vmatprep.subr.mxu0 0.0
        %2523 = vmatpush1.msra.mxu0 0.0
        %2524 = vmatprep.subr.mxu0 0.0
        %2525 = vmatpush1.msra.mxu0 0.0
        %2526 = vmatprep.mubr.f32.mxu0 0.0
        %2527 = vmatmul.mubr.f32.gmra.mrb[0].mxu0 %v675
        %v2528 = vpop.f32.mrb[0].mxu0
        %v2529 = vadd.f32 0.0, %v2528
        %v2530 = vpop.f32.mrb[0].mxu0
        %2531 = vdwg.mxu0
        %s2532 = scalar_lea.vmem [#allocation6], 64
        %v2533 = vld [vmem:[%s2532] sm:$0xff]
        %v2534 = vld [vmem:[%s2532 + $0x8] sm:$0xff]
        %v2535 = vld [vmem:[%s2532 + $0x10] sm:$0xff]
        %v2536 = vld [vmem:[%s2532 + $0x18] sm:$0xff]
        %2537 = vmatprep.subr.mxu0 0.0
        %2538 = vmatpush1.msra.mxu0 %v2533
        %2539 = vmatprep.subr.mxu0 0.0
        %2540 = vmatpush1.msra.mxu0 %v2534
        %2541 = vmatprep.subr.mxu0 0.0
        %2542 = vmatpush1.msra.mxu0 %v2535
        %2543 = vmatprep.subr.mxu0 0.0
        %2544 = vmatpush1.msra.mxu0 %v2536
        %2545 = vmatprep.subr.mxu0 0.0
        %2546 = vmatpush1.msra.mxu0 0.0
        %2547 = vmatprep.subr.mxu0 0.0
        %2548 = vmatpush1.msra.mxu0 0.0
        %2549 = vmatprep.subr.mxu0 0.0
        %2550 = vmatpush1.msra.mxu0 0.0
        %2551 = vmatprep.subr.mxu0 0.0
        %2552 = vmatpush1.msra.mxu0 0.0
        %2553 = vmatprep.subr.mxu0 0.0
        %2554 = vmatpush1.msra.mxu0 0.0
        %2555 = vmatprep.subr.mxu0 0.0
        %2556 = vmatpush1.msra.mxu0 0.0
        %2557 = vmatprep.subr.mxu0 0.0
        %2558 = vmatpush1.msra.mxu0 0.0
        %2559 = vmatprep.subr.mxu0 0.0
        %2560 = vmatpush1.msra.mxu0 0.0
        %2561 = vmatprep.subr.mxu0 0.0
        %2562 = vmatpush1.msra.mxu0 0.0
        %2563 = vmatprep.subr.mxu0 0.0
        %2564 = vmatpush1.msra.mxu0 0.0
        %2565 = vmatprep.subr.mxu0 0.0
        %2566 = vmatpush1.msra.mxu0 0.0
        %2567 = vmatprep.subr.mxu0 0.0
        %2568 = vmatpush1.msra.mxu0 0.0
        %2569 = vmatprep.subr.mxu0 0.0
        %2570 = vmatpush1.msra.mxu0 0.0
        %2571 = vmatprep.subr.mxu0 0.0
        %2572 = vmatpush1.msra.mxu0 0.0
        %2573 = vmatprep.subr.mxu0 0.0
        %2574 = vmatpush1.msra.mxu0 0.0
        %2575 = vmatprep.subr.mxu0 0.0
        %2576 = vmatpush1.msra.mxu0 0.0
        %2577 = vmatprep.subr.mxu0 0.0
        %2578 = vmatpush1.msra.mxu0 0.0
        %2579 = vmatprep.subr.mxu0 0.0
        %2580 = vmatpush1.msra.mxu0 0.0
        %2581 = vmatprep.subr.mxu0 0.0
        %2582 = vmatpush1.msra.mxu0 0.0
        %2583 = vmatprep.subr.mxu0 0.0
        %2584 = vmatpush1.msra.mxu0 0.0
        %2585 = vmatprep.subr.mxu0 0.0
        %2586 = vmatpush1.msra.mxu0 0.0
        %2587 = vmatprep.subr.mxu0 0.0
        %2588 = vmatpush1.msra.mxu0 0.0
        %2589 = vmatprep.subr.mxu0 0.0
        %2590 = vmatpush1.msra.mxu0 0.0
        %2591 = vmatprep.subr.mxu0 0.0
        %2592 = vmatpush1.msra.mxu0 0.0
        %2593 = vmatprep.subr.mxu0 0.0
        %2594 = vmatpush1.msra.mxu0 0.0
        %2595 = vmatprep.subr.mxu0 0.0
        %2596 = vmatpush1.msra.mxu0 0.0
        %2597 = vmatprep.subr.mxu0 0.0
        %2598 = vmatpush1.msra.mxu0 0.0
        %2599 = vmatprep.subr.mxu0 0.0
        %2600 = vmatpush1.msra.mxu0 0.0
        %2601 = vmatprep.mubr.f32.mxu0 0.0
        %2602 = vmatmul.mubr.f32.gmra.mrb[0].mxu0 %v675
        %v2603 = vpop.f32.mrb[0].mxu0
        %v2604 = vadd.f32 0.0, %v2603
        %v2605 = vpop.f32.mrb[0].mxu0
        %2606 = vdwg.mxu0
        %s2607 = scalar_lea.vmem %s5, 64
        %v2608 = vld [vmem:[%s2607] sm:$0xff]
        %v2609 = vld [vmem:[%s2607 + $0x8] sm:$0xff]
        %v2610 = vld [vmem:[%s2607 + $0x10] sm:$0xff]
        %v2611 = vld [vmem:[%s2607 + $0x18] sm:$0xff]
        %2612 = vmatprep.subr.mxu0 0.0
        %2613 = vmatpush1.msra.mxu0 %v2608
        %2614 = vmatprep.subr.mxu0 0.0
        %2615 = vmatpush1.msra.mxu0 %v2609
        %2616 = vmatprep.subr.mxu0 0.0
        %2617 = vmatpush1.msra.mxu0 %v2610
        %2618 = vmatprep.subr.mxu0 0.0
        %2619 = vmatpush1.msra.mxu0 %v2611
        %2620 = vmatprep.subr.mxu0 0.0
        %2621 = vmatpush1.msra.mxu0 0.0
        %2622 = vmatprep.subr.mxu0 0.0
        %2623 = vmatpush1.msra.mxu0 0.0
        %2624 = vmatprep.subr.mxu0 0.0
        %2625 = vmatpush1.msra.mxu0 0.0
        %2626 = vmatprep.subr.mxu0 0.0
        %2627 = vmatpush1.msra.mxu0 0.0
        %2628 = vmatprep.subr.mxu0 0.0
        %2629 = vmatpush1.msra.mxu0 0.0
        %2630 = vmatprep.subr.mxu0 0.0
        %2631 = vmatpush1.msra.mxu0 0.0
        %2632 = vmatprep.subr.mxu0 0.0
        %2633 = vmatpush1.msra.mxu0 0.0
        %2634 = vmatprep.subr.mxu0 0.0
        %2635 = vmatpush1.msra.mxu0 0.0
        %2636 = vmatprep.subr.mxu0 0.0
        %2637 = vmatpush1.msra.mxu0 0.0
        %2638 = vmatprep.subr.mxu0 0.0
        %2639 = vmatpush1.msra.mxu0 0.0
        %2640 = vmatprep.subr.mxu0 0.0
        %2641 = vmatpush1.msra.mxu0 0.0
        %2642 = vmatprep.subr.mxu0 0.0
        %2643 = vmatpush1.msra.mxu0 0.0
        %2644 = vmatprep.subr.mxu0 0.0
        %2645 = vmatpush1.msra.mxu0 0.0
        %2646 = vmatprep.subr.mxu0 0.0
        %2647 = vmatpush1.msra.mxu0 0.0
        %2648 = vmatprep.subr.mxu0 0.0
        %2649 = vmatpush1.msra.mxu0 0.0
        %2650 = vmatprep.subr.mxu0 0.0
        %2651 = vmatpush1.msra.mxu0 0.0
        %2652 = vmatprep.subr.mxu0 0.0
        %2653 = vmatpush1.msra.mxu0 0.0
        %2654 = vmatprep.subr.mxu0 0.0
        %2655 = vmatpush1.msra.mxu0 0.0
        %2656 = vmatprep.subr.mxu0 0.0
        %2657 = vmatpush1.msra.mxu0 0.0
        %2658 = vmatprep.subr.mxu0 0.0
        %2659 = vmatpush1.msra.mxu0 0.0
        %2660 = vmatprep.subr.mxu0 0.0
        %2661 = vmatpush1.msra.mxu0 0.0
        %2662 = vmatprep.subr.mxu0 0.0
        %2663 = vmatpush1.msra.mxu0 0.0
        %2664 = vmatprep.subr.mxu0 0.0
        %2665 = vmatpush1.msra.mxu0 0.0
        %2666 = vmatprep.subr.mxu0 0.0
        %2667 = vmatpush1.msra.mxu0 0.0
        %2668 = vmatprep.subr.mxu0 0.0
        %2669 = vmatpush1.msra.mxu0 0.0
        %2670 = vmatprep.subr.mxu0 0.0
        %2671 = vmatpush1.msra.mxu0 0.0
        %2672 = vmatprep.subr.mxu0 0.0
        %2673 = vmatpush1.msra.mxu0 0.0
        %2674 = vmatprep.subr.mxu0 0.0
        %2675 = vmatpush1.msra.mxu0 0.0
        %2676 = vmatprep.mubr.f32.mxu0 0.0
        %2677 = vmatmul.mubr.f32.gmra.mrb[0].mxu0 %v900
        %v2678 = vpop.f32.mrb[0].mxu0
        %v2679 = vadd.f32 0.0, %v2678
        %v2680 = vpop.f32.mrb[0].mxu0
        %2681 = vdwg.mxu0
        %s2682 = scalar_lea.vmem %s7, 2
        %v2683 = vld [vmem:[%s2682] sm:$0x1]
        %s2684 = scalar_lea.vmem %s8, 2
        %v2685 = vld [vmem:[%s2684] sm:$0x1]
        %v2687 = vlaneseq
        %v2688 = vshrl.u32 %v2687, 7
        %v2689 = vsub.s32 0, %v2688
        %v2690 = vrot.slane %v2683, %v2689
        %v2692 = vadd.f32 %v2454, %v2690
        %v2694 = vlaneseq
        %v2695 = vshrl.u32 %v2694, 7
        %v2696 = vsub.s32 0, %v2695
        %v2697 = vrot.slane %v2685, %v2696
        %v2699 = vadd.f32 %v2454, %v2697
        %v2701 = vsel %vm988, %v2699, 0
        %v2704 = vsel %vm988, %v2679, 0
        %2706 = vmatprep.subr.mxu0 0.0
        %2707 = vmatpush1.xpose.msra.mxu0 %v2704
        %2708 = vmatprep.subr.mxu0 0.0
        %2709 = vmatpush1.xpose.msra.mxu0 0.0
        %2710 = vmatprep.subr.mxu0 0.0
        %2711 = vmatpush1.xpose.msra.mxu0 0.0
        %2712 = vmatprep.subr.mxu0 0.0
        %2713 = vmatpush1.xpose.msra.mxu0 0.0
        %2714 = vmatprep.subr.mxu0 0.0
        %2715 = vmatpush1.xpose.msra.mxu0 0.0
        %2716 = vmatprep.subr.mxu0 0.0
        %2717 = vmatpush1.xpose.msra.mxu0 0.0
        %2718 = vmatprep.subr.mxu0 0.0
        %2719 = vmatpush1.xpose.msra.mxu0 0.0
        %2720 = vmatprep.subr.mxu0 0.0
        %2721 = vmatpush1.xpose.msra.mxu0 0.0
        %2722 = vmatprep.subr.mxu0 0.0
        %2723 = vmatpush1.xpose.msra.mxu0 0.0
        %2724 = vmatprep.subr.mxu0 0.0
        %2725 = vmatpush1.xpose.msra.mxu0 0.0
        %2726 = vmatprep.subr.mxu0 0.0
        %2727 = vmatpush1.xpose.msra.mxu0 0.0
        %2728 = vmatprep.subr.mxu0 0.0
        %2729 = vmatpush1.xpose.msra.mxu0 0.0
        %2730 = vmatprep.subr.mxu0 0.0
        %2731 = vmatpush1.xpose.msra.mxu0 0.0
        %2732 = vmatprep.subr.mxu0 0.0
        %2733 = vmatpush1.xpose.msra.mxu0 0.0
        %2734 = vmatprep.subr.mxu0 0.0
        %2735 = vmatpush1.xpose.msra.mxu0 0.0
        %2736 = vmatprep.subr.mxu0 0.0
        %2737 = vmatpush1.xpose.msra.mxu0 0.0
        %2738 = vmatprep.subr.mxu0 0.0
        %2739 = vmatpush1.xpose.msra.mxu0 0.0
        %2740 = vmatprep.subr.mxu0 0.0
        %2741 = vmatpush1.xpose.msra.mxu0 0.0
        %2742 = vmatprep.subr.mxu0 0.0
        %2743 = vmatpush1.xpose.msra.mxu0 0.0
        %2744 = vmatprep.subr.mxu0 0.0
        %2745 = vmatpush1.xpose.msra.mxu0 0.0
        %2746 = vmatprep.subr.mxu0 0.0
        %2747 = vmatpush1.xpose.msra.mxu0 0.0
        %2748 = vmatprep.subr.mxu0 0.0
        %2749 = vmatpush1.xpose.msra.mxu0 0.0
        %2750 = vmatprep.subr.mxu0 0.0
        %2751 = vmatpush1.xpose.msra.mxu0 0.0
        %2752 = vmatprep.subr.mxu0 0.0
        %2753 = vmatpush1.xpose.msra.mxu0 0.0
        %2754 = vmatprep.subr.mxu0 0.0
        %2755 = vmatpush1.xpose.msra.mxu0 0.0
        %2756 = vmatprep.subr.mxu0 0.0
        %2757 = vmatpush1.xpose.msra.mxu0 0.0
        %2758 = vmatprep.subr.mxu0 0.0
        %2759 = vmatpush1.xpose.msra.mxu0 0.0
        %2760 = vmatprep.subr.mxu0 0.0
        %2761 = vmatpush1.xpose.msra.mxu0 0.0
        %2762 = vmatprep.subr.mxu0 0.0
        %2763 = vmatpush1.xpose.msra.mxu0 0.0
        %2764 = vmatprep.subr.mxu0 0.0
        %2765 = vmatpush1.xpose.msra.mxu0 0.0
        %2766 = vmatprep.subr.mxu0 0.0
        %2767 = vmatpush1.xpose.msra.mxu0 0.0
        %2768 = vmatprep.subr.mxu0 0.0
        %2769 = vmatpush1.xpose.msra.mxu0 0.0
        %2770 = vmatprep.mubr.f32.mxu0 0.0
        %2771 = vmatmul.mubr.f32.gmra.mrb[0].mxu0 %v2701
        %v2772 = vpop.f32.mrb[0].mxu0
        %v2773 = vadd.f32 0.0, %v2772
        %v2774 = vpop.f32.mrb[0].mxu0
        %2775 = vdwg.mxu0
        %v2777 = vsel %vm988, %v2773, 0
        %2779 = vmatprep.subr.mxu0 0.0
        %2780 = vmatpush1.msra.mxu0 %v646
        %2781 = vmatprep.subr.mxu0 0.0
        %2782 = vmatpush1.msra.mxu0 0.0
        %2783 = vmatprep.subr.mxu0 0.0
        %2784 = vmatpush1.msra.mxu0 0.0
        %2785 = vmatprep.subr.mxu0 0.0
        %2786 = vmatpush1.msra.mxu0 0.0
        %2787 = vmatprep.subr.mxu0 0.0
        %2788 = vmatpush1.msra.mxu0 0.0
        %2789 = vmatprep.subr.mxu0 0.0
        %2790 = vmatpush1.msra.mxu0 0.0
        %2791 = vmatprep.subr.mxu0 0.0
        %2792 = vmatpush1.msra.mxu0 0.0
        %2793 = vmatprep.subr.mxu0 0.0
        %2794 = vmatpush1.msra.mxu0 0.0
        %2795 = vmatprep.subr.mxu0 0.0
        %2796 = vmatpush1.msra.mxu0 0.0
        %2797 = vmatprep.subr.mxu0 0.0
        %2798 = vmatpush1.msra.mxu0 0.0
        %2799 = vmatprep.subr.mxu0 0.0
        %2800 = vmatpush1.msra.mxu0 0.0
        %2801 = vmatprep.subr.mxu0 0.0
        %2802 = vmatpush1.msra.mxu0 0.0
        %2803 = vmatprep.subr.mxu0 0.0
        %2804 = vmatpush1.msra.mxu0 0.0
        %2805 = vmatprep.subr.mxu0 0.0
        %2806 = vmatpush1.msra.mxu0 0.0
        %2807 = vmatprep.subr.mxu0 0.0
        %2808 = vmatpush1.msra.mxu0 0.0
        %2809 = vmatprep.subr.mxu0 0.0
        %2810 = vmatpush1.msra.mxu0 0.0
        %2811 = vmatprep.subr.mxu0 0.0
        %2812 = vmatpush1.msra.mxu0 0.0
        %2813 = vmatprep.subr.mxu0 0.0
        %2814 = vmatpush1.msra.mxu0 0.0
        %2815 = vmatprep.subr.mxu0 0.0
        %2816 = vmatpush1.msra.mxu0 0.0
        %2817 = vmatprep.subr.mxu0 0.0
        %2818 = vmatpush1.msra.mxu0 0.0
        %2819 = vmatprep.subr.mxu0 0.0
        %2820 = vmatpush1.msra.mxu0 0.0
        %2821 = vmatprep.subr.mxu0 0.0
        %2822 = vmatpush1.msra.mxu0 0.0
        %2823 = vmatprep.subr.mxu0 0.0
        %2824 = vmatpush1.msra.mxu0 0.0
        %2825 = vmatprep.subr.mxu0 0.0
        %2826 = vmatpush1.msra.mxu0 0.0
        %2827 = vmatprep.subr.mxu0 0.0
        %2828 = vmatpush1.msra.mxu0 0.0
        %2829 = vmatprep.subr.mxu0 0.0
        %2830 = vmatpush1.msra.mxu0 0.0
        %2831 = vmatprep.subr.mxu0 0.0
        %2832 = vmatpush1.msra.mxu0 0.0
        %2833 = vmatprep.subr.mxu0 0.0
        %2834 = vmatpush1.msra.mxu0 0.0
        %2835 = vmatprep.subr.mxu0 0.0
        %2836 = vmatpush1.msra.mxu0 0.0
        %2837 = vmatprep.subr.mxu0 0.0
        %2838 = vmatpush1.msra.mxu0 0.0
        %2839 = vmatprep.subr.mxu0 0.0
        %2840 = vmatpush1.msra.mxu0 0.0
        %2841 = vmatprep.subr.mxu0 0.0
        %2842 = vmatpush1.msra.mxu0 0.0
        %2843 = vmatprep.mubr.f32.mxu0 0.0
        %2844 = vmatmul.mubr.f32.gmra.mrb[0].mxu0 %v2777
        %v2845 = vpop.f32.mrb[0].mxu0
        %v2846 = vadd.f32 0.0, %v2845
        %v2847 = vpop.f32.mrb[0].mxu0
        %2848 = vdwg.mxu0
        %v2849 = vsel %vm1139, %v2846, %v2773
        %v2851 = vsel %vm988, %v2849, 0
        %2853 = vmatprep.subr.mxu0 0.0
        %2854 = vmatpush1.msra.mxu0 %v655
        %2855 = vmatprep.subr.mxu0 0.0
        %2856 = vmatpush1.msra.mxu0 0.0
        %2857 = vmatprep.subr.mxu0 0.0
        %2858 = vmatpush1.msra.mxu0 0.0
        %2859 = vmatprep.subr.mxu0 0.0
        %2860 = vmatpush1.msra.mxu0 0.0
        %2861 = vmatprep.subr.mxu0 0.0
        %2862 = vmatpush1.msra.mxu0 0.0
        %2863 = vmatprep.subr.mxu0 0.0
        %2864 = vmatpush1.msra.mxu0 0.0
        %2865 = vmatprep.subr.mxu0 0.0
        %2866 = vmatpush1.msra.mxu0 0.0
        %2867 = vmatprep.subr.mxu0 0.0
        %2868 = vmatpush1.msra.mxu0 0.0
        %2869 = vmatprep.subr.mxu0 0.0
        %2870 = vmatpush1.msra.mxu0 0.0
        %2871 = vmatprep.subr.mxu0 0.0
        %2872 = vmatpush1.msra.mxu0 0.0
        %2873 = vmatprep.subr.mxu0 0.0
        %2874 = vmatpush1.msra.mxu0 0.0
        %2875 = vmatprep.subr.mxu0 0.0
        %2876 = vmatpush1.msra.mxu0 0.0
        %2877 = vmatprep.subr.mxu0 0.0
        %2878 = vmatpush1.msra.mxu0 0.0
        %2879 = vmatprep.subr.mxu0 0.0
        %2880 = vmatpush1.msra.mxu0 0.0
        %2881 = vmatprep.subr.mxu0 0.0
        %2882 = vmatpush1.msra.mxu0 0.0
        %2883 = vmatprep.subr.mxu0 0.0
        %2884 = vmatpush1.msra.mxu0 0.0
        %2885 = vmatprep.subr.mxu0 0.0
        %2886 = vmatpush1.msra.mxu0 0.0
        %2887 = vmatprep.subr.mxu0 0.0
        %2888 = vmatpush1.msra.mxu0 0.0
        %2889 = vmatprep.subr.mxu0 0.0
        %2890 = vmatpush1.msra.mxu0 0.0
        %2891 = vmatprep.subr.mxu0 0.0
        %2892 = vmatpush1.msra.mxu0 0.0
        %2893 = vmatprep.subr.mxu0 0.0
        %2894 = vmatpush1.msra.mxu0 0.0
        %2895 = vmatprep.subr.mxu0 0.0
        %2896 = vmatpush1.msra.mxu0 0.0
        %2897 = vmatprep.subr.mxu0 0.0
        %2898 = vmatpush1.msra.mxu0 0.0
        %2899 = vmatprep.subr.mxu0 0.0
        %2900 = vmatpush1.msra.mxu0 0.0
        %2901 = vmatprep.subr.mxu0 0.0
        %2902 = vmatpush1.msra.mxu0 0.0
        %2903 = vmatprep.subr.mxu0 0.0
        %2904 = vmatpush1.msra.mxu0 0.0
        %2905 = vmatprep.subr.mxu0 0.0
        %2906 = vmatpush1.msra.mxu0 0.0
        %2907 = vmatprep.subr.mxu0 0.0
        %2908 = vmatpush1.msra.mxu0 0.0
        %2909 = vmatprep.subr.mxu0 0.0
        %2910 = vmatpush1.msra.mxu0 0.0
        %2911 = vmatprep.subr.mxu0 0.0
        %2912 = vmatpush1.msra.mxu0 0.0
        %2913 = vmatprep.subr.mxu0 0.0
        %2914 = vmatpush1.msra.mxu0 0.0
        %2915 = vmatprep.subr.mxu0 0.0
        %2916 = vmatpush1.msra.mxu0 0.0
        %2917 = vmatprep.mubr.f32.mxu0 0.0
        %2918 = vmatmul.mubr.f32.gmra.mrb[0].mxu0 %v2851
        %v2919 = vpop.f32.mrb[0].mxu0
        %v2920 = vadd.f32 0.0, %v2919
        %v2921 = vpop.f32.mrb[0].mxu0
        %2922 = vdwg.mxu0
        %v2923 = vsel %vm1215, %v2920, %v2849
        %v2925 = vsel %vm988, %v2923, 0
        %2927 = vmatprep.subr.mxu0 0.0
        %2928 = vmatpush1.msra.mxu0 %v665
        %2929 = vmatprep.subr.mxu0 0.0
        %2930 = vmatpush1.msra.mxu0 0.0
        %2931 = vmatprep.subr.mxu0 0.0
        %2932 = vmatpush1.msra.mxu0 0.0
        %2933 = vmatprep.subr.mxu0 0.0
        %2934 = vmatpush1.msra.mxu0 0.0
        %2935 = vmatprep.subr.mxu0 0.0
        %2936 = vmatpush1.msra.mxu0 0.0
        %2937 = vmatprep.subr.mxu0 0.0
        %2938 = vmatpush1.msra.mxu0 0.0
        %2939 = vmatprep.subr.mxu0 0.0
        %2940 = vmatpush1.msra.mxu0 0.0
        %2941 = vmatprep.subr.mxu0 0.0
        %2942 = vmatpush1.msra.mxu0 0.0
        %2943 = vmatprep.subr.mxu0 0.0
        %2944 = vmatpush1.msra.mxu0 0.0
        %2945 = vmatprep.subr.mxu0 0.0
        %2946 = vmatpush1.msra.mxu0 0.0
        %2947 = vmatprep.subr.mxu0 0.0
        %2948 = vmatpush1.msra.mxu0 0.0
        %2949 = vmatprep.subr.mxu0 0.0
        %2950 = vmatpush1.msra.mxu0 0.0
        %2951 = vmatprep.subr.mxu0 0.0
        %2952 = vmatpush1.msra.mxu0 0.0
        %2953 = vmatprep.subr.mxu0 0.0
        %2954 = vmatpush1.msra.mxu0 0.0
        %2955 = vmatprep.subr.mxu0 0.0
        %2956 = vmatpush1.msra.mxu0 0.0
        %2957 = vmatprep.subr.mxu0 0.0
        %2958 = vmatpush1.msra.mxu0 0.0
        %2959 = vmatprep.subr.mxu0 0.0
        %2960 = vmatpush1.msra.mxu0 0.0
        %2961 = vmatprep.subr.mxu0 0.0
        %2962 = vmatpush1.msra.mxu0 0.0
        %2963 = vmatprep.subr.mxu0 0.0
        %2964 = vmatpush1.msra.mxu0 0.0
        %2965 = vmatprep.subr.mxu0 0.0
        %2966 = vmatpush1.msra.mxu0 0.0
        %2967 = vmatprep.subr.mxu0 0.0
        %2968 = vmatpush1.msra.mxu0 0.0
        %2969 = vmatprep.subr.mxu0 0.0
        %2970 = vmatpush1.msra.mxu0 0.0
        %2971 = vmatprep.subr.mxu0 0.0
        %2972 = vmatpush1.msra.mxu0 0.0
        %2973 = vmatprep.subr.mxu0 0.0
        %2974 = vmatpush1.msra.mxu0 0.0
        %2975 = vmatprep.subr.mxu0 0.0
        %2976 = vmatpush1.msra.mxu0 0.0
        %2977 = vmatprep.subr.mxu0 0.0
        %2978 = vmatpush1.msra.mxu0 0.0
        %2979 = vmatprep.subr.mxu0 0.0
        %2980 = vmatpush1.msra.mxu0 0.0
        %2981 = vmatprep.subr.mxu0 0.0
        %2982 = vmatpush1.msra.mxu0 0.0
        %2983 = vmatprep.subr.mxu0 0.0
        %2984 = vmatpush1.msra.mxu0 0.0
        %2985 = vmatprep.subr.mxu0 0.0
        %2986 = vmatpush1.msra.mxu0 0.0
        %2987 = vmatprep.subr.mxu0 0.0
        %2988 = vmatpush1.msra.mxu0 0.0
        %2989 = vmatprep.subr.mxu0 0.0
        %2990 = vmatpush1.msra.mxu0 0.0
        %2991 = vmatprep.mubr.f32.mxu0 0.0
        %2992 = vmatmul.mubr.f32.gmra.mrb[0].mxu0 %v2925
        %v2993 = vpop.f32.mrb[0].mxu0
        %v2994 = vadd.f32 0.0, %v2993
        %v2995 = vpop.f32.mrb[0].mxu0
        %2996 = vdwg.mxu0
        %v2997 = vsel %vm1291, %v2994, %v2923
        %v2999 = vsel %vm988, %v2692, 0
        %v3002 = vsel %vm988, %v2529, 0
        %3004 = vmatprep.subr.mxu0 0.0
        %3005 = vmatpush1.xpose.msra.mxu0 %v3002
        %3006 = vmatprep.subr.mxu0 0.0
        %3007 = vmatpush1.xpose.msra.mxu0 0.0
        %3008 = vmatprep.subr.mxu0 0.0
        %3009 = vmatpush1.xpose.msra.mxu0 0.0
        %3010 = vmatprep.subr.mxu0 0.0
        %3011 = vmatpush1.xpose.msra.mxu0 0.0
        %3012 = vmatprep.subr.mxu0 0.0
        %3013 = vmatpush1.xpose.msra.mxu0 0.0
        %3014 = vmatprep.subr.mxu0 0.0
        %3015 = vmatpush1.xpose.msra.mxu0 0.0
        %3016 = vmatprep.subr.mxu0 0.0
        %3017 = vmatpush1.xpose.msra.mxu0 0.0
        %3018 = vmatprep.subr.mxu0 0.0
        %3019 = vmatpush1.xpose.msra.mxu0 0.0
        %3020 = vmatprep.subr.mxu0 0.0
        %3021 = vmatpush1.xpose.msra.mxu0 0.0
        %3022 = vmatprep.subr.mxu0 0.0
        %3023 = vmatpush1.xpose.msra.mxu0 0.0
        %3024 = vmatprep.subr.mxu0 0.0
        %3025 = vmatpush1.xpose.msra.mxu0 0.0
        %3026 = vmatprep.subr.mxu0 0.0
        %3027 = vmatpush1.xpose.msra.mxu0 0.0
        %3028 = vmatprep.subr.mxu0 0.0
        %3029 = vmatpush1.xpose.msra.mxu0 0.0
        %3030 = vmatprep.subr.mxu0 0.0
        %3031 = vmatpush1.xpose.msra.mxu0 0.0
        %3032 = vmatprep.subr.mxu0 0.0
        %3033 = vmatpush1.xpose.msra.mxu0 0.0
        %3034 = vmatprep.subr.mxu0 0.0
        %3035 = vmatpush1.xpose.msra.mxu0 0.0
        %3036 = vmatprep.subr.mxu0 0.0
        %3037 = vmatpush1.xpose.msra.mxu0 0.0
        %3038 = vmatprep.subr.mxu0 0.0
        %3039 = vmatpush1.xpose.msra.mxu0 0.0
        %3040 = vmatprep.subr.mxu0 0.0
        %3041 = vmatpush1.xpose.msra.mxu0 0.0
        %3042 = vmatprep.subr.mxu0 0.0
        %3043 = vmatpush1.xpose.msra.mxu0 0.0
        %3044 = vmatprep.subr.mxu0 0.0
        %3045 = vmatpush1.xpose.msra.mxu0 0.0
        %3046 = vmatprep.subr.mxu0 0.0
        %3047 = vmatpush1.xpose.msra.mxu0 0.0
        %3048 = vmatprep.subr.mxu0 0.0
        %3049 = vmatpush1.xpose.msra.mxu0 0.0
        %3050 = vmatprep.subr.mxu0 0.0
        %3051 = vmatpush1.xpose.msra.mxu0 0.0
        %3052 = vmatprep.subr.mxu0 0.0
        %3053 = vmatpush1.xpose.msra.mxu0 0.0
        %3054 = vmatprep.subr.mxu0 0.0
        %3055 = vmatpush1.xpose.msra.mxu0 0.0
        %3056 = vmatprep.subr.mxu0 0.0
        %3057 = vmatpush1.xpose.msra.mxu0 0.0
        %3058 = vmatprep.subr.mxu0 0.0
        %3059 = vmatpush1.xpose.msra.mxu0 0.0
        %3060 = vmatprep.subr.mxu0 0.0
        %3061 = vmatpush1.xpose.msra.mxu0 0.0
        %3062 = vmatprep.subr.mxu0 0.0
        %3063 = vmatpush1.xpose.msra.mxu0 0.0
        %3064 = vmatprep.subr.mxu0 0.0
        %3065 = vmatpush1.xpose.msra.mxu0 0.0
        %3066 = vmatprep.subr.mxu0 0.0
        %3067 = vmatpush1.xpose.msra.mxu0 0.0
        %3068 = vmatprep.mubr.f32.mxu0 0.0
        %3069 = vmatmul.mubr.f32.gmra.mrb[0].mxu0 %v2999
        %v3070 = vpop.f32.mrb[0].mxu0
        %v3071 = vadd.f32 %v2997, %v3070
        %v3072 = vpop.f32.mrb[0].mxu0
        %3073 = vdwg.mxu0
        %v3074 = vmul.f32 %v3071, 0.35355338
        %v3075 = vsel %vm638, -1e+30, %v3074
        %v3076 = vsel %vm988, %v3075, -inf
        %3077 = vmax.xlane.f32.xlu0 %v3076
        %v3078 = vpop.xlane.xlu0 %3077
        %v3079 = vsub.f32 %v3075, %v3078
        %v3080 = vmul.f32 %v3079, 1.442695
        %v3081 = vpow.pop %v3080
        %v3082 = vsel %vm988, %v3081, 0.0
        %3083 = vadd.xlane.f32.xlu0 %v3082
        %v3084 = vpop.xlane.xlu0 %3083
        %v3085 = vrcp.pop %v3084
        %v3086 = vmul.f32 %v3081, %v3085
        %v3088 = vsel %vm988, %v3086, 0
        %3090 = vmatprep.subr.mxu0 0.0
        %3091 = vmatpush1.msra.mxu0 %v2604
        %3092 = vmatprep.subr.mxu0 0.0
        %3093 = vmatpush1.msra.mxu0 0.0
        %3094 = vmatprep.subr.mxu0 0.0
        %3095 = vmatpush1.msra.mxu0 0.0
        %3096 = vmatprep.subr.mxu0 0.0
        %3097 = vmatpush1.msra.mxu0 0.0
        %3098 = vmatprep.subr.mxu0 0.0
        %3099 = vmatpush1.msra.mxu0 0.0
        %3100 = vmatprep.subr.mxu0 0.0
        %3101 = vmatpush1.msra.mxu0 0.0
        %3102 = vmatprep.subr.mxu0 0.0
        %3103 = vmatpush1.msra.mxu0 0.0
        %3104 = vmatprep.subr.mxu0 0.0
        %3105 = vmatpush1.msra.mxu0 0.0
        %3106 = vmatprep.subr.mxu0 0.0
        %3107 = vmatpush1.msra.mxu0 0.0
        %3108 = vmatprep.subr.mxu0 0.0
        %3109 = vmatpush1.msra.mxu0 0.0
        %3110 = vmatprep.subr.mxu0 0.0
        %3111 = vmatpush1.msra.mxu0 0.0
        %3112 = vmatprep.subr.mxu0 0.0
        %3113 = vmatpush1.msra.mxu0 0.0
        %3114 = vmatprep.subr.mxu0 0.0
        %3115 = vmatpush1.msra.mxu0 0.0
        %3116 = vmatprep.subr.mxu0 0.0
        %3117 = vmatpush1.msra.mxu0 0.0
        %3118 = vmatprep.subr.mxu0 0.0
        %3119 = vmatpush1.msra.mxu0 0.0
        %3120 = vmatprep.subr.mxu0 0.0
        %3121 = vmatpush1.msra.mxu0 0.0
        %3122 = vmatprep.subr.mxu0 0.0
        %3123 = vmatpush1.msra.mxu0 0.0
        %3124 = vmatprep.subr.mxu0 0.0
        %3125 = vmatpush1.msra.mxu0 0.0
        %3126 = vmatprep.subr.mxu0 0.0
        %3127 = vmatpush1.msra.mxu0 0.0
        %3128 = vmatprep.subr.mxu0 0.0
        %3129 = vmatpush1.msra.mxu0 0.0
        %3130 = vmatprep.subr.mxu0 0.0
        %3131 = vmatpush1.msra.mxu0 0.0
        %3132 = vmatprep.subr.mxu0 0.0
        %3133 = vmatpush1.msra.mxu0 0.0
        %3134 = vmatprep.subr.mxu0 0.0
        %3135 = vmatpush1.msra.mxu0 0.0
        %3136 = vmatprep.subr.mxu0 0.0
        %3137 = vmatpush1.msra.mxu0 0.0
        %3138 = vmatprep.subr.mxu0 0.0
        %3139 = vmatpush1.msra.mxu0 0.0
        %3140 = vmatprep.subr.mxu0 0.0
        %3141 = vmatpush1.msra.mxu0 0.0
        %3142 = vmatprep.subr.mxu0 0.0
        %3143 = vmatpush1.msra.mxu0 0.0
        %3144 = vmatprep.subr.mxu0 0.0
        %3145 = vmatpush1.msra.mxu0 0.0
        %3146 = vmatprep.subr.mxu0 0.0
        %3147 = vmatpush1.msra.mxu0 0.0
        %3148 = vmatprep.subr.mxu0 0.0
        %3149 = vmatpush1.msra.mxu0 0.0
        %3150 = vmatprep.subr.mxu0 0.0
        %3151 = vmatpush1.msra.mxu0 0.0
        %3152 = vmatprep.subr.mxu0 0.0
        %3153 = vmatpush1.msra.mxu0 0.0
        %3154 = vmatprep.mubr.f32.mxu0 0.0
        %3155 = vmatmul.mubr.f32.gmra.mrb[0].mxu0 %v3088
        %v3156 = vpop.f32.mrb[0].mxu0
        %v3157 = vadd.f32 0.0, %v3156
        %v3158 = vpop.f32.mrb[0].mxu0
        %3159 = vdwg.mxu0
        %s3160 = scalar_lea.vmem [#allocation7], 16
        %v3161 = vld [vmem:[%s3160] sm:$0xff]
        %v3163 = vsel %vm988, %v3157, 0
        %3165 = vmatprep.subr.mxu0 0.0
        %3166 = vmatpush1.msra.mxu0 %v3161
        %3167 = vmatprep.subr.mxu0 0.0
        %3168 = vmatpush1.msra.mxu0 0.0
        %3169 = vmatprep.subr.mxu0 0.0
        %3170 = vmatpush1.msra.mxu0 0.0
        %3171 = vmatprep.subr.mxu0 0.0
        %3172 = vmatpush1.msra.mxu0 0.0
        %3173 = vmatprep.subr.mxu0 0.0
        %3174 = vmatpush1.msra.mxu0 0.0
        %3175 = vmatprep.subr.mxu0 0.0
        %3176 = vmatpush1.msra.mxu0 0.0
        %3177 = vmatprep.subr.mxu0 0.0
        %3178 = vmatpush1.msra.mxu0 0.0
        %3179 = vmatprep.subr.mxu0 0.0
        %3180 = vmatpush1.msra.mxu0 0.0
        %3181 = vmatprep.subr.mxu0 0.0
        %3182 = vmatpush1.msra.mxu0 0.0
        %3183 = vmatprep.subr.mxu0 0.0
        %3184 = vmatpush1.msra.mxu0 0.0
        %3185 = vmatprep.subr.mxu0 0.0
        %3186 = vmatpush1.msra.mxu0 0.0
        %3187 = vmatprep.subr.mxu0 0.0
        %3188 = vmatpush1.msra.mxu0 0.0
        %3189 = vmatprep.subr.mxu0 0.0
        %3190 = vmatpush1.msra.mxu0 0.0
        %3191 = vmatprep.subr.mxu0 0.0
        %3192 = vmatpush1.msra.mxu0 0.0
        %3193 = vmatprep.subr.mxu0 0.0
        %3194 = vmatpush1.msra.mxu0 0.0
        %3195 = vmatprep.subr.mxu0 0.0
        %3196 = vmatpush1.msra.mxu0 0.0
        %3197 = vmatprep.subr.mxu0 0.0
        %3198 = vmatpush1.msra.mxu0 0.0
        %3199 = vmatprep.subr.mxu0 0.0
        %3200 = vmatpush1.msra.mxu0 0.0
        %3201 = vmatprep.subr.mxu0 0.0
        %3202 = vmatpush1.msra.mxu0 0.0
        %3203 = vmatprep.subr.mxu0 0.0
        %3204 = vmatpush1.msra.mxu0 0.0
        %3205 = vmatprep.subr.mxu0 0.0
        %3206 = vmatpush1.msra.mxu0 0.0
        %3207 = vmatprep.subr.mxu0 0.0
        %3208 = vmatpush1.msra.mxu0 0.0
        %3209 = vmatprep.subr.mxu0 0.0
        %3210 = vmatpush1.msra.mxu0 0.0
        %3211 = vmatprep.subr.mxu0 0.0
        %3212 = vmatpush1.msra.mxu0 0.0
        %3213 = vmatprep.subr.mxu0 0.0
        %3214 = vmatpush1.msra.mxu0 0.0
        %3215 = vmatprep.subr.mxu0 0.0
        %3216 = vmatpush1.msra.mxu0 0.0
        %3217 = vmatprep.subr.mxu0 0.0
        %3218 = vmatpush1.msra.mxu0 0.0
        %3219 = vmatprep.subr.mxu0 0.0
        %3220 = vmatpush1.msra.mxu0 0.0
        %3221 = vmatprep.subr.mxu0 0.0
        %3222 = vmatpush1.msra.mxu0 0.0
        %3223 = vmatprep.subr.mxu0 0.0
        %3224 = vmatpush1.msra.mxu0 0.0
        %3225 = vmatprep.subr.mxu0 0.0
        %3226 = vmatpush1.msra.mxu0 0.0
        %3227 = vmatprep.subr.mxu0 0.0
        %3228 = vmatpush1.msra.mxu0 0.0
        %3229 = vmatprep.mubr.f32.mxu0 0.0
        %3230 = vmatmul.mubr.f32.gmra.mrb[0].mxu0 %v3163
        %v3231 = vpop.f32.mrb[0].mxu0
        %v3232 = vadd.f32 0.0, %v3231
        %v3233 = vpop.f32.mrb[0].mxu0
        %3234 = vdwg.mxu0
        %v3235 = vadd.f32 %v2379, %v3232
        %s3236 = scalar_lea.vmem [#allocation2], 96
        %v3237 = vld [vmem:[%s3236] sm:$0xff]
        %v3238 = vld [vmem:[%s3236 + $0x8] sm:$0xff]
        %v3239 = vld [vmem:[%s3236 + $0x10] sm:$0xff]
        %v3240 = vld [vmem:[%s3236 + $0x18] sm:$0xff]
        %3241 = vmatprep.subr.mxu0 0.0
        %3242 = vmatpush1.msra.mxu0 %v3237
        %3243 = vmatprep.subr.mxu0 0.0
        %3244 = vmatpush1.msra.mxu0 %v3238
        %3245 = vmatprep.subr.mxu0 0.0
        %3246 = vmatpush1.msra.mxu0 %v3239
        %3247 = vmatprep.subr.mxu0 0.0
        %3248 = vmatpush1.msra.mxu0 %v3240
        %3249 = vmatprep.subr.mxu0 0.0
        %3250 = vmatpush1.msra.mxu0 0.0
        %3251 = vmatprep.subr.mxu0 0.0
        %3252 = vmatpush1.msra.mxu0 0.0
        %3253 = vmatprep.subr.mxu0 0.0
        %3254 = vmatpush1.msra.mxu0 0.0
        %3255 = vmatprep.subr.mxu0 0.0
        %3256 = vmatpush1.msra.mxu0 0.0
        %3257 = vmatprep.subr.mxu0 0.0
        %3258 = vmatpush1.msra.mxu0 0.0
        %3259 = vmatprep.subr.mxu0 0.0
        %3260 = vmatpush1.msra.mxu0 0.0
        %3261 = vmatprep.subr.mxu0 0.0
        %3262 = vmatpush1.msra.mxu0 0.0
        %3263 = vmatprep.subr.mxu0 0.0
        %3264 = vmatpush1.msra.mxu0 0.0
        %3265 = vmatprep.subr.mxu0 0.0
        %3266 = vmatpush1.msra.mxu0 0.0
        %3267 = vmatprep.subr.mxu0 0.0
        %3268 = vmatpush1.msra.mxu0 0.0
        %3269 = vmatprep.subr.mxu0 0.0
        %3270 = vmatpush1.msra.mxu0 0.0
        %3271 = vmatprep.subr.mxu0 0.0
        %3272 = vmatpush1.msra.mxu0 0.0
        %3273 = vmatprep.subr.mxu0 0.0
        %3274 = vmatpush1.msra.mxu0 0.0
        %3275 = vmatprep.subr.mxu0 0.0
        %3276 = vmatpush1.msra.mxu0 0.0
        %3277 = vmatprep.subr.mxu0 0.0
        %3278 = vmatpush1.msra.mxu0 0.0
        %3279 = vmatprep.subr.mxu0 0.0
        %3280 = vmatpush1.msra.mxu0 0.0
        %3281 = vmatprep.subr.mxu0 0.0
        %3282 = vmatpush1.msra.mxu0 0.0
        %3283 = vmatprep.subr.mxu0 0.0
        %3284 = vmatpush1.msra.mxu0 0.0
        %3285 = vmatprep.subr.mxu0 0.0
        %3286 = vmatpush1.msra.mxu0 0.0
        %3287 = vmatprep.subr.mxu0 0.0
        %3288 = vmatpush1.msra.mxu0 0.0
        %3289 = vmatprep.subr.mxu0 0.0
        %3290 = vmatpush1.msra.mxu0 0.0
        %3291 = vmatprep.subr.mxu0 0.0
        %3292 = vmatpush1.msra.mxu0 0.0
        %3293 = vmatprep.subr.mxu0 0.0
        %3294 = vmatpush1.msra.mxu0 0.0
        %3295 = vmatprep.subr.mxu0 0.0
        %3296 = vmatpush1.msra.mxu0 0.0
        %3297 = vmatprep.subr.mxu0 0.0
        %3298 = vmatpush1.msra.mxu0 0.0
        %3299 = vmatprep.subr.mxu0 0.0
        %3300 = vmatpush1.msra.mxu0 0.0
        %3301 = vmatprep.subr.mxu0 0.0
        %3302 = vmatpush1.msra.mxu0 0.0
        %3303 = vmatprep.subr.mxu0 0.0
        %3304 = vmatpush1.msra.mxu0 0.0
        %3305 = vmatprep.mubr.f32.mxu0 0.0
        %3306 = vmatmul.mubr.f32.gmra.mrb[0].mxu0 %v675
        %v3307 = vpop.f32.mrb[0].mxu0
        %v3308 = vadd.f32 0.0, %v3307
        %v3309 = vpop.f32.mrb[0].mxu0
        %3310 = vdwg.mxu0
        %s3311 = scalar_lea.vmem [#allocation4], 96
        %v3312 = vld [vmem:[%s3311] sm:$0xff]
        %v3313 = vld [vmem:[%s3311 + $0x8] sm:$0xff]
        %v3314 = vld [vmem:[%s3311 + $0x10] sm:$0xff]
        %v3315 = vld [vmem:[%s3311 + $0x18] sm:$0xff]
        %3316 = vmatprep.subr.mxu0 0.0
        %3317 = vmatpush1.msra.mxu0 %v3312
        %3318 = vmatprep.subr.mxu0 0.0
        %3319 = vmatpush1.msra.mxu0 %v3313
        %3320 = vmatprep.subr.mxu0 0.0
        %3321 = vmatpush1.msra.mxu0 %v3314
        %3322 = vmatprep.subr.mxu0 0.0
        %3323 = vmatpush1.msra.mxu0 %v3315
        %3324 = vmatprep.subr.mxu0 0.0
        %3325 = vmatpush1.msra.mxu0 0.0
        %3326 = vmatprep.subr.mxu0 0.0
        %3327 = vmatpush1.msra.mxu0 0.0
        %3328 = vmatprep.subr.mxu0 0.0
        %3329 = vmatpush1.msra.mxu0 0.0
        %3330 = vmatprep.subr.mxu0 0.0
        %3331 = vmatpush1.msra.mxu0 0.0
        %3332 = vmatprep.subr.mxu0 0.0
        %3333 = vmatpush1.msra.mxu0 0.0
        %3334 = vmatprep.subr.mxu0 0.0
        %3335 = vmatpush1.msra.mxu0 0.0
        %3336 = vmatprep.subr.mxu0 0.0
        %3337 = vmatpush1.msra.mxu0 0.0
        %3338 = vmatprep.subr.mxu0 0.0
        %3339 = vmatpush1.msra.mxu0 0.0
        %3340 = vmatprep.subr.mxu0 0.0
        %3341 = vmatpush1.msra.mxu0 0.0
        %3342 = vmatprep.subr.mxu0 0.0
        %3343 = vmatpush1.msra.mxu0 0.0
        %3344 = vmatprep.subr.mxu0 0.0
        %3345 = vmatpush1.msra.mxu0 0.0
        %3346 = vmatprep.subr.mxu0 0.0
        %3347 = vmatpush1.msra.mxu0 0.0
        %3348 = vmatprep.subr.mxu0 0.0
        %3349 = vmatpush1.msra.mxu0 0.0
        %3350 = vmatprep.subr.mxu0 0.0
        %3351 = vmatpush1.msra.mxu0 0.0
        %3352 = vmatprep.subr.mxu0 0.0
        %3353 = vmatpush1.msra.mxu0 0.0
        %3354 = vmatprep.subr.mxu0 0.0
        %3355 = vmatpush1.msra.mxu0 0.0
        %3356 = vmatprep.subr.mxu0 0.0
        %3357 = vmatpush1.msra.mxu0 0.0
        %3358 = vmatprep.subr.mxu0 0.0
        %3359 = vmatpush1.msra.mxu0 0.0
        %3360 = vmatprep.subr.mxu0 0.0
        %3361 = vmatpush1.msra.mxu0 0.0
        %3362 = vmatprep.subr.mxu0 0.0
        %3363 = vmatpush1.msra.mxu0 0.0
        %3364 = vmatprep.subr.mxu0 0.0
        %3365 = vmatpush1.msra.mxu0 0.0
        %3366 = vmatprep.subr.mxu0 0.0
        %3367 = vmatpush1.msra.mxu0 0.0
        %3368 = vmatprep.subr.mxu0 0.0
        %3369 = vmatpush1.msra.mxu0 0.0
        %3370 = vmatprep.subr.mxu0 0.0
        %3371 = vmatpush1.msra.mxu0 0.0
        %3372 = vmatprep.subr.mxu0 0.0
        %3373 = vmatpush1.msra.mxu0 0.0
        %3374 = vmatprep.subr.mxu0 0.0
        %3375 = vmatpush1.msra.mxu0 0.0
        %3376 = vmatprep.subr.mxu0 0.0
        %3377 = vmatpush1.msra.mxu0 0.0
        %3378 = vmatprep.subr.mxu0 0.0
        %3379 = vmatpush1.msra.mxu0 0.0
        %3380 = vmatprep.mubr.f32.mxu0 0.0
        %3381 = vmatmul.mubr.f32.gmra.mrb[0].mxu0 %v675
        %v3382 = vpop.f32.mrb[0].mxu0
        %v3383 = vadd.f32 0.0, %v3382
        %v3384 = vpop.f32.mrb[0].mxu0
        %3385 = vdwg.mxu0
        %s3386 = scalar_lea.vmem [#allocation6], 96
        %v3387 = vld [vmem:[%s3386] sm:$0xff]
        %v3388 = vld [vmem:[%s3386 + $0x8] sm:$0xff]
        %v3389 = vld [vmem:[%s3386 + $0x10] sm:$0xff]
        %v3390 = vld [vmem:[%s3386 + $0x18] sm:$0xff]
        %3391 = vmatprep.subr.mxu0 0.0
        %3392 = vmatpush1.msra.mxu0 %v3387
        %3393 = vmatprep.subr.mxu0 0.0
        %3394 = vmatpush1.msra.mxu0 %v3388
        %3395 = vmatprep.subr.mxu0 0.0
        %3396 = vmatpush1.msra.mxu0 %v3389
        %3397 = vmatprep.subr.mxu0 0.0
        %3398 = vmatpush1.msra.mxu0 %v3390
        %3399 = vmatprep.subr.mxu0 0.0
        %3400 = vmatpush1.msra.mxu0 0.0
        %3401 = vmatprep.subr.mxu0 0.0
        %3402 = vmatpush1.msra.mxu0 0.0
        %3403 = vmatprep.subr.mxu0 0.0
        %3404 = vmatpush1.msra.mxu0 0.0
        %3405 = vmatprep.subr.mxu0 0.0
        %3406 = vmatpush1.msra.mxu0 0.0
        %3407 = vmatprep.subr.mxu0 0.0
        %3408 = vmatpush1.msra.mxu0 0.0
        %3409 = vmatprep.subr.mxu0 0.0
        %3410 = vmatpush1.msra.mxu0 0.0
        %3411 = vmatprep.subr.mxu0 0.0
        %3412 = vmatpush1.msra.mxu0 0.0
        %3413 = vmatprep.subr.mxu0 0.0
        %3414 = vmatpush1.msra.mxu0 0.0
        %3415 = vmatprep.subr.mxu0 0.0
        %3416 = vmatpush1.msra.mxu0 0.0
        %3417 = vmatprep.subr.mxu0 0.0
        %3418 = vmatpush1.msra.mxu0 0.0
        %3419 = vmatprep.subr.mxu0 0.0
        %3420 = vmatpush1.msra.mxu0 0.0
        %3421 = vmatprep.subr.mxu0 0.0
        %3422 = vmatpush1.msra.mxu0 0.0
        %3423 = vmatprep.subr.mxu0 0.0
        %3424 = vmatpush1.msra.mxu0 0.0
        %3425 = vmatprep.subr.mxu0 0.0
        %3426 = vmatpush1.msra.mxu0 0.0
        %3427 = vmatprep.subr.mxu0 0.0
        %3428 = vmatpush1.msra.mxu0 0.0
        %3429 = vmatprep.subr.mxu0 0.0
        %3430 = vmatpush1.msra.mxu0 0.0
        %3431 = vmatprep.subr.mxu0 0.0
        %3432 = vmatpush1.msra.mxu0 0.0
        %3433 = vmatprep.subr.mxu0 0.0
        %3434 = vmatpush1.msra.mxu0 0.0
        %3435 = vmatprep.subr.mxu0 0.0
        %3436 = vmatpush1.msra.mxu0 0.0
        %3437 = vmatprep.subr.mxu0 0.0
        %3438 = vmatpush1.msra.mxu0 0.0
        %3439 = vmatprep.subr.mxu0 0.0
        %3440 = vmatpush1.msra.mxu0 0.0
        %3441 = vmatprep.subr.mxu0 0.0
        %3442 = vmatpush1.msra.mxu0 0.0
        %3443 = vmatprep.subr.mxu0 0.0
        %3444 = vmatpush1.msra.mxu0 0.0
        %3445 = vmatprep.subr.mxu0 0.0
        %3446 = vmatpush1.msra.mxu0 0.0
        %3447 = vmatprep.subr.mxu0 0.0
        %3448 = vmatpush1.msra.mxu0 0.0
        %3449 = vmatprep.subr.mxu0 0.0
        %3450 = vmatpush1.msra.mxu0 0.0
        %3451 = vmatprep.subr.mxu0 0.0
        %3452 = vmatpush1.msra.mxu0 0.0
        %3453 = vmatprep.subr.mxu0 0.0
        %3454 = vmatpush1.msra.mxu0 0.0
        %3455 = vmatprep.mubr.f32.mxu0 0.0
        %3456 = vmatmul.mubr.f32.gmra.mrb[0].mxu0 %v675
        %v3457 = vpop.f32.mrb[0].mxu0
        %v3458 = vadd.f32 0.0, %v3457
        %v3459 = vpop.f32.mrb[0].mxu0
        %3460 = vdwg.mxu0
        %s3461 = scalar_lea.vmem %s5, 96
        %v3462 = vld [vmem:[%s3461] sm:$0xff]
        %v3463 = vld [vmem:[%s3461 + $0x8] sm:$0xff]
        %v3464 = vld [vmem:[%s3461 + $0x10] sm:$0xff]
        %v3465 = vld [vmem:[%s3461 + $0x18] sm:$0xff]
        %3466 = vmatprep.subr.mxu0 0.0
        %3467 = vmatpush1.msra.mxu0 %v3462
        %3468 = vmatprep.subr.mxu0 0.0
        %3469 = vmatpush1.msra.mxu0 %v3463
        %3470 = vmatprep.subr.mxu0 0.0
        %3471 = vmatpush1.msra.mxu0 %v3464
        %3472 = vmatprep.subr.mxu0 0.0
        %3473 = vmatpush1.msra.mxu0 %v3465
        %3474 = vmatprep.subr.mxu0 0.0
        %3475 = vmatpush1.msra.mxu0 0.0
        %3476 = vmatprep.subr.mxu0 0.0
        %3477 = vmatpush1.msra.mxu0 0.0
        %3478 = vmatprep.subr.mxu0 0.0
        %3479 = vmatpush1.msra.mxu0 0.0
        %3480 = vmatprep.subr.mxu0 0.0
        %3481 = vmatpush1.msra.mxu0 0.0
        %3482 = vmatprep.subr.mxu0 0.0
        %3483 = vmatpush1.msra.mxu0 0.0
        %3484 = vmatprep.subr.mxu0 0.0
        %3485 = vmatpush1.msra.mxu0 0.0
        %3486 = vmatprep.subr.mxu0 0.0
        %3487 = vmatpush1.msra.mxu0 0.0
        %3488 = vmatprep.subr.mxu0 0.0
        %3489 = vmatpush1.msra.mxu0 0.0
        %3490 = vmatprep.subr.mxu0 0.0
        %3491 = vmatpush1.msra.mxu0 0.0
        %3492 = vmatprep.subr.mxu0 0.0
        %3493 = vmatpush1.msra.mxu0 0.0
        %3494 = vmatprep.subr.mxu0 0.0
        %3495 = vmatpush1.msra.mxu0 0.0
        %3496 = vmatprep.subr.mxu0 0.0
        %3497 = vmatpush1.msra.mxu0 0.0
        %3498 = vmatprep.subr.mxu0 0.0
        %3499 = vmatpush1.msra.mxu0 0.0
        %3500 = vmatprep.subr.mxu0 0.0
        %3501 = vmatpush1.msra.mxu0 0.0
        %3502 = vmatprep.subr.mxu0 0.0
        %3503 = vmatpush1.msra.mxu0 0.0
        %3504 = vmatprep.subr.mxu0 0.0
        %3505 = vmatpush1.msra.mxu0 0.0
        %3506 = vmatprep.subr.mxu0 0.0
        %3507 = vmatpush1.msra.mxu0 0.0
        %3508 = vmatprep.subr.mxu0 0.0
        %3509 = vmatpush1.msra.mxu0 0.0
        %3510 = vmatprep.subr.mxu0 0.0
        %3511 = vmatpush1.msra.mxu0 0.0
        %3512 = vmatprep.subr.mxu0 0.0
        %3513 = vmatpush1.msra.mxu0 0.0
        %3514 = vmatprep.subr.mxu0 0.0
        %3515 = vmatpush1.msra.mxu0 0.0
        %3516 = vmatprep.subr.mxu0 0.0
        %3517 = vmatpush1.msra.mxu0 0.0
        %3518 = vmatprep.subr.mxu0 0.0
        %3519 = vmatpush1.msra.mxu0 0.0
        %3520 = vmatprep.subr.mxu0 0.0
        %3521 = vmatpush1.msra.mxu0 0.0
        %3522 = vmatprep.subr.mxu0 0.0
        %3523 = vmatpush1.msra.mxu0 0.0
        %3524 = vmatprep.subr.mxu0 0.0
        %3525 = vmatpush1.msra.mxu0 0.0
        %3526 = vmatprep.subr.mxu0 0.0
        %3527 = vmatpush1.msra.mxu0 0.0
        %3528 = vmatprep.subr.mxu0 0.0
        %3529 = vmatpush1.msra.mxu0 0.0
        %3530 = vmatprep.mubr.f32.mxu0 0.0
        %3531 = vmatmul.mubr.f32.gmra.mrb[0].mxu0 %v900
        %v3532 = vpop.f32.mrb[0].mxu0
        %v3533 = vadd.f32 0.0, %v3532
        %v3534 = vpop.f32.mrb[0].mxu0
        %3535 = vdwg.mxu0
        %s3536 = scalar_lea.vmem %s7, 3
        %v3537 = vld [vmem:[%s3536] sm:$0x1]
        %s3538 = scalar_lea.vmem %s8, 3
        %v3539 = vld [vmem:[%s3538] sm:$0x1]
        %v3541 = vlaneseq
        %v3542 = vshrl.u32 %v3541, 7
        %v3543 = vsub.s32 0, %v3542
        %v3544 = vrot.slane %v3537, %v3543
        %v3546 = vadd.f32 %v3308, %v3544
        %v3548 = vlaneseq
        %v3549 = vshrl.u32 %v3548, 7
        %v3550 = vsub.s32 0, %v3549
        %v3551 = vrot.slane %v3539, %v3550
        %v3553 = vadd.f32 %v3308, %v3551
        %v3555 = vsel %vm988, %v3553, 0
        %v3558 = vsel %vm988, %v3533, 0
        %3560 = vmatprep.subr.mxu0 0.0
        %3561 = vmatpush1.xpose.msra.mxu0 %v3558
        %3562 = vmatprep.subr.mxu0 0.0
        %3563 = vmatpush1.xpose.msra.mxu0 0.0
        %3564 = vmatprep.subr.mxu0 0.0
        %3565 = vmatpush1.xpose.msra.mxu0 0.0
        %3566 = vmatprep.subr.mxu0 0.0
        %3567 = vmatpush1.xpose.msra.mxu0 0.0
        %3568 = vmatprep.subr.mxu0 0.0
        %3569 = vmatpush1.xpose.msra.mxu0 0.0
        %3570 = vmatprep.subr.mxu0 0.0
        %3571 = vmatpush1.xpose.msra.mxu0 0.0
        %3572 = vmatprep.subr.mxu0 0.0
        %3573 = vmatpush1.xpose.msra.mxu0 0.0
        %3574 = vmatprep.subr.mxu0 0.0
        %3575 = vmatpush1.xpose.msra.mxu0 0.0
        %3576 = vmatprep.subr.mxu0 0.0
        %3577 = vmatpush1.xpose.msra.mxu0 0.0
        %3578 = vmatprep.subr.mxu0 0.0
        %3579 = vmatpush1.xpose.msra.mxu0 0.0
        %3580 = vmatprep.subr.mxu0 0.0
        %3581 = vmatpush1.xpose.msra.mxu0 0.0
        %3582 = vmatprep.subr.mxu0 0.0
        %3583 = vmatpush1.xpose.msra.mxu0 0.0
        %3584 = vmatprep.subr.mxu0 0.0
        %3585 = vmatpush1.xpose.msra.mxu0 0.0
        %3586 = vmatprep.subr.mxu0 0.0
        %3587 = vmatpush1.xpose.msra.mxu0 0.0
        %3588 = vmatprep.subr.mxu0 0.0
        %3589 = vmatpush1.xpose.msra.mxu0 0.0
        %3590 = vmatprep.subr.mxu0 0.0
        %3591 = vmatpush1.xpose.msra.mxu0 0.0
        %3592 = vmatprep.subr.mxu0 0.0
        %3593 = vmatpush1.xpose.msra.mxu0 0.0
        %3594 = vmatprep.subr.mxu0 0.0
        %3595 = vmatpush1.xpose.msra.mxu0 0.0
        %3596 = vmatprep.subr.mxu0 0.0
        %3597 = vmatpush1.xpose.msra.mxu0 0.0
        %3598 = vmatprep.subr.mxu0 0.0
        %3599 = vmatpush1.xpose.msra.mxu0 0.0
        %3600 = vmatprep.subr.mxu0 0.0
        %3601 = vmatpush1.xpose.msra.mxu0 0.0
        %3602 = vmatprep.subr.mxu0 0.0
        %3603 = vmatpush1.xpose.msra.mxu0 0.0
        %3604 = vmatprep.subr.mxu0 0.0
        %3605 = vmatpush1.xpose.msra.mxu0 0.0
        %3606 = vmatprep.subr.mxu0 0.0
        %3607 = vmatpush1.xpose.msra.mxu0 0.0
        %3608 = vmatprep.subr.mxu0 0.0
        %3609 = vmatpush1.xpose.msra.mxu0 0.0
        %3610 = vmatprep.subr.mxu0 0.0
        %3611 = vmatpush1.xpose.msra.mxu0 0.0
        %3612 = vmatprep.subr.mxu0 0.0
        %3613 = vmatpush1.xpose.msra.mxu0 0.0
        %3614 = vmatprep.subr.mxu0 0.0
        %3615 = vmatpush1.xpose.msra.mxu0 0.0
        %3616 = vmatprep.subr.mxu0 0.0
        %3617 = vmatpush1.xpose.msra.mxu0 0.0
        %3618 = vmatprep.subr.mxu0 0.0
        %3619 = vmatpush1.xpose.msra.mxu0 0.0
        %3620 = vmatprep.subr.mxu0 0.0
        %3621 = vmatpush1.xpose.msra.mxu0 0.0
        %3622 = vmatprep.subr.mxu0 0.0
        %3623 = vmatpush1.xpose.msra.mxu0 0.0
        %3624 = vmatprep.mubr.f32.mxu0 0.0
        %3625 = vmatmul.mubr.f32.gmra.mrb[0].mxu0 %v3555
        %v3626 = vpop.f32.mrb[0].mxu0
        %v3627 = vadd.f32 0.0, %v3626
        %v3628 = vpop.f32.mrb[0].mxu0
        %3629 = vdwg.mxu0
        %v3631 = vsel %vm988, %v3627, 0
        %3633 = vmatprep.subr.mxu0 0.0
        %3634 = vmatpush1.msra.mxu0 %v646
        %3635 = vmatprep.subr.mxu0 0.0
        %3636 = vmatpush1.msra.mxu0 0.0
        %3637 = vmatprep.subr.mxu0 0.0
        %3638 = vmatpush1.msra.mxu0 0.0
        %3639 = vmatprep.subr.mxu0 0.0
        %3640 = vmatpush1.msra.mxu0 0.0
        %3641 = vmatprep.subr.mxu0 0.0
        %3642 = vmatpush1.msra.mxu0 0.0
        %3643 = vmatprep.subr.mxu0 0.0
        %3644 = vmatpush1.msra.mxu0 0.0
        %3645 = vmatprep.subr.mxu0 0.0
        %3646 = vmatpush1.msra.mxu0 0.0
        %3647 = vmatprep.subr.mxu0 0.0
        %3648 = vmatpush1.msra.mxu0 0.0
        %3649 = vmatprep.subr.mxu0 0.0
        %3650 = vmatpush1.msra.mxu0 0.0
        %3651 = vmatprep.subr.mxu0 0.0
        %3652 = vmatpush1.msra.mxu0 0.0
        %3653 = vmatprep.subr.mxu0 0.0
        %3654 = vmatpush1.msra.mxu0 0.0
        %3655 = vmatprep.subr.mxu0 0.0
        %3656 = vmatpush1.msra.mxu0 0.0
        %3657 = vmatprep.subr.mxu0 0.0
        %3658 = vmatpush1.msra.mxu0 0.0
        %3659 = vmatprep.subr.mxu0 0.0
        %3660 = vmatpush1.msra.mxu0 0.0
        %3661 = vmatprep.subr.mxu0 0.0
        %3662 = vmatpush1.msra.mxu0 0.0
        %3663 = vmatprep.subr.mxu0 0.0
        %3664 = vmatpush1.msra.mxu0 0.0
        %3665 = vmatprep.subr.mxu0 0.0
        %3666 = vmatpush1.msra.mxu0 0.0
        %3667 = vmatprep.subr.mxu0 0.0
        %3668 = vmatpush1.msra.mxu0 0.0
        %3669 = vmatprep.subr.mxu0 0.0
        %3670 = vmatpush1.msra.mxu0 0.0
        %3671 = vmatprep.subr.mxu0 0.0
        %3672 = vmatpush1.msra.mxu0 0.0
        %3673 = vmatprep.subr.mxu0 0.0
        %3674 = vmatpush1.msra.mxu0 0.0
        %3675 = vmatprep.subr.mxu0 0.0
        %3676 = vmatpush1.msra.mxu0 0.0
        %3677 = vmatprep.subr.mxu0 0.0
        %3678 = vmatpush1.msra.mxu0 0.0
        %3679 = vmatprep.subr.mxu0 0.0
        %3680 = vmatpush1.msra.mxu0 0.0
        %3681 = vmatprep.subr.mxu0 0.0
        %3682 = vmatpush1.msra.mxu0 0.0
        %3683 = vmatprep.subr.mxu0 0.0
        %3684 = vmatpush1.msra.mxu0 0.0
        %3685 = vmatprep.subr.mxu0 0.0
        %3686 = vmatpush1.msra.mxu0 0.0
        %3687 = vmatprep.subr.mxu0 0.0
        %3688 = vmatpush1.msra.mxu0 0.0
        %3689 = vmatprep.subr.mxu0 0.0
        %3690 = vmatpush1.msra.mxu0 0.0
        %3691 = vmatprep.subr.mxu0 0.0
        %3692 = vmatpush1.msra.mxu0 0.0
        %3693 = vmatprep.subr.mxu0 0.0
        %3694 = vmatpush1.msra.mxu0 0.0
        %3695 = vmatprep.subr.mxu0 0.0
        %3696 = vmatpush1.msra.mxu0 0.0
        %3697 = vmatprep.mubr.f32.mxu0 0.0
        %3698 = vmatmul.mubr.f32.gmra.mrb[0].mxu0 %v3631
        %v3699 = vpop.f32.mrb[0].mxu0
        %v3700 = vadd.f32 0.0, %v3699
        %v3701 = vpop.f32.mrb[0].mxu0
        %3702 = vdwg.mxu0
        %v3703 = vsel %vm1139, %v3700, %v3627
        %v3705 = vsel %vm988, %v3703, 0
        %3707 = vmatprep.subr.mxu0 0.0
        %3708 = vmatpush1.msra.mxu0 %v655
        %3709 = vmatprep.subr.mxu0 0.0
        %3710 = vmatpush1.msra.mxu0 0.0
        %3711 = vmatprep.subr.mxu0 0.0
        %3712 = vmatpush1.msra.mxu0 0.0
        %3713 = vmatprep.subr.mxu0 0.0
        %3714 = vmatpush1.msra.mxu0 0.0
        %3715 = vmatprep.subr.mxu0 0.0
        %3716 = vmatpush1.msra.mxu0 0.0
        %3717 = vmatprep.subr.mxu0 0.0
        %3718 = vmatpush1.msra.mxu0 0.0
        %3719 = vmatprep.subr.mxu0 0.0
        %3720 = vmatpush1.msra.mxu0 0.0
        %3721 = vmatprep.subr.mxu0 0.0
        %3722 = vmatpush1.msra.mxu0 0.0
        %3723 = vmatprep.subr.mxu0 0.0
        %3724 = vmatpush1.msra.mxu0 0.0
        %3725 = vmatprep.subr.mxu0 0.0
        %3726 = vmatpush1.msra.mxu0 0.0
        %3727 = vmatprep.subr.mxu0 0.0
        %3728 = vmatpush1.msra.mxu0 0.0
        %3729 = vmatprep.subr.mxu0 0.0
        %3730 = vmatpush1.msra.mxu0 0.0
        %3731 = vmatprep.subr.mxu0 0.0
        %3732 = vmatpush1.msra.mxu0 0.0
        %3733 = vmatprep.subr.mxu0 0.0
        %3734 = vmatpush1.msra.mxu0 0.0
        %3735 = vmatprep.subr.mxu0 0.0
        %3736 = vmatpush1.msra.mxu0 0.0
        %3737 = vmatprep.subr.mxu0 0.0
        %3738 = vmatpush1.msra.mxu0 0.0
        %3739 = vmatprep.subr.mxu0 0.0
        %3740 = vmatpush1.msra.mxu0 0.0
        %3741 = vmatprep.subr.mxu0 0.0
        %3742 = vmatpush1.msra.mxu0 0.0
        %3743 = vmatprep.subr.mxu0 0.0
        %3744 = vmatpush1.msra.mxu0 0.0
        %3745 = vmatprep.subr.mxu0 0.0
        %3746 = vmatpush1.msra.mxu0 0.0
        %3747 = vmatprep.subr.mxu0 0.0
        %3748 = vmatpush1.msra.mxu0 0.0
        %3749 = vmatprep.subr.mxu0 0.0
        %3750 = vmatpush1.msra.mxu0 0.0
        %3751 = vmatprep.subr.mxu0 0.0
        %3752 = vmatpush1.msra.mxu0 0.0
        %3753 = vmatprep.subr.mxu0 0.0
        %3754 = vmatpush1.msra.mxu0 0.0
        %3755 = vmatprep.subr.mxu0 0.0
        %3756 = vmatpush1.msra.mxu0 0.0
        %3757 = vmatprep.subr.mxu0 0.0
        %3758 = vmatpush1.msra.mxu0 0.0
        %3759 = vmatprep.subr.mxu0 0.0
        %3760 = vmatpush1.msra.mxu0 0.0
        %3761 = vmatprep.subr.mxu0 0.0
        %3762 = vmatpush1.msra.mxu0 0.0
        %3763 = vmatprep.subr.mxu0 0.0
        %3764 = vmatpush1.msra.mxu0 0.0
        %3765 = vmatprep.subr.mxu0 0.0
        %3766 = vmatpush1.msra.mxu0 0.0
        %3767 = vmatprep.subr.mxu0 0.0
        %3768 = vmatpush1.msra.mxu0 0.0
        %3769 = vmatprep.subr.mxu0 0.0
        %3770 = vmatpush1.msra.mxu0 0.0
        %3771 = vmatprep.mubr.f32.mxu0 0.0
        %3772 = vmatmul.mubr.f32.gmra.mrb[0].mxu0 %v3705
        %v3773 = vpop.f32.mrb[0].mxu0
        %v3774 = vadd.f32 0.0, %v3773
        %v3775 = vpop.f32.mrb[0].mxu0
        %3776 = vdwg.mxu0
        %v3777 = vsel %vm1215, %v3774, %v3703
        %v3779 = vsel %vm988, %v3777, 0
        %3781 = vmatprep.subr.mxu0 0.0
        %3782 = vmatpush1.msra.mxu0 %v665
        %3783 = vmatprep.subr.mxu0 0.0
        %3784 = vmatpush1.msra.mxu0 0.0
        %3785 = vmatprep.subr.mxu0 0.0
        %3786 = vmatpush1.msra.mxu0 0.0
        %3787 = vmatprep.subr.mxu0 0.0
        %3788 = vmatpush1.msra.mxu0 0.0
        %3789 = vmatprep.subr.mxu0 0.0
        %3790 = vmatpush1.msra.mxu0 0.0
        %3791 = vmatprep.subr.mxu0 0.0
        %3792 = vmatpush1.msra.mxu0 0.0
        %3793 = vmatprep.subr.mxu0 0.0
        %3794 = vmatpush1.msra.mxu0 0.0
        %3795 = vmatprep.subr.mxu0 0.0
        %3796 = vmatpush1.msra.mxu0 0.0
        %3797 = vmatprep.subr.mxu0 0.0
        %3798 = vmatpush1.msra.mxu0 0.0
        %3799 = vmatprep.subr.mxu0 0.0
        %3800 = vmatpush1.msra.mxu0 0.0
        %3801 = vmatprep.subr.mxu0 0.0
        %3802 = vmatpush1.msra.mxu0 0.0
        %3803 = vmatprep.subr.mxu0 0.0
        %3804 = vmatpush1.msra.mxu0 0.0
        %3805 = vmatprep.subr.mxu0 0.0
        %3806 = vmatpush1.msra.mxu0 0.0
        %3807 = vmatprep.subr.mxu0 0.0
        %3808 = vmatpush1.msra.mxu0 0.0
        %3809 = vmatprep.subr.mxu0 0.0
        %3810 = vmatpush1.msra.mxu0 0.0
        %3811 = vmatprep.subr.mxu0 0.0
        %3812 = vmatpush1.msra.mxu0 0.0
        %3813 = vmatprep.subr.mxu0 0.0
        %3814 = vmatpush1.msra.mxu0 0.0
        %3815 = vmatprep.subr.mxu0 0.0
        %3816 = vmatpush1.msra.mxu0 0.0
        %3817 = vmatprep.subr.mxu0 0.0
        %3818 = vmatpush1.msra.mxu0 0.0
        %3819 = vmatprep.subr.mxu0 0.0
        %3820 = vmatpush1.msra.mxu0 0.0
        %3821 = vmatprep.subr.mxu0 0.0
        %3822 = vmatpush1.msra.mxu0 0.0
        %3823 = vmatprep.subr.mxu0 0.0
        %3824 = vmatpush1.msra.mxu0 0.0
        %3825 = vmatprep.subr.mxu0 0.0
        %3826 = vmatpush1.msra.mxu0 0.0
        %3827 = vmatprep.subr.mxu0 0.0
        %3828 = vmatpush1.msra.mxu0 0.0
        %3829 = vmatprep.subr.mxu0 0.0
        %3830 = vmatpush1.msra.mxu0 0.0
        %3831 = vmatprep.subr.mxu0 0.0
        %3832 = vmatpush1.msra.mxu0 0.0
        %3833 = vmatprep.subr.mxu0 0.0
        %3834 = vmatpush1.msra.mxu0 0.0
        %3835 = vmatprep.subr.mxu0 0.0
        %3836 = vmatpush1.msra.mxu0 0.0
        %3837 = vmatprep.subr.mxu0 0.0
        %3838 = vmatpush1.msra.mxu0 0.0
        %3839 = vmatprep.subr.mxu0 0.0
        %3840 = vmatpush1.msra.mxu0 0.0
        %3841 = vmatprep.subr.mxu0 0.0
        %3842 = vmatpush1.msra.mxu0 0.0
        %3843 = vmatprep.subr.mxu0 0.0
        %3844 = vmatpush1.msra.mxu0 0.0
        %3845 = vmatprep.mubr.f32.mxu0 0.0
        %3846 = vmatmul.mubr.f32.gmra.mrb[0].mxu0 %v3779
        %v3847 = vpop.f32.mrb[0].mxu0
        %v3848 = vadd.f32 0.0, %v3847
        %v3849 = vpop.f32.mrb[0].mxu0
        %3850 = vdwg.mxu0
        %v3851 = vsel %vm1291, %v3848, %v3777
        %v3853 = vsel %vm988, %v3546, 0
        %v3856 = vsel %vm988, %v3383, 0
        %3858 = vmatprep.subr.mxu0 0.0
        %3859 = vmatpush1.xpose.msra.mxu0 %v3856
        %3860 = vmatprep.subr.mxu0 0.0
        %3861 = vmatpush1.xpose.msra.mxu0 0.0
        %3862 = vmatprep.subr.mxu0 0.0
        %3863 = vmatpush1.xpose.msra.mxu0 0.0
        %3864 = vmatprep.subr.mxu0 0.0
        %3865 = vmatpush1.xpose.msra.mxu0 0.0
        %3866 = vmatprep.subr.mxu0 0.0
        %3867 = vmatpush1.xpose.msra.mxu0 0.0
        %3868 = vmatprep.subr.mxu0 0.0
        %3869 = vmatpush1.xpose.msra.mxu0 0.0
        %3870 = vmatprep.subr.mxu0 0.0
        %3871 = vmatpush1.xpose.msra.mxu0 0.0
        %3872 = vmatprep.subr.mxu0 0.0
        %3873 = vmatpush1.xpose.msra.mxu0 0.0
        %3874 = vmatprep.subr.mxu0 0.0
        %3875 = vmatpush1.xpose.msra.mxu0 0.0
        %3876 = vmatprep.subr.mxu0 0.0
        %3877 = vmatpush1.xpose.msra.mxu0 0.0
        %3878 = vmatprep.subr.mxu0 0.0
        %3879 = vmatpush1.xpose.msra.mxu0 0.0
        %3880 = vmatprep.subr.mxu0 0.0
        %3881 = vmatpush1.xpose.msra.mxu0 0.0
        %3882 = vmatprep.subr.mxu0 0.0
        %3883 = vmatpush1.xpose.msra.mxu0 0.0
        %3884 = vmatprep.subr.mxu0 0.0
        %3885 = vmatpush1.xpose.msra.mxu0 0.0
        %3886 = vmatprep.subr.mxu0 0.0
        %3887 = vmatpush1.xpose.msra.mxu0 0.0
        %3888 = vmatprep.subr.mxu0 0.0
        %3889 = vmatpush1.xpose.msra.mxu0 0.0
        %3890 = vmatprep.subr.mxu0 0.0
        %3891 = vmatpush1.xpose.msra.mxu0 0.0
        %3892 = vmatprep.subr.mxu0 0.0
        %3893 = vmatpush1.xpose.msra.mxu0 0.0
        %3894 = vmatprep.subr.mxu0 0.0
        %3895 = vmatpush1.xpose.msra.mxu0 0.0
        %3896 = vmatprep.subr.mxu0 0.0
        %3897 = vmatpush1.xpose.msra.mxu0 0.0
        %3898 = vmatprep.subr.mxu0 0.0
        %3899 = vmatpush1.xpose.msra.mxu0 0.0
        %3900 = vmatprep.subr.mxu0 0.0
        %3901 = vmatpush1.xpose.msra.mxu0 0.0
        %3902 = vmatprep.subr.mxu0 0.0
        %3903 = vmatpush1.xpose.msra.mxu0 0.0
        %3904 = vmatprep.subr.mxu0 0.0
        %3905 = vmatpush1.xpose.msra.mxu0 0.0
        %3906 = vmatprep.subr.mxu0 0.0
        %3907 = vmatpush1.xpose.msra.mxu0 0.0
        %3908 = vmatprep.subr.mxu0 0.0
        %3909 = vmatpush1.xpose.msra.mxu0 0.0
        %3910 = vmatprep.subr.mxu0 0.0
        %3911 = vmatpush1.xpose.msra.mxu0 0.0
        %3912 = vmatprep.subr.mxu0 0.0
        %3913 = vmatpush1.xpose.msra.mxu0 0.0
        %3914 = vmatprep.subr.mxu0 0.0
        %3915 = vmatpush1.xpose.msra.mxu0 0.0
        %3916 = vmatprep.subr.mxu0 0.0
        %3917 = vmatpush1.xpose.msra.mxu0 0.0
        %3918 = vmatprep.subr.mxu0 0.0
        %3919 = vmatpush1.xpose.msra.mxu0 0.0
        %3920 = vmatprep.subr.mxu0 0.0
        %3921 = vmatpush1.xpose.msra.mxu0 0.0
        %3922 = vmatprep.mubr.f32.mxu0 0.0
        %3923 = vmatmul.mubr.f32.gmra.mrb[0].mxu0 %v3853
        %v3924 = vpop.f32.mrb[0].mxu0
        %v3925 = vadd.f32 %v3851, %v3924
        %v3926 = vpop.f32.mrb[0].mxu0
        %3927 = vdwg.mxu0
        %v3928 = vmul.f32 %v3925, 0.35355338
        %v3929 = vsel %vm638, -1e+30, %v3928
        %v3930 = vsel %vm988, %v3929, -inf
        %3931 = vmax.xlane.f32.xlu0 %v3930
        %v3932 = vpop.xlane.xlu0 %3931
        %v3933 = vsub.f32 %v3929, %v3932
        %v3934 = vmul.f32 %v3933, 1.442695
        %v3935 = vpow.pop %v3934
        %v3936 = vsel %vm988, %v3935, 0.0
        %3937 = vadd.xlane.f32.xlu0 %v3936
        %v3938 = vpop.xlane.xlu0 %3937
        %v3939 = vrcp.pop %v3938
        %v3940 = vmul.f32 %v3935, %v3939
        %v3942 = vsel %vm988, %v3940, 0
        %3944 = vmatprep.subr.mxu0 0.0
        %3945 = vmatpush1.msra.mxu0 %v3458
        %3946 = vmatprep.subr.mxu0 0.0
        %3947 = vmatpush1.msra.mxu0 0.0
        %3948 = vmatprep.subr.mxu0 0.0
        %3949 = vmatpush1.msra.mxu0 0.0
        %3950 = vmatprep.subr.mxu0 0.0
        %3951 = vmatpush1.msra.mxu0 0.0
        %3952 = vmatprep.subr.mxu0 0.0
        %3953 = vmatpush1.msra.mxu0 0.0
        %3954 = vmatprep.subr.mxu0 0.0
        %3955 = vmatpush1.msra.mxu0 0.0
        %3956 = vmatprep.subr.mxu0 0.0
        %3957 = vmatpush1.msra.mxu0 0.0
        %3958 = vmatprep.subr.mxu0 0.0
        %3959 = vmatpush1.msra.mxu0 0.0
        %3960 = vmatprep.subr.mxu0 0.0
        %3961 = vmatpush1.msra.mxu0 0.0
        %3962 = vmatprep.subr.mxu0 0.0
        %3963 = vmatpush1.msra.mxu0 0.0
        %3964 = vmatprep.subr.mxu0 0.0
        %3965 = vmatpush1.msra.mxu0 0.0
        %3966 = vmatprep.subr.mxu0 0.0
        %3967 = vmatpush1.msra.mxu0 0.0
        %3968 = vmatprep.subr.mxu0 0.0
        %3969 = vmatpush1.msra.mxu0 0.0
        %3970 = vmatprep.subr.mxu0 0.0
        %3971 = vmatpush1.msra.mxu0 0.0
        %3972 = vmatprep.subr.mxu0 0.0
        %3973 = vmatpush1.msra.mxu0 0.0
        %3974 = vmatprep.subr.mxu0 0.0
        %3975 = vmatpush1.msra.mxu0 0.0
        %3976 = vmatprep.subr.mxu0 0.0
        %3977 = vmatpush1.msra.mxu0 0.0
        %3978 = vmatprep.subr.mxu0 0.0
        %3979 = vmatpush1.msra.mxu0 0.0
        %3980 = vmatprep.subr.mxu0 0.0
        %3981 = vmatpush1.msra.mxu0 0.0
        %3982 = vmatprep.subr.mxu0 0.0
        %3983 = vmatpush1.msra.mxu0 0.0
        %3984 = vmatprep.subr.mxu0 0.0
        %3985 = vmatpush1.msra.mxu0 0.0
        %3986 = vmatprep.subr.mxu0 0.0
        %3987 = vmatpush1.msra.mxu0 0.0
        %3988 = vmatprep.subr.mxu0 0.0
        %3989 = vmatpush1.msra.mxu0 0.0
        %3990 = vmatprep.subr.mxu0 0.0
        %3991 = vmatpush1.msra.mxu0 0.0
        %3992 = vmatprep.subr.mxu0 0.0
        %3993 = vmatpush1.msra.mxu0 0.0
        %3994 = vmatprep.subr.mxu0 0.0
        %3995 = vmatpush1.msra.mxu0 0.0
        %3996 = vmatprep.subr.mxu0 0.0
        %3997 = vmatpush1.msra.mxu0 0.0
        %3998 = vmatprep.subr.mxu0 0.0
        %3999 = vmatpush1.msra.mxu0 0.0
        %4000 = vmatprep.subr.mxu0 0.0
        %4001 = vmatpush1.msra.mxu0 0.0
        %4002 = vmatprep.subr.mxu0 0.0
        %4003 = vmatpush1.msra.mxu0 0.0
        %4004 = vmatprep.subr.mxu0 0.0
        %4005 = vmatpush1.msra.mxu0 0.0
        %4006 = vmatprep.subr.mxu0 0.0
        %4007 = vmatpush1.msra.mxu0 0.0
        %4008 = vmatprep.mubr.f32.mxu0 0.0
        %4009 = vmatmul.mubr.f32.gmra.mrb[0].mxu0 %v3942
        %v4010 = vpop.f32.mrb[0].mxu0
        %v4011 = vadd.f32 0.0, %v4010
        %v4012 = vpop.f32.mrb[0].mxu0
        %4013 = vdwg.mxu0
        %s4014 = scalar_lea.vmem [#allocation7], 24
        %v4015 = vld [vmem:[%s4014] sm:$0xff]
        %v4017 = vsel %vm988, %v4011, 0
        %4019 = vmatprep.subr.mxu0 0.0
        %4020 = vmatpush1.msra.mxu0 %v4015
        %4021 = vmatprep.subr.mxu0 0.0
        %4022 = vmatpush1.msra.mxu0 0.0
        %4023 = vmatprep.subr.mxu0 0.0
        %4024 = vmatpush1.msra.mxu0 0.0
        %4025 = vmatprep.subr.mxu0 0.0
        %4026 = vmatpush1.msra.mxu0 0.0
        %4027 = vmatprep.subr.mxu0 0.0
        %4028 = vmatpush1.msra.mxu0 0.0
        %4029 = vmatprep.subr.mxu0 0.0
        %4030 = vmatpush1.msra.mxu0 0.0
        %4031 = vmatprep.subr.mxu0 0.0
        %4032 = vmatpush1.msra.mxu0 0.0
        %4033 = vmatprep.subr.mxu0 0.0
        %4034 = vmatpush1.msra.mxu0 0.0
        %4035 = vmatprep.subr.mxu0 0.0
        %4036 = vmatpush1.msra.mxu0 0.0
        %4037 = vmatprep.subr.mxu0 0.0
        %4038 = vmatpush1.msra.mxu0 0.0
        %4039 = vmatprep.subr.mxu0 0.0
        %4040 = vmatpush1.msra.mxu0 0.0
        %4041 = vmatprep.subr.mxu0 0.0
        %4042 = vmatpush1.msra.mxu0 0.0
        %4043 = vmatprep.subr.mxu0 0.0
        %4044 = vmatpush1.msra.mxu0 0.0
        %4045 = vmatprep.subr.mxu0 0.0
        %4046 = vmatpush1.msra.mxu0 0.0
        %4047 = vmatprep.subr.mxu0 0.0
        %4048 = vmatpush1.msra.mxu0 0.0
        %4049 = vmatprep.subr.mxu0 0.0
        %4050 = vmatpush1.msra.mxu0 0.0
        %4051 = vmatprep.subr.mxu0 0.0
        %4052 = vmatpush1.msra.mxu0 0.0
        %4053 = vmatprep.subr.mxu0 0.0
        %4054 = vmatpush1.msra.mxu0 0.0
        %4055 = vmatprep.subr.mxu0 0.0
        %4056 = vmatpush1.msra.mxu0 0.0
        %4057 = vmatprep.subr.mxu0 0.0
        %4058 = vmatpush1.msra.mxu0 0.0
        %4059 = vmatprep.subr.mxu0 0.0
        %4060 = vmatpush1.msra.mxu0 0.0
        %4061 = vmatprep.subr.mxu0 0.0
        %4062 = vmatpush1.msra.mxu0 0.0
        %4063 = vmatprep.subr.mxu0 0.0
        %4064 = vmatpush1.msra.mxu0 0.0
        %4065 = vmatprep.subr.mxu0 0.0
        %4066 = vmatpush1.msra.mxu0 0.0
        %4067 = vmatprep.subr.mxu0 0.0
        %4068 = vmatpush1.msra.mxu0 0.0
        %4069 = vmatprep.subr.mxu0 0.0
        %4070 = vmatpush1.msra.mxu0 0.0
        %4071 = vmatprep.subr.mxu0 0.0
        %4072 = vmatpush1.msra.mxu0 0.0
        %4073 = vmatprep.subr.mxu0 0.0
        %4074 = vmatpush1.msra.mxu0 0.0
        %4075 = vmatprep.subr.mxu0 0.0
        %4076 = vmatpush1.msra.mxu0 0.0
        %4077 = vmatprep.subr.mxu0 0.0
        %4078 = vmatpush1.msra.mxu0 0.0
        %4079 = vmatprep.subr.mxu0 0.0
        %4080 = vmatpush1.msra.mxu0 0.0
        %4081 = vmatprep.subr.mxu0 0.0
        %4082 = vmatpush1.msra.mxu0 0.0
        %4083 = vmatprep.mubr.f32.mxu0 0.0
        %4084 = vmatmul.mubr.f32.gmra.mrb[0].mxu0 %v4017
        %v4085 = vpop.f32.mrb[0].mxu0
        %v4086 = vadd.f32 0.0, %v4085
        %v4087 = vpop.f32.mrb[0].mxu0
        %4088 = vdwg.mxu0
        %v4089 = vadd.f32 %v3235, %v4086
        %v4090 = vadd.f32 %v632, %v4089
        %v4091 = vld [vmem:[%s9] sm:$0x1]
        %v4092 = vld [vmem:[%s10] sm:$0x1]
        %v4093 = vsel %vm673, %v4090, 0.0
        %4094 = vadd.xlane.f32.xlu0 %v4093
        %v4095 = vpop.xlane.xlu0 %4094
        %v4096 = vrcp.pop 32.0
        %v4097 = vmul.f32 %v4095, %v4096
        %v4098 = vsub.f32 %v4090, %v4097
        %v4099 = vmul.f32 %v4098, %v4098
        %v4100 = vsel %vm673, %v4099, 0.0
        %4101 = vadd.xlane.f32.xlu0 %v4100
        %v4102 = vpop.xlane.xlu0 %4101
        %v4103 = vmul.f32 %v4102, %v4096
        %v4104 = vadd.f32 %v4103, 1e-05
        %v4105 = vrsqrt.pop %v4104
        %v4106 = vmul.f32 %v4098, %v4105
        %v4108 = vlaneseq
        %v4109 = vshrl.u32 %v4108, 7
        %v4110 = vsub.s32 0, %v4109
        %v4111 = vrot.slane %v4091, %v4110
        %v4113 = vmul.f32 %v4106, %v4111
        %v4115 = vlaneseq
        %v4116 = vshrl.u32 %v4115, 7
        %v4117 = vsub.s32 0, %v4116
        %v4118 = vrot.slane %v4092, %v4117
        %v4120 = vadd.f32 %v4113, %v4118
        %v4121 = vld [vmem:[#allocation9] sm:$0xff]
        %v4122 = vld [vmem:[#allocation9 + $0x8] sm:$0xff]
        %v4123 = vld [vmem:[#allocation9 + $0x10] sm:$0xff]
        %v4124 = vld [vmem:[#allocation9 + $0x18] sm:$0xff]
        %v4125 = vld [vmem:[%s12] sm:$0x1]
        %v4127 = vlaneseq
        %v4128 = vshrl.u32 %v4127, 7
        %v4129 = vsub.s32 0, %v4128
        %v4130 = vrot.slane %v4125, %v4129
        %v4133 = vsel %vm673, %v4120, 0
        %4135 = vmatprep.subr.mxu0 0.0
        %4136 = vmatpush1.msra.mxu0 %v4121
        %4137 = vmatprep.subr.mxu0 0.0
        %4138 = vmatpush1.msra.mxu0 %v4122
        %4139 = vmatprep.subr.mxu0 0.0
        %4140 = vmatpush1.msra.mxu0 %v4123
        %4141 = vmatprep.subr.mxu0 0.0
        %4142 = vmatpush1.msra.mxu0 %v4124
        %4143 = vmatprep.subr.mxu0 0.0
        %4144 = vmatpush1.msra.mxu0 0.0
        %4145 = vmatprep.subr.mxu0 0.0
        %4146 = vmatpush1.msra.mxu0 0.0
        %4147 = vmatprep.subr.mxu0 0.0
        %4148 = vmatpush1.msra.mxu0 0.0
        %4149 = vmatprep.subr.mxu0 0.0
        %4150 = vmatpush1.msra.mxu0 0.0
        %4151 = vmatprep.subr.mxu0 0.0
        %4152 = vmatpush1.msra.mxu0 0.0
        %4153 = vmatprep.subr.mxu0 0.0
        %4154 = vmatpush1.msra.mxu0 0.0
        %4155 = vmatprep.subr.mxu0 0.0
        %4156 = vmatpush1.msra.mxu0 0.0
        %4157 = vmatprep.subr.mxu0 0.0
        %4158 = vmatpush1.msra.mxu0 0.0
        %4159 = vmatprep.subr.mxu0 0.0
        %4160 = vmatpush1.msra.mxu0 0.0
        %4161 = vmatprep.subr.mxu0 0.0
        %4162 = vmatpush1.msra.mxu0 0.0
        %4163 = vmatprep.subr.mxu0 0.0
        %4164 = vmatpush1.msra.mxu0 0.0
        %4165 = vmatprep.subr.mxu0 0.0
        %4166 = vmatpush1.msra.mxu0 0.0
        %4167 = vmatprep.subr.mxu0 0.0
        %4168 = vmatpush1.msra.mxu0 0.0
        %4169 = vmatprep.subr.mxu0 0.0
        %4170 = vmatpush1.msra.mxu0 0.0
        %4171 = vmatprep.subr.mxu0 0.0
        %4172 = vmatpush1.msra.mxu0 0.0
        %4173 = vmatprep.subr.mxu0 0.0
        %4174 = vmatpush1.msra.mxu0 0.0
        %4175 = vmatprep.subr.mxu0 0.0
        %4176 = vmatpush1.msra.mxu0 0.0
        %4177 = vmatprep.subr.mxu0 0.0
        %4178 = vmatpush1.msra.mxu0 0.0
        %4179 = vmatprep.subr.mxu0 0.0
        %4180 = vmatpush1.msra.mxu0 0.0
        %4181 = vmatprep.subr.mxu0 0.0
        %4182 = vmatpush1.msra.mxu0 0.0
        %4183 = vmatprep.subr.mxu0 0.0
        %4184 = vmatpush1.msra.mxu0 0.0
        %4185 = vmatprep.subr.mxu0 0.0
        %4186 = vmatpush1.msra.mxu0 0.0
        %4187 = vmatprep.subr.mxu0 0.0
        %4188 = vmatpush1.msra.mxu0 0.0
        %4189 = vmatprep.subr.mxu0 0.0
        %4190 = vmatpush1.msra.mxu0 0.0
        %4191 = vmatprep.subr.mxu0 0.0
        %4192 = vmatpush1.msra.mxu0 0.0
        %4193 = vmatprep.subr.mxu0 0.0
        %4194 = vmatpush1.msra.mxu0 0.0
        %4195 = vmatprep.subr.mxu0 0.0
        %4196 = vmatpush1.msra.mxu0 0.0
        %4197 = vmatprep.subr.mxu0 0.0
        %4198 = vmatpush1.msra.mxu0 0.0
        %4199 = vmatprep.mubr.f32.mxu0 0.0
        %4200 = vmatmul.mubr.f32.gmra.mrb[0].mxu0 %v4133
        %v4201 = vpop.f32.mrb[0].mxu0
        %v4202 = vadd.f32 %v4130, %v4201
        %v4203 = vpop.f32.mrb[0].mxu0
        %4204 = vdwg.mxu0
        %v4205 = vmax.f32 %v4202, 0.0
        %v4206 = vld [vmem:[#allocation10] sm:$0xff]
        %v4207 = vld [vmem:[#allocation10 + $0x8] sm:$0xff]
        %v4208 = vld [vmem:[#allocation10 + $0x10] sm:$0xff]
        %v4209 = vld [vmem:[#allocation10 + $0x18] sm:$0xff]
        %v4210 = vld [vmem:[#allocation10 + $0x20] sm:$0xff]
        %v4211 = vld [vmem:[#allocation10 + $0x28] sm:$0xff]
        %v4212 = vld [vmem:[#allocation10 + $0x30] sm:$0xff]
        %v4213 = vld [vmem:[#allocation10 + $0x38] sm:$0xff]
        %v4214 = vld [vmem:[%s14] sm:$0x1]
        %v4216 = vlaneseq
        %v4217 = vshrl.u32 %v4216, 7
        %v4218 = vsub.s32 0, %v4217
        %v4219 = vrot.slane %v4214, %v4218
        %vm4221 = vcmask 523264
        %v4223 = vsel %vm4221, %v4205, 0
        %4225 = vmatprep.subr.mxu0 0.0
        %4226 = vmatpush1.msra.mxu0 %v4206
        %4227 = vmatprep.subr.mxu0 0.0
        %4228 = vmatpush1.msra.mxu0 %v4207
        %4229 = vmatprep.subr.mxu0 0.0
        %4230 = vmatpush1.msra.mxu0 %v4208
        %4231 = vmatprep.subr.mxu0 0.0
        %4232 = vmatpush1.msra.mxu0 %v4209
        %4233 = vmatprep.subr.mxu0 0.0
        %4234 = vmatpush1.msra.mxu0 %v4210
        %4235 = vmatprep.subr.mxu0 0.0
        %4236 = vmatpush1.msra.mxu0 %v4211
        %4237 = vmatprep.subr.mxu0 0.0
        %4238 = vmatpush1.msra.mxu0 %v4212
        %4239 = vmatprep.subr.mxu0 0.0
        %4240 = vmatpush1.msra.mxu0 %v4213
        %4241 = vmatprep.subr.mxu0 0.0
        %4242 = vmatpush1.msra.mxu0 0.0
        %4243 = vmatprep.subr.mxu0 0.0
        %4244 = vmatpush1.msra.mxu0 0.0
        %4245 = vmatprep.subr.mxu0 0.0
        %4246 = vmatpush1.msra.mxu0 0.0
        %4247 = vmatprep.subr.mxu0 0.0
        %4248 = vmatpush1.msra.mxu0 0.0
        %4249 = vmatprep.subr.mxu0 0.0
        %4250 = vmatpush1.msra.mxu0 0.0
        %4251 = vmatprep.subr.mxu0 0.0
        %4252 = vmatpush1.msra.mxu0 0.0
        %4253 = vmatprep.subr.mxu0 0.0
        %4254 = vmatpush1.msra.mxu0 0.0
        %4255 = vmatprep.subr.mxu0 0.0
        %4256 = vmatpush1.msra.mxu0 0.0
        %4257 = vmatprep.subr.mxu0 0.0
        %4258 = vmatpush1.msra.mxu0 0.0
        %4259 = vmatprep.subr.mxu0 0.0
        %4260 = vmatpush1.msra.mxu0 0.0
        %4261 = vmatprep.subr.mxu0 0.0
        %4262 = vmatpush1.msra.mxu0 0.0
        %4263 = vmatprep.subr.mxu0 0.0
        %4264 = vmatpush1.msra.mxu0 0.0
        %4265 = vmatprep.subr.mxu0 0.0
        %4266 = vmatpush1.msra.mxu0 0.0
        %4267 = vmatprep.subr.mxu0 0.0
        %4268 = vmatpush1.msra.mxu0 0.0
        %4269 = vmatprep.subr.mxu0 0.0
        %4270 = vmatpush1.msra.mxu0 0.0
        %4271 = vmatprep.subr.mxu0 0.0
        %4272 = vmatpush1.msra.mxu0 0.0
        %4273 = vmatprep.subr.mxu0 0.0
        %4274 = vmatpush1.msra.mxu0 0.0
        %4275 = vmatprep.subr.mxu0 0.0
        %4276 = vmatpush1.msra.mxu0 0.0
        %4277 = vmatprep.subr.mxu0 0.0
        %4278 = vmatpush1.msra.mxu0 0.0
        %4279 = vmatprep.subr.mxu0 0.0
        %4280 = vmatpush1.msra.mxu0 0.0
        %4281 = vmatprep.subr.mxu0 0.0
        %4282 = vmatpush1.msra.mxu0 0.0
        %4283 = vmatprep.subr.mxu0 0.0
        %4284 = vmatpush1.msra.mxu0 0.0
        %4285 = vmatprep.subr.mxu0 0.0
        %4286 = vmatpush1.msra.mxu0 0.0
        %4287 = vmatprep.subr.mxu0 0.0
        %4288 = vmatpush1.msra.mxu0 0.0
        %4289 = vmatprep.mubr.f32.mxu0 0.0
        %4290 = vmatmul.mubr.f32.gmra.mrb[0].mxu0 %v4223
        %v4291 = vpop.f32.mrb[0].mxu0
        %v4292 = vadd.f32 %v4219, %v4291
        %v4293 = vpop.f32.mrb[0].mxu0
        %4294 = vdwg.mxu0
        %v4295 = vadd.f32 %v4120, %v4292
        %v4296 = vld [vmem:[%s15] sm:$0x1]
        %v4297 = vld [vmem:[%s16] sm:$0x1]
        %v4298 = vsel %vm673, %v4295, 0.0
        %4299 = vadd.xlane.f32.xlu0 %v4298
        %v4300 = vpop.xlane.xlu0 %4299
        %v4301 = vmul.f32 %v4300, %v4096
        %v4302 = vsub.f32 %v4295, %v4301
        %v4303 = vmul.f32 %v4302, %v4302
        %v4304 = vsel %vm673, %v4303, 0.0
        %4305 = vadd.xlane.f32.xlu0 %v4304
        %v4306 = vpop.xlane.xlu0 %4305
        %v4307 = vmul.f32 %v4306, %v4096
        %v4308 = vadd.f32 %v4307, 1e-05
        %v4309 = vrsqrt.pop %v4308
        %v4310 = vmul.f32 %v4302, %v4309
        %v4312 = vlaneseq
        %v4313 = vshrl.u32 %v4312, 7
        %v4314 = vsub.s32 0, %v4313
        %v4315 = vrot.slane %v4296, %v4314
        %v4317 = vmul.f32 %v4310, %v4315
        %v4319 = vlaneseq
        %v4320 = vshrl.u32 %v4319, 7
        %v4321 = vsub.s32 0, %v4320
        %v4322 = vrot.slane %v4297, %v4321
        %v4324 = vadd.f32 %v4317, %v4322
        %s4325 = scalar_lea.vmem [#allocation2], 128
        %v4326 = vld [vmem:[%s4325] sm:$0xff]
        %v4327 = vld [vmem:[%s4325 + $0x8] sm:$0xff]
        %v4328 = vld [vmem:[%s4325 + $0x10] sm:$0xff]
        %v4329 = vld [vmem:[%s4325 + $0x18] sm:$0xff]
        %v4331 = vsel %vm673, %v4324, 0
        %4333 = vmatprep.subr.mxu0 0.0
        %4334 = vmatpush1.msra.mxu0 %v4326
        %4335 = vmatprep.subr.mxu0 0.0
        %4336 = vmatpush1.msra.mxu0 %v4327
        %4337 = vmatprep.subr.mxu0 0.0
        %4338 = vmatpush1.msra.mxu0 %v4328
        %4339 = vmatprep.subr.mxu0 0.0
        %4340 = vmatpush1.msra.mxu0 %v4329
        %4341 = vmatprep.subr.mxu0 0.0
        %4342 = vmatpush1.msra.mxu0 0.0
        %4343 = vmatprep.subr.mxu0 0.0
        %4344 = vmatpush1.msra.mxu0 0.0
        %4345 = vmatprep.subr.mxu0 0.0
        %4346 = vmatpush1.msra.mxu0 0.0
        %4347 = vmatprep.subr.mxu0 0.0
        %4348 = vmatpush1.msra.mxu0 0.0
        %4349 = vmatprep.subr.mxu0 0.0
        %4350 = vmatpush1.msra.mxu0 0.0
        %4351 = vmatprep.subr.mxu0 0.0
        %4352 = vmatpush1.msra.mxu0 0.0
        %4353 = vmatprep.subr.mxu0 0.0
        %4354 = vmatpush1.msra.mxu0 0.0
        %4355 = vmatprep.subr.mxu0 0.0
        %4356 = vmatpush1.msra.mxu0 0.0
        %4357 = vmatprep.subr.mxu0 0.0
        %4358 = vmatpush1.msra.mxu0 0.0
        %4359 = vmatprep.subr.mxu0 0.0
        %4360 = vmatpush1.msra.mxu0 0.0
        %4361 = vmatprep.subr.mxu0 0.0
        %4362 = vmatpush1.msra.mxu0 0.0
        %4363 = vmatprep.subr.mxu0 0.0
        %4364 = vmatpush1.msra.mxu0 0.0
        %4365 = vmatprep.subr.mxu0 0.0
        %4366 = vmatpush1.msra.mxu0 0.0
        %4367 = vmatprep.subr.mxu0 0.0
        %4368 = vmatpush1.msra.mxu0 0.0
        %4369 = vmatprep.subr.mxu0 0.0
        %4370 = vmatpush1.msra.mxu0 0.0
        %4371 = vmatprep.subr.mxu0 0.0
        %4372 = vmatpush1.msra.mxu0 0.0
        %4373 = vmatprep.subr.mxu0 0.0
        %4374 = vmatpush1.msra.mxu0 0.0
        %4375 = vmatprep.subr.mxu0 0.0
        %4376 = vmatpush1.msra.mxu0 0.0
        %4377 = vmatprep.subr.mxu0 0.0
        %4378 = vmatpush1.msra.mxu0 0.0
        %4379 = vmatprep.subr.mxu0 0.0
        %4380 = vmatpush1.msra.mxu0 0.0
        %4381 = vmatprep.subr.mxu0 0.0
        %4382 = vmatpush1.msra.mxu0 0.0
        %4383 = vmatprep.subr.mxu0 0.0
        %4384 = vmatpush1.msra.mxu0 0.0
        %4385 = vmatprep.subr.mxu0 0.0
        %4386 = vmatpush1.msra.mxu0 0.0
        %4387 = vmatprep.subr.mxu0 0.0
        %4388 = vmatpush1.msra.mxu0 0.0
        %4389 = vmatprep.subr.mxu0 0.0
        %4390 = vmatpush1.msra.mxu0 0.0
        %4391 = vmatprep.subr.mxu0 0.0
        %4392 = vmatpush1.msra.mxu0 0.0
        %4393 = vmatprep.subr.mxu0 0.0
        %4394 = vmatpush1.msra.mxu0 0.0
        %4395 = vmatprep.subr.mxu0 0.0
        %4396 = vmatpush1.msra.mxu0 0.0
        %4397 = vmatprep.mubr.f32.mxu0 0.0
        %4398 = vmatmul.mubr.f32.gmra.mrb[0].mxu0 %v4331
        %v4399 = vpop.f32.mrb[0].mxu0
        %v4400 = vadd.f32 0.0, %v4399
        %v4401 = vpop.f32.mrb[0].mxu0
        %4402 = vdwg.mxu0
        %s4403 = scalar_lea.vmem [#allocation4], 128
        %v4404 = vld [vmem:[%s4403] sm:$0xff]
        %v4405 = vld [vmem:[%s4403 + $0x8] sm:$0xff]
        %v4406 = vld [vmem:[%s4403 + $0x10] sm:$0xff]
        %v4407 = vld [vmem:[%s4403 + $0x18] sm:$0xff]
        %4408 = vmatprep.subr.mxu0 0.0
        %4409 = vmatpush1.msra.mxu0 %v4404
        %4410 = vmatprep.subr.mxu0 0.0
        %4411 = vmatpush1.msra.mxu0 %v4405
        %4412 = vmatprep.subr.mxu0 0.0
        %4413 = vmatpush1.msra.mxu0 %v4406
        %4414 = vmatprep.subr.mxu0 0.0
        %4415 = vmatpush1.msra.mxu0 %v4407
        %4416 = vmatprep.subr.mxu0 0.0
        %4417 = vmatpush1.msra.mxu0 0.0
        %4418 = vmatprep.subr.mxu0 0.0
        %4419 = vmatpush1.msra.mxu0 0.0
        %4420 = vmatprep.subr.mxu0 0.0
        %4421 = vmatpush1.msra.mxu0 0.0
        %4422 = vmatprep.subr.mxu0 0.0
        %4423 = vmatpush1.msra.mxu0 0.0
        %4424 = vmatprep.subr.mxu0 0.0
        %4425 = vmatpush1.msra.mxu0 0.0
        %4426 = vmatprep.subr.mxu0 0.0
        %4427 = vmatpush1.msra.mxu0 0.0
        %4428 = vmatprep.subr.mxu0 0.0
        %4429 = vmatpush1.msra.mxu0 0.0
        %4430 = vmatprep.subr.mxu0 0.0
        %4431 = vmatpush1.msra.mxu0 0.0
        %4432 = vmatprep.subr.mxu0 0.0
        %4433 = vmatpush1.msra.mxu0 0.0
        %4434 = vmatprep.subr.mxu0 0.0
        %4435 = vmatpush1.msra.mxu0 0.0
        %4436 = vmatprep.subr.mxu0 0.0
        %4437 = vmatpush1.msra.mxu0 0.0
        %4438 = vmatprep.subr.mxu0 0.0
        %4439 = vmatpush1.msra.mxu0 0.0
        %4440 = vmatprep.subr.mxu0 0.0
        %4441 = vmatpush1.msra.mxu0 0.0
        %4442 = vmatprep.subr.mxu0 0.0
        %4443 = vmatpush1.msra.mxu0 0.0
        %4444 = vmatprep.subr.mxu0 0.0
        %4445 = vmatpush1.msra.mxu0 0.0
        %4446 = vmatprep.subr.mxu0 0.0
        %4447 = vmatpush1.msra.mxu0 0.0
        %4448 = vmatprep.subr.mxu0 0.0
        %4449 = vmatpush1.msra.mxu0 0.0
        %4450 = vmatprep.subr.mxu0 0.0
        %4451 = vmatpush1.msra.mxu0 0.0
        %4452 = vmatprep.subr.mxu0 0.0
        %4453 = vmatpush1.msra.mxu0 0.0
        %4454 = vmatprep.subr.mxu0 0.0
        %4455 = vmatpush1.msra.mxu0 0.0
        %4456 = vmatprep.subr.mxu0 0.0
        %4457 = vmatpush1.msra.mxu0 0.0
        %4458 = vmatprep.subr.mxu0 0.0
        %4459 = vmatpush1.msra.mxu0 0.0
        %4460 = vmatprep.subr.mxu0 0.0
        %4461 = vmatpush1.msra.mxu0 0.0
        %4462 = vmatprep.subr.mxu0 0.0
        %4463 = vmatpush1.msra.mxu0 0.0
        %4464 = vmatprep.subr.mxu0 0.0
        %4465 = vmatpush1.msra.mxu0 0.0
        %4466 = vmatprep.subr.mxu0 0.0
        %4467 = vmatpush1.msra.mxu0 0.0
        %4468 = vmatprep.subr.mxu0 0.0
        %4469 = vmatpush1.msra.mxu0 0.0
        %4470 = vmatprep.subr.mxu0 0.0
        %4471 = vmatpush1.msra.mxu0 0.0
        %4472 = vmatprep.mubr.f32.mxu0 0.0
        %4473 = vmatmul.mubr.f32.gmra.mrb[0].mxu0 %v4331
        %v4474 = vpop.f32.mrb[0].mxu0
        %v4475 = vadd.f32 0.0, %v4474
        %v4476 = vpop.f32.mrb[0].mxu0
        %4477 = vdwg.mxu0
        %s4478 = scalar_lea.vmem [#allocation6], 128
        %v4479 = vld [vmem:[%s4478] sm:$0xff]
        %v4480 = vld [vmem:[%s4478 + $0x8] sm:$0xff]
        %v4481 = vld [vmem:[%s4478 + $0x10] sm:$0xff]
        %v4482 = vld [vmem:[%s4478 + $0x18] sm:$0xff]
        %4483 = vmatprep.subr.mxu0 0.0
        %4484 = vmatpush1.msra.mxu0 %v4479
        %4485 = vmatprep.subr.mxu0 0.0
        %4486 = vmatpush1.msra.mxu0 %v4480
        %4487 = vmatprep.subr.mxu0 0.0
        %4488 = vmatpush1.msra.mxu0 %v4481
        %4489 = vmatprep.subr.mxu0 0.0
        %4490 = vmatpush1.msra.mxu0 %v4482
        %4491 = vmatprep.subr.mxu0 0.0
        %4492 = vmatpush1.msra.mxu0 0.0
        %4493 = vmatprep.subr.mxu0 0.0
        %4494 = vmatpush1.msra.mxu0 0.0
        %4495 = vmatprep.subr.mxu0 0.0
        %4496 = vmatpush1.msra.mxu0 0.0
        %4497 = vmatprep.subr.mxu0 0.0
        %4498 = vmatpush1.msra.mxu0 0.0
        %4499 = vmatprep.subr.mxu0 0.0
        %4500 = vmatpush1.msra.mxu0 0.0
        %4501 = vmatprep.subr.mxu0 0.0
        %4502 = vmatpush1.msra.mxu0 0.0
        %4503 = vmatprep.subr.mxu0 0.0
        %4504 = vmatpush1.msra.mxu0 0.0
        %4505 = vmatprep.subr.mxu0 0.0
        %4506 = vmatpush1.msra.mxu0 0.0
        %4507 = vmatprep.subr.mxu0 0.0
        %4508 = vmatpush1.msra.mxu0 0.0
        %4509 = vmatprep.subr.mxu0 0.0
        %4510 = vmatpush1.msra.mxu0 0.0
        %4511 = vmatprep.subr.mxu0 0.0
        %4512 = vmatpush1.msra.mxu0 0.0
        %4513 = vmatprep.subr.mxu0 0.0
        %4514 = vmatpush1.msra.mxu0 0.0
        %4515 = vmatprep.subr.mxu0 0.0
        %4516 = vmatpush1.msra.mxu0 0.0
        %4517 = vmatprep.subr.mxu0 0.0
        %4518 = vmatpush1.msra.mxu0 0.0
        %4519 = vmatprep.subr.mxu0 0.0
        %4520 = vmatpush1.msra.mxu0 0.0
        %4521 = vmatprep.subr.mxu0 0.0
        %4522 = vmatpush1.msra.mxu0 0.0
        %4523 = vmatprep.subr.mxu0 0.0
        %4524 = vmatpush1.msra.mxu0 0.0
        %4525 = vmatprep.subr.mxu0 0.0
        %4526 = vmatpush1.msra.mxu0 0.0
        %4527 = vmatprep.subr.mxu0 0.0
        %4528 = vmatpush1.msra.mxu0 0.0
        %4529 = vmatprep.subr.mxu0 0.0
        %4530 = vmatpush1.msra.mxu0 0.0
        %4531 = vmatprep.subr.mxu0 0.0
        %4532 = vmatpush1.msra.mxu0 0.0
        %4533 = vmatprep.subr.mxu0 0.0
        %4534 = vmatpush1.msra.mxu0 0.0
        %4535 = vmatprep.subr.mxu0 0.0
        %4536 = vmatpush1.msra.mxu0 0.0
        %4537 = vmatprep.subr.mxu0 0.0
        %4538 = vmatpush1.msra.mxu0 0.0
        %4539 = vmatprep.subr.mxu0 0.0
        %4540 = vmatpush1.msra.mxu0 0.0
        %4541 = vmatprep.subr.mxu0 0.0
        %4542 = vmatpush1.msra.mxu0 0.0
        %4543 = vmatprep.subr.mxu0 0.0
        %4544 = vmatpush1.msra.mxu0 0.0
        %4545 = vmatprep.subr.mxu0 0.0
        %4546 = vmatpush1.msra.mxu0 0.0
        %4547 = vmatprep.mubr.f32.mxu0 0.0
        %4548 = vmatmul.mubr.f32.gmra.mrb[0].mxu0 %v4331
        %v4549 = vpop.f32.mrb[0].mxu0
        %v4550 = vadd.f32 0.0, %v4549
        %v4551 = vpop.f32.mrb[0].mxu0
        %4552 = vdwg.mxu0
        %s4553 = scalar_lea.vmem %s5, 128
        %v4554 = vld [vmem:[%s4553] sm:$0xff]
        %v4555 = vld [vmem:[%s4553 + $0x8] sm:$0xff]
        %v4556 = vld [vmem:[%s4553 + $0x10] sm:$0xff]
        %v4557 = vld [vmem:[%s4553 + $0x18] sm:$0xff]
        %4558 = vmatprep.subr.mxu0 0.0
        %4559 = vmatpush1.msra.mxu0 %v4554
        %4560 = vmatprep.subr.mxu0 0.0
        %4561 = vmatpush1.msra.mxu0 %v4555
        %4562 = vmatprep.subr.mxu0 0.0
        %4563 = vmatpush1.msra.mxu0 %v4556
        %4564 = vmatprep.subr.mxu0 0.0
        %4565 = vmatpush1.msra.mxu0 %v4557
        %4566 = vmatprep.subr.mxu0 0.0
        %4567 = vmatpush1.msra.mxu0 0.0
        %4568 = vmatprep.subr.mxu0 0.0
        %4569 = vmatpush1.msra.mxu0 0.0
        %4570 = vmatprep.subr.mxu0 0.0
        %4571 = vmatpush1.msra.mxu0 0.0
        %4572 = vmatprep.subr.mxu0 0.0
        %4573 = vmatpush1.msra.mxu0 0.0
        %4574 = vmatprep.subr.mxu0 0.0
        %4575 = vmatpush1.msra.mxu0 0.0
        %4576 = vmatprep.subr.mxu0 0.0
        %4577 = vmatpush1.msra.mxu0 0.0
        %4578 = vmatprep.subr.mxu0 0.0
        %4579 = vmatpush1.msra.mxu0 0.0
        %4580 = vmatprep.subr.mxu0 0.0
        %4581 = vmatpush1.msra.mxu0 0.0
        %4582 = vmatprep.subr.mxu0 0.0
        %4583 = vmatpush1.msra.mxu0 0.0
        %4584 = vmatprep.subr.mxu0 0.0
        %4585 = vmatpush1.msra.mxu0 0.0
        %4586 = vmatprep.subr.mxu0 0.0
        %4587 = vmatpush1.msra.mxu0 0.0
        %4588 = vmatprep.subr.mxu0 0.0
        %4589 = vmatpush1.msra.mxu0 0.0
        %4590 = vmatprep.subr.mxu0 0.0
        %4591 = vmatpush1.msra.mxu0 0.0
        %4592 = vmatprep.subr.mxu0 0.0
        %4593 = vmatpush1.msra.mxu0 0.0
        %4594 = vmatprep.subr.mxu0 0.0
        %4595 = vmatpush1.msra.mxu0 0.0
        %4596 = vmatprep.subr.mxu0 0.0
        %4597 = vmatpush1.msra.mxu0 0.0
        %4598 = vmatprep.subr.mxu0 0.0
        %4599 = vmatpush1.msra.mxu0 0.0
        %4600 = vmatprep.subr.mxu0 0.0
        %4601 = vmatpush1.msra.mxu0 0.0
        %4602 = vmatprep.subr.mxu0 0.0
        %4603 = vmatpush1.msra.mxu0 0.0
        %4604 = vmatprep.subr.mxu0 0.0
        %4605 = vmatpush1.msra.mxu0 0.0
        %4606 = vmatprep.subr.mxu0 0.0
        %4607 = vmatpush1.msra.mxu0 0.0
        %4608 = vmatprep.subr.mxu0 0.0
        %4609 = vmatpush1.msra.mxu0 0.0
        %4610 = vmatprep.subr.mxu0 0.0
        %4611 = vmatpush1.msra.mxu0 0.0
        %4612 = vmatprep.subr.mxu0 0.0
        %4613 = vmatpush1.msra.mxu0 0.0
        %4614 = vmatprep.subr.mxu0 0.0
        %4615 = vmatpush1.msra.mxu0 0.0
        %4616 = vmatprep.subr.mxu0 0.0
        %4617 = vmatpush1.msra.mxu0 0.0
        %4618 = vmatprep.subr.mxu0 0.0
        %4619 = vmatpush1.msra.mxu0 0.0
        %4620 = vmatprep.subr.mxu0 0.0
        %4621 = vmatpush1.msra.mxu0 0.0
        %4622 = vmatprep.mubr.f32.mxu0 0.0
        %4623 = vmatmul.mubr.f32.gmra.mrb[0].mxu0 %v900
        %v4624 = vpop.f32.mrb[0].mxu0
        %v4625 = vadd.f32 0.0, %v4624
        %v4626 = vpop.f32.mrb[0].mxu0
        %4627 = vdwg.mxu0
        %s4628 = scalar_lea.vmem %s7, 4
        %v4629 = vld [vmem:[%s4628] sm:$0x1]
        %s4630 = scalar_lea.vmem %s8, 4
        %v4631 = vld [vmem:[%s4630] sm:$0x1]
        %v4633 = vlaneseq
        %v4634 = vshrl.u32 %v4633, 7
        %v4635 = vsub.s32 0, %v4634
        %v4636 = vrot.slane %v4629, %v4635
        %v4638 = vadd.f32 %v4400, %v4636
        %v4640 = vlaneseq
        %v4641 = vshrl.u32 %v4640, 7
        %v4642 = vsub.s32 0, %v4641
        %v4643 = vrot.slane %v4631, %v4642
        %v4645 = vadd.f32 %v4400, %v4643
        %v4647 = vsel %vm988, %v4645, 0
        %v4650 = vsel %vm988, %v4625, 0
        %4652 = vmatprep.subr.mxu0 0.0
        %4653 = vmatpush1.xpose.msra.mxu0 %v4650
        %4654 = vmatprep.subr.mxu0 0.0
        %4655 = vmatpush1.xpose.msra.mxu0 0.0
        %4656 = vmatprep.subr.mxu0 0.0
        %4657 = vmatpush1.xpose.msra.mxu0 0.0
        %4658 = vmatprep.subr.mxu0 0.0
        %4659 = vmatpush1.xpose.msra.mxu0 0.0
        %4660 = vmatprep.subr.mxu0 0.0
        %4661 = vmatpush1.xpose.msra.mxu0 0.0
        %4662 = vmatprep.subr.mxu0 0.0
        %4663 = vmatpush1.xpose.msra.mxu0 0.0
        %4664 = vmatprep.subr.mxu0 0.0
        %4665 = vmatpush1.xpose.msra.mxu0 0.0
        %4666 = vmatprep.subr.mxu0 0.0
        %4667 = vmatpush1.xpose.msra.mxu0 0.0
        %4668 = vmatprep.subr.mxu0 0.0
        %4669 = vmatpush1.xpose.msra.mxu0 0.0
        %4670 = vmatprep.subr.mxu0 0.0
        %4671 = vmatpush1.xpose.msra.mxu0 0.0
        %4672 = vmatprep.subr.mxu0 0.0
        %4673 = vmatpush1.xpose.msra.mxu0 0.0
        %4674 = vmatprep.subr.mxu0 0.0
        %4675 = vmatpush1.xpose.msra.mxu0 0.0
        %4676 = vmatprep.subr.mxu0 0.0
        %4677 = vmatpush1.xpose.msra.mxu0 0.0
        %4678 = vmatprep.subr.mxu0 0.0
        %4679 = vmatpush1.xpose.msra.mxu0 0.0
        %4680 = vmatprep.subr.mxu0 0.0
        %4681 = vmatpush1.xpose.msra.mxu0 0.0
        %4682 = vmatprep.subr.mxu0 0.0
        %4683 = vmatpush1.xpose.msra.mxu0 0.0
        %4684 = vmatprep.subr.mxu0 0.0
        %4685 = vmatpush1.xpose.msra.mxu0 0.0
        %4686 = vmatprep.subr.mxu0 0.0
        %4687 = vmatpush1.xpose.msra.mxu0 0.0
        %4688 = vmatprep.subr.mxu0 0.0
        %4689 = vmatpush1.xpose.msra.mxu0 0.0
        %4690 = vmatprep.subr.mxu0 0.0
        %4691 = vmatpush1.xpose.msra.mxu0 0.0
        %4692 = vmatprep.subr.mxu0 0.0
        %4693 = vmatpush1.xpose.msra.mxu0 0.0
        %4694 = vmatprep.subr.mxu0 0.0
        %4695 = vmatpush1.xpose.msra.mxu0 0.0
        %4696 = vmatprep.subr.mxu0 0.0
        %4697 = vmatpush1.xpose.msra.mxu0 0.0
        %4698 = vmatprep.subr.mxu0 0.0
        %4699 = vmatpush1.xpose.msra.mxu0 0.0
        %4700 = vmatprep.subr.mxu0 0.0
        %4701 = vmatpush1.xpose.msra.mxu0 0.0
        %4702 = vmatprep.subr.mxu0 0.0
        %4703 = vmatpush1.xpose.msra.mxu0 0.0
        %4704 = vmatprep.subr.mxu0 0.0
        %4705 = vmatpush1.xpose.msra.mxu0 0.0
        %4706 = vmatprep.subr.mxu0 0.0
        %4707 = vmatpush1.xpose.msra.mxu0 0.0
        %4708 = vmatprep.subr.mxu0 0.0
        %4709 = vmatpush1.xpose.msra.mxu0 0.0
        %4710 = vmatprep.subr.mxu0 0.0
        %4711 = vmatpush1.xpose.msra.mxu0 0.0
        %4712 = vmatprep.subr.mxu0 0.0
        %4713 = vmatpush1.xpose.msra.mxu0 0.0
        %4714 = vmatprep.subr.mxu0 0.0
        %4715 = vmatpush1.xpose.msra.mxu0 0.0
        %4716 = vmatprep.mubr.f32.mxu0 0.0
        %4717 = vmatmul.mubr.f32.gmra.mrb[0].mxu0 %v4647
        %v4718 = vpop.f32.mrb[0].mxu0
        %v4719 = vadd.f32 0.0, %v4718
        %v4720 = vpop.f32.mrb[0].mxu0
        %4721 = vdwg.mxu0
        %v4723 = vsel %vm988, %v4719, 0
        %4725 = vmatprep.subr.mxu0 0.0
        %4726 = vmatpush1.msra.mxu0 %v646
        %4727 = vmatprep.subr.mxu0 0.0
        %4728 = vmatpush1.msra.mxu0 0.0
        %4729 = vmatprep.subr.mxu0 0.0
        %4730 = vmatpush1.msra.mxu0 0.0
        %4731 = vmatprep.subr.mxu0 0.0
        %4732 = vmatpush1.msra.mxu0 0.0
        %4733 = vmatprep.subr.mxu0 0.0
        %4734 = vmatpush1.msra.mxu0 0.0
        %4735 = vmatprep.subr.mxu0 0.0
        %4736 = vmatpush1.msra.mxu0 0.0
        %4737 = vmatprep.subr.mxu0 0.0
        %4738 = vmatpush1.msra.mxu0 0.0
        %4739 = vmatprep.subr.mxu0 0.0
        %4740 = vmatpush1.msra.mxu0 0.0
        %4741 = vmatprep.subr.mxu0 0.0
        %4742 = vmatpush1.msra.mxu0 0.0
        %4743 = vmatprep.subr.mxu0 0.0
        %4744 = vmatpush1.msra.mxu0 0.0
        %4745 = vmatprep.subr.mxu0 0.0
        %4746 = vmatpush1.msra.mxu0 0.0
        %4747 = vmatprep.subr.mxu0 0.0
        %4748 = vmatpush1.msra.mxu0 0.0
        %4749 = vmatprep.subr.mxu0 0.0
        %4750 = vmatpush1.msra.mxu0 0.0
        %4751 = vmatprep.subr.mxu0 0.0
        %4752 = vmatpush1.msra.mxu0 0.0
        %4753 = vmatprep.subr.mxu0 0.0
        %4754 = vmatpush1.msra.mxu0 0.0
        %4755 = vmatprep.subr.mxu0 0.0
        %4756 = vmatpush1.msra.mxu0 0.0
        %4757 = vmatprep.subr.mxu0 0.0
        %4758 = vmatpush1.msra.mxu0 0.0
        %4759 = vmatprep.subr.mxu0 0.0
        %4760 = vmatpush1.msra.mxu0 0.0
        %4761 = vmatprep.subr.mxu0 0.0
        %4762 = vmatpush1.msra.mxu0 0.0
        %4763 = vmatprep.subr.mxu0 0.0
        %4764 = vmatpush1.msra.mxu0 0.0
        %4765 = vmatprep.subr.mxu0 0.0
        %4766 = vmatpush1.msra.mxu0 0.0
        %4767 = vmatprep.subr.mxu0 0.0
        %4768 = vmatpush1.msra.mxu0 0.0
        %4769 = vmatprep.subr.mxu0 0.0
        %4770 = vmatpush1.msra.mxu0 0.0
        %4771 = vmatprep.subr.mxu0 0.0
        %4772 = vmatpush1.msra.mxu0 0.0
        %4773 = vmatprep.subr.mxu0 0.0
        %4774 = vmatpush1.msra.mxu0 0.0
        %4775 = vmatprep.subr.mxu0 0.0
        %4776 = vmatpush1.msra.mxu0 0.0
        %4777 = vmatprep.subr.mxu0 0.0
        %4778 = vmatpush1.msra.mxu0 0.0
        %4779 = vmatprep.subr.mxu0 0.0
        %4780 = vmatpush1.msra.mxu0 0.0
        %4781 = vmatprep.subr.mxu0 0.0
        %4782 = vmatpush1.msra.mxu0 0.0
        %4783 = vmatprep.subr.mxu0 0.0
        %4784 = vmatpush1.msra.mxu0 0.0
        %4785 = vmatprep.subr.mxu0 0.0
        %4786 = vmatpush1.msra.mxu0 0.0
        %4787 = vmatprep.subr.mxu0 0.0
        %4788 = vmatpush1.msra.mxu0 0.0
        %4789 = vmatprep.mubr.f32.mxu0 0.0
        %4790 = vmatmul.mubr.f32.gmra.mrb[0].mxu0 %v4723
        %v4791 = vpop.f32.mrb[0].mxu0
        %v4792 = vadd.f32 0.0, %v4791
        %v4793 = vpop.f32.mrb[0].mxu0
        %4794 = vdwg.mxu0
        %v4795 = vsel %vm1139, %v4792, %v4719
        %v4797 = vsel %vm988, %v4795, 0
        %4799 = vmatprep.subr.mxu0 0.0
        %4800 = vmatpush1.msra.mxu0 %v655
        %4801 = vmatprep.subr.mxu0 0.0
        %4802 = vmatpush1.msra.mxu0 0.0
        %4803 = vmatprep.subr.mxu0 0.0
        %4804 = vmatpush1.msra.mxu0 0.0
        %4805 = vmatprep.subr.mxu0 0.0
        %4806 = vmatpush1.msra.mxu0 0.0
        %4807 = vmatprep.subr.mxu0 0.0
        %4808 = vmatpush1.msra.mxu0 0.0
        %4809 = vmatprep.subr.mxu0 0.0
        %4810 = vmatpush1.msra.mxu0 0.0
        %4811 = vmatprep.subr.mxu0 0.0
        %4812 = vmatpush1.msra.mxu0 0.0
        %4813 = vmatprep.subr.mxu0 0.0
        %4814 = vmatpush1.msra.mxu0 0.0
        %4815 = vmatprep.subr.mxu0 0.0
        %4816 = vmatpush1.msra.mxu0 0.0
        %4817 = vmatprep.subr.mxu0 0.0
        %4818 = vmatpush1.msra.mxu0 0.0
        %4819 = vmatprep.subr.mxu0 0.0
        %4820 = vmatpush1.msra.mxu0 0.0
        %4821 = vmatprep.subr.mxu0 0.0
        %4822 = vmatpush1.msra.mxu0 0.0
        %4823 = vmatprep.subr.mxu0 0.0
        %4824 = vmatpush1.msra.mxu0 0.0
        %4825 = vmatprep.subr.mxu0 0.0
        %4826 = vmatpush1.msra.mxu0 0.0
        %4827 = vmatprep.subr.mxu0 0.0
        %4828 = vmatpush1.msra.mxu0 0.0
        %4829 = vmatprep.subr.mxu0 0.0
        %4830 = vmatpush1.msra.mxu0 0.0
        %4831 = vmatprep.subr.mxu0 0.0
        %4832 = vmatpush1.msra.mxu0 0.0
        %4833 = vmatprep.subr.mxu0 0.0
        %4834 = vmatpush1.msra.mxu0 0.0
        %4835 = vmatprep.subr.mxu0 0.0
        %4836 = vmatpush1.msra.mxu0 0.0
        %4837 = vmatprep.subr.mxu0 0.0
        %4838 = vmatpush1.msra.mxu0 0.0
        %4839 = vmatprep.subr.mxu0 0.0
        %4840 = vmatpush1.msra.mxu0 0.0
        %4841 = vmatprep.subr.mxu0 0.0
        %4842 = vmatpush1.msra.mxu0 0.0
        %4843 = vmatprep.subr.mxu0 0.0
        %4844 = vmatpush1.msra.mxu0 0.0
        %4845 = vmatprep.subr.mxu0 0.0
        %4846 = vmatpush1.msra.mxu0 0.0
        %4847 = vmatprep.subr.mxu0 0.0
        %4848 = vmatpush1.msra.mxu0 0.0
        %4849 = vmatprep.subr.mxu0 0.0
        %4850 = vmatpush1.msra.mxu0 0.0
        %4851 = vmatprep.subr.mxu0 0.0
        %4852 = vmatpush1.msra.mxu0 0.0
        %4853 = vmatprep.subr.mxu0 0.0
        %4854 = vmatpush1.msra.mxu0 0.0
        %4855 = vmatprep.subr.mxu0 0.0
        %4856 = vmatpush1.msra.mxu0 0.0
        %4857 = vmatprep.subr.mxu0 0.0
        %4858 = vmatpush1.msra.mxu0 0.0
        %4859 = vmatprep.subr.mxu0 0.0
        %4860 = vmatpush1.msra.mxu0 0.0
        %4861 = vmatprep.subr.mxu0 0.0
        %4862 = vmatpush1.msra.mxu0 0.0
        %4863 = vmatprep.mubr.f32.mxu0 0.0
        %4864 = vmatmul.mubr.f32.gmra.mrb[0].mxu0 %v4797
        %v4865 = vpop.f32.mrb[0].mxu0
        %v4866 = vadd.f32 0.0, %v4865
        %v4867 = vpop.f32.mrb[0].mxu0
        %4868 = vdwg.mxu0
        %v4869 = vsel %vm1215, %v4866, %v4795
        %v4871 = vsel %vm988, %v4869, 0
        %4873 = vmatprep.subr.mxu0 0.0
        %4874 = vmatpush1.msra.mxu0 %v665
        %4875 = vmatprep.subr.mxu0 0.0
        %4876 = vmatpush1.msra.mxu0 0.0
        %4877 = vmatprep.subr.mxu0 0.0
        %4878 = vmatpush1.msra.mxu0 0.0
        %4879 = vmatprep.subr.mxu0 0.0
        %4880 = vmatpush1.msra.mxu0 0.0
        %4881 = vmatprep.subr.mxu0 0.0
        %4882 = vmatpush1.msra.mxu0 0.0
        %4883 = vmatprep.subr.mxu0 0.0
        %4884 = vmatpush1.msra.mxu0 0.0
        %4885 = vmatprep.subr.mxu0 0.0
        %4886 = vmatpush1.msra.mxu0 0.0
        %4887 = vmatprep.subr.mxu0 0.0
        %4888 = vmatpush1.msra.mxu0 0.0
        %4889 = vmatprep.subr.mxu0 0.0
        %4890 = vmatpush1.msra.mxu0 0.0
        %4891 = vmatprep.subr.mxu0 0.0
        %4892 = vmatpush1.msra.mxu0 0.0
        %4893 = vmatprep.subr.mxu0 0.0
        %4894 = vmatpush1.msra.mxu0 0.0
        %4895 = vmatprep.subr.mxu0 0.0
        %4896 = vmatpush1.msra.mxu0 0.0
        %4897 = vmatprep.subr.mxu0 0.0
        %4898 = vmatpush1.msra.mxu0 0.0
        %4899 = vmatprep.subr.mxu0 0.0
        %4900 = vmatpush1.msra.mxu0 0.0
        %4901 = vmatprep.subr.mxu0 0.0
        %4902 = vmatpush1.msra.mxu0 0.0
        %4903 = vmatprep.subr.mxu0 0.0
        %4904 = vmatpush1.msra.mxu0 0.0
        %4905 = vmatprep.subr.mxu0 0.0
        %4906 = vmatpush1.msra.mxu0 0.0
        %4907 = vmatprep.subr.mxu0 0.0
        %4908 = vmatpush1.msra.mxu0 0.0
        %4909 = vmatprep.subr.mxu0 0.0
        %4910 = vmatpush1.msra.mxu0 0.0
        %4911 = vmatprep.subr.mxu0 0.0
        %4912 = vmatpush1.msra.mxu0 0.0
        %4913 = vmatprep.subr.mxu0 0.0
        %4914 = vmatpush1.msra.mxu0 0.0
        %4915 = vmatprep.subr.mxu0 0.0
        %4916 = vmatpush1.msra.mxu0 0.0
        %4917 = vmatprep.subr.mxu0 0.0
        %4918 = vmatpush1.msra.mxu0 0.0
        %4919 = vmatprep.subr.mxu0 0.0
        %4920 = vmatpush1.msra.mxu0 0.0
        %4921 = vmatprep.subr.mxu0 0.0
        %4922 = vmatpush1.msra.mxu0 0.0
        %4923 = vmatprep.subr.mxu0 0.0
        %4924 = vmatpush1.msra.mxu0 0.0
        %4925 = vmatprep.subr.mxu0 0.0
        %4926 = vmatpush1.msra.mxu0 0.0
        %4927 = vmatprep.subr.mxu0 0.0
        %4928 = vmatpush1.msra.mxu0 0.0
        %4929 = vmatprep.subr.mxu0 0.0
        %4930 = vmatpush1.msra.mxu0 0.0
        %4931 = vmatprep.subr.mxu0 0.0
        %4932 = vmatpush1.msra.mxu0 0.0
        %4933 = vmatprep.subr.mxu0 0.0
        %4934 = vmatpush1.msra.mxu0 0.0
        %4935 = vmatprep.subr.mxu0 0.0
        %4936 = vmatpush1.msra.mxu0 0.0
        %4937 = vmatprep.mubr.f32.mxu0 0.0
        %4938 = vmatmul.mubr.f32.gmra.mrb[0].mxu0 %v4871
        %v4939 = vpop.f32.mrb[0].mxu0
        %v4940 = vadd.f32 0.0, %v4939
        %v4941 = vpop.f32.mrb[0].mxu0
        %4942 = vdwg.mxu0
        %v4943 = vsel %vm1291, %v4940, %v4869
        %v4945 = vsel %vm988, %v4638, 0
        %v4948 = vsel %vm988, %v4475, 0
        %4950 = vmatprep.subr.mxu0 0.0
        %4951 = vmatpush1.xpose.msra.mxu0 %v4948
        %4952 = vmatprep.subr.mxu0 0.0
        %4953 = vmatpush1.xpose.msra.mxu0 0.0
        %4954 = vmatprep.subr.mxu0 0.0
        %4955 = vmatpush1.xpose.msra.mxu0 0.0
        %4956 = vmatprep.subr.mxu0 0.0
        %4957 = vmatpush1.xpose.msra.mxu0 0.0
        %4958 = vmatprep.subr.mxu0 0.0
        %4959 = vmatpush1.xpose.msra.mxu0 0.0
        %4960 = vmatprep.subr.mxu0 0.0
        %4961 = vmatpush1.xpose.msra.mxu0 0.0
        %4962 = vmatprep.subr.mxu0 0.0
        %4963 = vmatpush1.xpose.msra.mxu0 0.0
        %4964 = vmatprep.subr.mxu0 0.0
        %4965 = vmatpush1.xpose.msra.mxu0 0.0
        %4966 = vmatprep.subr.mxu0 0.0
        %4967 = vmatpush1.xpose.msra.mxu0 0.0
        %4968 = vmatprep.subr.mxu0 0.0
        %4969 = vmatpush1.xpose.msra.mxu0 0.0
        %4970 = vmatprep.subr.mxu0 0.0
        %4971 = vmatpush1.xpose.msra.mxu0 0.0
        %4972 = vmatprep.subr.mxu0 0.0
        %4973 = vmatpush1.xpose.msra.mxu0 0.0
        %4974 = vmatprep.subr.mxu0 0.0
        %4975 = vmatpush1.xpose.msra.mxu0 0.0
        %4976 = vmatprep.subr.mxu0 0.0
        %4977 = vmatpush1.xpose.msra.mxu0 0.0
        %4978 = vmatprep.subr.mxu0 0.0
        %4979 = vmatpush1.xpose.msra.mxu0 0.0
        %4980 = vmatprep.subr.mxu0 0.0
        %4981 = vmatpush1.xpose.msra.mxu0 0.0
        %4982 = vmatprep.subr.mxu0 0.0
        %4983 = vmatpush1.xpose.msra.mxu0 0.0
        %4984 = vmatprep.subr.mxu0 0.0
        %4985 = vmatpush1.xpose.msra.mxu0 0.0
        %4986 = vmatprep.subr.mxu0 0.0
        %4987 = vmatpush1.xpose.msra.mxu0 0.0
        %4988 = vmatprep.subr.mxu0 0.0
        %4989 = vmatpush1.xpose.msra.mxu0 0.0
        %4990 = vmatprep.subr.mxu0 0.0
        %4991 = vmatpush1.xpose.msra.mxu0 0.0
        %4992 = vmatprep.subr.mxu0 0.0
        %4993 = vmatpush1.xpose.msra.mxu0 0.0
        %4994 = vmatprep.subr.mxu0 0.0
        %4995 = vmatpush1.xpose.msra.mxu0 0.0
        %4996 = vmatprep.subr.mxu0 0.0
        %4997 = vmatpush1.xpose.msra.mxu0 0.0
        %4998 = vmatprep.subr.mxu0 0.0
        %4999 = vmatpush1.xpose.msra.mxu0 0.0
        %5000 = vmatprep.subr.mxu0 0.0
        %5001 = vmatpush1.xpose.msra.mxu0 0.0
        %5002 = vmatprep.subr.mxu0 0.0
        %5003 = vmatpush1.xpose.msra.mxu0 0.0
        %5004 = vmatprep.subr.mxu0 0.0
        %5005 = vmatpush1.xpose.msra.mxu0 0.0
        %5006 = vmatprep.subr.mxu0 0.0
        %5007 = vmatpush1.xpose.msra.mxu0 0.0
        %5008 = vmatprep.subr.mxu0 0.0
        %5009 = vmatpush1.xpose.msra.mxu0 0.0
        %5010 = vmatprep.subr.mxu0 0.0
        %5011 = vmatpush1.xpose.msra.mxu0 0.0
        %5012 = vmatprep.subr.mxu0 0.0
        %5013 = vmatpush1.xpose.msra.mxu0 0.0
        %5014 = vmatprep.mubr.f32.mxu0 0.0
        %5015 = vmatmul.mubr.f32.gmra.mrb[0].mxu0 %v4945
        %v5016 = vpop.f32.mrb[0].mxu0
        %v5017 = vadd.f32 %v4943, %v5016
        %v5018 = vpop.f32.mrb[0].mxu0
        %5019 = vdwg.mxu0
        %v5020 = vmul.f32 %v5017, 0.35355338
        %v5021 = vsel %vm638, -1e+30, %v5020
        %v5022 = vsel %vm988, %v5021, -inf
        %5023 = vmax.xlane.f32.xlu0 %v5022
        %v5024 = vpop.xlane.xlu0 %5023
        %v5025 = vsub.f32 %v5021, %v5024
        %v5026 = vmul.f32 %v5025, 1.442695
        %v5027 = vpow.pop %v5026
        %v5028 = vsel %vm988, %v5027, 0.0
        %5029 = vadd.xlane.f32.xlu0 %v5028
        %v5030 = vpop.xlane.xlu0 %5029
        %v5031 = vrcp.pop %v5030
        %v5032 = vmul.f32 %v5027, %v5031
        %v5034 = vsel %vm988, %v5032, 0
        %5036 = vmatprep.subr.mxu0 0.0
        %5037 = vmatpush1.msra.mxu0 %v4550
        %5038 = vmatprep.subr.mxu0 0.0
        %5039 = vmatpush1.msra.mxu0 0.0
        %5040 = vmatprep.subr.mxu0 0.0
        %5041 = vmatpush1.msra.mxu0 0.0
        %5042 = vmatprep.subr.mxu0 0.0
        %5043 = vmatpush1.msra.mxu0 0.0
        %5044 = vmatprep.subr.mxu0 0.0
        %5045 = vmatpush1.msra.mxu0 0.0
        %5046 = vmatprep.subr.mxu0 0.0
        %5047 = vmatpush1.msra.mxu0 0.0
        %5048 = vmatprep.subr.mxu0 0.0
        %5049 = vmatpush1.msra.mxu0 0.0
        %5050 = vmatprep.subr.mxu0 0.0
        %5051 = vmatpush1.msra.mxu0 0.0
        %5052 = vmatprep.subr.mxu0 0.0
        %5053 = vmatpush1.msra.mxu0 0.0
        %5054 = vmatprep.subr.mxu0 0.0
        %5055 = vmatpush1.msra.mxu0 0.0
        %5056 = vmatprep.subr.mxu0 0.0
        %5057 = vmatpush1.msra.mxu0 0.0
        %5058 = vmatprep.subr.mxu0 0.0
        %5059 = vmatpush1.msra.mxu0 0.0
        %5060 = vmatprep.subr.mxu0 0.0
        %5061 = vmatpush1.msra.mxu0 0.0
        %5062 = vmatprep.subr.mxu0 0.0
        %5063 = vmatpush1.msra.mxu0 0.0
        %5064 = vmatprep.subr.mxu0 0.0
        %5065 = vmatpush1.msra.mxu0 0.0
        %5066 = vmatprep.subr.mxu0 0.0
        %5067 = vmatpush1.msra.mxu0 0.0
        %5068 = vmatprep.subr.mxu0 0.0
        %5069 = vmatpush1.msra.mxu0 0.0
        %5070 = vmatprep.subr.mxu0 0.0
        %5071 = vmatpush1.msra.mxu0 0.0
        %5072 = vmatprep.subr.mxu0 0.0
        %5073 = vmatpush1.msra.mxu0 0.0
        %5074 = vmatprep.subr.mxu0 0.0
        %5075 = vmatpush1.msra.mxu0 0.0
        %5076 = vmatprep.subr.mxu0 0.0
        %5077 = vmatpush1.msra.mxu0 0.0
        %5078 = vmatprep.subr.mxu0 0.0
        %5079 = vmatpush1.msra.mxu0 0.0
        %5080 = vmatprep.subr.mxu0 0.0
        %5081 = vmatpush1.msra.mxu0 0.0
        %5082 = vmatprep.subr.mxu0 0.0
        %5083 = vmatpush1.msra.mxu0 0.0
        %5084 = vmatprep.subr.mxu0 0.0
        %5085 = vmatpush1.msra.mxu0 0.0
        %5086 = vmatprep.subr.mxu0 0.0
        %5087 = vmatpush1.msra.mxu0 0.0
        %5088 = vmatprep.subr.mxu0 0.0
        %5089 = vmatpush1.msra.mxu0 0.0
        %5090 = vmatprep.subr.mxu0 0.0
        %5091 = vmatpush1.msra.mxu0 0.0
        %5092 = vmatprep.subr.mxu0 0.0
        %5093 = vmatpush1.msra.mxu0 0.0
        %5094 = vmatprep.subr.mxu0 0.0
        %5095 = vmatpush1.msra.mxu0 0.0
        %5096 = vmatprep.subr.mxu0 0.0
        %5097 = vmatpush1.msra.mxu0 0.0
        %5098 = vmatprep.subr.mxu0 0.0
        %5099 = vmatpush1.msra.mxu0 0.0
        %5100 = vmatprep.mubr.f32.mxu0 0.0
        %5101 = vmatmul.mubr.f32.gmra.mrb[0].mxu0 %v5034
        %v5102 = vpop.f32.mrb[0].mxu0
        %v5103 = vadd.f32 0.0, %v5102
        %v5104 = vpop.f32.mrb[0].mxu0
        %5105 = vdwg.mxu0
        %s5106 = scalar_lea.vmem [#allocation7], 32
        %v5107 = vld [vmem:[%s5106] sm:$0xff]
        %s5108 = scalar_lea.vmem [#allocation2], 160
        %v5109 = vld [vmem:[%s5108] sm:$0xff]
        %v5110 = vld [vmem:[%s5108 + $0x8] sm:$0xff]
        %v5111 = vld [vmem:[%s5108 + $0x10] sm:$0xff]
        %v5112 = vld [vmem:[%s5108 + $0x18] sm:$0xff]
        %5113 = vmatprep.subr.mxu0 0.0
        %5114 = vmatpush1.msra.mxu0 %v5109
        %5115 = vmatprep.subr.mxu0 0.0
        %5116 = vmatpush1.msra.mxu0 %v5110
        %5117 = vmatprep.subr.mxu0 0.0
        %5118 = vmatpush1.msra.mxu0 %v5111
        %5119 = vmatprep.subr.mxu0 0.0
        %5120 = vmatpush1.msra.mxu0 %v5112
        %5121 = vmatprep.subr.mxu0 0.0
        %5122 = vmatpush1.msra.mxu0 0.0
        %5123 = vmatprep.subr.mxu0 0.0
        %5124 = vmatpush1.msra.mxu0 0.0
        %5125 = vmatprep.subr.mxu0 0.0
        %5126 = vmatpush1.msra.mxu0 0.0
        %5127 = vmatprep.subr.mxu0 0.0
        %5128 = vmatpush1.msra.mxu0 0.0
        %5129 = vmatprep.subr.mxu0 0.0
        %5130 = vmatpush1.msra.mxu0 0.0
        %5131 = vmatprep.subr.mxu0 0.0
        %5132 = vmatpush1.msra.mxu0 0.0
        %5133 = vmatprep.subr.mxu0 0.0
        %5134 = vmatpush1.msra.mxu0 0.0
        %5135 = vmatprep.subr.mxu0 0.0
        %5136 = vmatpush1.msra.mxu0 0.0
        %5137 = vmatprep.subr.mxu0 0.0
        %5138 = vmatpush1.msra.mxu0 0.0
        %5139 = vmatprep.subr.mxu0 0.0
        %5140 = vmatpush1.msra.mxu0 0.0
        %5141 = vmatprep.subr.mxu0 0.0
        %5142 = vmatpush1.msra.mxu0 0.0
        %5143 = vmatprep.subr.mxu0 0.0
        %5144 = vmatpush1.msra.mxu0 0.0
        %5145 = vmatprep.subr.mxu0 0.0
        %5146 = vmatpush1.msra.mxu0 0.0
        %5147 = vmatprep.subr.mxu0 0.0
        %5148 = vmatpush1.msra.mxu0 0.0
        %5149 = vmatprep.subr.mxu0 0.0
        %5150 = vmatpush1.msra.mxu0 0.0
        %5151 = vmatprep.subr.mxu0 0.0
        %5152 = vmatpush1.msra.mxu0 0.0
        %5153 = vmatprep.subr.mxu0 0.0
        %5154 = vmatpush1.msra.mxu0 0.0
        %5155 = vmatprep.subr.mxu0 0.0
        %5156 = vmatpush1.msra.mxu0 0.0
        %5157 = vmatprep.subr.mxu0 0.0
        %5158 = vmatpush1.msra.mxu0 0.0
        %5159 = vmatprep.subr.mxu0 0.0
        %5160 = vmatpush1.msra.mxu0 0.0
        %5161 = vmatprep.subr.mxu0 0.0
        %5162 = vmatpush1.msra.mxu0 0.0
        %5163 = vmatprep.subr.mxu0 0.0
        %5164 = vmatpush1.msra.mxu0 0.0
        %5165 = vmatprep.subr.mxu0 0.0
        %5166 = vmatpush1.msra.mxu0 0.0
        %5167 = vmatprep.subr.mxu0 0.0
        %5168 = vmatpush1.msra.mxu0 0.0
        %5169 = vmatprep.subr.mxu0 0.0
        %5170 = vmatpush1.msra.mxu0 0.0
        %5171 = vmatprep.subr.mxu0 0.0
        %5172 = vmatpush1.msra.mxu0 0.0
        %5173 = vmatprep.subr.mxu0 0.0
        %5174 = vmatpush1.msra.mxu0 0.0
        %5175 = vmatprep.subr.mxu0 0.0
        %5176 = vmatpush1.msra.mxu0 0.0
        %5177 = vmatprep.mubr.f32.mxu0 0.0
        %5178 = vmatmul.mubr.f32.gmra.mrb[0].mxu0 %v4331
        %v5179 = vpop.f32.mrb[0].mxu0
        %v5180 = vadd.f32 0.0, %v5179
        %v5181 = vpop.f32.mrb[0].mxu0
        %5182 = vdwg.mxu0
        %s5183 = scalar_lea.vmem [#allocation4], 160
        %v5184 = vld [vmem:[%s5183] sm:$0xff]
        %v5185 = vld [vmem:[%s5183 + $0x8] sm:$0xff]
        %v5186 = vld [vmem:[%s5183 + $0x10] sm:$0xff]
        %v5187 = vld [vmem:[%s5183 + $0x18] sm:$0xff]
        %5188 = vmatprep.subr.mxu0 0.0
        %5189 = vmatpush1.msra.mxu0 %v5184
        %5190 = vmatprep.subr.mxu0 0.0
        %5191 = vmatpush1.msra.mxu0 %v5185
        %5192 = vmatprep.subr.mxu0 0.0
        %5193 = vmatpush1.msra.mxu0 %v5186
        %5194 = vmatprep.subr.mxu0 0.0
        %5195 = vmatpush1.msra.mxu0 %v5187
        %5196 = vmatprep.subr.mxu0 0.0
        %5197 = vmatpush1.msra.mxu0 0.0
        %5198 = vmatprep.subr.mxu0 0.0
        %5199 = vmatpush1.msra.mxu0 0.0
        %5200 = vmatprep.subr.mxu0 0.0
        %5201 = vmatpush1.msra.mxu0 0.0
        %5202 = vmatprep.subr.mxu0 0.0
        %5203 = vmatpush1.msra.mxu0 0.0
        %5204 = vmatprep.subr.mxu0 0.0
        %5205 = vmatpush1.msra.mxu0 0.0
        %5206 = vmatprep.subr.mxu0 0.0
        %5207 = vmatpush1.msra.mxu0 0.0
        %5208 = vmatprep.subr.mxu0 0.0
        %5209 = vmatpush1.msra.mxu0 0.0
        %5210 = vmatprep.subr.mxu0 0.0
        %5211 = vmatpush1.msra.mxu0 0.0
        %5212 = vmatprep.subr.mxu0 0.0
        %5213 = vmatpush1.msra.mxu0 0.0
        %5214 = vmatprep.subr.mxu0 0.0
        %5215 = vmatpush1.msra.mxu0 0.0
        %5216 = vmatprep.subr.mxu0 0.0
        %5217 = vmatpush1.msra.mxu0 0.0
        %5218 = vmatprep.subr.mxu0 0.0
        %5219 = vmatpush1.msra.mxu0 0.0
        %5220 = vmatprep.subr.mxu0 0.0
        %5221 = vmatpush1.msra.mxu0 0.0
        %5222 = vmatprep.subr.mxu0 0.0
        %5223 = vmatpush1.msra.mxu0 0.0
        %5224 = vmatprep.subr.mxu0 0.0
        %5225 = vmatpush1.msra.mxu0 0.0
        %5226 = vmatprep.subr.mxu0 0.0
        %5227 = vmatpush1.msra.mxu0 0.0
        %5228 = vmatprep.subr.mxu0 0.0
        %5229 = vmatpush1.msra.mxu0 0.0
        %5230 = vmatprep.subr.mxu0 0.0
        %5231 = vmatpush1.msra.mxu0 0.0
        %5232 = vmatprep.subr.mxu0 0.0
        %5233 = vmatpush1.msra.mxu0 0.0
        %5234 = vmatprep.subr.mxu0 0.0
        %5235 = vmatpush1.msra.mxu0 0.0
        %5236 = vmatprep.subr.mxu0 0.0
        %5237 = vmatpush1.msra.mxu0 0.0
        %5238 = vmatprep.subr.mxu0 0.0
        %5239 = vmatpush1.msra.mxu0 0.0
        %5240 = vmatprep.subr.mxu0 0.0
        %5241 = vmatpush1.msra.mxu0 0.0
        %5242 = vmatprep.subr.mxu0 0.0
        %5243 = vmatpush1.msra.mxu0 0.0
        %5244 = vmatprep.subr.mxu0 0.0
        %5245 = vmatpush1.msra.mxu0 0.0
        %5246 = vmatprep.subr.mxu0 0.0
        %5247 = vmatpush1.msra.mxu0 0.0
        %5248 = vmatprep.subr.mxu0 0.0
        %5249 = vmatpush1.msra.mxu0 0.0
        %5250 = vmatprep.subr.mxu0 0.0
        %5251 = vmatpush1.msra.mxu0 0.0
        %5252 = vmatprep.mubr.f32.mxu0 0.0
        %5253 = vmatmul.mubr.f32.gmra.mrb[0].mxu0 %v4331
        %v5254 = vpop.f32.mrb[0].mxu0
        %v5255 = vadd.f32 0.0, %v5254
        %v5256 = vpop.f32.mrb[0].mxu0
        %5257 = vdwg.mxu0
        %s5258 = scalar_lea.vmem [#allocation6], 160
        %v5259 = vld [vmem:[%s5258] sm:$0xff]
        %v5260 = vld [vmem:[%s5258 + $0x8] sm:$0xff]
        %v5261 = vld [vmem:[%s5258 + $0x10] sm:$0xff]
        %v5262 = vld [vmem:[%s5258 + $0x18] sm:$0xff]
        %5263 = vmatprep.subr.mxu0 0.0
        %5264 = vmatpush1.msra.mxu0 %v5259
        %5265 = vmatprep.subr.mxu0 0.0
        %5266 = vmatpush1.msra.mxu0 %v5260
        %5267 = vmatprep.subr.mxu0 0.0
        %5268 = vmatpush1.msra.mxu0 %v5261
        %5269 = vmatprep.subr.mxu0 0.0
        %5270 = vmatpush1.msra.mxu0 %v5262
        %5271 = vmatprep.subr.mxu0 0.0
        %5272 = vmatpush1.msra.mxu0 0.0
        %5273 = vmatprep.subr.mxu0 0.0
        %5274 = vmatpush1.msra.mxu0 0.0
        %5275 = vmatprep.subr.mxu0 0.0
        %5276 = vmatpush1.msra.mxu0 0.0
        %5277 = vmatprep.subr.mxu0 0.0
        %5278 = vmatpush1.msra.mxu0 0.0
        %5279 = vmatprep.subr.mxu0 0.0
        %5280 = vmatpush1.msra.mxu0 0.0
        %5281 = vmatprep.subr.mxu0 0.0
        %5282 = vmatpush1.msra.mxu0 0.0
        %5283 = vmatprep.subr.mxu0 0.0
        %5284 = vmatpush1.msra.mxu0 0.0
        %5285 = vmatprep.subr.mxu0 0.0
        %5286 = vmatpush1.msra.mxu0 0.0
        %5287 = vmatprep.subr.mxu0 0.0
        %5288 = vmatpush1.msra.mxu0 0.0
        %5289 = vmatprep.subr.mxu0 0.0
        %5290 = vmatpush1.msra.mxu0 0.0
        %5291 = vmatprep.subr.mxu0 0.0
        %5292 = vmatpush1.msra.mxu0 0.0
        %5293 = vmatprep.subr.mxu0 0.0
        %5294 = vmatpush1.msra.mxu0 0.0
        %5295 = vmatprep.subr.mxu0 0.0
        %5296 = vmatpush1.msra.mxu0 0.0
        %5297 = vmatprep.subr.mxu0 0.0
        %5298 = vmatpush1.msra.mxu0 0.0
        %5299 = vmatprep.subr.mxu0 0.0
        %5300 = vmatpush1.msra.mxu0 0.0
        %5301 = vmatprep.subr.mxu0 0.0
        %5302 = vmatpush1.msra.mxu0 0.0
        %5303 = vmatprep.subr.mxu0 0.0
        %5304 = vmatpush1.msra.mxu0 0.0
        %5305 = vmatprep.subr.mxu0 0.0
        %5306 = vmatpush1.msra.mxu0 0.0
        %5307 = vmatprep.subr.mxu0 0.0
        %5308 = vmatpush1.msra.mxu0 0.0
        %5309 = vmatprep.subr.mxu0 0.0
        %5310 = vmatpush1.msra.mxu0 0.0
        %5311 = vmatprep.subr.mxu0 0.0
        %5312 = vmatpush1.msra.mxu0 0.0
        %5313 = vmatprep.subr.mxu0 0.0
        %5314 = vmatpush1.msra.mxu0 0.0
        %5315 = vmatprep.subr.mxu0 0.0
        %5316 = vmatpush1.msra.mxu0 0.0
        %5317 = vmatprep.subr.mxu0 0.0
        %5318 = vmatpush1.msra.mxu0 0.0
        %5319 = vmatprep.subr.mxu0 0.0
        %5320 = vmatpush1.msra.mxu0 0.0
        %5321 = vmatprep.subr.mxu0 0.0
        %5322 = vmatpush1.msra.mxu0 0.0
        %5323 = vmatprep.subr.mxu0 0.0
        %5324 = vmatpush1.msra.mxu0 0.0
        %5325 = vmatprep.subr.mxu0 0.0
        %5326 = vmatpush1.msra.mxu0 0.0
        %5327 = vmatprep.mubr.f32.mxu0 0.0
        %5328 = vmatmul.mubr.f32.gmra.mrb[0].mxu0 %v4331
        %v5329 = vpop.f32.mrb[0].mxu0
        %v5330 = vadd.f32 0.0, %v5329
        %v5331 = vpop.f32.mrb[0].mxu0
        %5332 = vdwg.mxu0
        %s5333 = scalar_lea.vmem %s5, 160
        %v5334 = vld [vmem:[%s5333] sm:$0xff]
        %v5335 = vld [vmem:[%s5333 + $0x8] sm:$0xff]
        %v5336 = vld [vmem:[%s5333 + $0x10] sm:$0xff]
        %v5337 = vld [vmem:[%s5333 + $0x18] sm:$0xff]
        %5338 = vmatprep.subr.mxu0 0.0
        %5339 = vmatpush1.msra.mxu0 %v5334
        %5340 = vmatprep.subr.mxu0 0.0
        %5341 = vmatpush1.msra.mxu0 %v5335
        %5342 = vmatprep.subr.mxu0 0.0
        %5343 = vmatpush1.msra.mxu0 %v5336
        %5344 = vmatprep.subr.mxu0 0.0
        %5345 = vmatpush1.msra.mxu0 %v5337
        %5346 = vmatprep.subr.mxu0 0.0
        %5347 = vmatpush1.msra.mxu0 0.0
        %5348 = vmatprep.subr.mxu0 0.0
        %5349 = vmatpush1.msra.mxu0 0.0
        %5350 = vmatprep.subr.mxu0 0.0
        %5351 = vmatpush1.msra.mxu0 0.0
        %5352 = vmatprep.subr.mxu0 0.0
        %5353 = vmatpush1.msra.mxu0 0.0
        %5354 = vmatprep.subr.mxu0 0.0
        %5355 = vmatpush1.msra.mxu0 0.0
        %5356 = vmatprep.subr.mxu0 0.0
        %5357 = vmatpush1.msra.mxu0 0.0
        %5358 = vmatprep.subr.mxu0 0.0
        %5359 = vmatpush1.msra.mxu0 0.0
        %5360 = vmatprep.subr.mxu0 0.0
        %5361 = vmatpush1.msra.mxu0 0.0
        %5362 = vmatprep.subr.mxu0 0.0
        %5363 = vmatpush1.msra.mxu0 0.0
        %5364 = vmatprep.subr.mxu0 0.0
        %5365 = vmatpush1.msra.mxu0 0.0
        %5366 = vmatprep.subr.mxu0 0.0
        %5367 = vmatpush1.msra.mxu0 0.0
        %5368 = vmatprep.subr.mxu0 0.0
        %5369 = vmatpush1.msra.mxu0 0.0
        %5370 = vmatprep.subr.mxu0 0.0
        %5371 = vmatpush1.msra.mxu0 0.0
        %5372 = vmatprep.subr.mxu0 0.0
        %5373 = vmatpush1.msra.mxu0 0.0
        %5374 = vmatprep.subr.mxu0 0.0
        %5375 = vmatpush1.msra.mxu0 0.0
        %5376 = vmatprep.subr.mxu0 0.0
        %5377 = vmatpush1.msra.mxu0 0.0
        %5378 = vmatprep.subr.mxu0 0.0
        %5379 = vmatpush1.msra.mxu0 0.0
        %5380 = vmatprep.subr.mxu0 0.0
        %5381 = vmatpush1.msra.mxu0 0.0
        %5382 = vmatprep.subr.mxu0 0.0
        %5383 = vmatpush1.msra.mxu0 0.0
        %5384 = vmatprep.subr.mxu0 0.0
        %5385 = vmatpush1.msra.mxu0 0.0
        %5386 = vmatprep.subr.mxu0 0.0
        %5387 = vmatpush1.msra.mxu0 0.0
        %5388 = vmatprep.subr.mxu0 0.0
        %5389 = vmatpush1.msra.mxu0 0.0
        %5390 = vmatprep.subr.mxu0 0.0
        %5391 = vmatpush1.msra.mxu0 0.0
        %5392 = vmatprep.subr.mxu0 0.0
        %5393 = vmatpush1.msra.mxu0 0.0
        %5394 = vmatprep.subr.mxu0 0.0
        %5395 = vmatpush1.msra.mxu0 0.0
        %5396 = vmatprep.subr.mxu0 0.0
        %5397 = vmatpush1.msra.mxu0 0.0
        %5398 = vmatprep.subr.mxu0 0.0
        %5399 = vmatpush1.msra.mxu0 0.0
        %5400 = vmatprep.subr.mxu0 0.0
        %5401 = vmatpush1.msra.mxu0 0.0
        %5402 = vmatprep.mubr.f32.mxu0 0.0
        %5403 = vmatmul.mubr.f32.gmra.mrb[0].mxu0 %v900
        %v5404 = vpop.f32.mrb[0].mxu0
        %v5405 = vadd.f32 0.0, %v5404
        %v5406 = vpop.f32.mrb[0].mxu0
        %5407 = vdwg.mxu0
        %s5408 = scalar_lea.vmem %s7, 5
        %v5409 = vld [vmem:[%s5408] sm:$0x1]
        %s5410 = scalar_lea.vmem %s8, 5
        %v5411 = vld [vmem:[%s5410] sm:$0x1]
        %v5413 = vlaneseq
        %v5414 = vshrl.u32 %v5413, 7
        %v5415 = vsub.s32 0, %v5414
        %v5416 = vrot.slane %v5409, %v5415
        %v5418 = vadd.f32 %v5180, %v5416
        %v5420 = vlaneseq
        %v5421 = vshrl.u32 %v5420, 7
        %v5422 = vsub.s32 0, %v5421
        %v5423 = vrot.slane %v5411, %v5422
        %v5425 = vadd.f32 %v5180, %v5423
        %v5427 = vsel %vm988, %v5425, 0
        %v5430 = vsel %vm988, %v5405, 0
        %5432 = vmatprep.subr.mxu0 0.0
        %5433 = vmatpush1.xpose.msra.mxu0 %v5430
        %5434 = vmatprep.subr.mxu0 0.0
        %5435 = vmatpush1.xpose.msra.mxu0 0.0
        %5436 = vmatprep.subr.mxu0 0.0
        %5437 = vmatpush1.xpose.msra.mxu0 0.0
        %5438 = vmatprep.subr.mxu0 0.0
        %5439 = vmatpush1.xpose.msra.mxu0 0.0
        %5440 = vmatprep.subr.mxu0 0.0
        %5441 = vmatpush1.xpose.msra.mxu0 0.0
        %5442 = vmatprep.subr.mxu0 0.0
        %5443 = vmatpush1.xpose.msra.mxu0 0.0
        %5444 = vmatprep.subr.mxu0 0.0
        %5445 = vmatpush1.xpose.msra.mxu0 0.0
        %5446 = vmatprep.subr.mxu0 0.0
        %5447 = vmatpush1.xpose.msra.mxu0 0.0
        %5448 = vmatprep.subr.mxu0 0.0
        %5449 = vmatpush1.xpose.msra.mxu0 0.0
        %5450 = vmatprep.subr.mxu0 0.0
        %5451 = vmatpush1.xpose.msra.mxu0 0.0
        %5452 = vmatprep.subr.mxu0 0.0
        %5453 = vmatpush1.xpose.msra.mxu0 0.0
        %5454 = vmatprep.subr.mxu0 0.0
        %5455 = vmatpush1.xpose.msra.mxu0 0.0
        %5456 = vmatprep.subr.mxu0 0.0
        %5457 = vmatpush1.xpose.msra.mxu0 0.0
        %5458 = vmatprep.subr.mxu0 0.0
        %5459 = vmatpush1.xpose.msra.mxu0 0.0
        %5460 = vmatprep.subr.mxu0 0.0
        %5461 = vmatpush1.xpose.msra.mxu0 0.0
        %5462 = vmatprep.subr.mxu0 0.0
        %5463 = vmatpush1.xpose.msra.mxu0 0.0
        %5464 = vmatprep.subr.mxu0 0.0
        %5465 = vmatpush1.xpose.msra.mxu0 0.0
        %5466 = vmatprep.subr.mxu0 0.0
        %5467 = vmatpush1.xpose.msra.mxu0 0.0
        %5468 = vmatprep.subr.mxu0 0.0
        %5469 = vmatpush1.xpose.msra.mxu0 0.0
        %5470 = vmatprep.subr.mxu0 0.0
        %5471 = vmatpush1.xpose.msra.mxu0 0.0
        %5472 = vmatprep.subr.mxu0 0.0
        %5473 = vmatpush1.xpose.msra.mxu0 0.0
        %5474 = vmatprep.subr.mxu0 0.0
        %5475 = vmatpush1.xpose.msra.mxu0 0.0
        %5476 = vmatprep.subr.mxu0 0.0
        %5477 = vmatpush1.xpose.msra.mxu0 0.0
        %5478 = vmatprep.subr.mxu0 0.0
        %5479 = vmatpush1.xpose.msra.mxu0 0.0
        %5480 = vmatprep.subr.mxu0 0.0
        %5481 = vmatpush1.xpose.msra.mxu0 0.0
        %5482 = vmatprep.subr.mxu0 0.0
        %5483 = vmatpush1.xpose.msra.mxu0 0.0
        %5484 = vmatprep.subr.mxu0 0.0
        %5485 = vmatpush1.xpose.msra.mxu0 0.0
        %5486 = vmatprep.subr.mxu0 0.0
        %5487 = vmatpush1.xpose.msra.mxu0 0.0
        %5488 = vmatprep.subr.mxu0 0.0
        %5489 = vmatpush1.xpose.msra.mxu0 0.0
        %5490 = vmatprep.subr.mxu0 0.0
        %5491 = vmatpush1.xpose.msra.mxu0 0.0
        %5492 = vmatprep.subr.mxu0 0.0
        %5493 = vmatpush1.xpose.msra.mxu0 0.0
        %5494 = vmatprep.subr.mxu0 0.0
        %5495 = vmatpush1.xpose.msra.mxu0 0.0
        %5496 = vmatprep.mubr.f32.mxu0 0.0
        %5497 = vmatmul.mubr.f32.gmra.mrb[0].mxu0 %v5427
        %v5498 = vpop.f32.mrb[0].mxu0
        %v5499 = vadd.f32 0.0, %v5498
        %v5500 = vpop.f32.mrb[0].mxu0
        %5501 = vdwg.mxu0
        %v5503 = vsel %vm988, %v5499, 0
        %5505 = vmatprep.subr.mxu0 0.0
        %5506 = vmatpush1.msra.mxu0 %v646
        %5507 = vmatprep.subr.mxu0 0.0
        %5508 = vmatpush1.msra.mxu0 0.0
        %5509 = vmatprep.subr.mxu0 0.0
        %5510 = vmatpush1.msra.mxu0 0.0
        %5511 = vmatprep.subr.mxu0 0.0
        %5512 = vmatpush1.msra.mxu0 0.0
        %5513 = vmatprep.subr.mxu0 0.0
        %5514 = vmatpush1.msra.mxu0 0.0
        %5515 = vmatprep.subr.mxu0 0.0
        %5516 = vmatpush1.msra.mxu0 0.0
        %5517 = vmatprep.subr.mxu0 0.0
        %5518 = vmatpush1.msra.mxu0 0.0
        %5519 = vmatprep.subr.mxu0 0.0
        %5520 = vmatpush1.msra.mxu0 0.0
        %5521 = vmatprep.subr.mxu0 0.0
        %5522 = vmatpush1.msra.mxu0 0.0
        %5523 = vmatprep.subr.mxu0 0.0
        %5524 = vmatpush1.msra.mxu0 0.0
        %5525 = vmatprep.subr.mxu0 0.0
        %5526 = vmatpush1.msra.mxu0 0.0
        %5527 = vmatprep.subr.mxu0 0.0
        %5528 = vmatpush1.msra.mxu0 0.0
        %5529 = vmatprep.subr.mxu0 0.0
        %5530 = vmatpush1.msra.mxu0 0.0
        %5531 = vmatprep.subr.mxu0 0.0
        %5532 = vmatpush1.msra.mxu0 0.0
        %5533 = vmatprep.subr.mxu0 0.0
        %5534 = vmatpush1.msra.mxu0 0.0
        %5535 = vmatprep.subr.mxu0 0.0
        %5536 = vmatpush1.msra.mxu0 0.0
        %5537 = vmatprep.subr.mxu0 0.0
        %5538 = vmatpush1.msra.mxu0 0.0
        %5539 = vmatprep.subr.mxu0 0.0
        %5540 = vmatpush1.msra.mxu0 0.0
        %5541 = vmatprep.subr.mxu0 0.0
        %5542 = vmatpush1.msra.mxu0 0.0
        %5543 = vmatprep.subr.mxu0 0.0
        %5544 = vmatpush1.msra.mxu0 0.0
        %5545 = vmatprep.subr.mxu0 0.0
        %5546 = vmatpush1.msra.mxu0 0.0
        %5547 = vmatprep.subr.mxu0 0.0
        %5548 = vmatpush1.msra.mxu0 0.0
        %5549 = vmatprep.subr.mxu0 0.0
        %5550 = vmatpush1.msra.mxu0 0.0
        %5551 = vmatprep.subr.mxu0 0.0
        %5552 = vmatpush1.msra.mxu0 0.0
        %5553 = vmatprep.subr.mxu0 0.0
        %5554 = vmatpush1.msra.mxu0 0.0
        %5555 = vmatprep.subr.mxu0 0.0
        %5556 = vmatpush1.msra.mxu0 0.0
        %5557 = vmatprep.subr.mxu0 0.0
        %5558 = vmatpush1.msra.mxu0 0.0
        %5559 = vmatprep.subr.mxu0 0.0
        %5560 = vmatpush1.msra.mxu0 0.0
        %5561 = vmatprep.subr.mxu0 0.0
        %5562 = vmatpush1.msra.mxu0 0.0
        %5563 = vmatprep.subr.mxu0 0.0
        %5564 = vmatpush1.msra.mxu0 0.0
        %5565 = vmatprep.subr.mxu0 0.0
        %5566 = vmatpush1.msra.mxu0 0.0
        %5567 = vmatprep.subr.mxu0 0.0
        %5568 = vmatpush1.msra.mxu0 0.0
        %5569 = vmatprep.mubr.f32.mxu0 0.0
        %5570 = vmatmul.mubr.f32.gmra.mrb[0].mxu0 %v5503
        %v5571 = vpop.f32.mrb[0].mxu0
        %v5572 = vadd.f32 0.0, %v5571
        %v5573 = vpop.f32.mrb[0].mxu0
        %5574 = vdwg.mxu0
        %v5575 = vsel %vm1139, %v5572, %v5499
        %v5577 = vsel %vm988, %v5575, 0
        %5579 = vmatprep.subr.mxu0 0.0
        %5580 = vmatpush1.msra.mxu0 %v655
        %5581 = vmatprep.subr.mxu0 0.0
        %5582 = vmatpush1.msra.mxu0 0.0
        %5583 = vmatprep.subr.mxu0 0.0
        %5584 = vmatpush1.msra.mxu0 0.0
        %5585 = vmatprep.subr.mxu0 0.0
        %5586 = vmatpush1.msra.mxu0 0.0
        %5587 = vmatprep.subr.mxu0 0.0
        %5588 = vmatpush1.msra.mxu0 0.0
        %5589 = vmatprep.subr.mxu0 0.0
        %5590 = vmatpush1.msra.mxu0 0.0
        %5591 = vmatprep.subr.mxu0 0.0
        %5592 = vmatpush1.msra.mxu0 0.0
        %5593 = vmatprep.subr.mxu0 0.0
        %5594 = vmatpush1.msra.mxu0 0.0
        %5595 = vmatprep.subr.mxu0 0.0
        %5596 = vmatpush1.msra.mxu0 0.0
        %5597 = vmatprep.subr.mxu0 0.0
        %5598 = vmatpush1.msra.mxu0 0.0
        %5599 = vmatprep.subr.mxu0 0.0
        %5600 = vmatpush1.msra.mxu0 0.0
        %5601 = vmatprep.subr.mxu0 0.0
        %5602 = vmatpush1.msra.mxu0 0.0
        %5603 = vmatprep.subr.mxu0 0.0
        %5604 = vmatpush1.msra.mxu0 0.0
        %5605 = vmatprep.subr.mxu0 0.0
        %5606 = vmatpush1.msra.mxu0 0.0
        %5607 = vmatprep.subr.mxu0 0.0
        %5608 = vmatpush1.msra.mxu0 0.0
        %5609 = vmatprep.subr.mxu0 0.0
        %5610 = vmatpush1.msra.mxu0 0.0
        %5611 = vmatprep.subr.mxu0 0.0
        %5612 = vmatpush1.msra.mxu0 0.0
        %5613 = vmatprep.subr.mxu0 0.0
        %5614 = vmatpush1.msra.mxu0 0.0
        %5615 = vmatprep.subr.mxu0 0.0
        %5616 = vmatpush1.msra.mxu0 0.0
        %5617 = vmatprep.subr.mxu0 0.0
        %5618 = vmatpush1.msra.mxu0 0.0
        %5619 = vmatprep.subr.mxu0 0.0
        %5620 = vmatpush1.msra.mxu0 0.0
        %5621 = vmatprep.subr.mxu0 0.0
        %5622 = vmatpush1.msra.mxu0 0.0
        %5623 = vmatprep.subr.mxu0 0.0
        %5624 = vmatpush1.msra.mxu0 0.0
        %5625 = vmatprep.subr.mxu0 0.0
        %5626 = vmatpush1.msra.mxu0 0.0
        %5627 = vmatprep.subr.mxu0 0.0
        %5628 = vmatpush1.msra.mxu0 0.0
        %5629 = vmatprep.subr.mxu0 0.0
        %5630 = vmatpush1.msra.mxu0 0.0
        %5631 = vmatprep.subr.mxu0 0.0
        %5632 = vmatpush1.msra.mxu0 0.0
        %5633 = vmatprep.subr.mxu0 0.0
        %5634 = vmatpush1.msra.mxu0 0.0
        %5635 = vmatprep.subr.mxu0 0.0
        %5636 = vmatpush1.msra.mxu0 0.0
        %5637 = vmatprep.subr.mxu0 0.0
        %5638 = vmatpush1.msra.mxu0 0.0
        %5639 = vmatprep.subr.mxu0 0.0
        %5640 = vmatpush1.msra.mxu0 0.0
        %5641 = vmatprep.subr.mxu0 0.0
        %5642 = vmatpush1.msra.mxu0 0.0
        %5643 = vmatprep.mubr.f32.mxu0 0.0
        %5644 = vmatmul.mubr.f32.gmra.mrb[0].mxu0 %v5577
        %v5645 = vpop.f32.mrb[0].mxu0
        %v5646 = vadd.f32 0.0, %v5645
        %v5647 = vpop.f32.mrb[0].mxu0
        %5648 = vdwg.mxu0
        %v5649 = vsel %vm1215, %v5646, %v5575
        %v5651 = vsel %vm988, %v5649, 0
        %5653 = vmatprep.subr.mxu0 0.0
        %5654 = vmatpush1.msra.mxu0 %v665
        %5655 = vmatprep.subr.mxu0 0.0
        %5656 = vmatpush1.msra.mxu0 0.0
        %5657 = vmatprep.subr.mxu0 0.0
        %5658 = vmatpush1.msra.mxu0 0.0
        %5659 = vmatprep.subr.mxu0 0.0
        %5660 = vmatpush1.msra.mxu0 0.0
        %5661 = vmatprep.subr.mxu0 0.0
        %5662 = vmatpush1.msra.mxu0 0.0
        %5663 = vmatprep.subr.mxu0 0.0
        %5664 = vmatpush1.msra.mxu0 0.0
        %5665 = vmatprep.subr.mxu0 0.0
        %5666 = vmatpush1.msra.mxu0 0.0
        %5667 = vmatprep.subr.mxu0 0.0
        %5668 = vmatpush1.msra.mxu0 0.0
        %5669 = vmatprep.subr.mxu0 0.0
        %5670 = vmatpush1.msra.mxu0 0.0
        %5671 = vmatprep.subr.mxu0 0.0
        %5672 = vmatpush1.msra.mxu0 0.0
        %5673 = vmatprep.subr.mxu0 0.0
        %5674 = vmatpush1.msra.mxu0 0.0
        %5675 = vmatprep.subr.mxu0 0.0
        %5676 = vmatpush1.msra.mxu0 0.0
        %5677 = vmatprep.subr.mxu0 0.0
        %5678 = vmatpush1.msra.mxu0 0.0
        %5679 = vmatprep.subr.mxu0 0.0
        %5680 = vmatpush1.msra.mxu0 0.0
        %5681 = vmatprep.subr.mxu0 0.0
        %5682 = vmatpush1.msra.mxu0 0.0
        %5683 = vmatprep.subr.mxu0 0.0
        %5684 = vmatpush1.msra.mxu0 0.0
        %5685 = vmatprep.subr.mxu0 0.0
        %5686 = vmatpush1.msra.mxu0 0.0
        %5687 = vmatprep.subr.mxu0 0.0
        %5688 = vmatpush1.msra.mxu0 0.0
        %5689 = vmatprep.subr.mxu0 0.0
        %5690 = vmatpush1.msra.mxu0 0.0
        %5691 = vmatprep.subr.mxu0 0.0
        %5692 = vmatpush1.msra.mxu0 0.0
        %5693 = vmatprep.subr.mxu0 0.0
        %5694 = vmatpush1.msra.mxu0 0.0
        %5695 = vmatprep.subr.mxu0 0.0
        %5696 = vmatpush1.msra.mxu0 0.0
        %5697 = vmatprep.subr.mxu0 0.0
        %5698 = vmatpush1.msra.mxu0 0.0
        %5699 = vmatprep.subr.mxu0 0.0
        %5700 = vmatpush1.msra.mxu0 0.0
        %5701 = vmatprep.subr.mxu0 0.0
        %5702 = vmatpush1.msra.mxu0 0.0
        %5703 = vmatprep.subr.mxu0 0.0
        %5704 = vmatpush1.msra.mxu0 0.0
        %5705 = vmatprep.subr.mxu0 0.0
        %5706 = vmatpush1.msra.mxu0 0.0
        %5707 = vmatprep.subr.mxu0 0.0
        %5708 = vmatpush1.msra.mxu0 0.0
        %5709 = vmatprep.subr.mxu0 0.0
        %5710 = vmatpush1.msra.mxu0 0.0
        %5711 = vmatprep.subr.mxu0 0.0
        %5712 = vmatpush1.msra.mxu0 0.0
        %5713 = vmatprep.subr.mxu0 0.0
        %5714 = vmatpush1.msra.mxu0 0.0
        %5715 = vmatprep.subr.mxu0 0.0
        %5716 = vmatpush1.msra.mxu0 0.0
        %5717 = vmatprep.mubr.f32.mxu0 0.0
        %5718 = vmatmul.mubr.f32.gmra.mrb[0].mxu0 %v5651
        %v5719 = vpop.f32.mrb[0].mxu0
        %v5720 = vadd.f32 0.0, %v5719
        %v5721 = vpop.f32.mrb[0].mxu0
        %5722 = vdwg.mxu0
        %v5723 = vsel %vm1291, %v5720, %v5649
        %v5725 = vsel %vm988, %v5418, 0
        %v5728 = vsel %vm988, %v5255, 0
        %5730 = vmatprep.subr.mxu0 0.0
        %5731 = vmatpush1.xpose.msra.mxu0 %v5728
        %5732 = vmatprep.subr.mxu0 0.0
        %5733 = vmatpush1.xpose.msra.mxu0 0.0
        %5734 = vmatprep.subr.mxu0 0.0
        %5735 = vmatpush1.xpose.msra.mxu0 0.0
        %5736 = vmatprep.subr.mxu0 0.0
        %5737 = vmatpush1.xpose.msra.mxu0 0.0
        %5738 = vmatprep.subr.mxu0 0.0
        %5739 = vmatpush1.xpose.msra.mxu0 0.0
        %5740 = vmatprep.subr.mxu0 0.0
        %5741 = vmatpush1.xpose.msra.mxu0 0.0
        %5742 = vmatprep.subr.mxu0 0.0
        %5743 = vmatpush1.xpose.msra.mxu0 0.0
        %5744 = vmatprep.subr.mxu0 0.0
        %5745 = vmatpush1.xpose.msra.mxu0 0.0
        %5746 = vmatprep.subr.mxu0 0.0
        %5747 = vmatpush1.xpose.msra.mxu0 0.0
        %5748 = vmatprep.subr.mxu0 0.0
        %5749 = vmatpush1.xpose.msra.mxu0 0.0
        %5750 = vmatprep.subr.mxu0 0.0
        %5751 = vmatpush1.xpose.msra.mxu0 0.0
        %5752 = vmatprep.subr.mxu0 0.0
        %5753 = vmatpush1.xpose.msra.mxu0 0.0
        %5754 = vmatprep.subr.mxu0 0.0
        %5755 = vmatpush1.xpose.msra.mxu0 0.0
        %5756 = vmatprep.subr.mxu0 0.0
        %5757 = vmatpush1.xpose.msra.mxu0 0.0
        %5758 = vmatprep.subr.mxu0 0.0
        %5759 = vmatpush1.xpose.msra.mxu0 0.0
        %5760 = vmatprep.subr.mxu0 0.0
        %5761 = vmatpush1.xpose.msra.mxu0 0.0
        %5762 = vmatprep.subr.mxu0 0.0
        %5763 = vmatpush1.xpose.msra.mxu0 0.0
        %5764 = vmatprep.subr.mxu0 0.0
        %5765 = vmatpush1.xpose.msra.mxu0 0.0
        %5766 = vmatprep.subr.mxu0 0.0
        %5767 = vmatpush1.xpose.msra.mxu0 0.0
        %5768 = vmatprep.subr.mxu0 0.0
        %5769 = vmatpush1.xpose.msra.mxu0 0.0
        %5770 = vmatprep.subr.mxu0 0.0
        %5771 = vmatpush1.xpose.msra.mxu0 0.0
        %5772 = vmatprep.subr.mxu0 0.0
        %5773 = vmatpush1.xpose.msra.mxu0 0.0
        %5774 = vmatprep.subr.mxu0 0.0
        %5775 = vmatpush1.xpose.msra.mxu0 0.0
        %5776 = vmatprep.subr.mxu0 0.0
        %5777 = vmatpush1.xpose.msra.mxu0 0.0
        %5778 = vmatprep.subr.mxu0 0.0
        %5779 = vmatpush1.xpose.msra.mxu0 0.0
        %5780 = vmatprep.subr.mxu0 0.0
        %5781 = vmatpush1.xpose.msra.mxu0 0.0
        %5782 = vmatprep.subr.mxu0 0.0
        %5783 = vmatpush1.xpose.msra.mxu0 0.0
        %5784 = vmatprep.subr.mxu0 0.0
        %5785 = vmatpush1.xpose.msra.mxu0 0.0
        %5786 = vmatprep.subr.mxu0 0.0
        %5787 = vmatpush1.xpose.msra.mxu0 0.0
        %5788 = vmatprep.subr.mxu0 0.0
        %5789 = vmatpush1.xpose.msra.mxu0 0.0
        %5790 = vmatprep.subr.mxu0 0.0
        %5791 = vmatpush1.xpose.msra.mxu0 0.0
        %5792 = vmatprep.subr.mxu0 0.0
        %5793 = vmatpush1.xpose.msra.mxu0 0.0
        %5794 = vmatprep.mubr.f32.mxu0 0.0
        %5795 = vmatmul.mubr.f32.gmra.mrb[0].mxu0 %v5725
        %v5796 = vpop.f32.mrb[0].mxu0
        %v5797 = vadd.f32 %v5723, %v5796
        %v5798 = vpop.f32.mrb[0].mxu0
        %5799 = vdwg.mxu0
        %v5800 = vmul.f32 %v5797, 0.35355338
        %v5801 = vsel %vm638, -1e+30, %v5800
        %v5802 = vsel %vm988, %v5801, -inf
        %5803 = vmax.xlane.f32.xlu0 %v5802
        %v5804 = vpop.xlane.xlu0 %5803
        %v5805 = vsub.f32 %v5801, %v5804
        %v5806 = vmul.f32 %v5805, 1.442695
        %v5807 = vpow.pop %v5806
        %v5808 = vsel %vm988, %v5807, 0.0
        %5809 = vadd.xlane.f32.xlu0 %v5808
        %v5810 = vpop.xlane.xlu0 %5809
        %v5811 = vrcp.pop %v5810
        %v5812 = vmul.f32 %v5807, %v5811
        %v5814 = vsel %vm988, %v5812, 0
        %5816 = vmatprep.subr.mxu0 0.0
        %5817 = vmatpush1.msra.mxu0 %v5330
        %5818 = vmatprep.subr.mxu0 0.0
        %5819 = vmatpush1.msra.mxu0 0.0
        %5820 = vmatprep.subr.mxu0 0.0
        %5821 = vmatpush1.msra.mxu0 0.0
        %5822 = vmatprep.subr.mxu0 0.0
        %5823 = vmatpush1.msra.mxu0 0.0
        %5824 = vmatprep.subr.mxu0 0.0
        %5825 = vmatpush1.msra.mxu0 0.0
        %5826 = vmatprep.subr.mxu0 0.0
        %5827 = vmatpush1.msra.mxu0 0.0
        %5828 = vmatprep.subr.mxu0 0.0
        %5829 = vmatpush1.msra.mxu0 0.0
        %5830 = vmatprep.subr.mxu0 0.0
        %5831 = vmatpush1.msra.mxu0 0.0
        %5832 = vmatprep.subr.mxu0 0.0
        %5833 = vmatpush1.msra.mxu0 0.0
        %5834 = vmatprep.subr.mxu0 0.0
        %5835 = vmatpush1.msra.mxu0 0.0
        %5836 = vmatprep.subr.mxu0 0.0
        %5837 = vmatpush1.msra.mxu0 0.0
        %5838 = vmatprep.subr.mxu0 0.0
        %5839 = vmatpush1.msra.mxu0 0.0
        %5840 = vmatprep.subr.mxu0 0.0
        %5841 = vmatpush1.msra.mxu0 0.0
        %5842 = vmatprep.subr.mxu0 0.0
        %5843 = vmatpush1.msra.mxu0 0.0
        %5844 = vmatprep.subr.mxu0 0.0
        %5845 = vmatpush1.msra.mxu0 0.0
        %5846 = vmatprep.subr.mxu0 0.0
        %5847 = vmatpush1.msra.mxu0 0.0
        %5848 = vmatprep.subr.mxu0 0.0
        %5849 = vmatpush1.msra.mxu0 0.0
        %5850 = vmatprep.subr.mxu0 0.0
        %5851 = vmatpush1.msra.mxu0 0.0
        %5852 = vmatprep.subr.mxu0 0.0
        %5853 = vmatpush1.msra.mxu0 0.0
        %5854 = vmatprep.subr.mxu0 0.0
        %5855 = vmatpush1.msra.mxu0 0.0
        %5856 = vmatprep.subr.mxu0 0.0
        %5857 = vmatpush1.msra.mxu0 0.0
        %5858 = vmatprep.subr.mxu0 0.0
        %5859 = vmatpush1.msra.mxu0 0.0
        %5860 = vmatprep.subr.mxu0 0.0
        %5861 = vmatpush1.msra.mxu0 0.0
        %5862 = vmatprep.subr.mxu0 0.0
        %5863 = vmatpush1.msra.mxu0 0.0
        %5864 = vmatprep.subr.mxu0 0.0
        %5865 = vmatpush1.msra.mxu0 0.0
        %5866 = vmatprep.subr.mxu0 0.0
        %5867 = vmatpush1.msra.mxu0 0.0
        %5868 = vmatprep.subr.mxu0 0.0
        %5869 = vmatpush1.msra.mxu0 0.0
        %5870 = vmatprep.subr.mxu0 0.0
        %5871 = vmatpush1.msra.mxu0 0.0
        %5872 = vmatprep.subr.mxu0 0.0
        %5873 = vmatpush1.msra.mxu0 0.0
        %5874 = vmatprep.subr.mxu0 0.0
        %5875 = vmatpush1.msra.mxu0 0.0
        %5876 = vmatprep.subr.mxu0 0.0
        %5877 = vmatpush1.msra.mxu0 0.0
        %5878 = vmatprep.subr.mxu0 0.0
        %5879 = vmatpush1.msra.mxu0 0.0
        %5880 = vmatprep.mubr.f32.mxu0 0.0
        %5881 = vmatmul.mubr.f32.gmra.mrb[0].mxu0 %v5814
        %v5882 = vpop.f32.mrb[0].mxu0
        %v5883 = vadd.f32 0.0, %v5882
        %v5884 = vpop.f32.mrb[0].mxu0
        %5885 = vdwg.mxu0
        %s5886 = scalar_lea.vmem [#allocation7], 40
        %v5887 = vld [vmem:[%s5886] sm:$0xff]
        %v5889 = vsel %vm988, %v5883, 0
        %5891 = vmatprep.subr.mxu0 0.0
        %5892 = vmatpush1.msra.mxu0 %v5887
        %5893 = vmatprep.subr.mxu0 0.0
        %5894 = vmatpush1.msra.mxu0 0.0
        %5895 = vmatprep.subr.mxu0 0.0
        %5896 = vmatpush1.msra.mxu0 0.0
        %5897 = vmatprep.subr.mxu0 0.0
        %5898 = vmatpush1.msra.mxu0 0.0
        %5899 = vmatprep.subr.mxu0 0.0
        %5900 = vmatpush1.msra.mxu0 0.0
        %5901 = vmatprep.subr.mxu0 0.0
        %5902 = vmatpush1.msra.mxu0 0.0
        %5903 = vmatprep.subr.mxu0 0.0
        %5904 = vmatpush1.msra.mxu0 0.0
        %5905 = vmatprep.subr.mxu0 0.0
        %5906 = vmatpush1.msra.mxu0 0.0
        %5907 = vmatprep.subr.mxu0 0.0
        %5908 = vmatpush1.msra.mxu0 0.0
        %5909 = vmatprep.subr.mxu0 0.0
        %5910 = vmatpush1.msra.mxu0 0.0
        %5911 = vmatprep.subr.mxu0 0.0
        %5912 = vmatpush1.msra.mxu0 0.0
        %5913 = vmatprep.subr.mxu0 0.0
        %5914 = vmatpush1.msra.mxu0 0.0
        %5915 = vmatprep.subr.mxu0 0.0
        %5916 = vmatpush1.msra.mxu0 0.0
        %5917 = vmatprep.subr.mxu0 0.0
        %5918 = vmatpush1.msra.mxu0 0.0
        %5919 = vmatprep.subr.mxu0 0.0
        %5920 = vmatpush1.msra.mxu0 0.0
        %5921 = vmatprep.subr.mxu0 0.0
        %5922 = vmatpush1.msra.mxu0 0.0
        %5923 = vmatprep.subr.mxu0 0.0
        %5924 = vmatpush1.msra.mxu0 0.0
        %5925 = vmatprep.subr.mxu0 0.0
        %5926 = vmatpush1.msra.mxu0 0.0
        %5927 = vmatprep.subr.mxu0 0.0
        %5928 = vmatpush1.msra.mxu0 0.0
        %5929 = vmatprep.subr.mxu0 0.0
        %5930 = vmatpush1.msra.mxu0 0.0
        %5931 = vmatprep.subr.mxu0 0.0
        %5932 = vmatpush1.msra.mxu0 0.0
        %5933 = vmatprep.subr.mxu0 0.0
        %5934 = vmatpush1.msra.mxu0 0.0
        %5935 = vmatprep.subr.mxu0 0.0
        %5936 = vmatpush1.msra.mxu0 0.0
        %5937 = vmatprep.subr.mxu0 0.0
        %5938 = vmatpush1.msra.mxu0 0.0
        %5939 = vmatprep.subr.mxu0 0.0
        %5940 = vmatpush1.msra.mxu0 0.0
        %5941 = vmatprep.subr.mxu0 0.0
        %5942 = vmatpush1.msra.mxu0 0.0
        %5943 = vmatprep.subr.mxu0 0.0
        %5944 = vmatpush1.msra.mxu0 0.0
        %5945 = vmatprep.subr.mxu0 0.0
        %5946 = vmatpush1.msra.mxu0 0.0
        %5947 = vmatprep.subr.mxu0 0.0
        %5948 = vmatpush1.msra.mxu0 0.0
        %5949 = vmatprep.subr.mxu0 0.0
        %5950 = vmatpush1.msra.mxu0 0.0
        %5951 = vmatprep.subr.mxu0 0.0
        %5952 = vmatpush1.msra.mxu0 0.0
        %5953 = vmatprep.subr.mxu0 0.0
        %5954 = vmatpush1.msra.mxu0 0.0
        %5955 = vmatprep.mubr.f32.mxu0 0.0
        %5956 = vmatmul.mubr.f32.gmra.mrb[0].mxu0 %v5889
        %v5957 = vpop.f32.mrb[0].mxu0
        %v5958 = vadd.f32 0.0, %v5957
        %v5959 = vpop.f32.mrb[0].mxu0
        %5960 = vdwg.mxu0
        %v5962 = vsel %vm988, %v5103, 0
        %5964 = vmatprep.subr.mxu0 0.0
        %5965 = vmatpush1.msra.mxu0 %v5107
        %5966 = vmatprep.subr.mxu0 0.0
        %5967 = vmatpush1.msra.mxu0 0.0
        %5968 = vmatprep.subr.mxu0 0.0
        %5969 = vmatpush1.msra.mxu0 0.0
        %5970 = vmatprep.subr.mxu0 0.0
        %5971 = vmatpush1.msra.mxu0 0.0
        %5972 = vmatprep.subr.mxu0 0.0
        %5973 = vmatpush1.msra.mxu0 0.0
        %5974 = vmatprep.subr.mxu0 0.0
        %5975 = vmatpush1.msra.mxu0 0.0
        %5976 = vmatprep.subr.mxu0 0.0
        %5977 = vmatpush1.msra.mxu0 0.0
        %5978 = vmatprep.subr.mxu0 0.0
        %5979 = vmatpush1.msra.mxu0 0.0
        %5980 = vmatprep.subr.mxu0 0.0
        %5981 = vmatpush1.msra.mxu0 0.0
        %5982 = vmatprep.subr.mxu0 0.0
        %5983 = vmatpush1.msra.mxu0 0.0
        %5984 = vmatprep.subr.mxu0 0.0
        %5985 = vmatpush1.msra.mxu0 0.0
        %5986 = vmatprep.subr.mxu0 0.0
        %5987 = vmatpush1.msra.mxu0 0.0
        %5988 = vmatprep.subr.mxu0 0.0
        %5989 = vmatpush1.msra.mxu0 0.0
        %5990 = vmatprep.subr.mxu0 0.0
        %5991 = vmatpush1.msra.mxu0 0.0
        %5992 = vmatprep.subr.mxu0 0.0
        %5993 = vmatpush1.msra.mxu0 0.0
        %5994 = vmatprep.subr.mxu0 0.0
        %5995 = vmatpush1.msra.mxu0 0.0
        %5996 = vmatprep.subr.mxu0 0.0
        %5997 = vmatpush1.msra.mxu0 0.0
        %5998 = vmatprep.subr.mxu0 0.0
        %5999 = vmatpush1.msra.mxu0 0.0
        %6000 = vmatprep.subr.mxu0 0.0
        %6001 = vmatpush1.msra.mxu0 0.0
        %6002 = vmatprep.subr.mxu0 0.0
        %6003 = vmatpush1.msra.mxu0 0.0
        %6004 = vmatprep.subr.mxu0 0.0
        %6005 = vmatpush1.msra.mxu0 0.0
        %6006 = vmatprep.subr.mxu0 0.0
        %6007 = vmatpush1.msra.mxu0 0.0
        %6008 = vmatprep.subr.mxu0 0.0
        %6009 = vmatpush1.msra.mxu0 0.0
        %6010 = vmatprep.subr.mxu0 0.0
        %6011 = vmatpush1.msra.mxu0 0.0
        %6012 = vmatprep.subr.mxu0 0.0
        %6013 = vmatpush1.msra.mxu0 0.0
        %6014 = vmatprep.subr.mxu0 0.0
        %6015 = vmatpush1.msra.mxu0 0.0
        %6016 = vmatprep.subr.mxu0 0.0
        %6017 = vmatpush1.msra.mxu0 0.0
        %6018 = vmatprep.subr.mxu0 0.0
        %6019 = vmatpush1.msra.mxu0 0.0
        %6020 = vmatprep.subr.mxu0 0.0
        %6021 = vmatpush1.msra.mxu0 0.0
        %6022 = vmatprep.subr.mxu0 0.0
        %6023 = vmatpush1.msra.mxu0 0.0
        %6024 = vmatprep.subr.mxu0 0.0
        %6025 = vmatpush1.msra.mxu0 0.0
        %6026 = vmatprep.subr.mxu0 0.0
        %6027 = vmatpush1.msra.mxu0 0.0
        %6028 = vmatprep.mubr.f32.mxu0 0.0
        %6029 = vmatmul.mubr.f32.gmra.mrb[0].mxu0 %v5962
        %v6030 = vpop.f32.mrb[0].mxu0
        %v6031 = vadd.f32 %v5958, %v6030
        %v6032 = vpop.f32.mrb[0].mxu0
        %6033 = vdwg.mxu0
        %s6034 = scalar_lea.vmem [#allocation2], 192
        %v6035 = vld [vmem:[%s6034] sm:$0xff]
        %v6036 = vld [vmem:[%s6034 + $0x8] sm:$0xff]
        %v6037 = vld [vmem:[%s6034 + $0x10] sm:$0xff]
        %v6038 = vld [vmem:[%s6034 + $0x18] sm:$0xff]
        %6039 = vmatprep.subr.mxu0 0.0
        %6040 = vmatpush1.msra.mxu0 %v6035
        %6041 = vmatprep.subr.mxu0 0.0
        %6042 = vmatpush1.msra.mxu0 %v6036
        %6043 = vmatprep.subr.mxu0 0.0
        %6044 = vmatpush1.msra.mxu0 %v6037
        %6045 = vmatprep.subr.mxu0 0.0
        %6046 = vmatpush1.msra.mxu0 %v6038
        %6047 = vmatprep.subr.mxu0 0.0
        %6048 = vmatpush1.msra.mxu0 0.0
        %6049 = vmatprep.subr.mxu0 0.0
        %6050 = vmatpush1.msra.mxu0 0.0
        %6051 = vmatprep.subr.mxu0 0.0
        %6052 = vmatpush1.msra.mxu0 0.0
        %6053 = vmatprep.subr.mxu0 0.0
        %6054 = vmatpush1.msra.mxu0 0.0
        %6055 = vmatprep.subr.mxu0 0.0
        %6056 = vmatpush1.msra.mxu0 0.0
        %6057 = vmatprep.subr.mxu0 0.0
        %6058 = vmatpush1.msra.mxu0 0.0
        %6059 = vmatprep.subr.mxu0 0.0
        %6060 = vmatpush1.msra.mxu0 0.0
        %6061 = vmatprep.subr.mxu0 0.0
        %6062 = vmatpush1.msra.mxu0 0.0
        %6063 = vmatprep.subr.mxu0 0.0
        %6064 = vmatpush1.msra.mxu0 0.0
        %6065 = vmatprep.subr.mxu0 0.0
        %6066 = vmatpush1.msra.mxu0 0.0
        %6067 = vmatprep.subr.mxu0 0.0
        %6068 = vmatpush1.msra.mxu0 0.0
        %6069 = vmatprep.subr.mxu0 0.0
        %6070 = vmatpush1.msra.mxu0 0.0
        %6071 = vmatprep.subr.mxu0 0.0
        %6072 = vmatpush1.msra.mxu0 0.0
        %6073 = vmatprep.subr.mxu0 0.0
        %6074 = vmatpush1.msra.mxu0 0.0
        %6075 = vmatprep.subr.mxu0 0.0
        %6076 = vmatpush1.msra.mxu0 0.0
        %6077 = vmatprep.subr.mxu0 0.0
        %6078 = vmatpush1.msra.mxu0 0.0
        %6079 = vmatprep.subr.mxu0 0.0
        %6080 = vmatpush1.msra.mxu0 0.0
        %6081 = vmatprep.subr.mxu0 0.0
        %6082 = vmatpush1.msra.mxu0 0.0
        %6083 = vmatprep.subr.mxu0 0.0
        %6084 = vmatpush1.msra.mxu0 0.0
        %6085 = vmatprep.subr.mxu0 0.0
        %6086 = vmatpush1.msra.mxu0 0.0
        %6087 = vmatprep.subr.mxu0 0.0
        %6088 = vmatpush1.msra.mxu0 0.0
        %6089 = vmatprep.subr.mxu0 0.0
        %6090 = vmatpush1.msra.mxu0 0.0
        %6091 = vmatprep.subr.mxu0 0.0
        %6092 = vmatpush1.msra.mxu0 0.0
        %6093 = vmatprep.subr.mxu0 0.0
        %6094 = vmatpush1.msra.mxu0 0.0
        %6095 = vmatprep.subr.mxu0 0.0
        %6096 = vmatpush1.msra.mxu0 0.0
        %6097 = vmatprep.subr.mxu0 0.0
        %6098 = vmatpush1.msra.mxu0 0.0
        %6099 = vmatprep.subr.mxu0 0.0
        %6100 = vmatpush1.msra.mxu0 0.0
        %6101 = vmatprep.subr.mxu0 0.0
        %6102 = vmatpush1.msra.mxu0 0.0
        %6103 = vmatprep.mubr.f32.mxu0 0.0
        %6104 = vmatmul.mubr.f32.gmra.mrb[0].mxu0 %v4331
        %v6105 = vpop.f32.mrb[0].mxu0
        %v6106 = vadd.f32 0.0, %v6105
        %v6107 = vpop.f32.mrb[0].mxu0
        %6108 = vdwg.mxu0
        %s6109 = scalar_lea.vmem [#allocation4], 192
        %v6110 = vld [vmem:[%s6109] sm:$0xff]
        %v6111 = vld [vmem:[%s6109 + $0x8] sm:$0xff]
        %v6112 = vld [vmem:[%s6109 + $0x10] sm:$0xff]
        %v6113 = vld [vmem:[%s6109 + $0x18] sm:$0xff]
        %6114 = vmatprep.subr.mxu0 0.0
        %6115 = vmatpush1.msra.mxu0 %v6110
        %6116 = vmatprep.subr.mxu0 0.0
        %6117 = vmatpush1.msra.mxu0 %v6111
        %6118 = vmatprep.subr.mxu0 0.0
        %6119 = vmatpush1.msra.mxu0 %v6112
        %6120 = vmatprep.subr.mxu0 0.0
        %6121 = vmatpush1.msra.mxu0 %v6113
        %6122 = vmatprep.subr.mxu0 0.0
        %6123 = vmatpush1.msra.mxu0 0.0
        %6124 = vmatprep.subr.mxu0 0.0
        %6125 = vmatpush1.msra.mxu0 0.0
        %6126 = vmatprep.subr.mxu0 0.0
        %6127 = vmatpush1.msra.mxu0 0.0
        %6128 = vmatprep.subr.mxu0 0.0
        %6129 = vmatpush1.msra.mxu0 0.0
        %6130 = vmatprep.subr.mxu0 0.0
        %6131 = vmatpush1.msra.mxu0 0.0
        %6132 = vmatprep.subr.mxu0 0.0
        %6133 = vmatpush1.msra.mxu0 0.0
        %6134 = vmatprep.subr.mxu0 0.0
        %6135 = vmatpush1.msra.mxu0 0.0
        %6136 = vmatprep.subr.mxu0 0.0
        %6137 = vmatpush1.msra.mxu0 0.0
        %6138 = vmatprep.subr.mxu0 0.0
        %6139 = vmatpush1.msra.mxu0 0.0
        %6140 = vmatprep.subr.mxu0 0.0
        %6141 = vmatpush1.msra.mxu0 0.0
        %6142 = vmatprep.subr.mxu0 0.0
        %6143 = vmatpush1.msra.mxu0 0.0
        %6144 = vmatprep.subr.mxu0 0.0
        %6145 = vmatpush1.msra.mxu0 0.0
        %6146 = vmatprep.subr.mxu0 0.0
        %6147 = vmatpush1.msra.mxu0 0.0
        %6148 = vmatprep.subr.mxu0 0.0
        %6149 = vmatpush1.msra.mxu0 0.0
        %6150 = vmatprep.subr.mxu0 0.0
        %6151 = vmatpush1.msra.mxu0 0.0
        %6152 = vmatprep.subr.mxu0 0.0
        %6153 = vmatpush1.msra.mxu0 0.0
        %6154 = vmatprep.subr.mxu0 0.0
        %6155 = vmatpush1.msra.mxu0 0.0
        %6156 = vmatprep.subr.mxu0 0.0
        %6157 = vmatpush1.msra.mxu0 0.0
        %6158 = vmatprep.subr.mxu0 0.0
        %6159 = vmatpush1.msra.mxu0 0.0
        %6160 = vmatprep.subr.mxu0 0.0
        %6161 = vmatpush1.msra.mxu0 0.0
        %6162 = vmatprep.subr.mxu0 0.0
        %6163 = vmatpush1.msra.mxu0 0.0
        %6164 = vmatprep.subr.mxu0 0.0
        %6165 = vmatpush1.msra.mxu0 0.0
        %6166 = vmatprep.subr.mxu0 0.0
        %6167 = vmatpush1.msra.mxu0 0.0
        %6168 = vmatprep.subr.mxu0 0.0
        %6169 = vmatpush1.msra.mxu0 0.0
        %6170 = vmatprep.subr.mxu0 0.0
        %6171 = vmatpush1.msra.mxu0 0.0
        %6172 = vmatprep.subr.mxu0 0.0
        %6173 = vmatpush1.msra.mxu0 0.0
        %6174 = vmatprep.subr.mxu0 0.0
        %6175 = vmatpush1.msra.mxu0 0.0
        %6176 = vmatprep.subr.mxu0 0.0
        %6177 = vmatpush1.msra.mxu0 0.0
        %6178 = vmatprep.mubr.f32.mxu0 0.0
        %6179 = vmatmul.mubr.f32.gmra.mrb[0].mxu0 %v4331
        %v6180 = vpop.f32.mrb[0].mxu0
        %v6181 = vadd.f32 0.0, %v6180
        %v6182 = vpop.f32.mrb[0].mxu0
        %6183 = vdwg.mxu0
        %s6184 = scalar_lea.vmem [#allocation6], 192
        %v6185 = vld [vmem:[%s6184] sm:$0xff]
        %v6186 = vld [vmem:[%s6184 + $0x8] sm:$0xff]
        %v6187 = vld [vmem:[%s6184 + $0x10] sm:$0xff]
        %v6188 = vld [vmem:[%s6184 + $0x18] sm:$0xff]
        %6189 = vmatprep.subr.mxu0 0.0
        %6190 = vmatpush1.msra.mxu0 %v6185
        %6191 = vmatprep.subr.mxu0 0.0
        %6192 = vmatpush1.msra.mxu0 %v6186
        %6193 = vmatprep.subr.mxu0 0.0
        %6194 = vmatpush1.msra.mxu0 %v6187
        %6195 = vmatprep.subr.mxu0 0.0
        %6196 = vmatpush1.msra.mxu0 %v6188
        %6197 = vmatprep.subr.mxu0 0.0
        %6198 = vmatpush1.msra.mxu0 0.0
        %6199 = vmatprep.subr.mxu0 0.0
        %6200 = vmatpush1.msra.mxu0 0.0
        %6201 = vmatprep.subr.mxu0 0.0
        %6202 = vmatpush1.msra.mxu0 0.0
        %6203 = vmatprep.subr.mxu0 0.0
        %6204 = vmatpush1.msra.mxu0 0.0
        %6205 = vmatprep.subr.mxu0 0.0
        %6206 = vmatpush1.msra.mxu0 0.0
        %6207 = vmatprep.subr.mxu0 0.0
        %6208 = vmatpush1.msra.mxu0 0.0
        %6209 = vmatprep.subr.mxu0 0.0
        %6210 = vmatpush1.msra.mxu0 0.0
        %6211 = vmatprep.subr.mxu0 0.0
        %6212 = vmatpush1.msra.mxu0 0.0
        %6213 = vmatprep.subr.mxu0 0.0
        %6214 = vmatpush1.msra.mxu0 0.0
        %6215 = vmatprep.subr.mxu0 0.0
        %6216 = vmatpush1.msra.mxu0 0.0
        %6217 = vmatprep.subr.mxu0 0.0
        %6218 = vmatpush1.msra.mxu0 0.0
        %6219 = vmatprep.subr.mxu0 0.0
        %6220 = vmatpush1.msra.mxu0 0.0
        %6221 = vmatprep.subr.mxu0 0.0
        %6222 = vmatpush1.msra.mxu0 0.0
        %6223 = vmatprep.subr.mxu0 0.0
        %6224 = vmatpush1.msra.mxu0 0.0
        %6225 = vmatprep.subr.mxu0 0.0
        %6226 = vmatpush1.msra.mxu0 0.0
        %6227 = vmatprep.subr.mxu0 0.0
        %6228 = vmatpush1.msra.mxu0 0.0
        %6229 = vmatprep.subr.mxu0 0.0
        %6230 = vmatpush1.msra.mxu0 0.0
        %6231 = vmatprep.subr.mxu0 0.0
        %6232 = vmatpush1.msra.mxu0 0.0
        %6233 = vmatprep.subr.mxu0 0.0
        %6234 = vmatpush1.msra.mxu0 0.0
        %6235 = vmatprep.subr.mxu0 0.0
        %6236 = vmatpush1.msra.mxu0 0.0
        %6237 = vmatprep.subr.mxu0 0.0
        %6238 = vmatpush1.msra.mxu0 0.0
        %6239 = vmatprep.subr.mxu0 0.0
        %6240 = vmatpush1.msra.mxu0 0.0
        %6241 = vmatprep.subr.mxu0 0.0
        %6242 = vmatpush1.msra.mxu0 0.0
        %6243 = vmatprep.subr.mxu0 0.0
        %6244 = vmatpush1.msra.mxu0 0.0
        %6245 = vmatprep.subr.mxu0 0.0
        %6246 = vmatpush1.msra.mxu0 0.0
        %6247 = vmatprep.subr.mxu0 0.0
        %6248 = vmatpush1.msra.mxu0 0.0
        %6249 = vmatprep.subr.mxu0 0.0
        %6250 = vmatpush1.msra.mxu0 0.0
        %6251 = vmatprep.subr.mxu0 0.0
        %6252 = vmatpush1.msra.mxu0 0.0
        %6253 = vmatprep.mubr.f32.mxu0 0.0
        %6254 = vmatmul.mubr.f32.gmra.mrb[0].mxu0 %v4331
        %v6255 = vpop.f32.mrb[0].mxu0
        %v6256 = vadd.f32 0.0, %v6255
        %v6257 = vpop.f32.mrb[0].mxu0
        %6258 = vdwg.mxu0
        %s6259 = scalar_lea.vmem %s5, 192
        %v6260 = vld [vmem:[%s6259] sm:$0xff]
        %v6261 = vld [vmem:[%s6259 + $0x8] sm:$0xff]
        %v6262 = vld [vmem:[%s6259 + $0x10] sm:$0xff]
        %v6263 = vld [vmem:[%s6259 + $0x18] sm:$0xff]
        %6264 = vmatprep.subr.mxu0 0.0
        %6265 = vmatpush1.msra.mxu0 %v6260
        %6266 = vmatprep.subr.mxu0 0.0
        %6267 = vmatpush1.msra.mxu0 %v6261
        %6268 = vmatprep.subr.mxu0 0.0
        %6269 = vmatpush1.msra.mxu0 %v6262
        %6270 = vmatprep.subr.mxu0 0.0
        %6271 = vmatpush1.msra.mxu0 %v6263
        %6272 = vmatprep.subr.mxu0 0.0
        %6273 = vmatpush1.msra.mxu0 0.0
        %6274 = vmatprep.subr.mxu0 0.0
        %6275 = vmatpush1.msra.mxu0 0.0
        %6276 = vmatprep.subr.mxu0 0.0
        %6277 = vmatpush1.msra.mxu0 0.0
        %6278 = vmatprep.subr.mxu0 0.0
        %6279 = vmatpush1.msra.mxu0 0.0
        %6280 = vmatprep.subr.mxu0 0.0
        %6281 = vmatpush1.msra.mxu0 0.0
        %6282 = vmatprep.subr.mxu0 0.0
        %6283 = vmatpush1.msra.mxu0 0.0
        %6284 = vmatprep.subr.mxu0 0.0
        %6285 = vmatpush1.msra.mxu0 0.0
        %6286 = vmatprep.subr.mxu0 0.0
        %6287 = vmatpush1.msra.mxu0 0.0
        %6288 = vmatprep.subr.mxu0 0.0
        %6289 = vmatpush1.msra.mxu0 0.0
        %6290 = vmatprep.subr.mxu0 0.0
        %6291 = vmatpush1.msra.mxu0 0.0
        %6292 = vmatprep.subr.mxu0 0.0
        %6293 = vmatpush1.msra.mxu0 0.0
        %6294 = vmatprep.subr.mxu0 0.0
        %6295 = vmatpush1.msra.mxu0 0.0
        %6296 = vmatprep.subr.mxu0 0.0
        %6297 = vmatpush1.msra.mxu0 0.0
        %6298 = vmatprep.subr.mxu0 0.0
        %6299 = vmatpush1.msra.mxu0 0.0
        %6300 = vmatprep.subr.mxu0 0.0
        %6301 = vmatpush1.msra.mxu0 0.0
        %6302 = vmatprep.subr.mxu0 0.0
        %6303 = vmatpush1.msra.mxu0 0.0
        %6304 = vmatprep.subr.mxu0 0.0
        %6305 = vmatpush1.msra.mxu0 0.0
        %6306 = vmatprep.subr.mxu0 0.0
        %6307 = vmatpush1.msra.mxu0 0.0
        %6308 = vmatprep.subr.mxu0 0.0
        %6309 = vmatpush1.msra.mxu0 0.0
        %6310 = vmatprep.subr.mxu0 0.0
        %6311 = vmatpush1.msra.mxu0 0.0
        %6312 = vmatprep.subr.mxu0 0.0
        %6313 = vmatpush1.msra.mxu0 0.0
        %6314 = vmatprep.subr.mxu0 0.0
        %6315 = vmatpush1.msra.mxu0 0.0
        %6316 = vmatprep.subr.mxu0 0.0
        %6317 = vmatpush1.msra.mxu0 0.0
        %6318 = vmatprep.subr.mxu0 0.0
        %6319 = vmatpush1.msra.mxu0 0.0
        %6320 = vmatprep.subr.mxu0 0.0
        %6321 = vmatpush1.msra.mxu0 0.0
        %6322 = vmatprep.subr.mxu0 0.0
        %6323 = vmatpush1.msra.mxu0 0.0
        %6324 = vmatprep.subr.mxu0 0.0
        %6325 = vmatpush1.msra.mxu0 0.0
        %6326 = vmatprep.subr.mxu0 0.0
        %6327 = vmatpush1.msra.mxu0 0.0
        %6328 = vmatprep.mubr.f32.mxu0 0.0
        %6329 = vmatmul.mubr.f32.gmra.mrb[0].mxu0 %v900
        %v6330 = vpop.f32.mrb[0].mxu0
        %v6331 = vadd.f32 0.0, %v6330
        %v6332 = vpop.f32.mrb[0].mxu0
        %6333 = vdwg.mxu0
        %s6334 = scalar_lea.vmem %s7, 6
        %v6335 = vld [vmem:[%s6334] sm:$0x1]
        %s6336 = scalar_lea.vmem %s8, 6
        %v6337 = vld [vmem:[%s6336] sm:$0x1]
        %v6339 = vlaneseq
        %v6340 = vshrl.u32 %v6339, 7
        %v6341 = vsub.s32 0, %v6340
        %v6342 = vrot.slane %v6335, %v6341
        %v6344 = vadd.f32 %v6106, %v6342
        %v6346 = vlaneseq
        %v6347 = vshrl.u32 %v6346, 7
        %v6348 = vsub.s32 0, %v6347
        %v6349 = vrot.slane %v6337, %v6348
        %v6351 = vadd.f32 %v6106, %v6349
        %v6353 = vsel %vm988, %v6351, 0
        %v6356 = vsel %vm988, %v6331, 0
        %6358 = vmatprep.subr.mxu0 0.0
        %6359 = vmatpush1.xpose.msra.mxu0 %v6356
        %6360 = vmatprep.subr.mxu0 0.0
        %6361 = vmatpush1.xpose.msra.mxu0 0.0
        %6362 = vmatprep.subr.mxu0 0.0
        %6363 = vmatpush1.xpose.msra.mxu0 0.0
        %6364 = vmatprep.subr.mxu0 0.0
        %6365 = vmatpush1.xpose.msra.mxu0 0.0
        %6366 = vmatprep.subr.mxu0 0.0
        %6367 = vmatpush1.xpose.msra.mxu0 0.0
        %6368 = vmatprep.subr.mxu0 0.0
        %6369 = vmatpush1.xpose.msra.mxu0 0.0
        %6370 = vmatprep.subr.mxu0 0.0
        %6371 = vmatpush1.xpose.msra.mxu0 0.0
        %6372 = vmatprep.subr.mxu0 0.0
        %6373 = vmatpush1.xpose.msra.mxu0 0.0
        %6374 = vmatprep.subr.mxu0 0.0
        %6375 = vmatpush1.xpose.msra.mxu0 0.0
        %6376 = vmatprep.subr.mxu0 0.0
        %6377 = vmatpush1.xpose.msra.mxu0 0.0
        %6378 = vmatprep.subr.mxu0 0.0
        %6379 = vmatpush1.xpose.msra.mxu0 0.0
        %6380 = vmatprep.subr.mxu0 0.0
        %6381 = vmatpush1.xpose.msra.mxu0 0.0
        %6382 = vmatprep.subr.mxu0 0.0
        %6383 = vmatpush1.xpose.msra.mxu0 0.0
        %6384 = vmatprep.subr.mxu0 0.0
        %6385 = vmatpush1.xpose.msra.mxu0 0.0
        %6386 = vmatprep.subr.mxu0 0.0
        %6387 = vmatpush1.xpose.msra.mxu0 0.0
        %6388 = vmatprep.subr.mxu0 0.0
        %6389 = vmatpush1.xpose.msra.mxu0 0.0
        %6390 = vmatprep.subr.mxu0 0.0
        %6391 = vmatpush1.xpose.msra.mxu0 0.0
        %6392 = vmatprep.subr.mxu0 0.0
        %6393 = vmatpush1.xpose.msra.mxu0 0.0
        %6394 = vmatprep.subr.mxu0 0.0
        %6395 = vmatpush1.xpose.msra.mxu0 0.0
        %6396 = vmatprep.subr.mxu0 0.0
        %6397 = vmatpush1.xpose.msra.mxu0 0.0
        %6398 = vmatprep.subr.mxu0 0.0
        %6399 = vmatpush1.xpose.msra.mxu0 0.0
        %6400 = vmatprep.subr.mxu0 0.0
        %6401 = vmatpush1.xpose.msra.mxu0 0.0
        %6402 = vmatprep.subr.mxu0 0.0
        %6403 = vmatpush1.xpose.msra.mxu0 0.0
        %6404 = vmatprep.subr.mxu0 0.0
        %6405 = vmatpush1.xpose.msra.mxu0 0.0
        %6406 = vmatprep.subr.mxu0 0.0
        %6407 = vmatpush1.xpose.msra.mxu0 0.0
        %6408 = vmatprep.subr.mxu0 0.0
        %6409 = vmatpush1.xpose.msra.mxu0 0.0
        %6410 = vmatprep.subr.mxu0 0.0
        %6411 = vmatpush1.xpose.msra.mxu0 0.0
        %6412 = vmatprep.subr.mxu0 0.0
        %6413 = vmatpush1.xpose.msra.mxu0 0.0
        %6414 = vmatprep.subr.mxu0 0.0
        %6415 = vmatpush1.xpose.msra.mxu0 0.0
        %6416 = vmatprep.subr.mxu0 0.0
        %6417 = vmatpush1.xpose.msra.mxu0 0.0
        %6418 = vmatprep.subr.mxu0 0.0
        %6419 = vmatpush1.xpose.msra.mxu0 0.0
        %6420 = vmatprep.subr.mxu0 0.0
        %6421 = vmatpush1.xpose.msra.mxu0 0.0
        %6422 = vmatprep.mubr.f32.mxu0 0.0
        %6423 = vmatmul.mubr.f32.gmra.mrb[0].mxu0 %v6353
        %v6424 = vpop.f32.mrb[0].mxu0
        %v6425 = vadd.f32 0.0, %v6424
        %v6426 = vpop.f32.mrb[0].mxu0
        %6427 = vdwg.mxu0
        %v6429 = vsel %vm988, %v6425, 0
        %6431 = vmatprep.subr.mxu0 0.0
        %6432 = vmatpush1.msra.mxu0 %v646
        %6433 = vmatprep.subr.mxu0 0.0
        %6434 = vmatpush1.msra.mxu0 0.0
        %6435 = vmatprep.subr.mxu0 0.0
        %6436 = vmatpush1.msra.mxu0 0.0
        %6437 = vmatprep.subr.mxu0 0.0
        %6438 = vmatpush1.msra.mxu0 0.0
        %6439 = vmatprep.subr.mxu0 0.0
        %6440 = vmatpush1.msra.mxu0 0.0
        %6441 = vmatprep.subr.mxu0 0.0
        %6442 = vmatpush1.msra.mxu0 0.0
        %6443 = vmatprep.subr.mxu0 0.0
        %6444 = vmatpush1.msra.mxu0 0.0
        %6445 = vmatprep.subr.mxu0 0.0
        %6446 = vmatpush1.msra.mxu0 0.0
        %6447 = vmatprep.subr.mxu0 0.0
        %6448 = vmatpush1.msra.mxu0 0.0
        %6449 = vmatprep.subr.mxu0 0.0
        %6450 = vmatpush1.msra.mxu0 0.0
        %6451 = vmatprep.subr.mxu0 0.0
        %6452 = vmatpush1.msra.mxu0 0.0
        %6453 = vmatprep.subr.mxu0 0.0
        %6454 = vmatpush1.msra.mxu0 0.0
        %6455 = vmatprep.subr.mxu0 0.0
        %6456 = vmatpush1.msra.mxu0 0.0
        %6457 = vmatprep.subr.mxu0 0.0
        %6458 = vmatpush1.msra.mxu0 0.0
        %6459 = vmatprep.subr.mxu0 0.0
        %6460 = vmatpush1.msra.mxu0 0.0
        %6461 = vmatprep.subr.mxu0 0.0
        %6462 = vmatpush1.msra.mxu0 0.0
        %6463 = vmatprep.subr.mxu0 0.0
        %6464 = vmatpush1.msra.mxu0 0.0
        %6465 = vmatprep.subr.mxu0 0.0
        %6466 = vmatpush1.msra.mxu0 0.0
        %6467 = vmatprep.subr.mxu0 0.0
        %6468 = vmatpush1.msra.mxu0 0.0
        %6469 = vmatprep.subr.mxu0 0.0
        %6470 = vmatpush1.msra.mxu0 0.0
        %6471 = vmatprep.subr.mxu0 0.0
        %6472 = vmatpush1.msra.mxu0 0.0
        %6473 = vmatprep.subr.mxu0 0.0
        %6474 = vmatpush1.msra.mxu0 0.0
        %6475 = vmatprep.subr.mxu0 0.0
        %6476 = vmatpush1.msra.mxu0 0.0
        %6477 = vmatprep.subr.mxu0 0.0
        %6478 = vmatpush1.msra.mxu0 0.0
        %6479 = vmatprep.subr.mxu0 0.0
        %6480 = vmatpush1.msra.mxu0 0.0
        %6481 = vmatprep.subr.mxu0 0.0
        %6482 = vmatpush1.msra.mxu0 0.0
        %6483 = vmatprep.subr.mxu0 0.0
        %6484 = vmatpush1.msra.mxu0 0.0
        %6485 = vmatprep.subr.mxu0 0.0
        %6486 = vmatpush1.msra.mxu0 0.0
        %6487 = vmatprep.subr.mxu0 0.0
        %6488 = vmatpush1.msra.mxu0 0.0
        %6489 = vmatprep.subr.mxu0 0.0
        %6490 = vmatpush1.msra.mxu0 0.0
        %6491 = vmatprep.subr.mxu0 0.0
        %6492 = vmatpush1.msra.mxu0 0.0
        %6493 = vmatprep.subr.mxu0 0.0
        %6494 = vmatpush1.msra.mxu0 0.0
        %6495 = vmatprep.mubr.f32.mxu0 0.0
        %6496 = vmatmul.mubr.f32.gmra.mrb[0].mxu0 %v6429
        %v6497 = vpop.f32.mrb[0].mxu0
        %v6498 = vadd.f32 0.0, %v6497
        %v6499 = vpop.f32.mrb[0].mxu0
        %6500 = vdwg.mxu0
        %v6501 = vsel %vm1139, %v6498, %v6425
        %v6503 = vsel %vm988, %v6501, 0
        %6505 = vmatprep.subr.mxu0 0.0
        %6506 = vmatpush1.msra.mxu0 %v655
        %6507 = vmatprep.subr.mxu0 0.0
        %6508 = vmatpush1.msra.mxu0 0.0
        %6509 = vmatprep.subr.mxu0 0.0
        %6510 = vmatpush1.msra.mxu0 0.0
        %6511 = vmatprep.subr.mxu0 0.0
        %6512 = vmatpush1.msra.mxu0 0.0
        %6513 = vmatprep.subr.mxu0 0.0
        %6514 = vmatpush1.msra.mxu0 0.0
        %6515 = vmatprep.subr.mxu0 0.0
        %6516 = vmatpush1.msra.mxu0 0.0
        %6517 = vmatprep.subr.mxu0 0.0
        %6518 = vmatpush1.msra.mxu0 0.0
        %6519 = vmatprep.subr.mxu0 0.0
        %6520 = vmatpush1.msra.mxu0 0.0
        %6521 = vmatprep.subr.mxu0 0.0
        %6522 = vmatpush1.msra.mxu0 0.0
        %6523 = vmatprep.subr.mxu0 0.0
        %6524 = vmatpush1.msra.mxu0 0.0
        %6525 = vmatprep.subr.mxu0 0.0
        %6526 = vmatpush1.msra.mxu0 0.0
        %6527 = vmatprep.subr.mxu0 0.0
        %6528 = vmatpush1.msra.mxu0 0.0
        %6529 = vmatprep.subr.mxu0 0.0
        %6530 = vmatpush1.msra.mxu0 0.0
        %6531 = vmatprep.subr.mxu0 0.0
        %6532 = vmatpush1.msra.mxu0 0.0
        %6533 = vmatprep.subr.mxu0 0.0
        %6534 = vmatpush1.msra.mxu0 0.0
        %6535 = vmatprep.subr.mxu0 0.0
        %6536 = vmatpush1.msra.mxu0 0.0
        %6537 = vmatprep.subr.mxu0 0.0
        %6538 = vmatpush1.msra.mxu0 0.0
        %6539 = vmatprep.subr.mxu0 0.0
        %6540 = vmatpush1.msra.mxu0 0.0
        %6541 = vmatprep.subr.mxu0 0.0
        %6542 = vmatpush1.msra.mxu0 0.0
        %6543 = vmatprep.subr.mxu0 0.0
        %6544 = vmatpush1.msra.mxu0 0.0
        %6545 = vmatprep.subr.mxu0 0.0
        %6546 = vmatpush1.msra.mxu0 0.0
        %6547 = vmatprep.subr.mxu0 0.0
        %6548 = vmatpush1.msra.mxu0 0.0
        %6549 = vmatprep.subr.mxu0 0.0
        %6550 = vmatpush1.msra.mxu0 0.0
        %6551 = vmatprep.subr.mxu0 0.0
        %6552 = vmatpush1.msra.mxu0 0.0
        %6553 = vmatprep.subr.mxu0 0.0
        %6554 = vmatpush1.msra.mxu0 0.0
        %6555 = vmatprep.subr.mxu0 0.0
        %6556 = vmatpush1.msra.mxu0 0.0
        %6557 = vmatprep.subr.mxu0 0.0
        %6558 = vmatpush1.msra.mxu0 0.0
        %6559 = vmatprep.subr.mxu0 0.0
        %6560 = vmatpush1.msra.mxu0 0.0
        %6561 = vmatprep.subr.mxu0 0.0
        %6562 = vmatpush1.msra.mxu0 0.0
        %6563 = vmatprep.subr.mxu0 0.0
        %6564 = vmatpush1.msra.mxu0 0.0
        %6565 = vmatprep.subr.mxu0 0.0
        %6566 = vmatpush1.msra.mxu0 0.0
        %6567 = vmatprep.subr.mxu0 0.0
        %6568 = vmatpush1.msra.mxu0 0.0
        %6569 = vmatprep.mubr.f32.mxu0 0.0
        %6570 = vmatmul.mubr.f32.gmra.mrb[0].mxu0 %v6503
        %v6571 = vpop.f32.mrb[0].mxu0
        %v6572 = vadd.f32 0.0, %v6571
        %v6573 = vpop.f32.mrb[0].mxu0
        %6574 = vdwg.mxu0
        %v6575 = vsel %vm1215, %v6572, %v6501
        %v6577 = vsel %vm988, %v6575, 0
        %6579 = vmatprep.subr.mxu0 0.0
        %6580 = vmatpush1.msra.mxu0 %v665
        %6581 = vmatprep.subr.mxu0 0.0
        %6582 = vmatpush1.msra.mxu0 0.0
        %6583 = vmatprep.subr.mxu0 0.0
        %6584 = vmatpush1.msra.mxu0 0.0
        %6585 = vmatprep.subr.mxu0 0.0
        %6586 = vmatpush1.msra.mxu0 0.0
        %6587 = vmatprep.subr.mxu0 0.0
        %6588 = vmatpush1.msra.mxu0 0.0
        %6589 = vmatprep.subr.mxu0 0.0
        %6590 = vmatpush1.msra.mxu0 0.0
        %6591 = vmatprep.subr.mxu0 0.0
        %6592 = vmatpush1.msra.mxu0 0.0
        %6593 = vmatprep.subr.mxu0 0.0
        %6594 = vmatpush1.msra.mxu0 0.0
        %6595 = vmatprep.subr.mxu0 0.0
        %6596 = vmatpush1.msra.mxu0 0.0
        %6597 = vmatprep.subr.mxu0 0.0
        %6598 = vmatpush1.msra.mxu0 0.0
        %6599 = vmatprep.subr.mxu0 0.0
        %6600 = vmatpush1.msra.mxu0 0.0
        %6601 = vmatprep.subr.mxu0 0.0
        %6602 = vmatpush1.msra.mxu0 0.0
        %6603 = vmatprep.subr.mxu0 0.0
        %6604 = vmatpush1.msra.mxu0 0.0
        %6605 = vmatprep.subr.mxu0 0.0
        %6606 = vmatpush1.msra.mxu0 0.0
        %6607 = vmatprep.subr.mxu0 0.0
        %6608 = vmatpush1.msra.mxu0 0.0
        %6609 = vmatprep.subr.mxu0 0.0
        %6610 = vmatpush1.msra.mxu0 0.0
        %6611 = vmatprep.subr.mxu0 0.0
        %6612 = vmatpush1.msra.mxu0 0.0
        %6613 = vmatprep.subr.mxu0 0.0
        %6614 = vmatpush1.msra.mxu0 0.0
        %6615 = vmatprep.subr.mxu0 0.0
        %6616 = vmatpush1.msra.mxu0 0.0
        %6617 = vmatprep.subr.mxu0 0.0
        %6618 = vmatpush1.msra.mxu0 0.0
        %6619 = vmatprep.subr.mxu0 0.0
        %6620 = vmatpush1.msra.mxu0 0.0
        %6621 = vmatprep.subr.mxu0 0.0
        %6622 = vmatpush1.msra.mxu0 0.0
        %6623 = vmatprep.subr.mxu0 0.0
        %6624 = vmatpush1.msra.mxu0 0.0
        %6625 = vmatprep.subr.mxu0 0.0
        %6626 = vmatpush1.msra.mxu0 0.0
        %6627 = vmatprep.subr.mxu0 0.0
        %6628 = vmatpush1.msra.mxu0 0.0
        %6629 = vmatprep.subr.mxu0 0.0
        %6630 = vmatpush1.msra.mxu0 0.0
        %6631 = vmatprep.subr.mxu0 0.0
        %6632 = vmatpush1.msra.mxu0 0.0
        %6633 = vmatprep.subr.mxu0 0.0
        %6634 = vmatpush1.msra.mxu0 0.0
        %6635 = vmatprep.subr.mxu0 0.0
        %6636 = vmatpush1.msra.mxu0 0.0
        %6637 = vmatprep.subr.mxu0 0.0
        %6638 = vmatpush1.msra.mxu0 0.0
        %6639 = vmatprep.subr.mxu0 0.0
        %6640 = vmatpush1.msra.mxu0 0.0
        %6641 = vmatprep.subr.mxu0 0.0
        %6642 = vmatpush1.msra.mxu0 0.0
        %6643 = vmatprep.mubr.f32.mxu0 0.0
        %6644 = vmatmul.mubr.f32.gmra.mrb[0].mxu0 %v6577
        %v6645 = vpop.f32.mrb[0].mxu0
        %v6646 = vadd.f32 0.0, %v6645
        %v6647 = vpop.f32.mrb[0].mxu0
        %6648 = vdwg.mxu0
        %v6649 = vsel %vm1291, %v6646, %v6575
        %v6651 = vsel %vm988, %v6344, 0
        %v6654 = vsel %vm988, %v6181, 0
        %6656 = vmatprep.subr.mxu0 0.0
        %6657 = vmatpush1.xpose.msra.mxu0 %v6654
        %6658 = vmatprep.subr.mxu0 0.0
        %6659 = vmatpush1.xpose.msra.mxu0 0.0
        %6660 = vmatprep.subr.mxu0 0.0
        %6661 = vmatpush1.xpose.msra.mxu0 0.0
        %6662 = vmatprep.subr.mxu0 0.0
        %6663 = vmatpush1.xpose.msra.mxu0 0.0
        %6664 = vmatprep.subr.mxu0 0.0
        %6665 = vmatpush1.xpose.msra.mxu0 0.0
        %6666 = vmatprep.subr.mxu0 0.0
        %6667 = vmatpush1.xpose.msra.mxu0 0.0
        %6668 = vmatprep.subr.mxu0 0.0
        %6669 = vmatpush1.xpose.msra.mxu0 0.0
        %6670 = vmatprep.subr.mxu0 0.0
        %6671 = vmatpush1.xpose.msra.mxu0 0.0
        %6672 = vmatprep.subr.mxu0 0.0
        %6673 = vmatpush1.xpose.msra.mxu0 0.0
        %6674 = vmatprep.subr.mxu0 0.0
        %6675 = vmatpush1.xpose.msra.mxu0 0.0
        %6676 = vmatprep.subr.mxu0 0.0
        %6677 = vmatpush1.xpose.msra.mxu0 0.0
        %6678 = vmatprep.subr.mxu0 0.0
        %6679 = vmatpush1.xpose.msra.mxu0 0.0
        %6680 = vmatprep.subr.mxu0 0.0
        %6681 = vmatpush1.xpose.msra.mxu0 0.0
        %6682 = vmatprep.subr.mxu0 0.0
        %6683 = vmatpush1.xpose.msra.mxu0 0.0
        %6684 = vmatprep.subr.mxu0 0.0
        %6685 = vmatpush1.xpose.msra.mxu0 0.0
        %6686 = vmatprep.subr.mxu0 0.0
        %6687 = vmatpush1.xpose.msra.mxu0 0.0
        %6688 = vmatprep.subr.mxu0 0.0
        %6689 = vmatpush1.xpose.msra.mxu0 0.0
        %6690 = vmatprep.subr.mxu0 0.0
        %6691 = vmatpush1.xpose.msra.mxu0 0.0
        %6692 = vmatprep.subr.mxu0 0.0
        %6693 = vmatpush1.xpose.msra.mxu0 0.0
        %6694 = vmatprep.subr.mxu0 0.0
        %6695 = vmatpush1.xpose.msra.mxu0 0.0
        %6696 = vmatprep.subr.mxu0 0.0
        %6697 = vmatpush1.xpose.msra.mxu0 0.0
        %6698 = vmatprep.subr.mxu0 0.0
        %6699 = vmatpush1.xpose.msra.mxu0 0.0
        %6700 = vmatprep.subr.mxu0 0.0
        %6701 = vmatpush1.xpose.msra.mxu0 0.0
        %6702 = vmatprep.subr.mxu0 0.0
        %6703 = vmatpush1.xpose.msra.mxu0 0.0
        %6704 = vmatprep.subr.mxu0 0.0
        %6705 = vmatpush1.xpose.msra.mxu0 0.0
        %6706 = vmatprep.subr.mxu0 0.0
        %6707 = vmatpush1.xpose.msra.mxu0 0.0
        %6708 = vmatprep.subr.mxu0 0.0
        %6709 = vmatpush1.xpose.msra.mxu0 0.0
        %6710 = vmatprep.subr.mxu0 0.0
        %6711 = vmatpush1.xpose.msra.mxu0 0.0
        %6712 = vmatprep.subr.mxu0 0.0
        %6713 = vmatpush1.xpose.msra.mxu0 0.0
        %6714 = vmatprep.subr.mxu0 0.0
        %6715 = vmatpush1.xpose.msra.mxu0 0.0
        %6716 = vmatprep.subr.mxu0 0.0
        %6717 = vmatpush1.xpose.msra.mxu0 0.0
        %6718 = vmatprep.subr.mxu0 0.0
        %6719 = vmatpush1.xpose.msra.mxu0 0.0
        %6720 = vmatprep.mubr.f32.mxu0 0.0
        %6721 = vmatmul.mubr.f32.gmra.mrb[0].mxu0 %v6651
        %v6722 = vpop.f32.mrb[0].mxu0
        %v6723 = vadd.f32 %v6649, %v6722
        %v6724 = vpop.f32.mrb[0].mxu0
        %6725 = vdwg.mxu0
        %v6726 = vmul.f32 %v6723, 0.35355338
        %v6727 = vsel %vm638, -1e+30, %v6726
        %v6728 = vsel %vm988, %v6727, -inf
        %6729 = vmax.xlane.f32.xlu0 %v6728
        %v6730 = vpop.xlane.xlu0 %6729
        %v6731 = vsub.f32 %v6727, %v6730
        %v6732 = vmul.f32 %v6731, 1.442695
        %v6733 = vpow.pop %v6732
        %v6734 = vsel %vm988, %v6733, 0.0
        %6735 = vadd.xlane.f32.xlu0 %v6734
        %v6736 = vpop.xlane.xlu0 %6735
        %v6737 = vrcp.pop %v6736
        %v6738 = vmul.f32 %v6733, %v6737
        %v6740 = vsel %vm988, %v6738, 0
        %6742 = vmatprep.subr.mxu0 0.0
        %6743 = vmatpush1.msra.mxu0 %v6256
        %6744 = vmatprep.subr.mxu0 0.0
        %6745 = vmatpush1.msra.mxu0 0.0
        %6746 = vmatprep.subr.mxu0 0.0
        %6747 = vmatpush1.msra.mxu0 0.0
        %6748 = vmatprep.subr.mxu0 0.0
        %6749 = vmatpush1.msra.mxu0 0.0
        %6750 = vmatprep.subr.mxu0 0.0
        %6751 = vmatpush1.msra.mxu0 0.0
        %6752 = vmatprep.subr.mxu0 0.0
        %6753 = vmatpush1.msra.mxu0 0.0
        %6754 = vmatprep.subr.mxu0 0.0
        %6755 = vmatpush1.msra.mxu0 0.0
        %6756 = vmatprep.subr.mxu0 0.0
        %6757 = vmatpush1.msra.mxu0 0.0
        %6758 = vmatprep.subr.mxu0 0.0
        %6759 = vmatpush1.msra.mxu0 0.0
        %6760 = vmatprep.subr.mxu0 0.0
        %6761 = vmatpush1.msra.mxu0 0.0
        %6762 = vmatprep.subr.mxu0 0.0
        %6763 = vmatpush1.msra.mxu0 0.0
        %6764 = vmatprep.subr.mxu0 0.0
        %6765 = vmatpush1.msra.mxu0 0.0
        %6766 = vmatprep.subr.mxu0 0.0
        %6767 = vmatpush1.msra.mxu0 0.0
        %6768 = vmatprep.subr.mxu0 0.0
        %6769 = vmatpush1.msra.mxu0 0.0
        %6770 = vmatprep.subr.mxu0 0.0
        %6771 = vmatpush1.msra.mxu0 0.0
        %6772 = vmatprep.subr.mxu0 0.0
        %6773 = vmatpush1.msra.mxu0 0.0
        %6774 = vmatprep.subr.mxu0 0.0
        %6775 = vmatpush1.msra.mxu0 0.0
        %6776 = vmatprep.subr.mxu0 0.0
        %6777 = vmatpush1.msra.mxu0 0.0
        %6778 = vmatprep.subr.mxu0 0.0
        %6779 = vmatpush1.msra.mxu0 0.0
        %6780 = vmatprep.subr.mxu0 0.0
        %6781 = vmatpush1.msra.mxu0 0.0
        %6782 = vmatprep.subr.mxu0 0.0
        %6783 = vmatpush1.msra.mxu0 0.0
        %6784 = vmatprep.subr.mxu0 0.0
        %6785 = vmatpush1.msra.mxu0 0.0
        %6786 = vmatprep.subr.mxu0 0.0
        %6787 = vmatpush1.msra.mxu0 0.0
        %6788 = vmatprep.subr.mxu0 0.0
        %6789 = vmatpush1.msra.mxu0 0.0
        %6790 = vmatprep.subr.mxu0 0.0
        %6791 = vmatpush1.msra.mxu0 0.0
        %6792 = vmatprep.subr.mxu0 0.0
        %6793 = vmatpush1.msra.mxu0 0.0
        %6794 = vmatprep.subr.mxu0 0.0
        %6795 = vmatpush1.msra.mxu0 0.0
        %6796 = vmatprep.subr.mxu0 0.0
        %6797 = vmatpush1.msra.mxu0 0.0
        %6798 = vmatprep.subr.mxu0 0.0
        %6799 = vmatpush1.msra.mxu0 0.0
        %6800 = vmatprep.subr.mxu0 0.0
        %6801 = vmatpush1.msra.mxu0 0.0
        %6802 = vmatprep.subr.mxu0 0.0
        %6803 = vmatpush1.msra.mxu0 0.0
        %6804 = vmatprep.subr.mxu0 0.0
        %6805 = vmatpush1.msra.mxu0 0.0
        %6806 = vmatprep.mubr.f32.mxu0 0.0
        %6807 = vmatmul.mubr.f32.gmra.mrb[0].mxu0 %v6740
        %v6808 = vpop.f32.mrb[0].mxu0
        %v6809 = vadd.f32 0.0, %v6808
        %v6810 = vpop.f32.mrb[0].mxu0
        %6811 = vdwg.mxu0
        %s6812 = scalar_lea.vmem [#allocation7], 48
        %v6813 = vld [vmem:[%s6812] sm:$0xff]
        %v6815 = vsel %vm988, %v6809, 0
        %6817 = vmatprep.subr.mxu0 0.0
        %6818 = vmatpush1.msra.mxu0 %v6813
        %6819 = vmatprep.subr.mxu0 0.0
        %6820 = vmatpush1.msra.mxu0 0.0
        %6821 = vmatprep.subr.mxu0 0.0
        %6822 = vmatpush1.msra.mxu0 0.0
        %6823 = vmatprep.subr.mxu0 0.0
        %6824 = vmatpush1.msra.mxu0 0.0
        %6825 = vmatprep.subr.mxu0 0.0
        %6826 = vmatpush1.msra.mxu0 0.0
        %6827 = vmatprep.subr.mxu0 0.0
        %6828 = vmatpush1.msra.mxu0 0.0
        %6829 = vmatprep.subr.mxu0 0.0
        %6830 = vmatpush1.msra.mxu0 0.0
        %6831 = vmatprep.subr.mxu0 0.0
        %6832 = vmatpush1.msra.mxu0 0.0
        %6833 = vmatprep.subr.mxu0 0.0
        %6834 = vmatpush1.msra.mxu0 0.0
        %6835 = vmatprep.subr.mxu0 0.0
        %6836 = vmatpush1.msra.mxu0 0.0
        %6837 = vmatprep.subr.mxu0 0.0
        %6838 = vmatpush1.msra.mxu0 0.0
        %6839 = vmatprep.subr.mxu0 0.0
        %6840 = vmatpush1.msra.mxu0 0.0
        %6841 = vmatprep.subr.mxu0 0.0
        %6842 = vmatpush1.msra.mxu0 0.0
        %6843 = vmatprep.subr.mxu0 0.0
        %6844 = vmatpush1.msra.mxu0 0.0
        %6845 = vmatprep.subr.mxu0 0.0
        %6846 = vmatpush1.msra.mxu0 0.0
        %6847 = vmatprep.subr.mxu0 0.0
        %6848 = vmatpush1.msra.mxu0 0.0
        %6849 = vmatprep.subr.mxu0 0.0
        %6850 = vmatpush1.msra.mxu0 0.0
        %6851 = vmatprep.subr.mxu0 0.0
        %6852 = vmatpush1.msra.mxu0 0.0
        %6853 = vmatprep.subr.mxu0 0.0
        %6854 = vmatpush1.msra.mxu0 0.0
        %6855 = vmatprep.subr.mxu0 0.0
        %6856 = vmatpush1.msra.mxu0 0.0
        %6857 = vmatprep.subr.mxu0 0.0
        %6858 = vmatpush1.msra.mxu0 0.0
        %6859 = vmatprep.subr.mxu0 0.0
        %6860 = vmatpush1.msra.mxu0 0.0
        %6861 = vmatprep.subr.mxu0 0.0
        %6862 = vmatpush1.msra.mxu0 0.0
        %6863 = vmatprep.subr.mxu0 0.0
        %6864 = vmatpush1.msra.mxu0 0.0
        %6865 = vmatprep.subr.mxu0 0.0
        %6866 = vmatpush1.msra.mxu0 0.0
        %6867 = vmatprep.subr.mxu0 0.0
        %6868 = vmatpush1.msra.mxu0 0.0
        %6869 = vmatprep.subr.mxu0 0.0
        %6870 = vmatpush1.msra.mxu0 0.0
        %6871 = vmatprep.subr.mxu0 0.0
        %6872 = vmatpush1.msra.mxu0 0.0
        %6873 = vmatprep.subr.mxu0 0.0
        %6874 = vmatpush1.msra.mxu0 0.0
        %6875 = vmatprep.subr.mxu0 0.0
        %6876 = vmatpush1.msra.mxu0 0.0
        %6877 = vmatprep.subr.mxu0 0.0
        %6878 = vmatpush1.msra.mxu0 0.0
        %6879 = vmatprep.subr.mxu0 0.0
        %6880 = vmatpush1.msra.mxu0 0.0
        %6881 = vmatprep.mubr.f32.mxu0 0.0
        %6882 = vmatmul.mubr.f32.gmra.mrb[0].mxu0 %v6815
        %v6883 = vpop.f32.mrb[0].mxu0
        %v6884 = vadd.f32 0.0, %v6883
        %v6885 = vpop.f32.mrb[0].mxu0
        %6886 = vdwg.mxu0
        %v6887 = vadd.f32 %v6031, %v6884
        %s6888 = scalar_lea.vmem [#allocation2], 224
        %v6889 = vld [vmem:[%s6888] sm:$0xff]
        %v6890 = vld [vmem:[%s6888 + $0x8] sm:$0xff]
        %v6891 = vld [vmem:[%s6888 + $0x10] sm:$0xff]
        %v6892 = vld [vmem:[%s6888 + $0x18] sm:$0xff]
        %6893 = vmatprep.subr.mxu0 0.0
        %6894 = vmatpush1.msra.mxu0 %v6889
        %6895 = vmatprep.subr.mxu0 0.0
        %6896 = vmatpush1.msra.mxu0 %v6890
        %6897 = vmatprep.subr.mxu0 0.0
        %6898 = vmatpush1.msra.mxu0 %v6891
        %6899 = vmatprep.subr.mxu0 0.0
        %6900 = vmatpush1.msra.mxu0 %v6892
        %6901 = vmatprep.subr.mxu0 0.0
        %6902 = vmatpush1.msra.mxu0 0.0
        %6903 = vmatprep.subr.mxu0 0.0
        %6904 = vmatpush1.msra.mxu0 0.0
        %6905 = vmatprep.subr.mxu0 0.0
        %6906 = vmatpush1.msra.mxu0 0.0
        %6907 = vmatprep.subr.mxu0 0.0
        %6908 = vmatpush1.msra.mxu0 0.0
        %6909 = vmatprep.subr.mxu0 0.0
        %6910 = vmatpush1.msra.mxu0 0.0
        %6911 = vmatprep.subr.mxu0 0.0
        %6912 = vmatpush1.msra.mxu0 0.0
        %6913 = vmatprep.subr.mxu0 0.0
        %6914 = vmatpush1.msra.mxu0 0.0
        %6915 = vmatprep.subr.mxu0 0.0
        %6916 = vmatpush1.msra.mxu0 0.0
        %6917 = vmatprep.subr.mxu0 0.0
        %6918 = vmatpush1.msra.mxu0 0.0
        %6919 = vmatprep.subr.mxu0 0.0
        %6920 = vmatpush1.msra.mxu0 0.0
        %6921 = vmatprep.subr.mxu0 0.0
        %6922 = vmatpush1.msra.mxu0 0.0
        %6923 = vmatprep.subr.mxu0 0.0
        %6924 = vmatpush1.msra.mxu0 0.0
        %6925 = vmatprep.subr.mxu0 0.0
        %6926 = vmatpush1.msra.mxu0 0.0
        %6927 = vmatprep.subr.mxu0 0.0
        %6928 = vmatpush1.msra.mxu0 0.0
        %6929 = vmatprep.subr.mxu0 0.0
        %6930 = vmatpush1.msra.mxu0 0.0
        %6931 = vmatprep.subr.mxu0 0.0
        %6932 = vmatpush1.msra.mxu0 0.0
        %6933 = vmatprep.subr.mxu0 0.0
        %6934 = vmatpush1.msra.mxu0 0.0
        %6935 = vmatprep.subr.mxu0 0.0
        %6936 = vmatpush1.msra.mxu0 0.0
        %6937 = vmatprep.subr.mxu0 0.0
        %6938 = vmatpush1.msra.mxu0 0.0
        %6939 = vmatprep.subr.mxu0 0.0
        %6940 = vmatpush1.msra.mxu0 0.0
        %6941 = vmatprep.subr.mxu0 0.0
        %6942 = vmatpush1.msra.mxu0 0.0
        %6943 = vmatprep.subr.mxu0 0.0
        %6944 = vmatpush1.msra.mxu0 0.0
        %6945 = vmatprep.subr.mxu0 0.0
        %6946 = vmatpush1.msra.mxu0 0.0
        %6947 = vmatprep.subr.mxu0 0.0
        %6948 = vmatpush1.msra.mxu0 0.0
        %6949 = vmatprep.subr.mxu0 0.0
        %6950 = vmatpush1.msra.mxu0 0.0
        %6951 = vmatprep.subr.mxu0 0.0
        %6952 = vmatpush1.msra.mxu0 0.0
        %6953 = vmatprep.subr.mxu0 0.0
        %6954 = vmatpush1.msra.mxu0 0.0
        %6955 = vmatprep.subr.mxu0 0.0
        %6956 = vmatpush1.msra.mxu0 0.0
        %6957 = vmatprep.mubr.f32.mxu0 0.0
        %6958 = vmatmul.mubr.f32.gmra.mrb[0].mxu0 %v4331
        %v6959 = vpop.f32.mrb[0].mxu0
        %v6960 = vadd.f32 0.0, %v6959
        %v6961 = vpop.f32.mrb[0].mxu0
        %6962 = vdwg.mxu0
        %s6963 = scalar_lea.vmem [#allocation4], 224
        %v6964 = vld [vmem:[%s6963] sm:$0xff]
        %v6965 = vld [vmem:[%s6963 + $0x8] sm:$0xff]
        %v6966 = vld [vmem:[%s6963 + $0x10] sm:$0xff]
        %v6967 = vld [vmem:[%s6963 + $0x18] sm:$0xff]
        %6968 = vmatprep.subr.mxu0 0.0
        %6969 = vmatpush1.msra.mxu0 %v6964
        %6970 = vmatprep.subr.mxu0 0.0
        %6971 = vmatpush1.msra.mxu0 %v6965
        %6972 = vmatprep.subr.mxu0 0.0
        %6973 = vmatpush1.msra.mxu0 %v6966
        %6974 = vmatprep.subr.mxu0 0.0
        %6975 = vmatpush1.msra.mxu0 %v6967
        %6976 = vmatprep.subr.mxu0 0.0
        %6977 = vmatpush1.msra.mxu0 0.0
        %6978 = vmatprep.subr.mxu0 0.0
        %6979 = vmatpush1.msra.mxu0 0.0
        %6980 = vmatprep.subr.mxu0 0.0
        %6981 = vmatpush1.msra.mxu0 0.0
        %6982 = vmatprep.subr.mxu0 0.0
        %6983 = vmatpush1.msra.mxu0 0.0
        %6984 = vmatprep.subr.mxu0 0.0
        %6985 = vmatpush1.msra.mxu0 0.0
        %6986 = vmatprep.subr.mxu0 0.0
        %6987 = vmatpush1.msra.mxu0 0.0
        %6988 = vmatprep.subr.mxu0 0.0
        %6989 = vmatpush1.msra.mxu0 0.0
        %6990 = vmatprep.subr.mxu0 0.0
        %6991 = vmatpush1.msra.mxu0 0.0
        %6992 = vmatprep.subr.mxu0 0.0
        %6993 = vmatpush1.msra.mxu0 0.0
        %6994 = vmatprep.subr.mxu0 0.0
        %6995 = vmatpush1.msra.mxu0 0.0
        %6996 = vmatprep.subr.mxu0 0.0
        %6997 = vmatpush1.msra.mxu0 0.0
        %6998 = vmatprep.subr.mxu0 0.0
        %6999 = vmatpush1.msra.mxu0 0.0
        %7000 = vmatprep.subr.mxu0 0.0
        %7001 = vmatpush1.msra.mxu0 0.0
        %7002 = vmatprep.subr.mxu0 0.0
        %7003 = vmatpush1.msra.mxu0 0.0
        %7004 = vmatprep.subr.mxu0 0.0
        %7005 = vmatpush1.msra.mxu0 0.0
        %7006 = vmatprep.subr.mxu0 0.0
        %7007 = vmatpush1.msra.mxu0 0.0
        %7008 = vmatprep.subr.mxu0 0.0
        %7009 = vmatpush1.msra.mxu0 0.0
        %7010 = vmatprep.subr.mxu0 0.0
        %7011 = vmatpush1.msra.mxu0 0.0
        %7012 = vmatprep.subr.mxu0 0.0
        %7013 = vmatpush1.msra.mxu0 0.0
        %7014 = vmatprep.subr.mxu0 0.0
        %7015 = vmatpush1.msra.mxu0 0.0
        %7016 = vmatprep.subr.mxu0 0.0
        %7017 = vmatpush1.msra.mxu0 0.0
        %7018 = vmatprep.subr.mxu0 0.0
        %7019 = vmatpush1.msra.mxu0 0.0
        %7020 = vmatprep.subr.mxu0 0.0
        %7021 = vmatpush1.msra.mxu0 0.0
        %7022 = vmatprep.subr.mxu0 0.0
        %7023 = vmatpush1.msra.mxu0 0.0
        %7024 = vmatprep.subr.mxu0 0.0
        %7025 = vmatpush1.msra.mxu0 0.0
        %7026 = vmatprep.subr.mxu0 0.0
        %7027 = vmatpush1.msra.mxu0 0.0
        %7028 = vmatprep.subr.mxu0 0.0
        %7029 = vmatpush1.msra.mxu0 0.0
        %7030 = vmatprep.subr.mxu0 0.0
        %7031 = vmatpush1.msra.mxu0 0.0
        %7032 = vmatprep.mubr.f32.mxu0 0.0
        %7033 = vmatmul.mubr.f32.gmra.mrb[0].mxu0 %v4331
        %v7034 = vpop.f32.mrb[0].mxu0
        %v7035 = vadd.f32 0.0, %v7034
        %v7036 = vpop.f32.mrb[0].mxu0
        %7037 = vdwg.mxu0
        %s7038 = scalar_lea.vmem [#allocation6], 224
        %v7039 = vld [vmem:[%s7038] sm:$0xff]
        %v7040 = vld [vmem:[%s7038 + $0x8] sm:$0xff]
        %v7041 = vld [vmem:[%s7038 + $0x10] sm:$0xff]
        %v7042 = vld [vmem:[%s7038 + $0x18] sm:$0xff]
        %7043 = vmatprep.subr.mxu0 0.0
        %7044 = vmatpush1.msra.mxu0 %v7039
        %7045 = vmatprep.subr.mxu0 0.0
        %7046 = vmatpush1.msra.mxu0 %v7040
        %7047 = vmatprep.subr.mxu0 0.0
        %7048 = vmatpush1.msra.mxu0 %v7041
        %7049 = vmatprep.subr.mxu0 0.0
        %7050 = vmatpush1.msra.mxu0 %v7042
        %7051 = vmatprep.subr.mxu0 0.0
        %7052 = vmatpush1.msra.mxu0 0.0
        %7053 = vmatprep.subr.mxu0 0.0
        %7054 = vmatpush1.msra.mxu0 0.0
        %7055 = vmatprep.subr.mxu0 0.0
        %7056 = vmatpush1.msra.mxu0 0.0
        %7057 = vmatprep.subr.mxu0 0.0
        %7058 = vmatpush1.msra.mxu0 0.0
        %7059 = vmatprep.subr.mxu0 0.0
        %7060 = vmatpush1.msra.mxu0 0.0
        %7061 = vmatprep.subr.mxu0 0.0
        %7062 = vmatpush1.msra.mxu0 0.0
        %7063 = vmatprep.subr.mxu0 0.0
        %7064 = vmatpush1.msra.mxu0 0.0
        %7065 = vmatprep.subr.mxu0 0.0
        %7066 = vmatpush1.msra.mxu0 0.0
        %7067 = vmatprep.subr.mxu0 0.0
        %7068 = vmatpush1.msra.mxu0 0.0
        %7069 = vmatprep.subr.mxu0 0.0
        %7070 = vmatpush1.msra.mxu0 0.0
        %7071 = vmatprep.subr.mxu0 0.0
        %7072 = vmatpush1.msra.mxu0 0.0
        %7073 = vmatprep.subr.mxu0 0.0
        %7074 = vmatpush1.msra.mxu0 0.0
        %7075 = vmatprep.subr.mxu0 0.0
        %7076 = vmatpush1.msra.mxu0 0.0
        %7077 = vmatprep.subr.mxu0 0.0
        %7078 = vmatpush1.msra.mxu0 0.0
        %7079 = vmatprep.subr.mxu0 0.0
        %7080 = vmatpush1.msra.mxu0 0.0
        %7081 = vmatprep.subr.mxu0 0.0
        %7082 = vmatpush1.msra.mxu0 0.0
        %7083 = vmatprep.subr.mxu0 0.0
        %7084 = vmatpush1.msra.mxu0 0.0
        %7085 = vmatprep.subr.mxu0 0.0
        %7086 = vmatpush1.msra.mxu0 0.0
        %7087 = vmatprep.subr.mxu0 0.0
        %7088 = vmatpush1.msra.mxu0 0.0
        %7089 = vmatprep.subr.mxu0 0.0
        %7090 = vmatpush1.msra.mxu0 0.0
        %7091 = vmatprep.subr.mxu0 0.0
        %7092 = vmatpush1.msra.mxu0 0.0
        %7093 = vmatprep.subr.mxu0 0.0
        %7094 = vmatpush1.msra.mxu0 0.0
        %7095 = vmatprep.subr.mxu0 0.0
        %7096 = vmatpush1.msra.mxu0 0.0
        %7097 = vmatprep.subr.mxu0 0.0
        %7098 = vmatpush1.msra.mxu0 0.0
        %7099 = vmatprep.subr.mxu0 0.0
        %7100 = vmatpush1.msra.mxu0 0.0
        %7101 = vmatprep.subr.mxu0 0.0
        %7102 = vmatpush1.msra.mxu0 0.0
        %7103 = vmatprep.subr.mxu0 0.0
        %7104 = vmatpush1.msra.mxu0 0.0
        %7105 = vmatprep.subr.mxu0 0.0
        %7106 = vmatpush1.msra.mxu0 0.0
        %7107 = vmatprep.mubr.f32.mxu0 0.0
        %7108 = vmatmul.mubr.f32.gmra.mrb[0].mxu0 %v4331
        %v7109 = vpop.f32.mrb[0].mxu0
        %v7110 = vadd.f32 0.0, %v7109
        %v7111 = vpop.f32.mrb[0].mxu0
        %7112 = vdwg.mxu0
        %s7113 = scalar_lea.vmem %s5, 224
        %v7114 = vld [vmem:[%s7113] sm:$0xff]
        %v7115 = vld [vmem:[%s7113 + $0x8] sm:$0xff]
        %v7116 = vld [vmem:[%s7113 + $0x10] sm:$0xff]
        %v7117 = vld [vmem:[%s7113 + $0x18] sm:$0xff]
        %7118 = vmatprep.subr.mxu0 0.0
        %7119 = vmatpush1.msra.mxu0 %v7114
        %7120 = vmatprep.subr.mxu0 0.0
        %7121 = vmatpush1.msra.mxu0 %v7115
        %7122 = vmatprep.subr.mxu0 0.0
        %7123 = vmatpush1.msra.mxu0 %v7116
        %7124 = vmatprep.subr.mxu0 0.0
        %7125 = vmatpush1.msra.mxu0 %v7117
        %7126 = vmatprep.subr.mxu0 0.0
        %7127 = vmatpush1.msra.mxu0 0.0
        %7128 = vmatprep.subr.mxu0 0.0
        %7129 = vmatpush1.msra.mxu0 0.0
        %7130 = vmatprep.subr.mxu0 0.0
        %7131 = vmatpush1.msra.mxu0 0.0
        %7132 = vmatprep.subr.mxu0 0.0
        %7133 = vmatpush1.msra.mxu0 0.0
        %7134 = vmatprep.subr.mxu0 0.0
        %7135 = vmatpush1.msra.mxu0 0.0
        %7136 = vmatprep.subr.mxu0 0.0
        %7137 = vmatpush1.msra.mxu0 0.0
        %7138 = vmatprep.subr.mxu0 0.0
        %7139 = vmatpush1.msra.mxu0 0.0
        %7140 = vmatprep.subr.mxu0 0.0
        %7141 = vmatpush1.msra.mxu0 0.0
        %7142 = vmatprep.subr.mxu0 0.0
        %7143 = vmatpush1.msra.mxu0 0.0
        %7144 = vmatprep.subr.mxu0 0.0
        %7145 = vmatpush1.msra.mxu0 0.0
        %7146 = vmatprep.subr.mxu0 0.0
        %7147 = vmatpush1.msra.mxu0 0.0
        %7148 = vmatprep.subr.mxu0 0.0
        %7149 = vmatpush1.msra.mxu0 0.0
        %7150 = vmatprep.subr.mxu0 0.0
        %7151 = vmatpush1.msra.mxu0 0.0
        %7152 = vmatprep.subr.mxu0 0.0
        %7153 = vmatpush1.msra.mxu0 0.0
        %7154 = vmatprep.subr.mxu0 0.0
        %7155 = vmatpush1.msra.mxu0 0.0
        %7156 = vmatprep.subr.mxu0 0.0
        %7157 = vmatpush1.msra.mxu0 0.0
        %7158 = vmatprep.subr.mxu0 0.0
        %7159 = vmatpush1.msra.mxu0 0.0
        %7160 = vmatprep.subr.mxu0 0.0
        %7161 = vmatpush1.msra.mxu0 0.0
        %7162 = vmatprep.subr.mxu0 0.0
        %7163 = vmatpush1.msra.mxu0 0.0
        %7164 = vmatprep.subr.mxu0 0.0
        %7165 = vmatpush1.msra.mxu0 0.0
        %7166 = vmatprep.subr.mxu0 0.0
        %7167 = vmatpush1.msra.mxu0 0.0
        %7168 = vmatprep.subr.mxu0 0.0
        %7169 = vmatpush1.msra.mxu0 0.0
        %7170 = vmatprep.subr.mxu0 0.0
        %7171 = vmatpush1.msra.mxu0 0.0
        %7172 = vmatprep.subr.mxu0 0.0
        %7173 = vmatpush1.msra.mxu0 0.0
        %7174 = vmatprep.subr.mxu0 0.0
        %7175 = vmatpush1.msra.mxu0 0.0
        %7176 = vmatprep.subr.mxu0 0.0
        %7177 = vmatpush1.msra.mxu0 0.0
        %7178 = vmatprep.subr.mxu0 0.0
        %7179 = vmatpush1.msra.mxu0 0.0
        %7180 = vmatprep.subr.mxu0 0.0
        %7181 = vmatpush1.msra.mxu0 0.0
        %7182 = vmatprep.mubr.f32.mxu0 0.0
        %7183 = vmatmul.mubr.f32.gmra.mrb[0].mxu0 %v900
        %v7184 = vpop.f32.mrb[0].mxu0
        %v7185 = vadd.f32 0.0, %v7184
        %v7186 = vpop.f32.mrb[0].mxu0
        %7187 = vdwg.mxu0
        %s7188 = scalar_lea.vmem %s7, 7
        %v7189 = vld [vmem:[%s7188] sm:$0x1]
        %s7190 = scalar_lea.vmem %s8, 7
        %v7191 = vld [vmem:[%s7190] sm:$0x1]
        %v7193 = vlaneseq
        %v7194 = vshrl.u32 %v7193, 7
        %v7195 = vsub.s32 0, %v7194
        %v7196 = vrot.slane %v7189, %v7195
        %v7198 = vadd.f32 %v6960, %v7196
        %v7200 = vlaneseq
        %v7201 = vshrl.u32 %v7200, 7
        %v7202 = vsub.s32 0, %v7201
        %v7203 = vrot.slane %v7191, %v7202
        %v7205 = vadd.f32 %v6960, %v7203
        %v7207 = vsel %vm988, %v7205, 0
        %v7210 = vsel %vm988, %v7185, 0
        %7212 = vmatprep.subr.mxu0 0.0
        %7213 = vmatpush1.xpose.msra.mxu0 %v7210
        %7214 = vmatprep.subr.mxu0 0.0
        %7215 = vmatpush1.xpose.msra.mxu0 0.0
        %7216 = vmatprep.subr.mxu0 0.0
        %7217 = vmatpush1.xpose.msra.mxu0 0.0
        %7218 = vmatprep.subr.mxu0 0.0
        %7219 = vmatpush1.xpose.msra.mxu0 0.0
        %7220 = vmatprep.subr.mxu0 0.0
        %7221 = vmatpush1.xpose.msra.mxu0 0.0
        %7222 = vmatprep.subr.mxu0 0.0
        %7223 = vmatpush1.xpose.msra.mxu0 0.0
        %7224 = vmatprep.subr.mxu0 0.0
        %7225 = vmatpush1.xpose.msra.mxu0 0.0
        %7226 = vmatprep.subr.mxu0 0.0
        %7227 = vmatpush1.xpose.msra.mxu0 0.0
        %7228 = vmatprep.subr.mxu0 0.0
        %7229 = vmatpush1.xpose.msra.mxu0 0.0
        %7230 = vmatprep.subr.mxu0 0.0
        %7231 = vmatpush1.xpose.msra.mxu0 0.0
        %7232 = vmatprep.subr.mxu0 0.0
        %7233 = vmatpush1.xpose.msra.mxu0 0.0
        %7234 = vmatprep.subr.mxu0 0.0
        %7235 = vmatpush1.xpose.msra.mxu0 0.0
        %7236 = vmatprep.subr.mxu0 0.0
        %7237 = vmatpush1.xpose.msra.mxu0 0.0
        %7238 = vmatprep.subr.mxu0 0.0
        %7239 = vmatpush1.xpose.msra.mxu0 0.0
        %7240 = vmatprep.subr.mxu0 0.0
        %7241 = vmatpush1.xpose.msra.mxu0 0.0
        %7242 = vmatprep.subr.mxu0 0.0
        %7243 = vmatpush1.xpose.msra.mxu0 0.0
        %7244 = vmatprep.subr.mxu0 0.0
        %7245 = vmatpush1.xpose.msra.mxu0 0.0
        %7246 = vmatprep.subr.mxu0 0.0
        %7247 = vmatpush1.xpose.msra.mxu0 0.0
        %7248 = vmatprep.subr.mxu0 0.0
        %7249 = vmatpush1.xpose.msra.mxu0 0.0
        %7250 = vmatprep.subr.mxu0 0.0
        %7251 = vmatpush1.xpose.msra.mxu0 0.0
        %7252 = vmatprep.subr.mxu0 0.0
        %7253 = vmatpush1.xpose.msra.mxu0 0.0
        %7254 = vmatprep.subr.mxu0 0.0
        %7255 = vmatpush1.xpose.msra.mxu0 0.0
        %7256 = vmatprep.subr.mxu0 0.0
        %7257 = vmatpush1.xpose.msra.mxu0 0.0
        %7258 = vmatprep.subr.mxu0 0.0
        %7259 = vmatpush1.xpose.msra.mxu0 0.0
        %7260 = vmatprep.subr.mxu0 0.0
        %7261 = vmatpush1.xpose.msra.mxu0 0.0
        %7262 = vmatprep.subr.mxu0 0.0
        %7263 = vmatpush1.xpose.msra.mxu0 0.0
        %7264 = vmatprep.subr.mxu0 0.0
        %7265 = vmatpush1.xpose.msra.mxu0 0.0
        %7266 = vmatprep.subr.mxu0 0.0
        %7267 = vmatpush1.xpose.msra.mxu0 0.0
        %7268 = vmatprep.subr.mxu0 0.0
        %7269 = vmatpush1.xpose.msra.mxu0 0.0
        %7270 = vmatprep.subr.mxu0 0.0
        %7271 = vmatpush1.xpose.msra.mxu0 0.0
        %7272 = vmatprep.subr.mxu0 0.0
        %7273 = vmatpush1.xpose.msra.mxu0 0.0
        %7274 = vmatprep.subr.mxu0 0.0
        %7275 = vmatpush1.xpose.msra.mxu0 0.0
        %7276 = vmatprep.mubr.f32.mxu0 0.0
        %7277 = vmatmul.mubr.f32.gmra.mrb[0].mxu0 %v7207
        %v7278 = vpop.f32.mrb[0].mxu0
        %v7279 = vadd.f32 0.0, %v7278
        %v7280 = vpop.f32.mrb[0].mxu0
        %7281 = vdwg.mxu0
        %v7283 = vsel %vm988, %v7279, 0
        %7285 = vmatprep.subr.mxu0 0.0
        %7286 = vmatpush1.msra.mxu0 %v646
        %7287 = vmatprep.subr.mxu0 0.0
        %7288 = vmatpush1.msra.mxu0 0.0
        %7289 = vmatprep.subr.mxu0 0.0
        %7290 = vmatpush1.msra.mxu0 0.0
        %7291 = vmatprep.subr.mxu0 0.0
        %7292 = vmatpush1.msra.mxu0 0.0
        %7293 = vmatprep.subr.mxu0 0.0
        %7294 = vmatpush1.msra.mxu0 0.0
        %7295 = vmatprep.subr.mxu0 0.0
        %7296 = vmatpush1.msra.mxu0 0.0
        %7297 = vmatprep.subr.mxu0 0.0
        %7298 = vmatpush1.msra.mxu0 0.0
        %7299 = vmatprep.subr.mxu0 0.0
        %7300 = vmatpush1.msra.mxu0 0.0
        %7301 = vmatprep.subr.mxu0 0.0
        %7302 = vmatpush1.msra.mxu0 0.0
        %7303 = vmatprep.subr.mxu0 0.0
        %7304 = vmatpush1.msra.mxu0 0.0
        %7305 = vmatprep.subr.mxu0 0.0
        %7306 = vmatpush1.msra.mxu0 0.0
        %7307 = vmatprep.subr.mxu0 0.0
        %7308 = vmatpush1.msra.mxu0 0.0
        %7309 = vmatprep.subr.mxu0 0.0
        %7310 = vmatpush1.msra.mxu0 0.0
        %7311 = vmatprep.subr.mxu0 0.0
        %7312 = vmatpush1.msra.mxu0 0.0
        %7313 = vmatprep.subr.mxu0 0.0
        %7314 = vmatpush1.msra.mxu0 0.0
        %7315 = vmatprep.subr.mxu0 0.0
        %7316 = vmatpush1.msra.mxu0 0.0
        %7317 = vmatprep.subr.mxu0 0.0
        %7318 = vmatpush1.msra.mxu0 0.0
        %7319 = vmatprep.subr.mxu0 0.0
        %7320 = vmatpush1.msra.mxu0 0.0
        %7321 = vmatprep.subr.mxu0 0.0
        %7322 = vmatpush1.msra.mxu0 0.0
        %7323 = vmatprep.subr.mxu0 0.0
        %7324 = vmatpush1.msra.mxu0 0.0
        %7325 = vmatprep.subr.mxu0 0.0
        %7326 = vmatpush1.msra.mxu0 0.0
        %7327 = vmatprep.subr.mxu0 0.0
        %7328 = vmatpush1.msra.mxu0 0.0
        %7329 = vmatprep.subr.mxu0 0.0
        %7330 = vmatpush1.msra.mxu0 0.0
        %7331 = vmatprep.subr.mxu0 0.0
        %7332 = vmatpush1.msra.mxu0 0.0
        %7333 = vmatprep.subr.mxu0 0.0
        %7334 = vmatpush1.msra.mxu0 0.0
        %7335 = vmatprep.subr.mxu0 0.0
        %7336 = vmatpush1.msra.mxu0 0.0
        %7337 = vmatprep.subr.mxu0 0.0
        %7338 = vmatpush1.msra.mxu0 0.0
        %7339 = vmatprep.subr.mxu0 0.0
        %7340 = vmatpush1.msra.mxu0 0.0
        %7341 = vmatprep.subr.mxu0 0.0
        %7342 = vmatpush1.msra.mxu0 0.0
        %7343 = vmatprep.subr.mxu0 0.0
        %7344 = vmatpush1.msra.mxu0 0.0
        %7345 = vmatprep.subr.mxu0 0.0
        %7346 = vmatpush1.msra.mxu0 0.0
        %7347 = vmatprep.subr.mxu0 0.0
        %7348 = vmatpush1.msra.mxu0 0.0
        %7349 = vmatprep.mubr.f32.mxu0 0.0
        %7350 = vmatmul.mubr.f32.gmra.mrb[0].mxu0 %v7283
        %v7351 = vpop.f32.mrb[0].mxu0
        %v7352 = vadd.f32 0.0, %v7351
        %v7353 = vpop.f32.mrb[0].mxu0
        %7354 = vdwg.mxu0
        %v7355 = vsel %vm1139, %v7352, %v7279
        %v7357 = vsel %vm988, %v7355, 0
        %7359 = vmatprep.subr.mxu0 0.0
        %7360 = vmatpush1.msra.mxu0 %v655
        %7361 = vmatprep.subr.mxu0 0.0
        %7362 = vmatpush1.msra.mxu0 0.0
        %7363 = vmatprep.subr.mxu0 0.0
        %7364 = vmatpush1.msra.mxu0 0.0
        %7365 = vmatprep.subr.mxu0 0.0
        %7366 = vmatpush1.msra.mxu0 0.0
        %7367 = vmatprep.subr.mxu0 0.0
        %7368 = vmatpush1.msra.mxu0 0.0
        %7369 = vmatprep.subr.mxu0 0.0
        %7370 = vmatpush1.msra.mxu0 0.0
        %7371 = vmatprep.subr.mxu0 0.0
        %7372 = vmatpush1.msra.mxu0 0.0
        %7373 = vmatprep.subr.mxu0 0.0
        %7374 = vmatpush1.msra.mxu0 0.0
        %7375 = vmatprep.subr.mxu0 0.0
        %7376 = vmatpush1.msra.mxu0 0.0
        %7377 = vmatprep.subr.mxu0 0.0
        %7378 = vmatpush1.msra.mxu0 0.0
        %7379 = vmatprep.subr.mxu0 0.0
        %7380 = vmatpush1.msra.mxu0 0.0
        %7381 = vmatprep.subr.mxu0 0.0
        %7382 = vmatpush1.msra.mxu0 0.0
        %7383 = vmatprep.subr.mxu0 0.0
        %7384 = vmatpush1.msra.mxu0 0.0
        %7385 = vmatprep.subr.mxu0 0.0
        %7386 = vmatpush1.msra.mxu0 0.0
        %7387 = vmatprep.subr.mxu0 0.0
        %7388 = vmatpush1.msra.mxu0 0.0
        %7389 = vmatprep.subr.mxu0 0.0
        %7390 = vmatpush1.msra.mxu0 0.0
        %7391 = vmatprep.subr.mxu0 0.0
        %7392 = vmatpush1.msra.mxu0 0.0
        %7393 = vmatprep.subr.mxu0 0.0
        %7394 = vmatpush1.msra.mxu0 0.0
        %7395 = vmatprep.subr.mxu0 0.0
        %7396 = vmatpush1.msra.mxu0 0.0
        %7397 = vmatprep.subr.mxu0 0.0
        %7398 = vmatpush1.msra.mxu0 0.0
        %7399 = vmatprep.subr.mxu0 0.0
        %7400 = vmatpush1.msra.mxu0 0.0
        %7401 = vmatprep.subr.mxu0 0.0
        %7402 = vmatpush1.msra.mxu0 0.0
        %7403 = vmatprep.subr.mxu0 0.0
        %7404 = vmatpush1.msra.mxu0 0.0
        %7405 = vmatprep.subr.mxu0 0.0
        %7406 = vmatpush1.msra.mxu0 0.0
        %7407 = vmatprep.subr.mxu0 0.0
        %7408 = vmatpush1.msra.mxu0 0.0
        %7409 = vmatprep.subr.mxu0 0.0
        %7410 = vmatpush1.msra.mxu0 0.0
        %7411 = vmatprep.subr.mxu0 0.0
        %7412 = vmatpush1.msra.mxu0 0.0
        %7413 = vmatprep.subr.mxu0 0.0
        %7414 = vmatpush1.msra.mxu0 0.0
        %7415 = vmatprep.subr.mxu0 0.0
        %7416 = vmatpush1.msra.mxu0 0.0
        %7417 = vmatprep.subr.mxu0 0.0
        %7418 = vmatpush1.msra.mxu0 0.0
        %7419 = vmatprep.subr.mxu0 0.0
        %7420 = vmatpush1.msra.mxu0 0.0
        %7421 = vmatprep.subr.mxu0 0.0
        %7422 = vmatpush1.msra.mxu0 0.0
        %7423 = vmatprep.mubr.f32.mxu0 0.0
        %7424 = vmatmul.mubr.f32.gmra.mrb[0].mxu0 %v7357
        %v7425 = vpop.f32.mrb[0].mxu0
        %v7426 = vadd.f32 0.0, %v7425
        %v7427 = vpop.f32.mrb[0].mxu0
        %7428 = vdwg.mxu0
        %v7429 = vsel %vm1215, %v7426, %v7355
        %v7431 = vsel %vm988, %v7429, 0
        %7433 = vmatprep.subr.mxu0 0.0
        %7434 = vmatpush1.msra.mxu0 %v665
        %7435 = vmatprep.subr.mxu0 0.0
        %7436 = vmatpush1.msra.mxu0 0.0
        %7437 = vmatprep.subr.mxu0 0.0
        %7438 = vmatpush1.msra.mxu0 0.0
        %7439 = vmatprep.subr.mxu0 0.0
        %7440 = vmatpush1.msra.mxu0 0.0
        %7441 = vmatprep.subr.mxu0 0.0
        %7442 = vmatpush1.msra.mxu0 0.0
        %7443 = vmatprep.subr.mxu0 0.0
        %7444 = vmatpush1.msra.mxu0 0.0
        %7445 = vmatprep.subr.mxu0 0.0
        %7446 = vmatpush1.msra.mxu0 0.0
        %7447 = vmatprep.subr.mxu0 0.0
        %7448 = vmatpush1.msra.mxu0 0.0
        %7449 = vmatprep.subr.mxu0 0.0
        %7450 = vmatpush1.msra.mxu0 0.0
        %7451 = vmatprep.subr.mxu0 0.0
        %7452 = vmatpush1.msra.mxu0 0.0
        %7453 = vmatprep.subr.mxu0 0.0
        %7454 = vmatpush1.msra.mxu0 0.0
        %7455 = vmatprep.subr.mxu0 0.0
        %7456 = vmatpush1.msra.mxu0 0.0
        %7457 = vmatprep.subr.mxu0 0.0
        %7458 = vmatpush1.msra.mxu0 0.0
        %7459 = vmatprep.subr.mxu0 0.0
        %7460 = vmatpush1.msra.mxu0 0.0
        %7461 = vmatprep.subr.mxu0 0.0
        %7462 = vmatpush1.msra.mxu0 0.0
        %7463 = vmatprep.subr.mxu0 0.0
        %7464 = vmatpush1.msra.mxu0 0.0
        %7465 = vmatprep.subr.mxu0 0.0
        %7466 = vmatpush1.msra.mxu0 0.0
        %7467 = vmatprep.subr.mxu0 0.0
        %7468 = vmatpush1.msra.mxu0 0.0
        %7469 = vmatprep.subr.mxu0 0.0
        %7470 = vmatpush1.msra.mxu0 0.0
        %7471 = vmatprep.subr.mxu0 0.0
        %7472 = vmatpush1.msra.mxu0 0.0
        %7473 = vmatprep.subr.mxu0 0.0
        %7474 = vmatpush1.msra.mxu0 0.0
        %7475 = vmatprep.subr.mxu0 0.0
        %7476 = vmatpush1.msra.mxu0 0.0
        %7477 = vmatprep.subr.mxu0 0.0
        %7478 = vmatpush1.msra.mxu0 0.0
        %7479 = vmatprep.subr.mxu0 0.0
        %7480 = vmatpush1.msra.mxu0 0.0
        %7481 = vmatprep.subr.mxu0 0.0
        %7482 = vmatpush1.msra.mxu0 0.0
        %7483 = vmatprep.subr.mxu0 0.0
        %7484 = vmatpush1.msra.mxu0 0.0
        %7485 = vmatprep.subr.mxu0 0.0
        %7486 = vmatpush1.msra.mxu0 0.0
        %7487 = vmatprep.subr.mxu0 0.0
        %7488 = vmatpush1.msra.mxu0 0.0
        %7489 = vmatprep.subr.mxu0 0.0
        %7490 = vmatpush1.msra.mxu0 0.0
        %7491 = vmatprep.subr.mxu0 0.0
        %7492 = vmatpush1.msra.mxu0 0.0
        %7493 = vmatprep.subr.mxu0 0.0
        %7494 = vmatpush1.msra.mxu0 0.0
        %7495 = vmatprep.subr.mxu0 0.0
        %7496 = vmatpush1.msra.mxu0 0.0
        %7497 = vmatprep.mubr.f32.mxu0 0.0
        %7498 = vmatmul.mubr.f32.gmra.mrb[0].mxu0 %v7431
        %v7499 = vpop.f32.mrb[0].mxu0
        %v7500 = vadd.f32 0.0, %v7499
        %v7501 = vpop.f32.mrb[0].mxu0
        %7502 = vdwg.mxu0
        %v7503 = vsel %vm1291, %v7500, %v7429
        %v7505 = vsel %vm988, %v7198, 0
        %v7508 = vsel %vm988, %v7035, 0
        %7510 = vmatprep.subr.mxu0 0.0
        %7511 = vmatpush1.xpose.msra.mxu0 %v7508
        %7512 = vmatprep.subr.mxu0 0.0
        %7513 = vmatpush1.xpose.msra.mxu0 0.0
        %7514 = vmatprep.subr.mxu0 0.0
        %7515 = vmatpush1.xpose.msra.mxu0 0.0
        %7516 = vmatprep.subr.mxu0 0.0
        %7517 = vmatpush1.xpose.msra.mxu0 0.0
        %7518 = vmatprep.subr.mxu0 0.0
        %7519 = vmatpush1.xpose.msra.mxu0 0.0
        %7520 = vmatprep.subr.mxu0 0.0
        %7521 = vmatpush1.xpose.msra.mxu0 0.0
        %7522 = vmatprep.subr.mxu0 0.0
        %7523 = vmatpush1.xpose.msra.mxu0 0.0
        %7524 = vmatprep.subr.mxu0 0.0
        %7525 = vmatpush1.xpose.msra.mxu0 0.0
        %7526 = vmatprep.subr.mxu0 0.0
        %7527 = vmatpush1.xpose.msra.mxu0 0.0
        %7528 = vmatprep.subr.mxu0 0.0
        %7529 = vmatpush1.xpose.msra.mxu0 0.0
        %7530 = vmatprep.subr.mxu0 0.0
        %7531 = vmatpush1.xpose.msra.mxu0 0.0
        %7532 = vmatprep.subr.mxu0 0.0
        %7533 = vmatpush1.xpose.msra.mxu0 0.0
        %7534 = vmatprep.subr.mxu0 0.0
        %7535 = vmatpush1.xpose.msra.mxu0 0.0
        %7536 = vmatprep.subr.mxu0 0.0
        %7537 = vmatpush1.xpose.msra.mxu0 0.0
        %7538 = vmatprep.subr.mxu0 0.0
        %7539 = vmatpush1.xpose.msra.mxu0 0.0
        %7540 = vmatprep.subr.mxu0 0.0
        %7541 = vmatpush1.xpose.msra.mxu0 0.0
        %7542 = vmatprep.subr.mxu0 0.0
        %7543 = vmatpush1.xpose.msra.mxu0 0.0
        %7544 = vmatprep.subr.mxu0 0.0
        %7545 = vmatpush1.xpose.msra.mxu0 0.0
        %7546 = vmatprep.subr.mxu0 0.0
        %7547 = vmatpush1.xpose.msra.mxu0 0.0
        %7548 = vmatprep.subr.mxu0 0.0
        %7549 = vmatpush1.xpose.msra.mxu0 0.0
        %7550 = vmatprep.subr.mxu0 0.0
        %7551 = vmatpush1.xpose.msra.mxu0 0.0
        %7552 = vmatprep.subr.mxu0 0.0
        %7553 = vmatpush1.xpose.msra.mxu0 0.0
        %7554 = vmatprep.subr.mxu0 0.0
        %7555 = vmatpush1.xpose.msra.mxu0 0.0
        %7556 = vmatprep.subr.mxu0 0.0
        %7557 = vmatpush1.xpose.msra.mxu0 0.0
        %7558 = vmatprep.subr.mxu0 0.0
        %7559 = vmatpush1.xpose.msra.mxu0 0.0
        %7560 = vmatprep.subr.mxu0 0.0
        %7561 = vmatpush1.xpose.msra.mxu0 0.0
        %7562 = vmatprep.subr.mxu0 0.0
        %7563 = vmatpush1.xpose.msra.mxu0 0.0
        %7564 = vmatprep.subr.mxu0 0.0
        %7565 = vmatpush1.xpose.msra.mxu0 0.0
        %7566 = vmatprep.subr.mxu0 0.0
        %7567 = vmatpush1.xpose.msra.mxu0 0.0
        %7568 = vmatprep.subr.mxu0 0.0
        %7569 = vmatpush1.xpose.msra.mxu0 0.0
        %7570 = vmatprep.subr.mxu0 0.0
        %7571 = vmatpush1.xpose.msra.mxu0 0.0
        %7572 = vmatprep.subr.mxu0 0.0
        %7573 = vmatpush1.xpose.msra.mxu0 0.0
        %7574 = vmatprep.mubr.f32.mxu0 0.0
        %7575 = vmatmul.mubr.f32.gmra.mrb[0].mxu0 %v7505
        %v7576 = vpop.f32.mrb[0].mxu0
        %v7577 = vadd.f32 %v7503, %v7576
        %v7578 = vpop.f32.mrb[0].mxu0
        %7579 = vdwg.mxu0
        %v7580 = vmul.f32 %v7577, 0.35355338
        %v7581 = vsel %vm638, -1e+30, %v7580
        %v7582 = vsel %vm988, %v7581, -inf
        %7583 = vmax.xlane.f32.xlu0 %v7582
        %v7584 = vpop.xlane.xlu0 %7583
        %v7585 = vsub.f32 %v7581, %v7584
        %v7586 = vmul.f32 %v7585, 1.442695
        %v7587 = vpow.pop %v7586
        %v7588 = vsel %vm988, %v7587, 0.0
        %7589 = vadd.xlane.f32.xlu0 %v7588
        %v7590 = vpop.xlane.xlu0 %7589
        %v7591 = vrcp.pop %v7590
        %v7592 = vmul.f32 %v7587, %v7591
        %v7594 = vsel %vm988, %v7592, 0
        %7596 = vmatprep.subr.mxu0 0.0
        %7597 = vmatpush1.msra.mxu0 %v7110
        %7598 = vmatprep.subr.mxu0 0.0
        %7599 = vmatpush1.msra.mxu0 0.0
        %7600 = vmatprep.subr.mxu0 0.0
        %7601 = vmatpush1.msra.mxu0 0.0
        %7602 = vmatprep.subr.mxu0 0.0
        %7603 = vmatpush1.msra.mxu0 0.0
        %7604 = vmatprep.subr.mxu0 0.0
        %7605 = vmatpush1.msra.mxu0 0.0
        %7606 = vmatprep.subr.mxu0 0.0
        %7607 = vmatpush1.msra.mxu0 0.0
        %7608 = vmatprep.subr.mxu0 0.0
        %7609 = vmatpush1.msra.mxu0 0.0
        %7610 = vmatprep.subr.mxu0 0.0
        %7611 = vmatpush1.msra.mxu0 0.0
        %7612 = vmatprep.subr.mxu0 0.0
        %7613 = vmatpush1.msra.mxu0 0.0
        %7614 = vmatprep.subr.mxu0 0.0
        %7615 = vmatpush1.msra.mxu0 0.0
        %7616 = vmatprep.subr.mxu0 0.0
        %7617 = vmatpush1.msra.mxu0 0.0
        %7618 = vmatprep.subr.mxu0 0.0
        %7619 = vmatpush1.msra.mxu0 0.0
        %7620 = vmatprep.subr.mxu0 0.0
        %7621 = vmatpush1.msra.mxu0 0.0
        %7622 = vmatprep.subr.mxu0 0.0
        %7623 = vmatpush1.msra.mxu0 0.0
        %7624 = vmatprep.subr.mxu0 0.0
        %7625 = vmatpush1.msra.mxu0 0.0
        %7626 = vmatprep.subr.mxu0 0.0
        %7627 = vmatpush1.msra.mxu0 0.0
        %7628 = vmatprep.subr.mxu0 0.0
        %7629 = vmatpush1.msra.mxu0 0.0
        %7630 = vmatprep.subr.mxu0 0.0
        %7631 = vmatpush1.msra.mxu0 0.0
        %7632 = vmatprep.subr.mxu0 0.0
        %7633 = vmatpush1.msra.mxu0 0.0
        %7634 = vmatprep.subr.mxu0 0.0
        %7635 = vmatpush1.msra.mxu0 0.0
        %7636 = vmatprep.subr.mxu0 0.0
        %7637 = vmatpush1.msra.mxu0 0.0
        %7638 = vmatprep.subr.mxu0 0.0
        %7639 = vmatpush1.msra.mxu0 0.0
        %7640 = vmatprep.subr.mxu0 0.0
        %7641 = vmatpush1.msra.mxu0 0.0
        %7642 = vmatprep.subr.mxu0 0.0
        %7643 = vmatpush1.msra.mxu0 0.0
        %7644 = vmatprep.subr.mxu0 0.0
        %7645 = vmatpush1.msra.mxu0 0.0
        %7646 = vmatprep.subr.mxu0 0.0
        %7647 = vmatpush1.msra.mxu0 0.0
        %7648 = vmatprep.subr.mxu0 0.0
        %7649 = vmatpush1.msra.mxu0 0.0
        %7650 = vmatprep.subr.mxu0 0.0
        %7651 = vmatpush1.msra.mxu0 0.0
        %7652 = vmatprep.subr.mxu0 0.0
        %7653 = vmatpush1.msra.mxu0 0.0
        %7654 = vmatprep.subr.mxu0 0.0
        %7655 = vmatpush1.msra.mxu0 0.0
        %7656 = vmatprep.subr.mxu0 0.0
        %7657 = vmatpush1.msra.mxu0 0.0
        %7658 = vmatprep.subr.mxu0 0.0
        %7659 = vmatpush1.msra.mxu0 0.0
        %7660 = vmatprep.mubr.f32.mxu0 0.0
        %7661 = vmatmul.mubr.f32.gmra.mrb[0].mxu0 %v7594
        %v7662 = vpop.f32.mrb[0].mxu0
        %v7663 = vadd.f32 0.0, %v7662
        %v7664 = vpop.f32.mrb[0].mxu0
        %7665 = vdwg.mxu0
        %s7666 = scalar_lea.vmem [#allocation7], 56
        %v7667 = vld [vmem:[%s7666] sm:$0xff]
        %v7669 = vsel %vm988, %v7663, 0
        %7671 = vmatprep.subr.mxu0 0.0
        %7672 = vmatpush1.msra.mxu0 %v7667
        %7673 = vmatprep.subr.mxu0 0.0
        %7674 = vmatpush1.msra.mxu0 0.0
        %7675 = vmatprep.subr.mxu0 0.0
        %7676 = vmatpush1.msra.mxu0 0.0
        %7677 = vmatprep.subr.mxu0 0.0
        %7678 = vmatpush1.msra.mxu0 0.0
        %7679 = vmatprep.subr.mxu0 0.0
        %7680 = vmatpush1.msra.mxu0 0.0
        %7681 = vmatprep.subr.mxu0 0.0
        %7682 = vmatpush1.msra.mxu0 0.0
        %7683 = vmatprep.subr.mxu0 0.0
        %7684 = vmatpush1.msra.mxu0 0.0
        %7685 = vmatprep.subr.mxu0 0.0
        %7686 = vmatpush1.msra.mxu0 0.0
        %7687 = vmatprep.subr.mxu0 0.0
        %7688 = vmatpush1.msra.mxu0 0.0
        %7689 = vmatprep.subr.mxu0 0.0
        %7690 = vmatpush1.msra.mxu0 0.0
        %7691 = vmatprep.subr.mxu0 0.0
        %7692 = vmatpush1.msra.mxu0 0.0
        %7693 = vmatprep.subr.mxu0 0.0
        %7694 = vmatpush1.msra.mxu0 0.0
        %7695 = vmatprep.subr.mxu0 0.0
        %7696 = vmatpush1.msra.mxu0 0.0
        %7697 = vmatprep.subr.mxu0 0.0
        %7698 = vmatpush1.msra.mxu0 0.0
        %7699 = vmatprep.subr.mxu0 0.0
        %7700 = vmatpush1.msra.mxu0 0.0
        %7701 = vmatprep.subr.mxu0 0.0
        %7702 = vmatpush1.msra.mxu0 0.0
        %7703 = vmatprep.subr.mxu0 0.0
        %7704 = vmatpush1.msra.mxu0 0.0
        %7705 = vmatprep.subr.mxu0 0.0
        %7706 = vmatpush1.msra.mxu0 0.0
        %7707 = vmatprep.subr.mxu0 0.0
        %7708 = vmatpush1.msra.mxu0 0.0
        %7709 = vmatprep.subr.mxu0 0.0
        %7710 = vmatpush1.msra.mxu0 0.0
        %7711 = vmatprep.subr.mxu0 0.0
        %7712 = vmatpush1.msra.mxu0 0.0
        %7713 = vmatprep.subr.mxu0 0.0
        %7714 = vmatpush1.msra.mxu0 0.0
        %7715 = vmatprep.subr.mxu0 0.0
        %7716 = vmatpush1.msra.mxu0 0.0
        %7717 = vmatprep.subr.mxu0 0.0
        %7718 = vmatpush1.msra.mxu0 0.0
        %7719 = vmatprep.subr.mxu0 0.0
        %7720 = vmatpush1.msra.mxu0 0.0
        %7721 = vmatprep.subr.mxu0 0.0
        %7722 = vmatpush1.msra.mxu0 0.0
        %7723 = vmatprep.subr.mxu0 0.0
        %7724 = vmatpush1.msra.mxu0 0.0
        %7725 = vmatprep.subr.mxu0 0.0
        %7726 = vmatpush1.msra.mxu0 0.0
        %7727 = vmatprep.subr.mxu0 0.0
        %7728 = vmatpush1.msra.mxu0 0.0
        %7729 = vmatprep.subr.mxu0 0.0
        %7730 = vmatpush1.msra.mxu0 0.0
        %7731 = vmatprep.subr.mxu0 0.0
        %7732 = vmatpush1.msra.mxu0 0.0
        %7733 = vmatprep.subr.mxu0 0.0
        %7734 = vmatpush1.msra.mxu0 0.0
        %7735 = vmatprep.mubr.f32.mxu0 0.0
        %7736 = vmatmul.mubr.f32.gmra.mrb[0].mxu0 %v7669
        %v7737 = vpop.f32.mrb[0].mxu0
        %v7738 = vadd.f32 0.0, %v7737
        %v7739 = vpop.f32.mrb[0].mxu0
        %7740 = vdwg.mxu0
        %v7741 = vadd.f32 %v6887, %v7738
        %v7742 = vadd.f32 %v4324, %v7741
        %s7743 = scalar_lea.vmem %s9, 1
        %v7744 = vld [vmem:[%s7743] sm:$0x1]
        %s7745 = scalar_lea.vmem %s10, 1
        %v7746 = vld [vmem:[%s7745] sm:$0x1]
        %v7747 = vsel %vm673, %v7742, 0.0
        %7748 = vadd.xlane.f32.xlu0 %v7747
        %v7749 = vpop.xlane.xlu0 %7748
        %v7750 = vmul.f32 %v7749, %v4096
        %v7751 = vsub.f32 %v7742, %v7750
        %v7752 = vmul.f32 %v7751, %v7751
        %v7753 = vsel %vm673, %v7752, 0.0
        %7754 = vadd.xlane.f32.xlu0 %v7753
        %v7755 = vpop.xlane.xlu0 %7754
        %v7756 = vmul.f32 %v7755, %v4096
        %v7757 = vadd.f32 %v7756, 1e-05
        %v7758 = vrsqrt.pop %v7757
        %v7759 = vmul.f32 %v7751, %v7758
        %v7761 = vlaneseq
        %v7762 = vshrl.u32 %v7761, 7
        %v7763 = vsub.s32 0, %v7762
        %v7764 = vrot.slane %v7744, %v7763
        %v7766 = vmul.f32 %v7759, %v7764
        %v7768 = vlaneseq
        %v7769 = vshrl.u32 %v7768, 7
        %v7770 = vsub.s32 0, %v7769
        %v7771 = vrot.slane %v7746, %v7770
        %v7773 = vadd.f32 %v7766, %v7771
        %s7774 = scalar_lea.vmem [#allocation9], 32
        %v7775 = vld [vmem:[%s7774] sm:$0xff]
        %v7776 = vld [vmem:[%s7774 + $0x8] sm:$0xff]
        %v7777 = vld [vmem:[%s7774 + $0x10] sm:$0xff]
        %v7778 = vld [vmem:[%s7774 + $0x18] sm:$0xff]
        %s7779 = scalar_lea.vmem %s12, 1
        %v7780 = vld [vmem:[%s7779] sm:$0x1]
        %v7782 = vlaneseq
        %v7783 = vshrl.u32 %v7782, 7
        %v7784 = vsub.s32 0, %v7783
        %v7785 = vrot.slane %v7780, %v7784
        %v7788 = vsel %vm673, %v7773, 0
        %7790 = vmatprep.subr.mxu0 0.0
        %7791 = vmatpush1.msra.mxu0 %v7775
        %7792 = vmatprep.subr.mxu0 0.0
        %7793 = vmatpush1.msra.mxu0 %v7776
        %7794 = vmatprep.subr.mxu0 0.0
        %7795 = vmatpush1.msra.mxu0 %v7777
        %7796 = vmatprep.subr.mxu0 0.0
        %7797 = vmatpush1.msra.mxu0 %v7778
        %7798 = vmatprep.subr.mxu0 0.0
        %7799 = vmatpush1.msra.mxu0 0.0
        %7800 = vmatprep.subr.mxu0 0.0
        %7801 = vmatpush1.msra.mxu0 0.0
        %7802 = vmatprep.subr.mxu0 0.0
        %7803 = vmatpush1.msra.mxu0 0.0
        %7804 = vmatprep.subr.mxu0 0.0
        %7805 = vmatpush1.msra.mxu0 0.0
        %7806 = vmatprep.subr.mxu0 0.0
        %7807 = vmatpush1.msra.mxu0 0.0
        %7808 = vmatprep.subr.mxu0 0.0
        %7809 = vmatpush1.msra.mxu0 0.0
        %7810 = vmatprep.subr.mxu0 0.0
        %7811 = vmatpush1.msra.mxu0 0.0
        %7812 = vmatprep.subr.mxu0 0.0
        %7813 = vmatpush1.msra.mxu0 0.0
        %7814 = vmatprep.subr.mxu0 0.0
        %7815 = vmatpush1.msra.mxu0 0.0
        %7816 = vmatprep.subr.mxu0 0.0
        %7817 = vmatpush1.msra.mxu0 0.0
        %7818 = vmatprep.subr.mxu0 0.0
        %7819 = vmatpush1.msra.mxu0 0.0
        %7820 = vmatprep.subr.mxu0 0.0
        %7821 = vmatpush1.msra.mxu0 0.0
        %7822 = vmatprep.subr.mxu0 0.0
        %7823 = vmatpush1.msra.mxu0 0.0
        %7824 = vmatprep.subr.mxu0 0.0
        %7825 = vmatpush1.msra.mxu0 0.0
        %7826 = vmatprep.subr.mxu0 0.0
        %7827 = vmatpush1.msra.mxu0 0.0
        %7828 = vmatprep.subr.mxu0 0.0
        %7829 = vmatpush1.msra.mxu0 0.0
        %7830 = vmatprep.subr.mxu0 0.0
        %7831 = vmatpush1.msra.mxu0 0.0
        %7832 = vmatprep.subr.mxu0 0.0
        %7833 = vmatpush1.msra.mxu0 0.0
        %7834 = vmatprep.subr.mxu0 0.0
        %7835 = vmatpush1.msra.mxu0 0.0
        %7836 = vmatprep.subr.mxu0 0.0
        %7837 = vmatpush1.msra.mxu0 0.0
        %7838 = vmatprep.subr.mxu0 0.0
        %7839 = vmatpush1.msra.mxu0 0.0
        %7840 = vmatprep.subr.mxu0 0.0
        %7841 = vmatpush1.msra.mxu0 0.0
        %7842 = vmatprep.subr.mxu0 0.0
        %7843 = vmatpush1.msra.mxu0 0.0
        %7844 = vmatprep.subr.mxu0 0.0
        %7845 = vmatpush1.msra.mxu0 0.0
        %7846 = vmatprep.subr.mxu0 0.0
        %7847 = vmatpush1.msra.mxu0 0.0
        %7848 = vmatprep.subr.mxu0 0.0
        %7849 = vmatpush1.msra.mxu0 0.0
        %7850 = vmatprep.subr.mxu0 0.0
        %7851 = vmatpush1.msra.mxu0 0.0
        %7852 = vmatprep.subr.mxu0 0.0
        %7853 = vmatpush1.msra.mxu0 0.0
        %7854 = vmatprep.mubr.f32.mxu0 0.0
        %7855 = vmatmul.mubr.f32.gmra.mrb[0].mxu0 %v7788
        %v7856 = vpop.f32.mrb[0].mxu0
        %v7857 = vadd.f32 %v7785, %v7856
        %v7858 = vpop.f32.mrb[0].mxu0
        %7859 = vdwg.mxu0
        %v7860 = vmax.f32 %v7857, 0.0
        %s7861 = scalar_lea.vmem [#allocation10], 64
        %v7862 = vld [vmem:[%s7861] sm:$0xff]
        %v7863 = vld [vmem:[%s7861 + $0x8] sm:$0xff]
        %v7864 = vld [vmem:[%s7861 + $0x10] sm:$0xff]
        %v7865 = vld [vmem:[%s7861 + $0x18] sm:$0xff]
        %v7866 = vld [vmem:[%s7861 + $0x20] sm:$0xff]
        %v7867 = vld [vmem:[%s7861 + $0x28] sm:$0xff]
        %v7868 = vld [vmem:[%s7861 + $0x30] sm:$0xff]
        %v7869 = vld [vmem:[%s7861 + $0x38] sm:$0xff]
        %s7870 = scalar_lea.vmem %s14, 1
        %v7871 = vld [vmem:[%s7870] sm:$0x1]
        %v7873 = vlaneseq
        %v7874 = vshrl.u32 %v7873, 7
        %v7875 = vsub.s32 0, %v7874
        %v7876 = vrot.slane %v7871, %v7875
        %v7879 = vsel %vm4221, %v7860, 0
        %7881 = vmatprep.subr.mxu0 0.0
        %7882 = vmatpush1.msra.mxu0 %v7862
        %7883 = vmatprep.subr.mxu0 0.0
        %7884 = vmatpush1.msra.mxu0 %v7863
        %7885 = vmatprep.subr.mxu0 0.0
        %7886 = vmatpush1.msra.mxu0 %v7864
        %7887 = vmatprep.subr.mxu0 0.0
        %7888 = vmatpush1.msra.mxu0 %v7865
        %7889 = vmatprep.subr.mxu0 0.0
        %7890 = vmatpush1.msra.mxu0 %v7866
        %7891 = vmatprep.subr.mxu0 0.0
        %7892 = vmatpush1.msra.mxu0 %v7867
        %7893 = vmatprep.subr.mxu0 0.0
        %7894 = vmatpush1.msra.mxu0 %v7868
        %7895 = vmatprep.subr.mxu0 0.0
        %7896 = vmatpush1.msra.mxu0 %v7869
        %7897 = vmatprep.subr.mxu0 0.0
        %7898 = vmatpush1.msra.mxu0 0.0
        %7899 = vmatprep.subr.mxu0 0.0
        %7900 = vmatpush1.msra.mxu0 0.0
        %7901 = vmatprep.subr.mxu0 0.0
        %7902 = vmatpush1.msra.mxu0 0.0
        %7903 = vmatprep.subr.mxu0 0.0
        %7904 = vmatpush1.msra.mxu0 0.0
        %7905 = vmatprep.subr.mxu0 0.0
        %7906 = vmatpush1.msra.mxu0 0.0
        %7907 = vmatprep.subr.mxu0 0.0
        %7908 = vmatpush1.msra.mxu0 0.0
        %7909 = vmatprep.subr.mxu0 0.0
        %7910 = vmatpush1.msra.mxu0 0.0
        %7911 = vmatprep.subr.mxu0 0.0
        %7912 = vmatpush1.msra.mxu0 0.0
        %7913 = vmatprep.subr.mxu0 0.0
        %7914 = vmatpush1.msra.mxu0 0.0
        %7915 = vmatprep.subr.mxu0 0.0
        %7916 = vmatpush1.msra.mxu0 0.0
        %7917 = vmatprep.subr.mxu0 0.0
        %7918 = vmatpush1.msra.mxu0 0.0
        %7919 = vmatprep.subr.mxu0 0.0
        %7920 = vmatpush1.msra.mxu0 0.0
        %7921 = vmatprep.subr.mxu0 0.0
        %7922 = vmatpush1.msra.mxu0 0.0
        %7923 = vmatprep.subr.mxu0 0.0
        %7924 = vmatpush1.msra.mxu0 0.0
        %7925 = vmatprep.subr.mxu0 0.0
        %7926 = vmatpush1.msra.mxu0 0.0
        %7927 = vmatprep.subr.mxu0 0.0
        %7928 = vmatpush1.msra.mxu0 0.0
        %7929 = vmatprep.subr.mxu0 0.0
        %7930 = vmatpush1.msra.mxu0 0.0
        %7931 = vmatprep.subr.mxu0 0.0
        %7932 = vmatpush1.msra.mxu0 0.0
        %7933 = vmatprep.subr.mxu0 0.0
        %7934 = vmatpush1.msra.mxu0 0.0
        %7935 = vmatprep.subr.mxu0 0.0
        %7936 = vmatpush1.msra.mxu0 0.0
        %7937 = vmatprep.subr.mxu0 0.0
        %7938 = vmatpush1.msra.mxu0 0.0
        %7939 = vmatprep.subr.mxu0 0.0
        %7940 = vmatpush1.msra.mxu0 0.0
        %7941 = vmatprep.subr.mxu0 0.0
        %7942 = vmatpush1.msra.mxu0 0.0
        %7943 = vmatprep.subr.mxu0 0.0
        %7944 = vmatpush1.msra.mxu0 0.0
        %7945 = vmatprep.mubr.f32.mxu0 0.0
        %7946 = vmatmul.mubr.f32.gmra.mrb[0].mxu0 %v7879
        %v7947 = vpop.f32.mrb[0].mxu0
        %v7948 = vadd.f32 %v7876, %v7947
        %v7949 = vpop.f32.mrb[0].mxu0
        %7950 = vdwg.mxu0
        %v7951 = vadd.f32 %v7773, %v7948
        %s7952 = scalar_lea.vmem %s15, 1
        %v7953 = vld [vmem:[%s7952] sm:$0x1]
        %s7954 = scalar_lea.vmem %s16, 1
        %v7955 = vld [vmem:[%s7954] sm:$0x1]
        %v7956 = vsel %vm673, %v7951, 0.0
        %7957 = vadd.xlane.f32.xlu0 %v7956
        %v7958 = vpop.xlane.xlu0 %7957
        %v7959 = vmul.f32 %v7958, %v4096
        %v7960 = vsub.f32 %v7951, %v7959
        %v7961 = vmul.f32 %v7960, %v7960
        %v7962 = vsel %vm673, %v7961, 0.0
        %7963 = vadd.xlane.f32.xlu0 %v7962
        %v7964 = vpop.xlane.xlu0 %7963
        %v7965 = vmul.f32 %v7964, %v4096
        %v7966 = vadd.f32 %v7965, 1e-05
        %v7967 = vrsqrt.pop %v7966
        %v7968 = vmul.f32 %v7960, %v7967
        %v7970 = vlaneseq
        %v7971 = vshrl.u32 %v7970, 7
        %v7972 = vsub.s32 0, %v7971
        %v7973 = vrot.slane %v7953, %v7972
        %v7975 = vmul.f32 %v7968, %v7973
        %v7977 = vlaneseq
        %v7978 = vshrl.u32 %v7977, 7
        %v7979 = vsub.s32 0, %v7978
        %v7980 = vrot.slane %v7955, %v7979
        %v7982 = vadd.f32 %v7975, %v7980
        %7983 = vst.msk [vmem:[%s631] sm:$0xff] %vm673, %v7982
        %p7984 = scmp.lt.s32.totalorder %s32, 1
        %s7985 = scalar_select %p7984, %s32, 1
        %s7986 = smul.addr %s7985, 8
        %s7987 = scalar_lea.vmem %s17, %s7986
        // Predicated region
        $region113: #{transxl_forward.1} parent=87 // pred_check
          %p7988 = pneg %p412
        $region114: #{transxl_forward.1} parent=87 // pred_check_branch
          %7990 = sbr.rel (%p7988) target = $region116
        $region115: #{transxl_forward.1} parent=87 // pred_region
          _
        $region116: #{transxl_forward.1} parent=87 // pred_fallthru
          _
      $region88: #{transxl_forward.1} parent=5 // pred_fallthru
        _
      %p7991 = scmp.le.s32.totalorder 2, %s27
      // Predicated region
      $region117: #{transxl_forward.1} parent=5 // pred_check
        %p7992 = pneg %p7991
      $region118: #{transxl_forward.1} parent=5 // pred_check_branch
        %7994 = sbr.rel (%p7992) target = $region120
      $region119: #{transxl_forward.1} parent=5 // pred_region
        %s7995 = ssub.s32 %s27, 2
        // Predicated region
        $region121: #{transxl_forward.1} parent=119 // pred_check
          %p7996 = pneg %p418
        $region122: #{transxl_forward.1} parent=119 // pred_check_branch
          %7998 = sbr.rel (%p7996) target = $region124
        $region123: #{transxl_forward.1} parent=119 // pred_region
          %p7999 = scmp.lt.s32.totalorder %s33, 1
          %s8000 = scalar_select %p7999, %s33, 1
          %s8001 = smul.addr %s8000, 8
          %s8002 = scalar_lea.vmem %s17, %s8001
        $region124: #{transxl_forward.1} parent=119 // pred_fallthru
          _
      $region120: #{transxl_forward.1} parent=5 // pred_fallthru
        _
    $region6: #{transxl_forward.1} parent=1 // loop_footer
      %s31 = sadd.s32 1, %s27
    $region7: #{transxl_forward.1} parent=1 // loop_footer_branch
      %26 = sbr.rel target = $region3
    $region8: #{transxl_forward.1} parent=1 // loop_exit
      _
    %8003 = vsyncpa [#allocation3], 1
    %s8004 = scalar_lea.sflag [#allocation3], 1
    %8005 = vsyncpa %s8004, 1
    %8006 = vsyncpa [#allocation5], 1
    %8007 = vsyncpa [#allocation8], 1
    %8008 = vsyncpa [#allocation11], 1

</llo_original>
